<compile_context>
chip_gen: v6e
topology: v6e:2x2x1
jax: 0.10.0
libtpu: 0.0.40
codegen_flags: <defaults>
</compile_context>

<pallas_src>
import numpy as np

import jax
import jax.numpy as jnp
from jax.experimental import pallas as pl
from jax.experimental.pallas import tpu as pltpu

CAPACITY = 8      # `capacity` global in the original script
LATENT_DIMS = 32  # `latent_dims` global in the original script

_K = 4                 # conv kernel size
_H0, _W0 = 28, 28      # input spatial
_H1, _W1 = 14, 14      # conv1 output spatial
_H2, _W2 = 7, 7        # conv2 output spatial
_P0 = _H0 * _W0        # 784 pixels per image
_M1 = _H1 * _W1        # 196 conv1 output positions
_M2 = _H2 * _W2        # 49  conv2 output positions

B_TILE_DEFAULT = 128   # images per grid step (multiple of 8)


def _round_up(x, m):
    return (x + m - 1) // m * m


# ----------------------------------------------------------------------------
# Fused encoder kernel: one grid step == B_TILE images, everything on-chip.
# Three matmuls, two bias+ReLU passes, one bias add.  No loops.
# ----------------------------------------------------------------------------
def _encoder_kernel(x_ref, t1_ref, t2_ref, wfc_ref,
                    b1_ref, b2_ref, bfc_ref, out_ref):
    f32, bf16 = jnp.float32, jnp.bfloat16

    # conv1 (+ im2col) + ReLU:  (B, 784) @ (784, c*196) -> (B, c*196)
    x = x_ref[...].astype(bf16)
    act1 = jnp.maximum(
        jnp.dot(x, t1_ref[...], preferred_element_type=f32) + b1_ref[...],
        0.0).astype(bf16)

    # conv2 (+ im2col) + ReLU:  (B, c*196) @ (c*196, 2c*49) -> (B, 2c*49)
    # column order is c2*49 + m2 == PyTorch's x.view(B, -1) flatten order.
    act2 = jnp.maximum(
        jnp.dot(act1, t2_ref[...], preferred_element_type=f32) + b2_ref[...],
        0.0).astype(bf16)

    # fc:  (B, 784) @ (784, latent) + bias
    out_ref[...] = (jnp.dot(act2, wfc_ref[...], preferred_element_type=f32)
                    + bfc_ref[...])


# ----------------------------------------------------------------------------
# Constant 0/1 patch-selection matrices for k=4, s=2, p=1 convolutions.
#   S[t, in_pos, out_pos] = 1  iff tap t of output position reads input pos.
# ----------------------------------------------------------------------------
def _build_selection(h_in, w_in, h_out, w_out):
    s = np.zeros((_K * _K, h_in * w_in, h_out * w_out), np.float32)
    for kh in range(_K):
        for kw in range(_K):
            t = kh * _K + kw
            for oh in range(h_out):
                ih = 2 * oh - 1 + kh
                if not 0 <= ih < h_in:
                    continue
                for ow in range(w_out):
                    iw = 2 * ow - 1 + kw
                    if not 0 <= iw < w_in:
                        continue
                    s[t, ih * w_in + iw, oh * w_out + ow] = 1.0
    return s


# ----------------------------------------------------------------------------
# One-time parameter preparation: fold conv weights into the im2col selection
# matrices (each nonzero of T1/T2 equals exactly one original weight value,
# so bf16 casting here is no worse than casting the raw conv weights).
# ----------------------------------------------------------------------------
def prepare_params(params):
    c = params["w1"].shape[0]
    c2 = params["w2"].shape[0]
    latent = params["wfc"].shape[0]

    s1 = jnp.asarray(_build_selection(_H0, _W0, _H1, _W1), jnp.float32)  # (16, 784, 196)
    s2 = jnp.asarray(_build_selection(_H1, _W1, _H2, _W2), jnp.float32)  # (16, 196, 49)

    w1r = params["w1"].reshape(c, _K * _K).astype(jnp.float32)           # (c, 16)
    w2r = params["w2"].reshape(c2, c, _K * _K).astype(jnp.float32)       # (c2, c, 16)

    # T1[p, c1*196 + m1] = sum_t S1[t, p, m1] * W1[c1, t]
    t1 = jnp.einsum("tpm,ct->pcm", s1, w1r).reshape(_P0, c * _M1)
    # T2[c1*196 + m1, c2*49 + m2] = sum_t S2[t, m1, m2] * W2[c2, c1, t]
    t2 = jnp.einsum("tmn,dct->cmdn", s2, w2r).reshape(c * _M1, c2 * _M2)

    return {
        "t1": t1.astype(jnp.bfloat16),                                   # (784, c*196)
        "t2": t2.astype(jnp.bfloat16),                                   # (c*196, 2c*49)
        "wfc": params["wfc"].T.astype(jnp.bfloat16),                     # (2c*49, latent)
        "b1": jnp.repeat(params["b1"], _M1).reshape(1, c * _M1).astype(jnp.float32),
        "b2": jnp.repeat(params["b2"], _M2).reshape(1, c2 * _M2).astype(jnp.float32),
        "bfc": params["bfc"].reshape(1, latent).astype(jnp.float32),
    }


# ----------------------------------------------------------------------------
# Encoder forward: ONE fused, batch-tiled pallas_call.
# ----------------------------------------------------------------------------
def encoder_forward(x, pp, *, block_batch=B_TILE_DEFAULT):
    n = x.shape[0]
    latent = pp["bfc"].shape[1]

    # Raw pixels only -- no duplicated patches prepass.
    x_flat = x.reshape(n, _P0).astype(jnp.float32)

    bt = min(block_batch, _round_up(n, 8))     # images per grid step (mult of 8)
    n_pad = _round_up(n, bt)
    if n_pad != n:
        x_flat = jnp.pad(x_flat, ((0, n_pad - n), (0, 0)))

    out = pl.pallas_call(
        _encoder_kernel,
        out_shape=jax.ShapeDtypeStruct((n_pad, latent), jnp.float32),
        grid=(n_pad // bt,),
        in_specs=[
            pl.BlockSpec((bt, _P0), lambda i: (i, 0)),          # x (per batch tile)
            pl.BlockSpec(pp["t1"].shape, lambda i: (0, 0)),     # fused conv1 weights
            pl.BlockSpec(pp["t2"].shape, lambda i: (0, 0)),     # fused conv2 weights
            pl.BlockSpec(pp["wfc"].shape, lambda i: (0, 0)),    # fc weights
            pl.BlockSpec(pp["b1"].shape, lambda i: (0, 0)),     # conv1 bias (expanded)
            pl.BlockSpec(pp["b2"].shape, lambda i: (0, 0)),     # conv2 bias (expanded)
            pl.BlockSpec(pp["bfc"].shape, lambda i: (0, 0)),    # fc bias
        ],
        out_specs=pl.BlockSpec((bt, latent), lambda i: (i, 0)),
        compiler_params=pltpu.CompilerParams(
            dimension_semantics=("parallel",),
            vmem_limit_bytes=32 * 1024 * 1024),
    )(x_flat, pp["t1"], pp["t2"], pp["wfc"], pp["b1"], pp["b2"], pp["bfc"])

    return out[:n]


# ----------------------------------------------------------------------------
# Parameter init + pure-JAX f32 reference (for correctness check)
# ----------------------------------------------------------------------------
def init_params(key):
    c = CAPACITY
    k1, k2, k3 = jax.random.split(key, 3)
    return {
        "w1": 0.05 * jax.random.normal(k1, (c, 1, _K, _K), jnp.float32),
        "b1": jnp.linspace(-0.1, 0.1, c, dtype=jnp.float32),
        "w2": 0.05 * jax.random.normal(k2, (2 * c, c, _K, _K), jnp.float32),
        "b2": jnp.linspace(-0.1, 0.1, 2 * c, dtype=jnp.float32),
        "wfc": 0.05 * jax.random.normal(k3, (LATENT_DIMS, 2 * c * _M2), jnp.float32),
        "bfc": jnp.linspace(-0.1, 0.1, LATENT_DIMS, dtype=jnp.float32),
    }


def encoder_ref(x, params):
    def conv(x, w, b):
        y = jax.lax.conv_general_dilated(
            x, w, window_strides=(2, 2), padding=((1, 1), (1, 1)),
            dimension_numbers=("NCHW", "OIHW", "NCHW"))
        return y + b.reshape(1, -1, 1, 1)

    x = jax.nn.relu(conv(x, params["w1"], params["b1"]))
    x = jax.nn.relu(conv(x, params["w2"], params["b2"]))
    x = x.reshape(x.shape[0], -1)
    return x @ params["wfc"].T + params["bfc"]


if __name__ == "__main__":
    key = jax.random.PRNGKey(0)
    kx, kp = jax.random.split(key)
    # MNIST-like input implied by the 7*7 spatial size in the fc layer.
    x = jax.random.normal(kx, (2, 1, 28, 28), jnp.float32)
    params = init_params(kp)
    prepped = prepare_params(params)          # one-time weight prep (hoisted)

    fwd = jax.jit(encoder_forward)
    out = jax.block_until_ready(fwd(x, prepped))
    assert out.shape == (2, LATENT_DIMS), out.shape

    ref = jax.block_until_ready(encoder_ref(x, params))
    err = float(jnp.max(jnp.abs(out - ref)))
    # bf16 MXU operands with f32 accumulation: expect ~1e-3 abs error.
    assert err < 2e-2, err

    print("KERNEL_OK")
</pallas_src>

<mosaic_0001>
module attributes {stable_mosaic.version = 11 : i64} {
  func.func @_encoder_kernel(%arg0: i32, %arg1: memref<8x784xf32, #tpu.memory_space<vmem>>, %arg2: memref<784x1568xbf16, #tpu.memory_space<vmem>>, %arg3: memref<1568x784xbf16, #tpu.memory_space<vmem>>, %arg4: memref<784x32xbf16, #tpu.memory_space<vmem>>, %arg5: memref<1x1568xf32, #tpu.memory_space<vmem>>, %arg6: memref<1x784xf32, #tpu.memory_space<vmem>>, %arg7: memref<1x32xf32, #tpu.memory_space<vmem>>, %arg8: memref<8x32xf32, #tpu.memory_space<vmem>>) attributes {dimension_semantics = [#tpu.dimension_semantics<parallel>], iteration_bounds = array<i64: 1>, scalar_prefetch = 0 : i64, scratch_operands = 0 : i64, tpu.core_type = #tpu.core_type<tc>, window_params = [{transform_indices = @transform_0, window_bounds = array<i64: 8, 784>}, {pipeline_mode = #tpu.pipeline_mode<synchronous>, transform_indices = @transform_1, window_bounds = array<i64: 784, 1568>}, {pipeline_mode = #tpu.pipeline_mode<synchronous>, transform_indices = @transform_2, window_bounds = array<i64: 1568, 784>}, {pipeline_mode = #tpu.pipeline_mode<synchronous>, transform_indices = @transform_3, window_bounds = array<i64: 784, 32>}, {pipeline_mode = #tpu.pipeline_mode<synchronous>, transform_indices = @transform_4, window_bounds = array<i64: 1, 1568>}, {pipeline_mode = #tpu.pipeline_mode<synchronous>, transform_indices = @transform_5, window_bounds = array<i64: 1, 784>}, {pipeline_mode = #tpu.pipeline_mode<synchronous>, transform_indices = @transform_6, window_bounds = array<i64: 1, 32>}, {transform_indices = @transform_7, window_bounds = array<i64: 8, 32>}]} {
    %c0 = arith.constant 0 : index
    %c0_0 = arith.constant 0 : index
    %0 = vector.load %arg1[%c0, %c0_0] : memref<8x784xf32, #tpu.memory_space<vmem>>, vector<8x784xf32>
    %1 = arith.truncf %0 : vector<8x784xf32> to vector<8x784xbf16>
    %c0_1 = arith.constant 0 : index
    %c0_2 = arith.constant 0 : index
    %2 = vector.load %arg2[%c0_1, %c0_2] : memref<784x1568xbf16, #tpu.memory_space<vmem>>, vector<784x1568xbf16>
    %cst = arith.constant dense<0.000000e+00> : vector<8x1568xf32>
    %3 = tpu.matmul %1, %2, %cst {dimension_numbers = #tpu.dot_dimension_numbers<[1], [0], [0], [1], [0, 0, 1, 1], [], []>} : vector<8x784xbf16>, vector<784x1568xbf16>, vector<8x1568xf32> -> vector<8x1568xf32>
    %c0_3 = arith.constant 0 : index
    %c0_4 = arith.constant 0 : index
    %4 = vector.load %arg5[%c0_3, %c0_4] : memref<1x1568xf32, #tpu.memory_space<vmem>>, vector<1x1568xf32>
    %5 = vector.broadcast %4 : vector<1x1568xf32> to vector<8x1568xf32>
    %6 = arith.addf %3, %5 : vector<8x1568xf32>
    %cst_5 = arith.constant 0.000000e+00 : f32
    %7 = vector.broadcast %cst_5 : f32 to vector<8x1568xf32>
    %8 = arith.maximumf %6, %7 : vector<8x1568xf32>
    %9 = arith.truncf %8 : vector<8x1568xf32> to vector<8x1568xbf16>
    %c0_6 = arith.constant 0 : index
    %c0_7 = arith.constant 0 : index
    %10 = vector.load %arg3[%c0_6, %c0_7] : memref<1568x784xbf16, #tpu.memory_space<vmem>>, vector<1568x784xbf16>
    %cst_8 = arith.constant dense<0.000000e+00> : vector<8x784xf32>
    %11 = tpu.matmul %9, %10, %cst_8 {dimension_numbers = #tpu.dot_dimension_numbers<[1], [0], [0], [1], [0, 0, 1, 1], [], []>} : vector<8x1568xbf16>, vector<1568x784xbf16>, vector<8x784xf32> -> vector<8x784xf32>
    %c0_9 = arith.constant 0 : index
    %c0_10 = arith.constant 0 : index
    %12 = vector.load %arg6[%c0_9, %c0_10] : memref<1x784xf32, #tpu.memory_space<vmem>>, vector<1x784xf32>
    %13 = vector.broadcast %12 : vector<1x784xf32> to vector<8x784xf32>
    %14 = arith.addf %11, %13 : vector<8x784xf32>
    %cst_11 = arith.constant 0.000000e+00 : f32
    %15 = vector.broadcast %cst_11 : f32 to vector<8x784xf32>
    %16 = arith.maximumf %14, %15 : vector<8x784xf32>
    %17 = arith.truncf %16 : vector<8x784xf32> to vector<8x784xbf16>
    %c0_12 = arith.constant 0 : index
    %c0_13 = arith.constant 0 : index
    %18 = vector.load %arg4[%c0_12, %c0_13] : memref<784x32xbf16, #tpu.memory_space<vmem>>, vector<784x32xbf16>
    %cst_14 = arith.constant dense<0.000000e+00> : vector<8x32xf32>
    %19 = tpu.matmul %17, %18, %cst_14 {dimension_numbers = #tpu.dot_dimension_numbers<[1], [0], [0], [1], [0, 0, 1, 1], [], []>} : vector<8x784xbf16>, vector<784x32xbf16>, vector<8x32xf32> -> vector<8x32xf32>
    %c0_15 = arith.constant 0 : index
    %c0_16 = arith.constant 0 : index
    %20 = vector.load %arg7[%c0_15, %c0_16] : memref<1x32xf32, #tpu.memory_space<vmem>>, vector<1x32xf32>
    %21 = vector.broadcast %20 : vector<1x32xf32> to vector<8x32xf32>
    %22 = arith.addf %19, %21 : vector<8x32xf32>
    %c0_17 = arith.constant 0 : index
    %c0_18 = arith.constant 0 : index
    %23 = vector.load %arg8[%c0_17, %c0_18] : memref<8x32xf32, #tpu.memory_space<vmem>>, vector<8x32xf32>
    tpu.vector_store %arg8[%c0_17, %c0_18], %22 {strides = array<i32>} : memref<8x32xf32, #tpu.memory_space<vmem>>, vector<8x32xf32>,
    return
  }
  func.func @transform_0(%arg0: i32) -> (i32, i32) {
    %c0_i32 = arith.constant 0 : i32
    %c0_i32_0 = arith.constant 0 : i32
    return %arg0, %c0_i32 : i32, i32
  }
  func.func @transform_1(%arg0: i32) -> (i32, i32) {
    %c0_i32 = arith.constant 0 : i32
    %c0_i32_0 = arith.constant 0 : i32
    %c0_i32_1 = arith.constant 0 : i32
    return %c0_i32, %c0_i32_0 : i32, i32
  }
  func.func @transform_2(%arg0: i32) -> (i32, i32) {
    %c0_i32 = arith.constant 0 : i32
    %c0_i32_0 = arith.constant 0 : i32
    %c0_i32_1 = arith.constant 0 : i32
    return %c0_i32, %c0_i32_0 : i32, i32
  }
  func.func @transform_3(%arg0: i32) -> (i32, i32) {
    %c0_i32 = arith.constant 0 : i32
    %c0_i32_0 = arith.constant 0 : i32
    %c0_i32_1 = arith.constant 0 : i32
    return %c0_i32, %c0_i32_0 : i32, i32
  }
  func.func @transform_4(%arg0: i32) -> (i32, i32) {
    %c0_i32 = arith.constant 0 : i32
    %c0_i32_0 = arith.constant 0 : i32
    %c0_i32_1 = arith.constant 0 : i32
    return %c0_i32, %c0_i32_0 : i32, i32
  }
  func.func @transform_5(%arg0: i32) -> (i32, i32) {
    %c0_i32 = arith.constant 0 : i32
    %c0_i32_0 = arith.constant 0 : i32
    %c0_i32_1 = arith.constant 0 : i32
    return %c0_i32, %c0_i32_0 : i32, i32
  }
  func.func @transform_6(%arg0: i32) -> (i32, i32) {
    %c0_i32 = arith.constant 0 : i32
    %c0_i32_0 = arith.constant 0 : i32
    %c0_i32_1 = arith.constant 0 : i32
    return %c0_i32, %c0_i32_0 : i32, i32
  }
  func.func @transform_7(%arg0: i32) -> (i32, i32) {
    %c0_i32 = arith.constant 0 : i32
    %c0_i32_0 = arith.constant 0 : i32
    return %arg0, %c0_i32 : i32, i32
  }
}

</mosaic_0001>

<llo_original>
// kernel: encoder_forward.1
$region0: #{encoder_forward.1}
  #allocation0 [shape = 'u32[]', space=smem, size = 0x4, offset = 0x4, fixed_abs, tag = 'smem constant byte address 0x4 - core index']
  #allocation1 [shape = 'u32[144,128]{1,0:T(1,128)}', space=vmem, size = 0x12000, scoped, tag = 'internal scratch']
  %s0 = inlined_call_operand.vmem [shape: f32[8,784], index: 0, kind: input, shape index: {}]
  %s1 = inlined_call_operand.vmem [shape: bf16[784,1568], index: 1, kind: input, shape index: {}]
  %s2 = inlined_call_operand.vmem [shape: bf16[1568,784], index: 2, kind: input, shape index: {}]
  %s3 = inlined_call_operand.vmem [shape: bf16[784,32], index: 3, kind: input, shape index: {}]
  %s4 = inlined_call_operand.vmem [shape: f32[1,1568], index: 4, kind: input, shape index: {}]
  %s5 = inlined_call_operand.vmem [shape: f32[1,784], index: 5, kind: input, shape index: {}]
  %s6 = inlined_call_operand.vmem [shape: f32[1,32], index: 6, kind: input, shape index: {}]
  %s7 = inlined_call_operand.vmem [shape: f32[8,32], index: 7, kind: output, shape index: {}]
  %s8 = sld [smem:[#allocation0]]
  $region38: #{encoder_forward.1} parent=0
    _
  %s10 = ssub.s32 1, %s8
  %s11 = scalar_select 0, %s10, %s8
  // Predicated region
  $region2: #{encoder_forward.1} parent=0 // pred_check
    _
  $region3: #{encoder_forward.1} parent=0 // pred_check_branch
    %13 = sbr.rel (0) target = $region5
  $region4: #{encoder_forward.1} parent=0 // pred_region
    _
  $region5: #{encoder_forward.1} parent=0 // pred_fallthru
    _
  // Predicated region
  $region6: #{encoder_forward.1} parent=0 // pred_check
    _
  $region7: #{encoder_forward.1} parent=0 // pred_check_branch
    %15 = sbr.rel (0) target = $region9
  $region8: #{encoder_forward.1} parent=0 // pred_region
    _
  $region9: #{encoder_forward.1} parent=0 // pred_fallthru
    _
  // Predicated region
  $region10: #{encoder_forward.1} parent=0 // pred_check
    _
  $region11: #{encoder_forward.1} parent=0 // pred_check_branch
    %17 = sbr.rel (0) target = $region13
  $region12: #{encoder_forward.1} parent=0 // pred_region
    _
  $region13: #{encoder_forward.1} parent=0 // pred_fallthru
    _
  // Predicated region
  $region14: #{encoder_forward.1} parent=0 // pred_check
    _
  $region15: #{encoder_forward.1} parent=0 // pred_check_branch
    %19 = sbr.rel (0) target = $region17
  $region16: #{encoder_forward.1} parent=0 // pred_region
    _
  $region17: #{encoder_forward.1} parent=0 // pred_fallthru
    _
  // Predicated region
  $region18: #{encoder_forward.1} parent=0 // pred_check
    _
  $region19: #{encoder_forward.1} parent=0 // pred_check_branch
    %21 = sbr.rel (0) target = $region21
  $region20: #{encoder_forward.1} parent=0 // pred_region
    _
  $region21: #{encoder_forward.1} parent=0 // pred_fallthru
    _
  // Predicated region
  $region22: #{encoder_forward.1} parent=0 // pred_check
    _
  $region23: #{encoder_forward.1} parent=0 // pred_check_branch
    %23 = sbr.rel (0) target = $region25
  $region24: #{encoder_forward.1} parent=0 // pred_region
    _
  $region25: #{encoder_forward.1} parent=0 // pred_fallthru
    _
  // Predicated region
  $region26: #{encoder_forward.1} parent=0 // pred_check
    _
  $region27: #{encoder_forward.1} parent=0 // pred_check_branch
    %25 = sbr.rel (0) target = $region29
  $region28: #{encoder_forward.1} parent=0 // pred_region
    _
  $region29: #{encoder_forward.1} parent=0 // pred_fallthru
    _
  %v27 = vld [vmem:[%s0] sm:$0xff]
  %v28 = vld [vmem:[%s0 + $0x8] sm:$0xff]
  %v29 = vld [vmem:[%s0 + $0x10] sm:$0xff]
  %v30 = vld [vmem:[%s0 + $0x18] sm:$0xff]
  %v31 = vld [vmem:[%s0 + $0x20] sm:$0xff]
  %v32 = vld [vmem:[%s0 + $0x28] sm:$0xff]
  %v33 = vld [vmem:[%s0 + $0x30] sm:$0xff]
  %v34 = vpack.c.bf16 %v27, %v27
  %v35 = vpack.c.bf16 %v28, %v28
  %v36 = vpack.c.bf16 %v29, %v29
  %v37 = vpack.c.bf16 %v30, %v30
  %v38 = vpack.c.bf16 %v31, %v31
  %v39 = vpack.c.bf16 %v32, %v32
  %v40 = vpack.c.bf16 %v33, %v33
  %v41 = vld [vmem:[%s1] sm:$0xff]
  %v42 = vld [vmem:[%s1 + $0x8] sm:$0xff]
  %v43 = vld [vmem:[%s1 + $0x10] sm:$0xff]
  %v44 = vld [vmem:[%s1 + $0x18] sm:$0xff]
  %v45 = vld [vmem:[%s1 + $0x20] sm:$0xff]
  %v46 = vld [vmem:[%s1 + $0x28] sm:$0xff]
  %v47 = vld [vmem:[%s1 + $0x30] sm:$0xf]
  %v48 = vld [vmem:[%s1 + $0x34] sm:$0xff]
  %v49 = vld [vmem:[%s1 + $0x3c] sm:$0xff]
  %v50 = vld [vmem:[%s1 + $0x44] sm:$0xff]
  %v51 = vld [vmem:[%s1 + $0x4c] sm:$0xff]
  %v52 = vld [vmem:[%s1 + $0x54] sm:$0xff]
  %v53 = vld [vmem:[%s1 + $0x5c] sm:$0xff]
  %v54 = vld [vmem:[%s1 + $0x64] sm:$0xf]
  %v55 = vld [vmem:[%s1 + $0x68] sm:$0xff]
  %v56 = vld [vmem:[%s1 + $0x70] sm:$0xff]
  %v57 = vld [vmem:[%s1 + $0x78] sm:$0xff]
  %v58 = vld [vmem:[%s1 + $0x80] sm:$0xff]
  %v59 = vld [vmem:[%s1 + $0x88] sm:$0xff]
  %v60 = vld [vmem:[%s1 + $0x90] sm:$0xff]
  %v61 = vld [vmem:[%s1 + $0x98] sm:$0xf]
  %v62 = vld [vmem:[%s1 + $0x9c] sm:$0xff]
  %v63 = vld [vmem:[%s1 + $0xa4] sm:$0xff]
  %v64 = vld [vmem:[%s1 + $0xac] sm:$0xff]
  %v65 = vld [vmem:[%s1 + $0xb4] sm:$0xff]
  %v66 = vld [vmem:[%s1 + $0xbc] sm:$0xff]
  %v67 = vld [vmem:[%s1 + $0xc4] sm:$0xff]
  %v68 = vld [vmem:[%s1 + $0xcc] sm:$0xf]
  %v69 = vld [vmem:[%s1 + $0xd0] sm:$0xff]
  %v70 = vld [vmem:[%s1 + $0xd8] sm:$0xff]
  %v71 = vld [vmem:[%s1 + $0xe0] sm:$0xff]
  %v72 = vld [vmem:[%s1 + $0xe8] sm:$0xff]
  %v73 = vld [vmem:[%s1 + $0xf0] sm:$0xff]
  %v74 = vld [vmem:[%s1 + $0xf8] sm:$0xff]
  %v75 = vld [vmem:[%s1 + $0x100] sm:$0xf]
  %v76 = vld [vmem:[%s1 + $0x104] sm:$0xff]
  %v77 = vld [vmem:[%s1 + $0x10c] sm:$0xff]
  %v78 = vld [vmem:[%s1 + $0x114] sm:$0xff]
  %v79 = vld [vmem:[%s1 + $0x11c] sm:$0xff]
  %v80 = vld [vmem:[%s1 + $0x124] sm:$0xff]
  %v81 = vld [vmem:[%s1 + $0x12c] sm:$0xff]
  %v82 = vld [vmem:[%s1 + $0x134] sm:$0xf]
  %v83 = vld [vmem:[%s1 + $0x138] sm:$0xff]
  %v84 = vld [vmem:[%s1 + $0x140] sm:$0xff]
  %v85 = vld [vmem:[%s1 + $0x148] sm:$0xff]
  %v86 = vld [vmem:[%s1 + $0x150] sm:$0xff]
  %v87 = vld [vmem:[%s1 + $0x158] sm:$0xff]
  %v88 = vld [vmem:[%s1 + $0x160] sm:$0xff]
  %v89 = vld [vmem:[%s1 + $0x168] sm:$0xf]
  %v90 = vld [vmem:[%s1 + $0x16c] sm:$0xff]
  %v91 = vld [vmem:[%s1 + $0x174] sm:$0xff]
  %v92 = vld [vmem:[%s1 + $0x17c] sm:$0xff]
  %v93 = vld [vmem:[%s1 + $0x184] sm:$0xff]
  %v94 = vld [vmem:[%s1 + $0x18c] sm:$0xff]
  %v95 = vld [vmem:[%s1 + $0x194] sm:$0xff]
  %v96 = vld [vmem:[%s1 + $0x19c] sm:$0xf]
  %v97 = vld [vmem:[%s1 + $0x1a0] sm:$0xff]
  %v98 = vld [vmem:[%s1 + $0x1a8] sm:$0xff]
  %v99 = vld [vmem:[%s1 + $0x1b0] sm:$0xff]
  %v100 = vld [vmem:[%s1 + $0x1b8] sm:$0xff]
  %v101 = vld [vmem:[%s1 + $0x1c0] sm:$0xff]
  %v102 = vld [vmem:[%s1 + $0x1c8] sm:$0xff]
  %v103 = vld [vmem:[%s1 + $0x1d0] sm:$0xf]
  %v104 = vld [vmem:[%s1 + $0x1d4] sm:$0xff]
  %v105 = vld [vmem:[%s1 + $0x1dc] sm:$0xff]
  %v106 = vld [vmem:[%s1 + $0x1e4] sm:$0xff]
  %v107 = vld [vmem:[%s1 + $0x1ec] sm:$0xff]
  %v108 = vld [vmem:[%s1 + $0x1f4] sm:$0xff]
  %v109 = vld [vmem:[%s1 + $0x1fc] sm:$0xff]
  %v110 = vld [vmem:[%s1 + $0x204] sm:$0xf]
  %v111 = vld [vmem:[%s1 + $0x208] sm:$0xff]
  %v112 = vld [vmem:[%s1 + $0x210] sm:$0xff]
  %v113 = vld [vmem:[%s1 + $0x218] sm:$0xff]
  %v114 = vld [vmem:[%s1 + $0x220] sm:$0xff]
  %v115 = vld [vmem:[%s1 + $0x228] sm:$0xff]
  %v116 = vld [vmem:[%s1 + $0x230] sm:$0xff]
  %v117 = vld [vmem:[%s1 + $0x238] sm:$0xf]
  %v118 = vld [vmem:[%s1 + $0x23c] sm:$0xff]
  %v119 = vld [vmem:[%s1 + $0x244] sm:$0xff]
  %v120 = vld [vmem:[%s1 + $0x24c] sm:$0xff]
  %v121 = vld [vmem:[%s1 + $0x254] sm:$0xff]
  %v122 = vld [vmem:[%s1 + $0x25c] sm:$0xff]
  %v123 = vld [vmem:[%s1 + $0x264] sm:$0xff]
  %v124 = vld [vmem:[%s1 + $0x26c] sm:$0xf]
  %v125 = vld [vmem:[%s1 + $0x270] sm:$0xff]
  %v126 = vld [vmem:[%s1 + $0x278] sm:$0xff]
  %v127 = vld [vmem:[%s1 + $0x280] sm:$0xff]
  %v128 = vld [vmem:[%s1 + $0x288] sm:$0xff]
  %v129 = vld [vmem:[%s1 + $0x290] sm:$0xff]
  %v130 = vld [vmem:[%s1 + $0x298] sm:$0xff]
  %v131 = vld [vmem:[%s1 + $0x2a0] sm:$0xf]
  %v132 = vld [vmem:[%s1 + $0x2a4] sm:$0xff]
  %v133 = vld [vmem:[%s1 + $0x2ac] sm:$0xff]
  %v134 = vld [vmem:[%s1 + $0x2b4] sm:$0xff]
  %v135 = vld [vmem:[%s1 + $0x2bc] sm:$0xff]
  %v136 = vld [vmem:[%s1 + $0x2c4] sm:$0xff]
  %v137 = vld [vmem:[%s1 + $0x2cc] sm:$0xff]
  %v138 = vld [vmem:[%s1 + $0x2d4] sm:$0xf]
  %v139 = vld [vmem:[%s1 + $0x2d8] sm:$0xff]
  %v140 = vld [vmem:[%s1 + $0x2e0] sm:$0xff]
  %v141 = vld [vmem:[%s1 + $0x2e8] sm:$0xff]
  %v142 = vld [vmem:[%s1 + $0x2f0] sm:$0xff]
  %v143 = vld [vmem:[%s1 + $0x2f8] sm:$0xff]
  %v144 = vld [vmem:[%s1 + $0x300] sm:$0xff]
  %v145 = vld [vmem:[%s1 + $0x308] sm:$0xf]
  %v146 = vld [vmem:[%s1 + $0x30c] sm:$0xff]
  %v147 = vld [vmem:[%s1 + $0x314] sm:$0xff]
  %v148 = vld [vmem:[%s1 + $0x31c] sm:$0xff]
  %v149 = vld [vmem:[%s1 + $0x324] sm:$0xff]
  %v150 = vld [vmem:[%s1 + $0x32c] sm:$0xff]
  %v151 = vld [vmem:[%s1 + $0x334] sm:$0xff]
  %v152 = vld [vmem:[%s1 + $0x33c] sm:$0xf]
  %v153 = vld [vmem:[%s1 + $0x340] sm:$0xff]
  %v154 = vld [vmem:[%s1 + $0x348] sm:$0xff]
  %v155 = vld [vmem:[%s1 + $0x350] sm:$0xff]
  %v156 = vld [vmem:[%s1 + $0x358] sm:$0xff]
  %v157 = vld [vmem:[%s1 + $0x360] sm:$0xff]
  %v158 = vld [vmem:[%s1 + $0x368] sm:$0xff]
  %v159 = vld [vmem:[%s1 + $0x370] sm:$0xf]
  %v160 = vld [vmem:[%s1 + $0x374] sm:$0xff]
  %v161 = vld [vmem:[%s1 + $0x37c] sm:$0xff]
  %v162 = vld [vmem:[%s1 + $0x384] sm:$0xff]
  %v163 = vld [vmem:[%s1 + $0x38c] sm:$0xff]
  %v164 = vld [vmem:[%s1 + $0x394] sm:$0xff]
  %v165 = vld [vmem:[%s1 + $0x39c] sm:$0xff]
  %v166 = vld [vmem:[%s1 + $0x3a4] sm:$0xf]
  %v167 = vld [vmem:[%s1 + $0x3a8] sm:$0xff]
  %v168 = vld [vmem:[%s1 + $0x3b0] sm:$0xff]
  %v169 = vld [vmem:[%s1 + $0x3b8] sm:$0xff]
  %v170 = vld [vmem:[%s1 + $0x3c0] sm:$0xff]
  %v171 = vld [vmem:[%s1 + $0x3c8] sm:$0xff]
  %v172 = vld [vmem:[%s1 + $0x3d0] sm:$0xff]
  %v173 = vld [vmem:[%s1 + $0x3d8] sm:$0xf]
  %v174 = vld [vmem:[%s1 + $0x3dc] sm:$0xff]
  %v175 = vld [vmem:[%s1 + $0x3e4] sm:$0xff]
  %v176 = vld [vmem:[%s1 + $0x3ec] sm:$0xff]
  %v177 = vld [vmem:[%s1 + $0x3f4] sm:$0xff]
  %v178 = vld [vmem:[%s1 + $0x3fc] sm:$0xff]
  %v179 = vld [vmem:[%s1 + $0x404] sm:$0xff]
  %v180 = vld [vmem:[%s1 + $0x40c] sm:$0xf]
  %v181 = vld [vmem:[%s1 + $0x410] sm:$0xff]
  %v182 = vld [vmem:[%s1 + $0x418] sm:$0xff]
  %v183 = vld [vmem:[%s1 + $0x420] sm:$0xff]
  %v184 = vld [vmem:[%s1 + $0x428] sm:$0xff]
  %v185 = vld [vmem:[%s1 + $0x430] sm:$0xff]
  %v186 = vld [vmem:[%s1 + $0x438] sm:$0xff]
  %v187 = vld [vmem:[%s1 + $0x440] sm:$0xf]
  %v188 = vld [vmem:[%s1 + $0x444] sm:$0xff]
  %v189 = vld [vmem:[%s1 + $0x44c] sm:$0xff]
  %v190 = vld [vmem:[%s1 + $0x454] sm:$0xff]
  %v191 = vld [vmem:[%s1 + $0x45c] sm:$0xff]
  %v192 = vld [vmem:[%s1 + $0x464] sm:$0xff]
  %v193 = vld [vmem:[%s1 + $0x46c] sm:$0xff]
  %v194 = vld [vmem:[%s1 + $0x474] sm:$0xf]
  %v195 = vld [vmem:[%s1 + $0x478] sm:$0xff]
  %v196 = vld [vmem:[%s1 + $0x480] sm:$0xff]
  %v197 = vld [vmem:[%s1 + $0x488] sm:$0xff]
  %v198 = vld [vmem:[%s1 + $0x490] sm:$0xff]
  %v199 = vld [vmem:[%s1 + $0x498] sm:$0xff]
  %v200 = vld [vmem:[%s1 + $0x4a0] sm:$0xff]
  %v201 = vld [vmem:[%s1 + $0x4a8] sm:$0xf]
  %v202 = vld [vmem:[%s1 + $0x4ac] sm:$0xff]
  %v203 = vld [vmem:[%s1 + $0x4b4] sm:$0xff]
  %v204 = vld [vmem:[%s1 + $0x4bc] sm:$0xff]
  %v205 = vld [vmem:[%s1 + $0x4c4] sm:$0xff]
  %v206 = vld [vmem:[%s1 + $0x4cc] sm:$0xff]
  %v207 = vld [vmem:[%s1 + $0x4d4] sm:$0xff]
  %v208 = vld [vmem:[%s1 + $0x4dc] sm:$0xf]
  %v209 = vld [vmem:[%s1 + $0x4e0] sm:$0xff]
  %v210 = vld [vmem:[%s1 + $0x4e8] sm:$0xff]
  %v211 = vld [vmem:[%s1 + $0x4f0] sm:$0xff]
  %v212 = vld [vmem:[%s1 + $0x4f8] sm:$0xff]
  %v213 = vld [vmem:[%s1 + $0x500] sm:$0xff]
  %v214 = vld [vmem:[%s1 + $0x508] sm:$0xff]
  %v215 = vld [vmem:[%s1 + $0x510] sm:$0xf]
  %v216 = vld [vmem:[%s1 + $0x514] sm:$0xff]
  %v217 = vld [vmem:[%s1 + $0x51c] sm:$0xff]
  %v218 = vld [vmem:[%s1 + $0x524] sm:$0xff]
  %v219 = vld [vmem:[%s1 + $0x52c] sm:$0xff]
  %v220 = vld [vmem:[%s1 + $0x534] sm:$0xff]
  %v221 = vld [vmem:[%s1 + $0x53c] sm:$0xff]
  %v222 = vld [vmem:[%s1 + $0x544] sm:$0xf]
  %v223 = vld [vmem:[%s1 + $0x548] sm:$0xff]
  %v224 = vld [vmem:[%s1 + $0x550] sm:$0xff]
  %v225 = vld [vmem:[%s1 + $0x558] sm:$0xff]
  %v226 = vld [vmem:[%s1 + $0x560] sm:$0xff]
  %v227 = vld [vmem:[%s1 + $0x568] sm:$0xff]
  %v228 = vld [vmem:[%s1 + $0x570] sm:$0xff]
  %v229 = vld [vmem:[%s1 + $0x578] sm:$0xf]
  %v230 = vld [vmem:[%s1 + $0x57c] sm:$0xff]
  %v231 = vld [vmem:[%s1 + $0x584] sm:$0xff]
  %v232 = vld [vmem:[%s1 + $0x58c] sm:$0xff]
  %v233 = vld [vmem:[%s1 + $0x594] sm:$0xff]
  %v234 = vld [vmem:[%s1 + $0x59c] sm:$0xff]
  %v235 = vld [vmem:[%s1 + $0x5a4] sm:$0xff]
  %v236 = vld [vmem:[%s1 + $0x5ac] sm:$0xf]
  %v237 = vld [vmem:[%s1 + $0x5b0] sm:$0xff]
  %v238 = vld [vmem:[%s1 + $0x5b8] sm:$0xff]
  %v239 = vld [vmem:[%s1 + $0x5c0] sm:$0xff]
  %v240 = vld [vmem:[%s1 + $0x5c8] sm:$0xff]
  %v241 = vld [vmem:[%s1 + $0x5d0] sm:$0xff]
  %v242 = vld [vmem:[%s1 + $0x5d8] sm:$0xff]
  %v243 = vld [vmem:[%s1 + $0x5e0] sm:$0xf]
  %v244 = vld [vmem:[%s1 + $0x5e4] sm:$0xff]
  %v245 = vld [vmem:[%s1 + $0x5ec] sm:$0xff]
  %v246 = vld [vmem:[%s1 + $0x5f4] sm:$0xff]
  %v247 = vld [vmem:[%s1 + $0x5fc] sm:$0xff]
  %v248 = vld [vmem:[%s1 + $0x604] sm:$0xff]
  %v249 = vld [vmem:[%s1 + $0x60c] sm:$0xff]
  %v250 = vld [vmem:[%s1 + $0x614] sm:$0xf]
  %v251 = vld [vmem:[%s1 + $0x618] sm:$0xff]
  %v252 = vld [vmem:[%s1 + $0x620] sm:$0xff]
  %v253 = vld [vmem:[%s1 + $0x628] sm:$0xff]
  %v254 = vld [vmem:[%s1 + $0x630] sm:$0xff]
  %v255 = vld [vmem:[%s1 + $0x638] sm:$0xff]
  %v256 = vld [vmem:[%s1 + $0x640] sm:$0xff]
  %v257 = vld [vmem:[%s1 + $0x648] sm:$0xf]
  %v258 = vld [vmem:[%s1 + $0x64c] sm:$0xff]
  %v259 = vld [vmem:[%s1 + $0x654] sm:$0xff]
  %v260 = vld [vmem:[%s1 + $0x65c] sm:$0xff]
  %v261 = vld [vmem:[%s1 + $0x664] sm:$0xff]
  %v262 = vld [vmem:[%s1 + $0x66c] sm:$0xff]
  %v263 = vld [vmem:[%s1 + $0x674] sm:$0xff]
  %v264 = vld [vmem:[%s1 + $0x67c] sm:$0xf]
  %v265 = vld [vmem:[%s1 + $0x680] sm:$0xff]
  %v266 = vld [vmem:[%s1 + $0x688] sm:$0xff]
  %v267 = vld [vmem:[%s1 + $0x690] sm:$0xff]
  %v268 = vld [vmem:[%s1 + $0x698] sm:$0xff]
  %v269 = vld [vmem:[%s1 + $0x6a0] sm:$0xff]
  %v270 = vld [vmem:[%s1 + $0x6a8] sm:$0xff]
  %v271 = vld [vmem:[%s1 + $0x6b0] sm:$0xf]
  %v272 = vld [vmem:[%s1 + $0x6b4] sm:$0xff]
  %v273 = vld [vmem:[%s1 + $0x6bc] sm:$0xff]
  %v274 = vld [vmem:[%s1 + $0x6c4] sm:$0xff]
  %v275 = vld [vmem:[%s1 + $0x6cc] sm:$0xff]
  %v276 = vld [vmem:[%s1 + $0x6d4] sm:$0xff]
  %v277 = vld [vmem:[%s1 + $0x6dc] sm:$0xff]
  %v278 = vld [vmem:[%s1 + $0x6e4] sm:$0xf]
  %v279 = vld [vmem:[%s1 + $0x6e8] sm:$0xff]
  %v280 = vld [vmem:[%s1 + $0x6f0] sm:$0xff]
  %v281 = vld [vmem:[%s1 + $0x6f8] sm:$0xff]
  %v282 = vld [vmem:[%s1 + $0x700] sm:$0xff]
  %v283 = vld [vmem:[%s1 + $0x708] sm:$0xff]
  %v284 = vld [vmem:[%s1 + $0x710] sm:$0xff]
  %v285 = vld [vmem:[%s1 + $0x718] sm:$0xf]
  %v286 = vld [vmem:[%s1 + $0x71c] sm:$0xff]
  %v287 = vld [vmem:[%s1 + $0x724] sm:$0xff]
  %v288 = vld [vmem:[%s1 + $0x72c] sm:$0xff]
  %v289 = vld [vmem:[%s1 + $0x734] sm:$0xff]
  %v290 = vld [vmem:[%s1 + $0x73c] sm:$0xff]
  %v291 = vld [vmem:[%s1 + $0x744] sm:$0xff]
  %v292 = vld [vmem:[%s1 + $0x74c] sm:$0xf]
  %v293 = vld [vmem:[%s1 + $0x750] sm:$0xff]
  %v294 = vld [vmem:[%s1 + $0x758] sm:$0xff]
  %v295 = vld [vmem:[%s1 + $0x760] sm:$0xff]
  %v296 = vld [vmem:[%s1 + $0x768] sm:$0xff]
  %v297 = vld [vmem:[%s1 + $0x770] sm:$0xff]
  %v298 = vld [vmem:[%s1 + $0x778] sm:$0xff]
  %v299 = vld [vmem:[%s1 + $0x780] sm:$0xf]
  %v300 = vld [vmem:[%s1 + $0x784] sm:$0xff]
  %v301 = vld [vmem:[%s1 + $0x78c] sm:$0xff]
  %v302 = vld [vmem:[%s1 + $0x794] sm:$0xff]
  %v303 = vld [vmem:[%s1 + $0x79c] sm:$0xff]
  %v304 = vld [vmem:[%s1 + $0x7a4] sm:$0xff]
  %v305 = vld [vmem:[%s1 + $0x7ac] sm:$0xff]
  %v306 = vld [vmem:[%s1 + $0x7b4] sm:$0xf]
  %v307 = vld [vmem:[%s1 + $0x7b8] sm:$0xff]
  %v308 = vld [vmem:[%s1 + $0x7c0] sm:$0xff]
  %v309 = vld [vmem:[%s1 + $0x7c8] sm:$0xff]
  %v310 = vld [vmem:[%s1 + $0x7d0] sm:$0xff]
  %v311 = vld [vmem:[%s1 + $0x7d8] sm:$0xff]
  %v312 = vld [vmem:[%s1 + $0x7e0] sm:$0xff]
  %v313 = vld [vmem:[%s1 + $0x7e8] sm:$0xf]
  %v314 = vld [vmem:[%s1 + $0x7ec] sm:$0xff]
  %v315 = vld [vmem:[%s1 + $0x7f4] sm:$0xff]
  %v316 = vld [vmem:[%s1 + $0x7fc] sm:$0xff]
  %v317 = vld [vmem:[%s1 + $0x804] sm:$0xff]
  %v318 = vld [vmem:[%s1 + $0x80c] sm:$0xff]
  %v319 = vld [vmem:[%s1 + $0x814] sm:$0xff]
  %v320 = vld [vmem:[%s1 + $0x81c] sm:$0xf]
  %v321 = vld [vmem:[%s1 + $0x820] sm:$0xff]
  %v322 = vld [vmem:[%s1 + $0x828] sm:$0xff]
  %v323 = vld [vmem:[%s1 + $0x830] sm:$0xff]
  %v324 = vld [vmem:[%s1 + $0x838] sm:$0xff]
  %v325 = vld [vmem:[%s1 + $0x840] sm:$0xff]
  %v326 = vld [vmem:[%s1 + $0x848] sm:$0xff]
  %v327 = vld [vmem:[%s1 + $0x850] sm:$0xf]
  %v328 = vld [vmem:[%s1 + $0x854] sm:$0xff]
  %v329 = vld [vmem:[%s1 + $0x85c] sm:$0xff]
  %v330 = vld [vmem:[%s1 + $0x864] sm:$0xff]
  %v331 = vld [vmem:[%s1 + $0x86c] sm:$0xff]
  %v332 = vld [vmem:[%s1 + $0x874] sm:$0xff]
  %v333 = vld [vmem:[%s1 + $0x87c] sm:$0xff]
  %v334 = vld [vmem:[%s1 + $0x884] sm:$0xf]
  %v335 = vld [vmem:[%s1 + $0x888] sm:$0xff]
  %v336 = vld [vmem:[%s1 + $0x890] sm:$0xff]
  %v337 = vld [vmem:[%s1 + $0x898] sm:$0xff]
  %v338 = vld [vmem:[%s1 + $0x8a0] sm:$0xff]
  %v339 = vld [vmem:[%s1 + $0x8a8] sm:$0xff]
  %v340 = vld [vmem:[%s1 + $0x8b0] sm:$0xff]
  %v341 = vld [vmem:[%s1 + $0x8b8] sm:$0xf]
  %v342 = vld [vmem:[%s1 + $0x8bc] sm:$0xff]
  %v343 = vld [vmem:[%s1 + $0x8c4] sm:$0xff]
  %v344 = vld [vmem:[%s1 + $0x8cc] sm:$0xff]
  %v345 = vld [vmem:[%s1 + $0x8d4] sm:$0xff]
  %v346 = vld [vmem:[%s1 + $0x8dc] sm:$0xff]
  %v347 = vld [vmem:[%s1 + $0x8e4] sm:$0xff]
  %v348 = vld [vmem:[%s1 + $0x8ec] sm:$0xf]
  %v349 = vld [vmem:[%s1 + $0x8f0] sm:$0xff]
  %v350 = vld [vmem:[%s1 + $0x8f8] sm:$0xff]
  %v351 = vld [vmem:[%s1 + $0x900] sm:$0xff]
  %v352 = vld [vmem:[%s1 + $0x908] sm:$0xff]
  %v353 = vld [vmem:[%s1 + $0x910] sm:$0xff]
  %v354 = vld [vmem:[%s1 + $0x918] sm:$0xff]
  %v355 = vld [vmem:[%s1 + $0x920] sm:$0xf]
  %v356 = vld [vmem:[%s1 + $0x924] sm:$0xff]
  %v357 = vld [vmem:[%s1 + $0x92c] sm:$0xff]
  %v358 = vld [vmem:[%s1 + $0x934] sm:$0xff]
  %v359 = vld [vmem:[%s1 + $0x93c] sm:$0xff]
  %v360 = vld [vmem:[%s1 + $0x944] sm:$0xff]
  %v361 = vld [vmem:[%s1 + $0x94c] sm:$0xff]
  %v362 = vld [vmem:[%s1 + $0x954] sm:$0xf]
  %v363 = vld [vmem:[%s1 + $0x958] sm:$0xff]
  %v364 = vld [vmem:[%s1 + $0x960] sm:$0xff]
  %v365 = vld [vmem:[%s1 + $0x968] sm:$0xff]
  %v366 = vld [vmem:[%s1 + $0x970] sm:$0xff]
  %v367 = vld [vmem:[%s1 + $0x978] sm:$0xff]
  %v368 = vld [vmem:[%s1 + $0x980] sm:$0xff]
  %v369 = vld [vmem:[%s1 + $0x988] sm:$0xf]
  %v370 = vld [vmem:[%s1 + $0x98c] sm:$0xff]
  %v371 = vld [vmem:[%s1 + $0x994] sm:$0xff]
  %v372 = vld [vmem:[%s1 + $0x99c] sm:$0xff]
  %v373 = vld [vmem:[%s1 + $0x9a4] sm:$0xff]
  %v374 = vld [vmem:[%s1 + $0x9ac] sm:$0xff]
  %v375 = vld [vmem:[%s1 + $0x9b4] sm:$0xff]
  %v376 = vld [vmem:[%s1 + $0x9bc] sm:$0xf]
  %v377 = vld [vmem:[%s1 + $0x9c0] sm:$0xff]
  %v378 = vld [vmem:[%s1 + $0x9c8] sm:$0xff]
  %v379 = vld [vmem:[%s1 + $0x9d0] sm:$0xff]
  %v380 = vld [vmem:[%s1 + $0x9d8] sm:$0xff]
  %v381 = vld [vmem:[%s1 + $0x9e0] sm:$0xff]
  %v382 = vld [vmem:[%s1 + $0x9e8] sm:$0xff]
  %v383 = vld [vmem:[%s1 + $0x9f0] sm:$0xf]
  %v384 = vld [vmem:[%s1 + $0x9f4] sm:$0xff]
  %v385 = vld [vmem:[%s1 + $0x9fc] sm:$0xff]
  %v386 = vld [vmem:[%s1 + $0xa04] sm:$0xff]
  %v387 = vld [vmem:[%s1 + $0xa0c] sm:$0xff]
  %v388 = vld [vmem:[%s1 + $0xa14] sm:$0xff]
  %v389 = vld [vmem:[%s1 + $0xa1c] sm:$0xff]
  %v390 = vld [vmem:[%s1 + $0xa24] sm:$0xf]
  %v391 = vld [vmem:[%s1 + $0xa28] sm:$0xff]
  %v392 = vld [vmem:[%s1 + $0xa30] sm:$0xff]
  %v393 = vld [vmem:[%s1 + $0xa38] sm:$0xff]
  %v394 = vld [vmem:[%s1 + $0xa40] sm:$0xff]
  %v395 = vld [vmem:[%s1 + $0xa48] sm:$0xff]
  %v396 = vld [vmem:[%s1 + $0xa50] sm:$0xff]
  %v397 = vld [vmem:[%s1 + $0xa58] sm:$0xf]
  %v398 = vld [vmem:[%s1 + $0xa5c] sm:$0xff]
  %v399 = vld [vmem:[%s1 + $0xa64] sm:$0xff]
  %v400 = vld [vmem:[%s1 + $0xa6c] sm:$0xff]
  %v401 = vld [vmem:[%s1 + $0xa74] sm:$0xff]
  %v402 = vld [vmem:[%s1 + $0xa7c] sm:$0xff]
  %v403 = vld [vmem:[%s1 + $0xa84] sm:$0xff]
  %v404 = vld [vmem:[%s1 + $0xa8c] sm:$0xf]
  %v405 = vld [vmem:[%s1 + $0xa90] sm:$0xff]
  %v406 = vld [vmem:[%s1 + $0xa98] sm:$0xff]
  %v407 = vld [vmem:[%s1 + $0xaa0] sm:$0xff]
  %v408 = vld [vmem:[%s1 + $0xaa8] sm:$0xff]
  %v409 = vld [vmem:[%s1 + $0xab0] sm:$0xff]
  %v410 = vld [vmem:[%s1 + $0xab8] sm:$0xff]
  %v411 = vld [vmem:[%s1 + $0xac0] sm:$0xf]
  %v412 = vld [vmem:[%s1 + $0xac4] sm:$0xff]
  %v413 = vld [vmem:[%s1 + $0xacc] sm:$0xff]
  %v414 = vld [vmem:[%s1 + $0xad4] sm:$0xff]
  %v415 = vld [vmem:[%s1 + $0xadc] sm:$0xff]
  %v416 = vld [vmem:[%s1 + $0xae4] sm:$0xff]
  %v417 = vld [vmem:[%s1 + $0xaec] sm:$0xff]
  %v418 = vld [vmem:[%s1 + $0xaf4] sm:$0xf]
  %v419 = vld [vmem:[%s1 + $0xaf8] sm:$0xff]
  %v420 = vld [vmem:[%s1 + $0xb00] sm:$0xff]
  %v421 = vld [vmem:[%s1 + $0xb08] sm:$0xff]
  %v422 = vld [vmem:[%s1 + $0xb10] sm:$0xff]
  %v423 = vld [vmem:[%s1 + $0xb18] sm:$0xff]
  %v424 = vld [vmem:[%s1 + $0xb20] sm:$0xff]
  %v425 = vld [vmem:[%s1 + $0xb28] sm:$0xf]
  %v426 = vld [vmem:[%s1 + $0xb2c] sm:$0xff]
  %v427 = vld [vmem:[%s1 + $0xb34] sm:$0xff]
  %v428 = vld [vmem:[%s1 + $0xb3c] sm:$0xff]
  %v429 = vld [vmem:[%s1 + $0xb44] sm:$0xff]
  %v430 = vld [vmem:[%s1 + $0xb4c] sm:$0xff]
  %v431 = vld [vmem:[%s1 + $0xb54] sm:$0xff]
  %v432 = vld [vmem:[%s1 + $0xb5c] sm:$0xf]
  %v433 = vld [vmem:[%s1 + $0xb60] sm:$0xff]
  %v434 = vld [vmem:[%s1 + $0xb68] sm:$0xff]
  %v435 = vld [vmem:[%s1 + $0xb70] sm:$0xff]
  %v436 = vld [vmem:[%s1 + $0xb78] sm:$0xff]
  %v437 = vld [vmem:[%s1 + $0xb80] sm:$0xff]
  %v438 = vld [vmem:[%s1 + $0xb88] sm:$0xff]
  %v439 = vld [vmem:[%s1 + $0xb90] sm:$0xf]
  %v440 = vld [vmem:[%s1 + $0xb94] sm:$0xff]
  %v441 = vld [vmem:[%s1 + $0xb9c] sm:$0xff]
  %v442 = vld [vmem:[%s1 + $0xba4] sm:$0xff]
  %v443 = vld [vmem:[%s1 + $0xbac] sm:$0xff]
  %v444 = vld [vmem:[%s1 + $0xbb4] sm:$0xff]
  %v445 = vld [vmem:[%s1 + $0xbbc] sm:$0xff]
  %v446 = vld [vmem:[%s1 + $0xbc4] sm:$0xf]
  %v447 = vld [vmem:[%s1 + $0xbc8] sm:$0xff]
  %v448 = vld [vmem:[%s1 + $0xbd0] sm:$0xff]
  %v449 = vld [vmem:[%s1 + $0xbd8] sm:$0xff]
  %v450 = vld [vmem:[%s1 + $0xbe0] sm:$0xff]
  %v451 = vld [vmem:[%s1 + $0xbe8] sm:$0xff]
  %v452 = vld [vmem:[%s1 + $0xbf0] sm:$0xff]
  %v453 = vld [vmem:[%s1 + $0xbf8] sm:$0xf]
  %v454 = vld [vmem:[%s1 + $0xbfc] sm:$0xff]
  %v455 = vld [vmem:[%s1 + $0xc04] sm:$0xff]
  %v456 = vld [vmem:[%s1 + $0xc0c] sm:$0xff]
  %v457 = vld [vmem:[%s1 + $0xc14] sm:$0xff]
  %v458 = vld [vmem:[%s1 + $0xc1c] sm:$0xff]
  %v459 = vld [vmem:[%s1 + $0xc24] sm:$0xff]
  %v460 = vld [vmem:[%s1 + $0xc2c] sm:$0xf]
  %v461 = vld [vmem:[%s1 + $0xc30] sm:$0xff]
  %v462 = vld [vmem:[%s1 + $0xc38] sm:$0xff]
  %v463 = vld [vmem:[%s1 + $0xc40] sm:$0xff]
  %v464 = vld [vmem:[%s1 + $0xc48] sm:$0xff]
  %v465 = vld [vmem:[%s1 + $0xc50] sm:$0xff]
  %v466 = vld [vmem:[%s1 + $0xc58] sm:$0xff]
  %v467 = vld [vmem:[%s1 + $0xc60] sm:$0xf]
  %v468 = vld [vmem:[%s1 + $0xc64] sm:$0xff]
  %v469 = vld [vmem:[%s1 + $0xc6c] sm:$0xff]
  %v470 = vld [vmem:[%s1 + $0xc74] sm:$0xff]
  %v471 = vld [vmem:[%s1 + $0xc7c] sm:$0xff]
  %v472 = vld [vmem:[%s1 + $0xc84] sm:$0xff]
  %v473 = vld [vmem:[%s1 + $0xc8c] sm:$0xff]
  %v474 = vld [vmem:[%s1 + $0xc94] sm:$0xf]
  %v475 = vld [vmem:[%s1 + $0xc98] sm:$0xff]
  %v476 = vld [vmem:[%s1 + $0xca0] sm:$0xff]
  %v477 = vld [vmem:[%s1 + $0xca8] sm:$0xff]
  %v478 = vld [vmem:[%s1 + $0xcb0] sm:$0xff]
  %v479 = vld [vmem:[%s1 + $0xcb8] sm:$0xff]
  %v480 = vld [vmem:[%s1 + $0xcc0] sm:$0xff]
  %v481 = vld [vmem:[%s1 + $0xcc8] sm:$0xf]
  %v482 = vld [vmem:[%s1 + $0xccc] sm:$0xff]
  %v483 = vld [vmem:[%s1 + $0xcd4] sm:$0xff]
  %v484 = vld [vmem:[%s1 + $0xcdc] sm:$0xff]
  %v485 = vld [vmem:[%s1 + $0xce4] sm:$0xff]
  %v486 = vld [vmem:[%s1 + $0xcec] sm:$0xff]
  %v487 = vld [vmem:[%s1 + $0xcf4] sm:$0xff]
  %v488 = vld [vmem:[%s1 + $0xcfc] sm:$0xf]
  %v489 = vld [vmem:[%s1 + $0xd00] sm:$0xff]
  %v490 = vld [vmem:[%s1 + $0xd08] sm:$0xff]
  %v491 = vld [vmem:[%s1 + $0xd10] sm:$0xff]
  %v492 = vld [vmem:[%s1 + $0xd18] sm:$0xff]
  %v493 = vld [vmem:[%s1 + $0xd20] sm:$0xff]
  %v494 = vld [vmem:[%s1 + $0xd28] sm:$0xff]
  %v495 = vld [vmem:[%s1 + $0xd30] sm:$0xf]
  %v496 = vld [vmem:[%s1 + $0xd34] sm:$0xff]
  %v497 = vld [vmem:[%s1 + $0xd3c] sm:$0xff]
  %v498 = vld [vmem:[%s1 + $0xd44] sm:$0xff]
  %v499 = vld [vmem:[%s1 + $0xd4c] sm:$0xff]
  %v500 = vld [vmem:[%s1 + $0xd54] sm:$0xff]
  %v501 = vld [vmem:[%s1 + $0xd5c] sm:$0xff]
  %v502 = vld [vmem:[%s1 + $0xd64] sm:$0xf]
  %v503 = vld [vmem:[%s1 + $0xd68] sm:$0xff]
  %v504 = vld [vmem:[%s1 + $0xd70] sm:$0xff]
  %v505 = vld [vmem:[%s1 + $0xd78] sm:$0xff]
  %v506 = vld [vmem:[%s1 + $0xd80] sm:$0xff]
  %v507 = vld [vmem:[%s1 + $0xd88] sm:$0xff]
  %v508 = vld [vmem:[%s1 + $0xd90] sm:$0xff]
  %v509 = vld [vmem:[%s1 + $0xd98] sm:$0xf]
  %v510 = vld [vmem:[%s1 + $0xd9c] sm:$0xff]
  %v511 = vld [vmem:[%s1 + $0xda4] sm:$0xff]
  %v512 = vld [vmem:[%s1 + $0xdac] sm:$0xff]
  %v513 = vld [vmem:[%s1 + $0xdb4] sm:$0xff]
  %v514 = vld [vmem:[%s1 + $0xdbc] sm:$0xff]
  %v515 = vld [vmem:[%s1 + $0xdc4] sm:$0xff]
  %v516 = vld [vmem:[%s1 + $0xdcc] sm:$0xf]
  %v517 = vld [vmem:[%s1 + $0xdd0] sm:$0xff]
  %v518 = vld [vmem:[%s1 + $0xdd8] sm:$0xff]
  %v519 = vld [vmem:[%s1 + $0xde0] sm:$0xff]
  %v520 = vld [vmem:[%s1 + $0xde8] sm:$0xff]
  %v521 = vld [vmem:[%s1 + $0xdf0] sm:$0xff]
  %v522 = vld [vmem:[%s1 + $0xdf8] sm:$0xff]
  %v523 = vld [vmem:[%s1 + $0xe00] sm:$0xf]
  %v524 = vld [vmem:[%s1 + $0xe04] sm:$0xff]
  %v525 = vld [vmem:[%s1 + $0xe0c] sm:$0xff]
  %v526 = vld [vmem:[%s1 + $0xe14] sm:$0xff]
  %v527 = vld [vmem:[%s1 + $0xe1c] sm:$0xff]
  %v528 = vld [vmem:[%s1 + $0xe24] sm:$0xff]
  %v529 = vld [vmem:[%s1 + $0xe2c] sm:$0xff]
  %v530 = vld [vmem:[%s1 + $0xe34] sm:$0xf]
  %v531 = vld [vmem:[%s1 + $0xe38] sm:$0xff]
  %v532 = vld [vmem:[%s1 + $0xe40] sm:$0xff]
  %v533 = vld [vmem:[%s1 + $0xe48] sm:$0xff]
  %v534 = vld [vmem:[%s1 + $0xe50] sm:$0xff]
  %v535 = vld [vmem:[%s1 + $0xe58] sm:$0xff]
  %v536 = vld [vmem:[%s1 + $0xe60] sm:$0xff]
  %v537 = vld [vmem:[%s1 + $0xe68] sm:$0xf]
  %v538 = vld [vmem:[%s1 + $0xe6c] sm:$0xff]
  %v539 = vld [vmem:[%s1 + $0xe74] sm:$0xff]
  %v540 = vld [vmem:[%s1 + $0xe7c] sm:$0xff]
  %v541 = vld [vmem:[%s1 + $0xe84] sm:$0xff]
  %v542 = vld [vmem:[%s1 + $0xe8c] sm:$0xff]
  %v543 = vld [vmem:[%s1 + $0xe94] sm:$0xff]
  %v544 = vld [vmem:[%s1 + $0xe9c] sm:$0xf]
  %v545 = vld [vmem:[%s1 + $0xea0] sm:$0xff]
  %v546 = vld [vmem:[%s1 + $0xea8] sm:$0xff]
  %v547 = vld [vmem:[%s1 + $0xeb0] sm:$0xff]
  %v548 = vld [vmem:[%s1 + $0xeb8] sm:$0xff]
  %v549 = vld [vmem:[%s1 + $0xec0] sm:$0xff]
  %v550 = vld [vmem:[%s1 + $0xec8] sm:$0xff]
  %v551 = vld [vmem:[%s1 + $0xed0] sm:$0xf]
  %v552 = vld [vmem:[%s1 + $0xed4] sm:$0xff]
  %v553 = vld [vmem:[%s1 + $0xedc] sm:$0xff]
  %v554 = vld [vmem:[%s1 + $0xee4] sm:$0xff]
  %v555 = vld [vmem:[%s1 + $0xeec] sm:$0xff]
  %v556 = vld [vmem:[%s1 + $0xef4] sm:$0xff]
  %v557 = vld [vmem:[%s1 + $0xefc] sm:$0xff]
  %v558 = vld [vmem:[%s1 + $0xf04] sm:$0xf]
  %v559 = vld [vmem:[%s1 + $0xf08] sm:$0xff]
  %v560 = vld [vmem:[%s1 + $0xf10] sm:$0xff]
  %v561 = vld [vmem:[%s1 + $0xf18] sm:$0xff]
  %v562 = vld [vmem:[%s1 + $0xf20] sm:$0xff]
  %v563 = vld [vmem:[%s1 + $0xf28] sm:$0xff]
  %v564 = vld [vmem:[%s1 + $0xf30] sm:$0xff]
  %v565 = vld [vmem:[%s1 + $0xf38] sm:$0xf]
  %v566 = vld [vmem:[%s1 + $0xf3c] sm:$0xff]
  %v567 = vld [vmem:[%s1 + $0xf44] sm:$0xff]
  %v568 = vld [vmem:[%s1 + $0xf4c] sm:$0xff]
  %v569 = vld [vmem:[%s1 + $0xf54] sm:$0xff]
  %v570 = vld [vmem:[%s1 + $0xf5c] sm:$0xff]
  %v571 = vld [vmem:[%s1 + $0xf64] sm:$0xff]
  %v572 = vld [vmem:[%s1 + $0xf6c] sm:$0xf]
  %v573 = vld [vmem:[%s1 + $0xf70] sm:$0xff]
  %v574 = vld [vmem:[%s1 + $0xf78] sm:$0xff]
  %v575 = vld [vmem:[%s1 + $0xf80] sm:$0xff]
  %v576 = vld [vmem:[%s1 + $0xf88] sm:$0xff]
  %v577 = vld [vmem:[%s1 + $0xf90] sm:$0xff]
  %v578 = vld [vmem:[%s1 + $0xf98] sm:$0xff]
  %v579 = vld [vmem:[%s1 + $0xfa0] sm:$0xf]
  %v580 = vld [vmem:[%s1 + $0xfa4] sm:$0xff]
  %v581 = vld [vmem:[%s1 + $0xfac] sm:$0xff]
  %v582 = vld [vmem:[%s1 + $0xfb4] sm:$0xff]
  %v583 = vld [vmem:[%s1 + $0xfbc] sm:$0xff]
  %v584 = vld [vmem:[%s1 + $0xfc4] sm:$0xff]
  %v585 = vld [vmem:[%s1 + $0xfcc] sm:$0xff]
  %v586 = vld [vmem:[%s1 + $0xfd4] sm:$0xf]
  %v587 = vld [vmem:[%s1 + $0xfd8] sm:$0xff]
  %v588 = vld [vmem:[%s1 + $0xfe0] sm:$0xff]
  %v589 = vld [vmem:[%s1 + $0xfe8] sm:$0xff]
  %v590 = vld [vmem:[%s1 + $0xff0] sm:$0xff]
  %v591 = vld [vmem:[%s1 + $0xff8] sm:$0xff]
  %v592 = vld [vmem:[%s1 + $0x1000] sm:$0xff]
  %v593 = vld [vmem:[%s1 + $0x1008] sm:$0xf]
  %v594 = vld [vmem:[%s1 + $0x100c] sm:$0xff]
  %v595 = vld [vmem:[%s1 + $0x1014] sm:$0xff]
  %v596 = vld [vmem:[%s1 + $0x101c] sm:$0xff]
  %v597 = vld [vmem:[%s1 + $0x1024] sm:$0xff]
  %v598 = vld [vmem:[%s1 + $0x102c] sm:$0xff]
  %v599 = vld [vmem:[%s1 + $0x1034] sm:$0xff]
  %v600 = vld [vmem:[%s1 + $0x103c] sm:$0xf]
  %v601 = vld [vmem:[%s1 + $0x1040] sm:$0xff]
  %v602 = vld [vmem:[%s1 + $0x1048] sm:$0xff]
  %v603 = vld [vmem:[%s1 + $0x1050] sm:$0xff]
  %v604 = vld [vmem:[%s1 + $0x1058] sm:$0xff]
  %v605 = vld [vmem:[%s1 + $0x1060] sm:$0xff]
  %v606 = vld [vmem:[%s1 + $0x1068] sm:$0xff]
  %v607 = vld [vmem:[%s1 + $0x1070] sm:$0xf]
  %v608 = vld [vmem:[%s1 + $0x1074] sm:$0xff]
  %v609 = vld [vmem:[%s1 + $0x107c] sm:$0xff]
  %v610 = vld [vmem:[%s1 + $0x1084] sm:$0xff]
  %v611 = vld [vmem:[%s1 + $0x108c] sm:$0xff]
  %v612 = vld [vmem:[%s1 + $0x1094] sm:$0xff]
  %v613 = vld [vmem:[%s1 + $0x109c] sm:$0xff]
  %v614 = vld [vmem:[%s1 + $0x10a4] sm:$0xf]
  %v615 = vld [vmem:[%s1 + $0x10a8] sm:$0xff]
  %v616 = vld [vmem:[%s1 + $0x10b0] sm:$0xff]
  %v617 = vld [vmem:[%s1 + $0x10b8] sm:$0xff]
  %v618 = vld [vmem:[%s1 + $0x10c0] sm:$0xff]
  %v619 = vld [vmem:[%s1 + $0x10c8] sm:$0xff]
  %v620 = vld [vmem:[%s1 + $0x10d0] sm:$0xff]
  %v621 = vld [vmem:[%s1 + $0x10d8] sm:$0xf]
  %v622 = vld [vmem:[%s1 + $0x10dc] sm:$0xff]
  %v623 = vld [vmem:[%s1 + $0x10e4] sm:$0xff]
  %v624 = vld [vmem:[%s1 + $0x10ec] sm:$0xff]
  %v625 = vld [vmem:[%s1 + $0x10f4] sm:$0xff]
  %v626 = vld [vmem:[%s1 + $0x10fc] sm:$0xff]
  %v627 = vld [vmem:[%s1 + $0x1104] sm:$0xff]
  %v628 = vld [vmem:[%s1 + $0x110c] sm:$0xf]
  %v629 = vld [vmem:[%s1 + $0x1110] sm:$0xff]
  %v630 = vld [vmem:[%s1 + $0x1118] sm:$0xff]
  %v631 = vld [vmem:[%s1 + $0x1120] sm:$0xff]
  %v632 = vld [vmem:[%s1 + $0x1128] sm:$0xff]
  %v633 = vld [vmem:[%s1 + $0x1130] sm:$0xff]
  %v634 = vld [vmem:[%s1 + $0x1138] sm:$0xff]
  %v635 = vld [vmem:[%s1 + $0x1140] sm:$0xf]
  %v636 = vld [vmem:[%s1 + $0x1144] sm:$0xff]
  %v637 = vld [vmem:[%s1 + $0x114c] sm:$0xff]
  %v638 = vld [vmem:[%s1 + $0x1154] sm:$0xff]
  %v639 = vld [vmem:[%s1 + $0x115c] sm:$0xff]
  %v640 = vld [vmem:[%s1 + $0x1164] sm:$0xff]
  %v641 = vld [vmem:[%s1 + $0x116c] sm:$0xff]
  %v642 = vld [vmem:[%s1 + $0x1174] sm:$0xf]
  %v643 = vld [vmem:[%s1 + $0x1178] sm:$0xff]
  %v644 = vld [vmem:[%s1 + $0x1180] sm:$0xff]
  %v645 = vld [vmem:[%s1 + $0x1188] sm:$0xff]
  %v646 = vld [vmem:[%s1 + $0x1190] sm:$0xff]
  %v647 = vld [vmem:[%s1 + $0x1198] sm:$0xff]
  %v648 = vld [vmem:[%s1 + $0x11a0] sm:$0xff]
  %v649 = vld [vmem:[%s1 + $0x11a8] sm:$0xf]
  %v650 = vld [vmem:[%s1 + $0x11ac] sm:$0xff]
  %v651 = vld [vmem:[%s1 + $0x11b4] sm:$0xff]
  %v652 = vld [vmem:[%s1 + $0x11bc] sm:$0xff]
  %v653 = vld [vmem:[%s1 + $0x11c4] sm:$0xff]
  %v654 = vld [vmem:[%s1 + $0x11cc] sm:$0xff]
  %v655 = vld [vmem:[%s1 + $0x11d4] sm:$0xff]
  %v656 = vld [vmem:[%s1 + $0x11dc] sm:$0xf]
  %v657 = vld [vmem:[%s1 + $0x11e0] sm:$0xff]
  %v658 = vld [vmem:[%s1 + $0x11e8] sm:$0xff]
  %v659 = vld [vmem:[%s1 + $0x11f0] sm:$0xff]
  %v660 = vld [vmem:[%s1 + $0x11f8] sm:$0xff]
  %v661 = vld [vmem:[%s1 + $0x1200] sm:$0xff]
  %v662 = vld [vmem:[%s1 + $0x1208] sm:$0xff]
  %v663 = vld [vmem:[%s1 + $0x1210] sm:$0xf]
  %v664 = vld [vmem:[%s1 + $0x1214] sm:$0xff]
  %v665 = vld [vmem:[%s1 + $0x121c] sm:$0xff]
  %v666 = vld [vmem:[%s1 + $0x1224] sm:$0xff]
  %v667 = vld [vmem:[%s1 + $0x122c] sm:$0xff]
  %v668 = vld [vmem:[%s1 + $0x1234] sm:$0xff]
  %v669 = vld [vmem:[%s1 + $0x123c] sm:$0xff]
  %v670 = vld [vmem:[%s1 + $0x1244] sm:$0xf]
  %v671 = vld [vmem:[%s1 + $0x1248] sm:$0xff]
  %v672 = vld [vmem:[%s1 + $0x1250] sm:$0xff]
  %v673 = vld [vmem:[%s1 + $0x1258] sm:$0xff]
  %v674 = vld [vmem:[%s1 + $0x1260] sm:$0xff]
  %v675 = vld [vmem:[%s1 + $0x1268] sm:$0xff]
  %v676 = vld [vmem:[%s1 + $0x1270] sm:$0xff]
  %v677 = vld [vmem:[%s1 + $0x1278] sm:$0xf]
  %v678 = vld [vmem:[%s1 + $0x127c] sm:$0xff]
  %v679 = vld [vmem:[%s1 + $0x1284] sm:$0xff]
  %v680 = vld [vmem:[%s1 + $0x128c] sm:$0xff]
  %v681 = vld [vmem:[%s1 + $0x1294] sm:$0xff]
  %v682 = vld [vmem:[%s1 + $0x129c] sm:$0xff]
  %v683 = vld [vmem:[%s1 + $0x12a4] sm:$0xff]
  %v684 = vld [vmem:[%s1 + $0x12ac] sm:$0xf]
  %v685 = vld [vmem:[%s1 + $0x12b0] sm:$0xff]
  %v686 = vld [vmem:[%s1 + $0x12b8] sm:$0xff]
  %v687 = vld [vmem:[%s1 + $0x12c0] sm:$0xff]
  %v688 = vld [vmem:[%s1 + $0x12c8] sm:$0xff]
  %v689 = vld [vmem:[%s1 + $0x12d0] sm:$0xff]
  %v690 = vld [vmem:[%s1 + $0x12d8] sm:$0xff]
  %v691 = vld [vmem:[%s1 + $0x12e0] sm:$0xf]
  %v692 = vld [vmem:[%s1 + $0x12e4] sm:$0xff]
  %v693 = vld [vmem:[%s1 + $0x12ec] sm:$0xff]
  %v694 = vld [vmem:[%s1 + $0x12f4] sm:$0xff]
  %v695 = vld [vmem:[%s1 + $0x12fc] sm:$0xff]
  %v696 = vld [vmem:[%s1 + $0x1304] sm:$0xff]
  %v697 = vld [vmem:[%s1 + $0x130c] sm:$0xff]
  %v698 = vld [vmem:[%s1 + $0x1314] sm:$0xf]
  %v699 = vld [vmem:[%s1 + $0x1318] sm:$0xff]
  %v700 = vld [vmem:[%s1 + $0x1320] sm:$0xff]
  %v701 = vld [vmem:[%s1 + $0x1328] sm:$0xff]
  %v702 = vld [vmem:[%s1 + $0x1330] sm:$0xff]
  %v703 = vld [vmem:[%s1 + $0x1338] sm:$0xff]
  %v704 = vld [vmem:[%s1 + $0x1340] sm:$0xff]
  %v705 = vld [vmem:[%s1 + $0x1348] sm:$0xf]
  %v706 = vld [vmem:[%s1 + $0x134c] sm:$0xff]
  %v707 = vld [vmem:[%s1 + $0x1354] sm:$0xff]
  %v708 = vld [vmem:[%s1 + $0x135c] sm:$0xff]
  %v709 = vld [vmem:[%s1 + $0x1364] sm:$0xff]
  %v710 = vld [vmem:[%s1 + $0x136c] sm:$0xff]
  %v711 = vld [vmem:[%s1 + $0x1374] sm:$0xff]
  %v712 = vld [vmem:[%s1 + $0x137c] sm:$0xf]
  %v713 = vld [vmem:[%s1 + $0x1380] sm:$0xff]
  %v714 = vld [vmem:[%s1 + $0x1388] sm:$0xff]
  %v715 = vld [vmem:[%s1 + $0x1390] sm:$0xff]
  %v716 = vld [vmem:[%s1 + $0x1398] sm:$0xff]
  %v717 = vld [vmem:[%s1 + $0x13a0] sm:$0xff]
  %v718 = vld [vmem:[%s1 + $0x13a8] sm:$0xff]
  %v719 = vld [vmem:[%s1 + $0x13b0] sm:$0xf]
  %v720 = vld [vmem:[%s1 + $0x13b4] sm:$0xff]
  %v721 = vld [vmem:[%s1 + $0x13bc] sm:$0xff]
  %v722 = vld [vmem:[%s1 + $0x13c4] sm:$0xff]
  %v723 = vld [vmem:[%s1 + $0x13cc] sm:$0xff]
  %v724 = vld [vmem:[%s1 + $0x13d4] sm:$0xff]
  %v725 = vld [vmem:[%s1 + $0x13dc] sm:$0xff]
  %v726 = vld [vmem:[%s1 + $0x13e4] sm:$0xf]
  %v727 = vld [vmem:[%s4] sm:$0xff]
  %v728 = vld [vmem:[%s4 + $0x8] sm:$0x1f]
  %v731 = vlaneseq
  %v732 = vshrl.u32 %v731, 7
  %v733 = vsub.s32 0, %v732
  %v734 = vrot.slane %v727, %v733
  %v735 = vlaneseq
  %v736 = vshrl.u32 %v735, 7
  %v737 = vsub.s32 1, %v736
  %v738 = vrot.slane %v727, %v737
  %v739 = vlaneseq
  %v740 = vshrl.u32 %v739, 7
  %v741 = vsub.s32 2, %v740
  %v742 = vrot.slane %v727, %v741
  %v743 = vlaneseq
  %v744 = vshrl.u32 %v743, 7
  %v745 = vsub.s32 3, %v744
  %v746 = vrot.slane %v727, %v745
  %v747 = vlaneseq
  %v748 = vshrl.u32 %v747, 7
  %v749 = vsub.s32 4, %v748
  %v750 = vrot.slane %v727, %v749
  %v751 = vlaneseq
  %v752 = vshrl.u32 %v751, 7
  %v753 = vsub.s32 5, %v752
  %v754 = vrot.slane %v727, %v753
  %v755 = vlaneseq
  %v756 = vshrl.u32 %v755, 7
  %v757 = vsub.s32 6, %v756
  %v758 = vrot.slane %v727, %v757
  %v759 = vlaneseq
  %v760 = vshrl.u32 %v759, 7
  %v761 = vsub.s32 7, %v760
  %v762 = vrot.slane %v727, %v761
  %v763 = vlaneseq
  %v764 = vshrl.u32 %v763, 7
  %v765 = vsub.s32 0, %v764
  %v766 = vrot.slane %v728, %v765
  %v767 = vlaneseq
  %v768 = vshrl.u32 %v767, 7
  %v769 = vsub.s32 1, %v768
  %v770 = vrot.slane %v728, %v769
  %v771 = vlaneseq
  %v772 = vshrl.u32 %v771, 7
  %v773 = vsub.s32 2, %v772
  %v774 = vrot.slane %v728, %v773
  %v775 = vlaneseq
  %v776 = vshrl.u32 %v775, 7
  %v777 = vsub.s32 3, %v776
  %v778 = vrot.slane %v728, %v777
  %v779 = vlaneseq
  %v780 = vshrl.u32 %v779, 7
  %v781 = vsub.s32 4, %v780
  %v782 = vrot.slane %v728, %v781
  %v1482 = vunpack.c.l.b16 %v41
  %v1483 = vunpack.c.h.b16 %v41
  %v1484 = vunpack.c.l.b16 %v42
  %v1485 = vunpack.c.h.b16 %v42
  %v1486 = vunpack.c.l.b16 %v43
  %v1487 = vunpack.c.h.b16 %v43
  %v1488 = vunpack.c.l.b16 %v44
  %v1489 = vunpack.c.h.b16 %v44
  %v1490 = vunpack.c.l.b16 %v45
  %v1491 = vunpack.c.h.b16 %v45
  %v1492 = vunpack.c.l.b16 %v46
  %v1493 = vunpack.c.h.b16 %v46
  %v1494 = vunpack.c.l.b16 %v47
  %v1495 = vunpack.c.l.b16 %v48
  %v1496 = vunpack.c.h.b16 %v48
  %v1497 = vunpack.c.l.b16 %v49
  %v1498 = vunpack.c.h.b16 %v49
  %v1499 = vunpack.c.l.b16 %v50
  %v1500 = vunpack.c.h.b16 %v50
  %v1501 = vunpack.c.l.b16 %v51
  %v1502 = vunpack.c.h.b16 %v51
  %v1503 = vunpack.c.l.b16 %v52
  %v1504 = vunpack.c.h.b16 %v52
  %v1505 = vunpack.c.l.b16 %v53
  %v1506 = vunpack.c.h.b16 %v53
  %v1507 = vunpack.c.l.b16 %v54
  %v1508 = vunpack.c.l.b16 %v55
  %v1509 = vunpack.c.h.b16 %v55
  %v1510 = vunpack.c.l.b16 %v56
  %v1511 = vunpack.c.h.b16 %v56
  %v1512 = vunpack.c.l.b16 %v57
  %v1513 = vunpack.c.h.b16 %v57
  %v1514 = vunpack.c.l.b16 %v58
  %v1515 = vunpack.c.h.b16 %v58
  %v1516 = vunpack.c.l.b16 %v59
  %v1517 = vunpack.c.h.b16 %v59
  %v1518 = vunpack.c.l.b16 %v60
  %v1519 = vunpack.c.h.b16 %v60
  %v1520 = vunpack.c.l.b16 %v61
  %v1521 = vunpack.c.l.b16 %v62
  %v1522 = vunpack.c.h.b16 %v62
  %v1523 = vunpack.c.l.b16 %v63
  %v1524 = vunpack.c.h.b16 %v63
  %v1525 = vunpack.c.l.b16 %v64
  %v1526 = vunpack.c.h.b16 %v64
  %v1527 = vunpack.c.l.b16 %v65
  %v1528 = vunpack.c.h.b16 %v65
  %v1529 = vunpack.c.l.b16 %v66
  %v1530 = vunpack.c.h.b16 %v66
  %v1531 = vunpack.c.l.b16 %v67
  %v1532 = vunpack.c.h.b16 %v67
  %v1533 = vunpack.c.l.b16 %v68
  %v1534 = vunpack.c.l.b16 %v69
  %v1535 = vunpack.c.h.b16 %v69
  %v1536 = vunpack.c.l.b16 %v70
  %v1537 = vunpack.c.h.b16 %v70
  %v1538 = vunpack.c.l.b16 %v71
  %v1539 = vunpack.c.h.b16 %v71
  %v1540 = vunpack.c.l.b16 %v72
  %v1541 = vunpack.c.h.b16 %v72
  %v1542 = vunpack.c.l.b16 %v73
  %v1543 = vunpack.c.h.b16 %v73
  %v1544 = vunpack.c.l.b16 %v74
  %v1545 = vunpack.c.h.b16 %v74
  %v1546 = vunpack.c.l.b16 %v75
  %v1547 = vunpack.c.l.b16 %v76
  %v1548 = vunpack.c.h.b16 %v76
  %v1549 = vunpack.c.l.b16 %v77
  %v1550 = vunpack.c.h.b16 %v77
  %v1551 = vunpack.c.l.b16 %v78
  %v1552 = vunpack.c.h.b16 %v78
  %v1553 = vunpack.c.l.b16 %v79
  %v1554 = vunpack.c.h.b16 %v79
  %v1555 = vunpack.c.l.b16 %v80
  %v1556 = vunpack.c.h.b16 %v80
  %v1557 = vunpack.c.l.b16 %v81
  %v1558 = vunpack.c.h.b16 %v81
  %v1559 = vunpack.c.l.b16 %v82
  %v1560 = vunpack.c.l.b16 %v83
  %v1561 = vunpack.c.h.b16 %v83
  %v1562 = vunpack.c.l.b16 %v84
  %v1563 = vunpack.c.h.b16 %v84
  %v1564 = vunpack.c.l.b16 %v85
  %v1565 = vunpack.c.h.b16 %v85
  %v1566 = vunpack.c.l.b16 %v86
  %v1567 = vunpack.c.h.b16 %v86
  %v1568 = vunpack.c.l.b16 %v87
  %v1569 = vunpack.c.h.b16 %v87
  %v1570 = vunpack.c.l.b16 %v88
  %v1571 = vunpack.c.h.b16 %v88
  %v1572 = vunpack.c.l.b16 %v89
  %v1573 = vunpack.c.l.b16 %v90
  %v1574 = vunpack.c.h.b16 %v90
  %v1575 = vunpack.c.l.b16 %v91
  %v1576 = vunpack.c.h.b16 %v91
  %v1577 = vunpack.c.l.b16 %v92
  %v1578 = vunpack.c.h.b16 %v92
  %v1579 = vunpack.c.l.b16 %v93
  %v1580 = vunpack.c.h.b16 %v93
  %v1581 = vunpack.c.l.b16 %v94
  %v1582 = vunpack.c.h.b16 %v94
  %v1583 = vunpack.c.l.b16 %v95
  %v1584 = vunpack.c.h.b16 %v95
  %v1585 = vunpack.c.l.b16 %v96
  %v1586 = vunpack.c.l.b16 %v97
  %v1587 = vunpack.c.h.b16 %v97
  %v1588 = vunpack.c.l.b16 %v98
  %v1589 = vunpack.c.h.b16 %v98
  %v1590 = vunpack.c.l.b16 %v99
  %v1591 = vunpack.c.h.b16 %v99
  %v1592 = vunpack.c.l.b16 %v100
  %v1593 = vunpack.c.h.b16 %v100
  %v1594 = vunpack.c.l.b16 %v101
  %v1595 = vunpack.c.h.b16 %v101
  %v1596 = vunpack.c.l.b16 %v102
  %v1597 = vunpack.c.h.b16 %v102
  %v1598 = vunpack.c.l.b16 %v103
  %v1599 = vunpack.c.l.b16 %v104
  %v1600 = vunpack.c.h.b16 %v104
  %v1601 = vunpack.c.l.b16 %v105
  %v1602 = vunpack.c.h.b16 %v105
  %v1603 = vunpack.c.l.b16 %v106
  %v1604 = vunpack.c.h.b16 %v106
  %v1605 = vunpack.c.l.b16 %v107
  %v1606 = vunpack.c.h.b16 %v107
  %v1607 = vunpack.c.l.b16 %v108
  %v1608 = vunpack.c.h.b16 %v108
  %v1609 = vunpack.c.l.b16 %v109
  %v1610 = vunpack.c.h.b16 %v109
  %v1611 = vunpack.c.l.b16 %v110
  %v1612 = vunpack.c.l.b16 %v111
  %v1613 = vunpack.c.h.b16 %v111
  %v1614 = vunpack.c.l.b16 %v112
  %v1615 = vunpack.c.h.b16 %v112
  %v1616 = vunpack.c.l.b16 %v113
  %v1617 = vunpack.c.h.b16 %v113
  %v1618 = vunpack.c.l.b16 %v114
  %v1619 = vunpack.c.h.b16 %v114
  %v1620 = vunpack.c.l.b16 %v115
  %v1621 = vunpack.c.h.b16 %v115
  %v1622 = vunpack.c.l.b16 %v116
  %v1623 = vunpack.c.h.b16 %v116
  %v1624 = vunpack.c.l.b16 %v117
  %v1625 = vunpack.c.l.b16 %v118
  %v1626 = vunpack.c.h.b16 %v118
  %v1627 = vunpack.c.l.b16 %v119
  %v1628 = vunpack.c.h.b16 %v119
  %v1629 = vunpack.c.l.b16 %v120
  %v1630 = vunpack.c.h.b16 %v120
  %v1631 = vunpack.c.l.b16 %v121
  %v1632 = vunpack.c.h.b16 %v121
  %v1633 = vunpack.c.l.b16 %v122
  %v1634 = vunpack.c.h.b16 %v122
  %v1635 = vunpack.c.l.b16 %v123
  %v1636 = vunpack.c.h.b16 %v123
  %v1637 = vunpack.c.l.b16 %v124
  %v1638 = vunpack.c.l.b16 %v125
  %v1639 = vunpack.c.h.b16 %v125
  %v1640 = vunpack.c.l.b16 %v126
  %v1641 = vunpack.c.h.b16 %v126
  %v1642 = vunpack.c.l.b16 %v127
  %v1643 = vunpack.c.h.b16 %v127
  %v1644 = vunpack.c.l.b16 %v128
  %v1645 = vunpack.c.h.b16 %v128
  %v1646 = vunpack.c.l.b16 %v129
  %v1647 = vunpack.c.h.b16 %v129
  %v1648 = vunpack.c.l.b16 %v130
  %v1649 = vunpack.c.h.b16 %v130
  %v1650 = vunpack.c.l.b16 %v131
  %v1651 = vunpack.c.l.b16 %v132
  %v1652 = vunpack.c.h.b16 %v132
  %v1653 = vunpack.c.l.b16 %v133
  %v1654 = vunpack.c.h.b16 %v133
  %v1655 = vunpack.c.l.b16 %v134
  %v1656 = vunpack.c.h.b16 %v134
  %v1657 = vunpack.c.l.b16 %v135
  %v1658 = vunpack.c.h.b16 %v135
  %v1659 = vunpack.c.l.b16 %v136
  %v1660 = vunpack.c.h.b16 %v136
  %v1661 = vunpack.c.l.b16 %v137
  %v1662 = vunpack.c.h.b16 %v137
  %v1663 = vunpack.c.l.b16 %v138
  %v1664 = vunpack.c.l.b16 %v139
  %v1665 = vunpack.c.h.b16 %v139
  %v1666 = vunpack.c.l.b16 %v140
  %v1667 = vunpack.c.h.b16 %v140
  %v1668 = vunpack.c.l.b16 %v141
  %v1669 = vunpack.c.h.b16 %v141
  %v1670 = vunpack.c.l.b16 %v142
  %v1671 = vunpack.c.h.b16 %v142
  %v1672 = vunpack.c.l.b16 %v143
  %v1673 = vunpack.c.h.b16 %v143
  %v1674 = vunpack.c.l.b16 %v144
  %v1675 = vunpack.c.h.b16 %v144
  %v1676 = vunpack.c.l.b16 %v145
  %v1677 = vunpack.c.l.b16 %v146
  %v1678 = vunpack.c.h.b16 %v146
  %v1679 = vunpack.c.l.b16 %v147
  %v1680 = vunpack.c.h.b16 %v147
  %v1681 = vunpack.c.l.b16 %v148
  %v1682 = vunpack.c.h.b16 %v148
  %v1683 = vunpack.c.l.b16 %v149
  %v1684 = vunpack.c.h.b16 %v149
  %v1685 = vunpack.c.l.b16 %v150
  %v1686 = vunpack.c.h.b16 %v150
  %v1687 = vunpack.c.l.b16 %v151
  %v1688 = vunpack.c.h.b16 %v151
  %v1689 = vunpack.c.l.b16 %v152
  %v1690 = vunpack.c.l.b16 %v153
  %v1691 = vunpack.c.h.b16 %v153
  %v1692 = vunpack.c.l.b16 %v154
  %v1693 = vunpack.c.h.b16 %v154
  %v1694 = vunpack.c.l.b16 %v155
  %v1695 = vunpack.c.h.b16 %v155
  %v1696 = vunpack.c.l.b16 %v156
  %v1697 = vunpack.c.h.b16 %v156
  %v1698 = vunpack.c.l.b16 %v157
  %v1699 = vunpack.c.h.b16 %v157
  %v1700 = vunpack.c.l.b16 %v158
  %v1701 = vunpack.c.h.b16 %v158
  %v1702 = vunpack.c.l.b16 %v159
  %v1703 = vunpack.c.l.b16 %v160
  %v1704 = vunpack.c.h.b16 %v160
  %v1705 = vunpack.c.l.b16 %v161
  %v1706 = vunpack.c.h.b16 %v161
  %v1707 = vunpack.c.l.b16 %v162
  %v1708 = vunpack.c.h.b16 %v162
  %v1709 = vunpack.c.l.b16 %v163
  %v1710 = vunpack.c.h.b16 %v163
  %v1711 = vunpack.c.l.b16 %v164
  %v1712 = vunpack.c.h.b16 %v164
  %v1713 = vunpack.c.l.b16 %v165
  %v1714 = vunpack.c.h.b16 %v165
  %v1715 = vunpack.c.l.b16 %v166
  %v1716 = vunpack.c.l.b16 %v167
  %v1717 = vunpack.c.h.b16 %v167
  %v1718 = vunpack.c.l.b16 %v168
  %v1719 = vunpack.c.h.b16 %v168
  %v1720 = vunpack.c.l.b16 %v169
  %v1721 = vunpack.c.h.b16 %v169
  %v1722 = vunpack.c.l.b16 %v170
  %v1723 = vunpack.c.h.b16 %v170
  %v1724 = vunpack.c.l.b16 %v171
  %v1725 = vunpack.c.h.b16 %v171
  %v1726 = vunpack.c.l.b16 %v172
  %v1727 = vunpack.c.h.b16 %v172
  %v1728 = vunpack.c.l.b16 %v173
  %v1729 = vunpack.c.l.b16 %v174
  %v1730 = vunpack.c.h.b16 %v174
  %v1731 = vunpack.c.l.b16 %v175
  %v1732 = vunpack.c.h.b16 %v175
  %v1733 = vunpack.c.l.b16 %v176
  %v1734 = vunpack.c.h.b16 %v176
  %v1735 = vunpack.c.l.b16 %v177
  %v1736 = vunpack.c.h.b16 %v177
  %v1737 = vunpack.c.l.b16 %v178
  %v1738 = vunpack.c.h.b16 %v178
  %v1739 = vunpack.c.l.b16 %v179
  %v1740 = vunpack.c.h.b16 %v179
  %v1741 = vunpack.c.l.b16 %v180
  %v1742 = vunpack.c.l.b16 %v181
  %v1743 = vunpack.c.h.b16 %v181
  %v1744 = vunpack.c.l.b16 %v182
  %v1745 = vunpack.c.h.b16 %v182
  %v1746 = vunpack.c.l.b16 %v183
  %v1747 = vunpack.c.h.b16 %v183
  %v1748 = vunpack.c.l.b16 %v184
  %v1749 = vunpack.c.h.b16 %v184
  %v1750 = vunpack.c.l.b16 %v185
  %v1751 = vunpack.c.h.b16 %v185
  %v1752 = vunpack.c.l.b16 %v186
  %v1753 = vunpack.c.h.b16 %v186
  %v1754 = vunpack.c.l.b16 %v187
  %v1755 = vunpack.c.l.b16 %v188
  %v1756 = vunpack.c.h.b16 %v188
  %v1757 = vunpack.c.l.b16 %v189
  %v1758 = vunpack.c.h.b16 %v189
  %v1759 = vunpack.c.l.b16 %v190
  %v1760 = vunpack.c.h.b16 %v190
  %v1761 = vunpack.c.l.b16 %v191
  %v1762 = vunpack.c.h.b16 %v191
  %v1763 = vunpack.c.l.b16 %v192
  %v1764 = vunpack.c.h.b16 %v192
  %v1765 = vunpack.c.l.b16 %v193
  %v1766 = vunpack.c.h.b16 %v193
  %v1767 = vunpack.c.l.b16 %v194
  %v1768 = vunpack.c.l.b16 %v195
  %v1769 = vunpack.c.h.b16 %v195
  %v1770 = vunpack.c.l.b16 %v196
  %v1771 = vunpack.c.h.b16 %v196
  %v1772 = vunpack.c.l.b16 %v197
  %v1773 = vunpack.c.h.b16 %v197
  %v1774 = vunpack.c.l.b16 %v198
  %v1775 = vunpack.c.h.b16 %v198
  %v1776 = vunpack.c.l.b16 %v199
  %v1777 = vunpack.c.h.b16 %v199
  %v1778 = vunpack.c.l.b16 %v200
  %v1779 = vunpack.c.h.b16 %v200
  %v1780 = vunpack.c.l.b16 %v201
  %v1781 = vunpack.c.l.b16 %v202
  %v1782 = vunpack.c.h.b16 %v202
  %v1783 = vunpack.c.l.b16 %v203
  %v1784 = vunpack.c.h.b16 %v203
  %v1785 = vunpack.c.l.b16 %v204
  %v1786 = vunpack.c.h.b16 %v204
  %v1787 = vunpack.c.l.b16 %v205
  %v1788 = vunpack.c.h.b16 %v205
  %v1789 = vunpack.c.l.b16 %v206
  %v1790 = vunpack.c.h.b16 %v206
  %v1791 = vunpack.c.l.b16 %v207
  %v1792 = vunpack.c.h.b16 %v207
  %v1793 = vunpack.c.l.b16 %v208
  %v1794 = vunpack.c.l.b16 %v209
  %v1795 = vunpack.c.h.b16 %v209
  %v1796 = vunpack.c.l.b16 %v210
  %v1797 = vunpack.c.h.b16 %v210
  %v1798 = vunpack.c.l.b16 %v211
  %v1799 = vunpack.c.h.b16 %v211
  %v1800 = vunpack.c.l.b16 %v212
  %v1801 = vunpack.c.h.b16 %v212
  %v1802 = vunpack.c.l.b16 %v213
  %v1803 = vunpack.c.h.b16 %v213
  %v1804 = vunpack.c.l.b16 %v214
  %v1805 = vunpack.c.h.b16 %v214
  %v1806 = vunpack.c.l.b16 %v215
  %v1807 = vunpack.c.l.b16 %v216
  %v1808 = vunpack.c.h.b16 %v216
  %v1809 = vunpack.c.l.b16 %v217
  %v1810 = vunpack.c.h.b16 %v217
  %v1811 = vunpack.c.l.b16 %v218
  %v1812 = vunpack.c.h.b16 %v218
  %v1813 = vunpack.c.l.b16 %v219
  %v1814 = vunpack.c.h.b16 %v219
  %v1815 = vunpack.c.l.b16 %v220
  %v1816 = vunpack.c.h.b16 %v220
  %v1817 = vunpack.c.l.b16 %v221
  %v1818 = vunpack.c.h.b16 %v221
  %v1819 = vunpack.c.l.b16 %v222
  %v1820 = vunpack.c.l.b16 %v223
  %v1821 = vunpack.c.h.b16 %v223
  %v1822 = vunpack.c.l.b16 %v224
  %v1823 = vunpack.c.h.b16 %v224
  %v1824 = vunpack.c.l.b16 %v225
  %v1825 = vunpack.c.h.b16 %v225
  %v1826 = vunpack.c.l.b16 %v226
  %v1827 = vunpack.c.h.b16 %v226
  %v1828 = vunpack.c.l.b16 %v227
  %v1829 = vunpack.c.h.b16 %v227
  %v1830 = vunpack.c.l.b16 %v228
  %v1831 = vunpack.c.h.b16 %v228
  %v1832 = vunpack.c.l.b16 %v229
  %v1833 = vunpack.c.l.b16 %v230
  %v1834 = vunpack.c.h.b16 %v230
  %v1835 = vunpack.c.l.b16 %v231
  %v1836 = vunpack.c.h.b16 %v231
  %v1837 = vunpack.c.l.b16 %v232
  %v1838 = vunpack.c.h.b16 %v232
  %v1839 = vunpack.c.l.b16 %v233
  %v1840 = vunpack.c.h.b16 %v233
  %v1841 = vunpack.c.l.b16 %v234
  %v1842 = vunpack.c.h.b16 %v234
  %v1843 = vunpack.c.l.b16 %v235
  %v1844 = vunpack.c.h.b16 %v235
  %v1845 = vunpack.c.l.b16 %v236
  %v1846 = vunpack.c.l.b16 %v237
  %v1847 = vunpack.c.h.b16 %v237
  %v1848 = vunpack.c.l.b16 %v238
  %v1849 = vunpack.c.h.b16 %v238
  %v1850 = vunpack.c.l.b16 %v239
  %v1851 = vunpack.c.h.b16 %v239
  %v1852 = vunpack.c.l.b16 %v240
  %v1853 = vunpack.c.h.b16 %v240
  %v1854 = vunpack.c.l.b16 %v241
  %v1855 = vunpack.c.h.b16 %v241
  %v1856 = vunpack.c.l.b16 %v242
  %v1857 = vunpack.c.h.b16 %v242
  %v1858 = vunpack.c.l.b16 %v243
  %v1859 = vunpack.c.l.b16 %v244
  %v1860 = vunpack.c.h.b16 %v244
  %v1861 = vunpack.c.l.b16 %v245
  %v1862 = vunpack.c.h.b16 %v245
  %v1863 = vunpack.c.l.b16 %v246
  %v1864 = vunpack.c.h.b16 %v246
  %v1865 = vunpack.c.l.b16 %v247
  %v1866 = vunpack.c.h.b16 %v247
  %v1867 = vunpack.c.l.b16 %v248
  %v1868 = vunpack.c.h.b16 %v248
  %v1869 = vunpack.c.l.b16 %v249
  %v1870 = vunpack.c.h.b16 %v249
  %v1871 = vunpack.c.l.b16 %v250
  %v1872 = vunpack.c.l.b16 %v251
  %v1873 = vunpack.c.h.b16 %v251
  %v1874 = vunpack.c.l.b16 %v252
  %v1875 = vunpack.c.h.b16 %v252
  %v1876 = vunpack.c.l.b16 %v253
  %v1877 = vunpack.c.h.b16 %v253
  %v1878 = vunpack.c.l.b16 %v254
  %v1879 = vunpack.c.h.b16 %v254
  %v1880 = vunpack.c.l.b16 %v255
  %v1881 = vunpack.c.h.b16 %v255
  %v1882 = vunpack.c.l.b16 %v256
  %v1883 = vunpack.c.h.b16 %v256
  %v1884 = vunpack.c.l.b16 %v257
  %v1885 = vunpack.c.l.b16 %v258
  %v1886 = vunpack.c.h.b16 %v258
  %v1887 = vunpack.c.l.b16 %v259
  %v1888 = vunpack.c.h.b16 %v259
  %v1889 = vunpack.c.l.b16 %v260
  %v1890 = vunpack.c.h.b16 %v260
  %v1891 = vunpack.c.l.b16 %v261
  %v1892 = vunpack.c.h.b16 %v261
  %v1893 = vunpack.c.l.b16 %v262
  %v1894 = vunpack.c.h.b16 %v262
  %v1895 = vunpack.c.l.b16 %v263
  %v1896 = vunpack.c.h.b16 %v263
  %v1897 = vunpack.c.l.b16 %v264
  %v1898 = vunpack.c.l.b16 %v265
  %v1899 = vunpack.c.h.b16 %v265
  %v1900 = vunpack.c.l.b16 %v266
  %v1901 = vunpack.c.h.b16 %v266
  %v1902 = vunpack.c.l.b16 %v267
  %v1903 = vunpack.c.h.b16 %v267
  %v1904 = vunpack.c.l.b16 %v268
  %v1905 = vunpack.c.h.b16 %v268
  %v1906 = vunpack.c.l.b16 %v269
  %v1907 = vunpack.c.h.b16 %v269
  %v1908 = vunpack.c.l.b16 %v270
  %v1909 = vunpack.c.h.b16 %v270
  %v1910 = vunpack.c.l.b16 %v271
  %v1911 = vunpack.c.l.b16 %v272
  %v1912 = vunpack.c.h.b16 %v272
  %v1913 = vunpack.c.l.b16 %v273
  %v1914 = vunpack.c.h.b16 %v273
  %v1915 = vunpack.c.l.b16 %v274
  %v1916 = vunpack.c.h.b16 %v274
  %v1917 = vunpack.c.l.b16 %v275
  %v1918 = vunpack.c.h.b16 %v275
  %v1919 = vunpack.c.l.b16 %v276
  %v1920 = vunpack.c.h.b16 %v276
  %v1921 = vunpack.c.l.b16 %v277
  %v1922 = vunpack.c.h.b16 %v277
  %v1923 = vunpack.c.l.b16 %v278
  %v1924 = vunpack.c.l.b16 %v279
  %v1925 = vunpack.c.h.b16 %v279
  %v1926 = vunpack.c.l.b16 %v280
  %v1927 = vunpack.c.h.b16 %v280
  %v1928 = vunpack.c.l.b16 %v281
  %v1929 = vunpack.c.h.b16 %v281
  %v1930 = vunpack.c.l.b16 %v282
  %v1931 = vunpack.c.h.b16 %v282
  %v1932 = vunpack.c.l.b16 %v283
  %v1933 = vunpack.c.h.b16 %v283
  %v1934 = vunpack.c.l.b16 %v284
  %v1935 = vunpack.c.h.b16 %v284
  %v1936 = vunpack.c.l.b16 %v285
  %v1937 = vunpack.c.l.b16 %v286
  %v1938 = vunpack.c.h.b16 %v286
  %v1939 = vunpack.c.l.b16 %v287
  %v1940 = vunpack.c.h.b16 %v287
  %v1941 = vunpack.c.l.b16 %v288
  %v1942 = vunpack.c.h.b16 %v288
  %v1943 = vunpack.c.l.b16 %v289
  %v1944 = vunpack.c.h.b16 %v289
  %v1945 = vunpack.c.l.b16 %v290
  %v1946 = vunpack.c.h.b16 %v290
  %v1947 = vunpack.c.l.b16 %v291
  %v1948 = vunpack.c.h.b16 %v291
  %v1949 = vunpack.c.l.b16 %v292
  %v1950 = vunpack.c.l.b16 %v293
  %v1951 = vunpack.c.h.b16 %v293
  %v1952 = vunpack.c.l.b16 %v294
  %v1953 = vunpack.c.h.b16 %v294
  %v1954 = vunpack.c.l.b16 %v295
  %v1955 = vunpack.c.h.b16 %v295
  %v1956 = vunpack.c.l.b16 %v296
  %v1957 = vunpack.c.h.b16 %v296
  %v1958 = vunpack.c.l.b16 %v297
  %v1959 = vunpack.c.h.b16 %v297
  %v1960 = vunpack.c.l.b16 %v298
  %v1961 = vunpack.c.h.b16 %v298
  %v1962 = vunpack.c.l.b16 %v299
  %v1963 = vunpack.c.l.b16 %v300
  %v1964 = vunpack.c.h.b16 %v300
  %v1965 = vunpack.c.l.b16 %v301
  %v1966 = vunpack.c.h.b16 %v301
  %v1967 = vunpack.c.l.b16 %v302
  %v1968 = vunpack.c.h.b16 %v302
  %v1969 = vunpack.c.l.b16 %v303
  %v1970 = vunpack.c.h.b16 %v303
  %v1971 = vunpack.c.l.b16 %v304
  %v1972 = vunpack.c.h.b16 %v304
  %v1973 = vunpack.c.l.b16 %v305
  %v1974 = vunpack.c.h.b16 %v305
  %v1975 = vunpack.c.l.b16 %v306
  %v1976 = vunpack.c.l.b16 %v307
  %v1977 = vunpack.c.h.b16 %v307
  %v1978 = vunpack.c.l.b16 %v308
  %v1979 = vunpack.c.h.b16 %v308
  %v1980 = vunpack.c.l.b16 %v309
  %v1981 = vunpack.c.h.b16 %v309
  %v1982 = vunpack.c.l.b16 %v310
  %v1983 = vunpack.c.h.b16 %v310
  %v1984 = vunpack.c.l.b16 %v311
  %v1985 = vunpack.c.h.b16 %v311
  %v1986 = vunpack.c.l.b16 %v312
  %v1987 = vunpack.c.h.b16 %v312
  %v1988 = vunpack.c.l.b16 %v313
  %v1989 = vunpack.c.l.b16 %v314
  %v1990 = vunpack.c.h.b16 %v314
  %v1991 = vunpack.c.l.b16 %v315
  %v1992 = vunpack.c.h.b16 %v315
  %v1993 = vunpack.c.l.b16 %v316
  %v1994 = vunpack.c.h.b16 %v316
  %v1995 = vunpack.c.l.b16 %v317
  %v1996 = vunpack.c.h.b16 %v317
  %v1997 = vunpack.c.l.b16 %v318
  %v1998 = vunpack.c.h.b16 %v318
  %v1999 = vunpack.c.l.b16 %v319
  %v2000 = vunpack.c.h.b16 %v319
  %v2001 = vunpack.c.l.b16 %v320
  %v2002 = vunpack.c.l.b16 %v321
  %v2003 = vunpack.c.h.b16 %v321
  %v2004 = vunpack.c.l.b16 %v322
  %v2005 = vunpack.c.h.b16 %v322
  %v2006 = vunpack.c.l.b16 %v323
  %v2007 = vunpack.c.h.b16 %v323
  %v2008 = vunpack.c.l.b16 %v324
  %v2009 = vunpack.c.h.b16 %v324
  %v2010 = vunpack.c.l.b16 %v325
  %v2011 = vunpack.c.h.b16 %v325
  %v2012 = vunpack.c.l.b16 %v326
  %v2013 = vunpack.c.h.b16 %v326
  %v2014 = vunpack.c.l.b16 %v327
  %v2015 = vunpack.c.l.b16 %v328
  %v2016 = vunpack.c.h.b16 %v328
  %v2017 = vunpack.c.l.b16 %v329
  %v2018 = vunpack.c.h.b16 %v329
  %v2019 = vunpack.c.l.b16 %v330
  %v2020 = vunpack.c.h.b16 %v330
  %v2021 = vunpack.c.l.b16 %v331
  %v2022 = vunpack.c.h.b16 %v331
  %v2023 = vunpack.c.l.b16 %v332
  %v2024 = vunpack.c.h.b16 %v332
  %v2025 = vunpack.c.l.b16 %v333
  %v2026 = vunpack.c.h.b16 %v333
  %v2027 = vunpack.c.l.b16 %v334
  %v2028 = vunpack.c.l.b16 %v335
  %v2029 = vunpack.c.h.b16 %v335
  %v2030 = vunpack.c.l.b16 %v336
  %v2031 = vunpack.c.h.b16 %v336
  %v2032 = vunpack.c.l.b16 %v337
  %v2033 = vunpack.c.h.b16 %v337
  %v2034 = vunpack.c.l.b16 %v338
  %v2035 = vunpack.c.h.b16 %v338
  %v2036 = vunpack.c.l.b16 %v339
  %v2037 = vunpack.c.h.b16 %v339
  %v2038 = vunpack.c.l.b16 %v340
  %v2039 = vunpack.c.h.b16 %v340
  %v2040 = vunpack.c.l.b16 %v341
  %v2041 = vunpack.c.l.b16 %v342
  %v2042 = vunpack.c.h.b16 %v342
  %v2043 = vunpack.c.l.b16 %v343
  %v2044 = vunpack.c.h.b16 %v343
  %v2045 = vunpack.c.l.b16 %v344
  %v2046 = vunpack.c.h.b16 %v344
  %v2047 = vunpack.c.l.b16 %v345
  %v2048 = vunpack.c.h.b16 %v345
  %v2049 = vunpack.c.l.b16 %v346
  %v2050 = vunpack.c.h.b16 %v346
  %v2051 = vunpack.c.l.b16 %v347
  %v2052 = vunpack.c.h.b16 %v347
  %v2053 = vunpack.c.l.b16 %v348
  %v2054 = vunpack.c.l.b16 %v349
  %v2055 = vunpack.c.h.b16 %v349
  %v2056 = vunpack.c.l.b16 %v350
  %v2057 = vunpack.c.h.b16 %v350
  %v2058 = vunpack.c.l.b16 %v351
  %v2059 = vunpack.c.h.b16 %v351
  %v2060 = vunpack.c.l.b16 %v352
  %v2061 = vunpack.c.h.b16 %v352
  %v2062 = vunpack.c.l.b16 %v353
  %v2063 = vunpack.c.h.b16 %v353
  %v2064 = vunpack.c.l.b16 %v354
  %v2065 = vunpack.c.h.b16 %v354
  %v2066 = vunpack.c.l.b16 %v355
  %v2067 = vunpack.c.l.b16 %v356
  %v2068 = vunpack.c.h.b16 %v356
  %v2069 = vunpack.c.l.b16 %v357
  %v2070 = vunpack.c.h.b16 %v357
  %v2071 = vunpack.c.l.b16 %v358
  %v2072 = vunpack.c.h.b16 %v358
  %v2073 = vunpack.c.l.b16 %v359
  %v2074 = vunpack.c.h.b16 %v359
  %v2075 = vunpack.c.l.b16 %v360
  %v2076 = vunpack.c.h.b16 %v360
  %v2077 = vunpack.c.l.b16 %v361
  %v2078 = vunpack.c.h.b16 %v361
  %v2079 = vunpack.c.l.b16 %v362
  %v2080 = vunpack.c.l.b16 %v363
  %v2081 = vunpack.c.h.b16 %v363
  %v2082 = vunpack.c.l.b16 %v364
  %v2083 = vunpack.c.h.b16 %v364
  %v2084 = vunpack.c.l.b16 %v365
  %v2085 = vunpack.c.h.b16 %v365
  %v2086 = vunpack.c.l.b16 %v366
  %v2087 = vunpack.c.h.b16 %v366
  %v2088 = vunpack.c.l.b16 %v367
  %v2089 = vunpack.c.h.b16 %v367
  %v2090 = vunpack.c.l.b16 %v368
  %v2091 = vunpack.c.h.b16 %v368
  %v2092 = vunpack.c.l.b16 %v369
  %v2093 = vunpack.c.l.b16 %v370
  %v2094 = vunpack.c.h.b16 %v370
  %v2095 = vunpack.c.l.b16 %v371
  %v2096 = vunpack.c.h.b16 %v371
  %v2097 = vunpack.c.l.b16 %v372
  %v2098 = vunpack.c.h.b16 %v372
  %v2099 = vunpack.c.l.b16 %v373
  %v2100 = vunpack.c.h.b16 %v373
  %v2101 = vunpack.c.l.b16 %v374
  %v2102 = vunpack.c.h.b16 %v374
  %v2103 = vunpack.c.l.b16 %v375
  %v2104 = vunpack.c.h.b16 %v375
  %v2105 = vunpack.c.l.b16 %v376
  %v2106 = vunpack.c.l.b16 %v377
  %v2107 = vunpack.c.h.b16 %v377
  %v2108 = vunpack.c.l.b16 %v378
  %v2109 = vunpack.c.h.b16 %v378
  %v2110 = vunpack.c.l.b16 %v379
  %v2111 = vunpack.c.h.b16 %v379
  %v2112 = vunpack.c.l.b16 %v380
  %v2113 = vunpack.c.h.b16 %v380
  %v2114 = vunpack.c.l.b16 %v381
  %v2115 = vunpack.c.h.b16 %v381
  %v2116 = vunpack.c.l.b16 %v382
  %v2117 = vunpack.c.h.b16 %v382
  %v2118 = vunpack.c.l.b16 %v383
  %v2119 = vunpack.c.l.b16 %v384
  %v2120 = vunpack.c.h.b16 %v384
  %v2121 = vunpack.c.l.b16 %v385
  %v2122 = vunpack.c.h.b16 %v385
  %v2123 = vunpack.c.l.b16 %v386
  %v2124 = vunpack.c.h.b16 %v386
  %v2125 = vunpack.c.l.b16 %v387
  %v2126 = vunpack.c.h.b16 %v387
  %v2127 = vunpack.c.l.b16 %v388
  %v2128 = vunpack.c.h.b16 %v388
  %v2129 = vunpack.c.l.b16 %v389
  %v2130 = vunpack.c.h.b16 %v389
  %v2131 = vunpack.c.l.b16 %v390
  %v2132 = vunpack.c.l.b16 %v391
  %v2133 = vunpack.c.h.b16 %v391
  %v2134 = vunpack.c.l.b16 %v392
  %v2135 = vunpack.c.h.b16 %v392
  %v2136 = vunpack.c.l.b16 %v393
  %v2137 = vunpack.c.h.b16 %v393
  %v2138 = vunpack.c.l.b16 %v394
  %v2139 = vunpack.c.h.b16 %v394
  %v2140 = vunpack.c.l.b16 %v395
  %v2141 = vunpack.c.h.b16 %v395
  %v2142 = vunpack.c.l.b16 %v396
  %v2143 = vunpack.c.h.b16 %v396
  %v2144 = vunpack.c.l.b16 %v397
  %v2145 = vunpack.c.l.b16 %v398
  %v2146 = vunpack.c.h.b16 %v398
  %v2147 = vunpack.c.l.b16 %v399
  %v2148 = vunpack.c.h.b16 %v399
  %v2149 = vunpack.c.l.b16 %v400
  %v2150 = vunpack.c.h.b16 %v400
  %v2151 = vunpack.c.l.b16 %v401
  %v2152 = vunpack.c.h.b16 %v401
  %v2153 = vunpack.c.l.b16 %v402
  %v2154 = vunpack.c.h.b16 %v402
  %v2155 = vunpack.c.l.b16 %v403
  %v2156 = vunpack.c.h.b16 %v403
  %v2157 = vunpack.c.l.b16 %v404
  %v2158 = vunpack.c.l.b16 %v405
  %v2159 = vunpack.c.h.b16 %v405
  %v2160 = vunpack.c.l.b16 %v406
  %v2161 = vunpack.c.h.b16 %v406
  %v2162 = vunpack.c.l.b16 %v407
  %v2163 = vunpack.c.h.b16 %v407
  %v2164 = vunpack.c.l.b16 %v408
  %v2165 = vunpack.c.h.b16 %v408
  %v2166 = vunpack.c.l.b16 %v409
  %v2167 = vunpack.c.h.b16 %v409
  %v2168 = vunpack.c.l.b16 %v410
  %v2169 = vunpack.c.h.b16 %v410
  %v2170 = vunpack.c.l.b16 %v411
  %v2171 = vunpack.c.l.b16 %v412
  %v2172 = vunpack.c.h.b16 %v412
  %v2173 = vunpack.c.l.b16 %v413
  %v2174 = vunpack.c.h.b16 %v413
  %v2175 = vunpack.c.l.b16 %v414
  %v2176 = vunpack.c.h.b16 %v414
  %v2177 = vunpack.c.l.b16 %v415
  %v2178 = vunpack.c.h.b16 %v415
  %v2179 = vunpack.c.l.b16 %v416
  %v2180 = vunpack.c.h.b16 %v416
  %v2181 = vunpack.c.l.b16 %v417
  %v2182 = vunpack.c.h.b16 %v417
  %v2183 = vunpack.c.l.b16 %v418
  %v2184 = vunpack.c.l.b16 %v419
  %v2185 = vunpack.c.h.b16 %v419
  %v2186 = vunpack.c.l.b16 %v420
  %v2187 = vunpack.c.h.b16 %v420
  %v2188 = vunpack.c.l.b16 %v421
  %v2189 = vunpack.c.h.b16 %v421
  %v2190 = vunpack.c.l.b16 %v422
  %v2191 = vunpack.c.h.b16 %v422
  %v2192 = vunpack.c.l.b16 %v423
  %v2193 = vunpack.c.h.b16 %v423
  %v2194 = vunpack.c.l.b16 %v424
  %v2195 = vunpack.c.h.b16 %v424
  %v2196 = vunpack.c.l.b16 %v425
  %v2197 = vunpack.c.l.b16 %v426
  %v2198 = vunpack.c.h.b16 %v426
  %v2199 = vunpack.c.l.b16 %v427
  %v2200 = vunpack.c.h.b16 %v427
  %v2201 = vunpack.c.l.b16 %v428
  %v2202 = vunpack.c.h.b16 %v428
  %v2203 = vunpack.c.l.b16 %v429
  %v2204 = vunpack.c.h.b16 %v429
  %v2205 = vunpack.c.l.b16 %v430
  %v2206 = vunpack.c.h.b16 %v430
  %v2207 = vunpack.c.l.b16 %v431
  %v2208 = vunpack.c.h.b16 %v431
  %v2209 = vunpack.c.l.b16 %v432
  %v2210 = vunpack.c.l.b16 %v433
  %v2211 = vunpack.c.h.b16 %v433
  %v2212 = vunpack.c.l.b16 %v434
  %v2213 = vunpack.c.h.b16 %v434
  %v2214 = vunpack.c.l.b16 %v435
  %v2215 = vunpack.c.h.b16 %v435
  %v2216 = vunpack.c.l.b16 %v436
  %v2217 = vunpack.c.h.b16 %v436
  %v2218 = vunpack.c.l.b16 %v437
  %v2219 = vunpack.c.h.b16 %v437
  %v2220 = vunpack.c.l.b16 %v438
  %v2221 = vunpack.c.h.b16 %v438
  %v2222 = vunpack.c.l.b16 %v439
  %v2223 = vunpack.c.l.b16 %v440
  %v2224 = vunpack.c.h.b16 %v440
  %v2225 = vunpack.c.l.b16 %v441
  %v2226 = vunpack.c.h.b16 %v441
  %v2227 = vunpack.c.l.b16 %v442
  %v2228 = vunpack.c.h.b16 %v442
  %v2229 = vunpack.c.l.b16 %v443
  %v2230 = vunpack.c.h.b16 %v443
  %v2231 = vunpack.c.l.b16 %v444
  %v2232 = vunpack.c.h.b16 %v444
  %v2233 = vunpack.c.l.b16 %v445
  %v2234 = vunpack.c.h.b16 %v445
  %v2235 = vunpack.c.l.b16 %v446
  %v2236 = vunpack.c.l.b16 %v447
  %v2237 = vunpack.c.h.b16 %v447
  %v2238 = vunpack.c.l.b16 %v448
  %v2239 = vunpack.c.h.b16 %v448
  %v2240 = vunpack.c.l.b16 %v449
  %v2241 = vunpack.c.h.b16 %v449
  %v2242 = vunpack.c.l.b16 %v450
  %v2243 = vunpack.c.h.b16 %v450
  %v2244 = vunpack.c.l.b16 %v451
  %v2245 = vunpack.c.h.b16 %v451
  %v2246 = vunpack.c.l.b16 %v452
  %v2247 = vunpack.c.h.b16 %v452
  %v2248 = vunpack.c.l.b16 %v453
  %v2249 = vunpack.c.l.b16 %v454
  %v2250 = vunpack.c.h.b16 %v454
  %v2251 = vunpack.c.l.b16 %v455
  %v2252 = vunpack.c.h.b16 %v455
  %v2253 = vunpack.c.l.b16 %v456
  %v2254 = vunpack.c.h.b16 %v456
  %v2255 = vunpack.c.l.b16 %v457
  %v2256 = vunpack.c.h.b16 %v457
  %v2257 = vunpack.c.l.b16 %v458
  %v2258 = vunpack.c.h.b16 %v458
  %v2259 = vunpack.c.l.b16 %v459
  %v2260 = vunpack.c.h.b16 %v459
  %v2261 = vunpack.c.l.b16 %v460
  %v2262 = vunpack.c.l.b16 %v461
  %v2263 = vunpack.c.h.b16 %v461
  %v2264 = vunpack.c.l.b16 %v462
  %v2265 = vunpack.c.h.b16 %v462
  %v2266 = vunpack.c.l.b16 %v463
  %v2267 = vunpack.c.h.b16 %v463
  %v2268 = vunpack.c.l.b16 %v464
  %v2269 = vunpack.c.h.b16 %v464
  %v2270 = vunpack.c.l.b16 %v465
  %v2271 = vunpack.c.h.b16 %v465
  %v2272 = vunpack.c.l.b16 %v466
  %v2273 = vunpack.c.h.b16 %v466
  %v2274 = vunpack.c.l.b16 %v467
  %v2275 = vunpack.c.l.b16 %v468
  %v2276 = vunpack.c.h.b16 %v468
  %v2277 = vunpack.c.l.b16 %v469
  %v2278 = vunpack.c.h.b16 %v469
  %v2279 = vunpack.c.l.b16 %v470
  %v2280 = vunpack.c.h.b16 %v470
  %v2281 = vunpack.c.l.b16 %v471
  %v2282 = vunpack.c.h.b16 %v471
  %v2283 = vunpack.c.l.b16 %v472
  %v2284 = vunpack.c.h.b16 %v472
  %v2285 = vunpack.c.l.b16 %v473
  %v2286 = vunpack.c.h.b16 %v473
  %v2287 = vunpack.c.l.b16 %v474
  %v2288 = vunpack.c.l.b16 %v475
  %v2289 = vunpack.c.h.b16 %v475
  %v2290 = vunpack.c.l.b16 %v476
  %v2291 = vunpack.c.h.b16 %v476
  %v2292 = vunpack.c.l.b16 %v477
  %v2293 = vunpack.c.h.b16 %v477
  %v2294 = vunpack.c.l.b16 %v478
  %v2295 = vunpack.c.h.b16 %v478
  %v2296 = vunpack.c.l.b16 %v479
  %v2297 = vunpack.c.h.b16 %v479
  %v2298 = vunpack.c.l.b16 %v480
  %v2299 = vunpack.c.h.b16 %v480
  %v2300 = vunpack.c.l.b16 %v481
  %v2301 = vunpack.c.l.b16 %v482
  %v2302 = vunpack.c.h.b16 %v482
  %v2303 = vunpack.c.l.b16 %v483
  %v2304 = vunpack.c.h.b16 %v483
  %v2305 = vunpack.c.l.b16 %v484
  %v2306 = vunpack.c.h.b16 %v484
  %v2307 = vunpack.c.l.b16 %v485
  %v2308 = vunpack.c.h.b16 %v485
  %v2309 = vunpack.c.l.b16 %v486
  %v2310 = vunpack.c.h.b16 %v486
  %v2311 = vunpack.c.l.b16 %v487
  %v2312 = vunpack.c.h.b16 %v487
  %v2313 = vunpack.c.l.b16 %v488
  %v2314 = vunpack.c.l.b16 %v489
  %v2315 = vunpack.c.h.b16 %v489
  %v2316 = vunpack.c.l.b16 %v490
  %v2317 = vunpack.c.h.b16 %v490
  %v2318 = vunpack.c.l.b16 %v491
  %v2319 = vunpack.c.h.b16 %v491
  %v2320 = vunpack.c.l.b16 %v492
  %v2321 = vunpack.c.h.b16 %v492
  %v2322 = vunpack.c.l.b16 %v493
  %v2323 = vunpack.c.h.b16 %v493
  %v2324 = vunpack.c.l.b16 %v494
  %v2325 = vunpack.c.h.b16 %v494
  %v2326 = vunpack.c.l.b16 %v495
  %v2327 = vunpack.c.l.b16 %v496
  %v2328 = vunpack.c.h.b16 %v496
  %v2329 = vunpack.c.l.b16 %v497
  %v2330 = vunpack.c.h.b16 %v497
  %v2331 = vunpack.c.l.b16 %v498
  %v2332 = vunpack.c.h.b16 %v498
  %v2333 = vunpack.c.l.b16 %v499
  %v2334 = vunpack.c.h.b16 %v499
  %v2335 = vunpack.c.l.b16 %v500
  %v2336 = vunpack.c.h.b16 %v500
  %v2337 = vunpack.c.l.b16 %v501
  %v2338 = vunpack.c.h.b16 %v501
  %v2339 = vunpack.c.l.b16 %v502
  %v2340 = vunpack.c.l.b16 %v503
  %v2341 = vunpack.c.h.b16 %v503
  %v2342 = vunpack.c.l.b16 %v504
  %v2343 = vunpack.c.h.b16 %v504
  %v2344 = vunpack.c.l.b16 %v505
  %v2345 = vunpack.c.h.b16 %v505
  %v2346 = vunpack.c.l.b16 %v506
  %v2347 = vunpack.c.h.b16 %v506
  %v2348 = vunpack.c.l.b16 %v507
  %v2349 = vunpack.c.h.b16 %v507
  %v2350 = vunpack.c.l.b16 %v508
  %v2351 = vunpack.c.h.b16 %v508
  %v2352 = vunpack.c.l.b16 %v509
  %v2353 = vunpack.c.l.b16 %v510
  %v2354 = vunpack.c.h.b16 %v510
  %v2355 = vunpack.c.l.b16 %v511
  %v2356 = vunpack.c.h.b16 %v511
  %v2357 = vunpack.c.l.b16 %v512
  %v2358 = vunpack.c.h.b16 %v512
  %v2359 = vunpack.c.l.b16 %v513
  %v2360 = vunpack.c.h.b16 %v513
  %v2361 = vunpack.c.l.b16 %v514
  %v2362 = vunpack.c.h.b16 %v514
  %v2363 = vunpack.c.l.b16 %v515
  %v2364 = vunpack.c.h.b16 %v515
  %v2365 = vunpack.c.l.b16 %v516
  %v2366 = vunpack.c.l.b16 %v517
  %v2367 = vunpack.c.h.b16 %v517
  %v2368 = vunpack.c.l.b16 %v518
  %v2369 = vunpack.c.h.b16 %v518
  %v2370 = vunpack.c.l.b16 %v519
  %v2371 = vunpack.c.h.b16 %v519
  %v2372 = vunpack.c.l.b16 %v520
  %v2373 = vunpack.c.h.b16 %v520
  %v2374 = vunpack.c.l.b16 %v521
  %v2375 = vunpack.c.h.b16 %v521
  %v2376 = vunpack.c.l.b16 %v522
  %v2377 = vunpack.c.h.b16 %v522
  %v2378 = vunpack.c.l.b16 %v523
  %v2379 = vunpack.c.l.b16 %v524
  %v2380 = vunpack.c.h.b16 %v524
  %v2381 = vunpack.c.l.b16 %v525
  %v2382 = vunpack.c.h.b16 %v525
  %v2383 = vunpack.c.l.b16 %v526
  %v2384 = vunpack.c.h.b16 %v526
  %v2385 = vunpack.c.l.b16 %v527
  %v2386 = vunpack.c.h.b16 %v527
  %v2387 = vunpack.c.l.b16 %v528
  %v2388 = vunpack.c.h.b16 %v528
  %v2389 = vunpack.c.l.b16 %v529
  %v2390 = vunpack.c.h.b16 %v529
  %v2391 = vunpack.c.l.b16 %v530
  %v2392 = vunpack.c.l.b16 %v531
  %v2393 = vunpack.c.h.b16 %v531
  %v2394 = vunpack.c.l.b16 %v532
  %v2395 = vunpack.c.h.b16 %v532
  %v2396 = vunpack.c.l.b16 %v533
  %v2397 = vunpack.c.h.b16 %v533
  %v2398 = vunpack.c.l.b16 %v534
  %v2399 = vunpack.c.h.b16 %v534
  %v2400 = vunpack.c.l.b16 %v535
  %v2401 = vunpack.c.h.b16 %v535
  %v2402 = vunpack.c.l.b16 %v536
  %v2403 = vunpack.c.h.b16 %v536
  %v2404 = vunpack.c.l.b16 %v537
  %v2405 = vunpack.c.l.b16 %v538
  %v2406 = vunpack.c.h.b16 %v538
  %v2407 = vunpack.c.l.b16 %v539
  %v2408 = vunpack.c.h.b16 %v539
  %v2409 = vunpack.c.l.b16 %v540
  %v2410 = vunpack.c.h.b16 %v540
  %v2411 = vunpack.c.l.b16 %v541
  %v2412 = vunpack.c.h.b16 %v541
  %v2413 = vunpack.c.l.b16 %v542
  %v2414 = vunpack.c.h.b16 %v542
  %v2415 = vunpack.c.l.b16 %v543
  %v2416 = vunpack.c.h.b16 %v543
  %v2417 = vunpack.c.l.b16 %v544
  %v2418 = vunpack.c.l.b16 %v545
  %v2419 = vunpack.c.h.b16 %v545
  %v2420 = vunpack.c.l.b16 %v546
  %v2421 = vunpack.c.h.b16 %v546
  %v2422 = vunpack.c.l.b16 %v547
  %v2423 = vunpack.c.h.b16 %v547
  %v2424 = vunpack.c.l.b16 %v548
  %v2425 = vunpack.c.h.b16 %v548
  %v2426 = vunpack.c.l.b16 %v549
  %v2427 = vunpack.c.h.b16 %v549
  %v2428 = vunpack.c.l.b16 %v550
  %v2429 = vunpack.c.h.b16 %v550
  %v2430 = vunpack.c.l.b16 %v551
  %v2431 = vunpack.c.l.b16 %v552
  %v2432 = vunpack.c.h.b16 %v552
  %v2433 = vunpack.c.l.b16 %v553
  %v2434 = vunpack.c.h.b16 %v553
  %v2435 = vunpack.c.l.b16 %v554
  %v2436 = vunpack.c.h.b16 %v554
  %v2437 = vunpack.c.l.b16 %v555
  %v2438 = vunpack.c.h.b16 %v555
  %v2439 = vunpack.c.l.b16 %v556
  %v2440 = vunpack.c.h.b16 %v556
  %v2441 = vunpack.c.l.b16 %v557
  %v2442 = vunpack.c.h.b16 %v557
  %v2443 = vunpack.c.l.b16 %v558
  %v2444 = vunpack.c.l.b16 %v559
  %v2445 = vunpack.c.h.b16 %v559
  %v2446 = vunpack.c.l.b16 %v560
  %v2447 = vunpack.c.h.b16 %v560
  %v2448 = vunpack.c.l.b16 %v561
  %v2449 = vunpack.c.h.b16 %v561
  %v2450 = vunpack.c.l.b16 %v562
  %v2451 = vunpack.c.h.b16 %v562
  %v2452 = vunpack.c.l.b16 %v563
  %v2453 = vunpack.c.h.b16 %v563
  %v2454 = vunpack.c.l.b16 %v564
  %v2455 = vunpack.c.h.b16 %v564
  %v2456 = vunpack.c.l.b16 %v565
  %v2457 = vunpack.c.l.b16 %v566
  %v2458 = vunpack.c.h.b16 %v566
  %v2459 = vunpack.c.l.b16 %v567
  %v2460 = vunpack.c.h.b16 %v567
  %v2461 = vunpack.c.l.b16 %v568
  %v2462 = vunpack.c.h.b16 %v568
  %v2463 = vunpack.c.l.b16 %v569
  %v2464 = vunpack.c.h.b16 %v569
  %v2465 = vunpack.c.l.b16 %v570
  %v2466 = vunpack.c.h.b16 %v570
  %v2467 = vunpack.c.l.b16 %v571
  %v2468 = vunpack.c.h.b16 %v571
  %v2469 = vunpack.c.l.b16 %v572
  %v2470 = vunpack.c.l.b16 %v573
  %v2471 = vunpack.c.h.b16 %v573
  %v2472 = vunpack.c.l.b16 %v574
  %v2473 = vunpack.c.h.b16 %v574
  %v2474 = vunpack.c.l.b16 %v575
  %v2475 = vunpack.c.h.b16 %v575
  %v2476 = vunpack.c.l.b16 %v576
  %v2477 = vunpack.c.h.b16 %v576
  %v2478 = vunpack.c.l.b16 %v577
  %v2479 = vunpack.c.h.b16 %v577
  %v2480 = vunpack.c.l.b16 %v578
  %v2481 = vunpack.c.h.b16 %v578
  %v2482 = vunpack.c.l.b16 %v579
  %v2483 = vunpack.c.l.b16 %v580
  %v2484 = vunpack.c.h.b16 %v580
  %v2485 = vunpack.c.l.b16 %v581
  %v2486 = vunpack.c.h.b16 %v581
  %v2487 = vunpack.c.l.b16 %v582
  %v2488 = vunpack.c.h.b16 %v582
  %v2489 = vunpack.c.l.b16 %v583
  %v2490 = vunpack.c.h.b16 %v583
  %v2491 = vunpack.c.l.b16 %v584
  %v2492 = vunpack.c.h.b16 %v584
  %v2493 = vunpack.c.l.b16 %v585
  %v2494 = vunpack.c.h.b16 %v585
  %v2495 = vunpack.c.l.b16 %v586
  %v2496 = vunpack.c.l.b16 %v587
  %v2497 = vunpack.c.h.b16 %v587
  %v2498 = vunpack.c.l.b16 %v588
  %v2499 = vunpack.c.h.b16 %v588
  %v2500 = vunpack.c.l.b16 %v589
  %v2501 = vunpack.c.h.b16 %v589
  %v2502 = vunpack.c.l.b16 %v590
  %v2503 = vunpack.c.h.b16 %v590
  %v2504 = vunpack.c.l.b16 %v591
  %v2505 = vunpack.c.h.b16 %v591
  %v2506 = vunpack.c.l.b16 %v592
  %v2507 = vunpack.c.h.b16 %v592
  %v2508 = vunpack.c.l.b16 %v593
  %v2509 = vunpack.c.l.b16 %v594
  %v2510 = vunpack.c.h.b16 %v594
  %v2511 = vunpack.c.l.b16 %v595
  %v2512 = vunpack.c.h.b16 %v595
  %v2513 = vunpack.c.l.b16 %v596
  %v2514 = vunpack.c.h.b16 %v596
  %v2515 = vunpack.c.l.b16 %v597
  %v2516 = vunpack.c.h.b16 %v597
  %v2517 = vunpack.c.l.b16 %v598
  %v2518 = vunpack.c.h.b16 %v598
  %v2519 = vunpack.c.l.b16 %v599
  %v2520 = vunpack.c.h.b16 %v599
  %v2521 = vunpack.c.l.b16 %v600
  %v2522 = vunpack.c.l.b16 %v601
  %v2523 = vunpack.c.h.b16 %v601
  %v2524 = vunpack.c.l.b16 %v602
  %v2525 = vunpack.c.h.b16 %v602
  %v2526 = vunpack.c.l.b16 %v603
  %v2527 = vunpack.c.h.b16 %v603
  %v2528 = vunpack.c.l.b16 %v604
  %v2529 = vunpack.c.h.b16 %v604
  %v2530 = vunpack.c.l.b16 %v605
  %v2531 = vunpack.c.h.b16 %v605
  %v2532 = vunpack.c.l.b16 %v606
  %v2533 = vunpack.c.h.b16 %v606
  %v2534 = vunpack.c.l.b16 %v607
  %v2535 = vunpack.c.l.b16 %v608
  %v2536 = vunpack.c.h.b16 %v608
  %v2537 = vunpack.c.l.b16 %v609
  %v2538 = vunpack.c.h.b16 %v609
  %v2539 = vunpack.c.l.b16 %v610
  %v2540 = vunpack.c.h.b16 %v610
  %v2541 = vunpack.c.l.b16 %v611
  %v2542 = vunpack.c.h.b16 %v611
  %v2543 = vunpack.c.l.b16 %v612
  %v2544 = vunpack.c.h.b16 %v612
  %v2545 = vunpack.c.l.b16 %v613
  %v2546 = vunpack.c.h.b16 %v613
  %v2547 = vunpack.c.l.b16 %v614
  %v2548 = vunpack.c.l.b16 %v615
  %v2549 = vunpack.c.h.b16 %v615
  %v2550 = vunpack.c.l.b16 %v616
  %v2551 = vunpack.c.h.b16 %v616
  %v2552 = vunpack.c.l.b16 %v617
  %v2553 = vunpack.c.h.b16 %v617
  %v2554 = vunpack.c.l.b16 %v618
  %v2555 = vunpack.c.h.b16 %v618
  %v2556 = vunpack.c.l.b16 %v619
  %v2557 = vunpack.c.h.b16 %v619
  %v2558 = vunpack.c.l.b16 %v620
  %v2559 = vunpack.c.h.b16 %v620
  %v2560 = vunpack.c.l.b16 %v621
  %v2561 = vunpack.c.l.b16 %v622
  %v2562 = vunpack.c.h.b16 %v622
  %v2563 = vunpack.c.l.b16 %v623
  %v2564 = vunpack.c.h.b16 %v623
  %v2565 = vunpack.c.l.b16 %v624
  %v2566 = vunpack.c.h.b16 %v624
  %v2567 = vunpack.c.l.b16 %v625
  %v2568 = vunpack.c.h.b16 %v625
  %v2569 = vunpack.c.l.b16 %v626
  %v2570 = vunpack.c.h.b16 %v626
  %v2571 = vunpack.c.l.b16 %v627
  %v2572 = vunpack.c.h.b16 %v627
  %v2573 = vunpack.c.l.b16 %v628
  %v2574 = vunpack.c.l.b16 %v629
  %v2575 = vunpack.c.h.b16 %v629
  %v2576 = vunpack.c.l.b16 %v630
  %v2577 = vunpack.c.h.b16 %v630
  %v2578 = vunpack.c.l.b16 %v631
  %v2579 = vunpack.c.h.b16 %v631
  %v2580 = vunpack.c.l.b16 %v632
  %v2581 = vunpack.c.h.b16 %v632
  %v2582 = vunpack.c.l.b16 %v633
  %v2583 = vunpack.c.h.b16 %v633
  %v2584 = vunpack.c.l.b16 %v634
  %v2585 = vunpack.c.h.b16 %v634
  %v2586 = vunpack.c.l.b16 %v635
  %v2587 = vunpack.c.l.b16 %v636
  %v2588 = vunpack.c.h.b16 %v636
  %v2589 = vunpack.c.l.b16 %v637
  %v2590 = vunpack.c.h.b16 %v637
  %v2591 = vunpack.c.l.b16 %v638
  %v2592 = vunpack.c.h.b16 %v638
  %v2593 = vunpack.c.l.b16 %v639
  %v2594 = vunpack.c.h.b16 %v639
  %v2595 = vunpack.c.l.b16 %v640
  %v2596 = vunpack.c.h.b16 %v640
  %v2597 = vunpack.c.l.b16 %v641
  %v2598 = vunpack.c.h.b16 %v641
  %v2599 = vunpack.c.l.b16 %v642
  %v2600 = vunpack.c.l.b16 %v643
  %v2601 = vunpack.c.h.b16 %v643
  %v2602 = vunpack.c.l.b16 %v644
  %v2603 = vunpack.c.h.b16 %v644
  %v2604 = vunpack.c.l.b16 %v645
  %v2605 = vunpack.c.h.b16 %v645
  %v2606 = vunpack.c.l.b16 %v646
  %v2607 = vunpack.c.h.b16 %v646
  %v2608 = vunpack.c.l.b16 %v647
  %v2609 = vunpack.c.h.b16 %v647
  %v2610 = vunpack.c.l.b16 %v648
  %v2611 = vunpack.c.h.b16 %v648
  %v2612 = vunpack.c.l.b16 %v649
  %v2613 = vunpack.c.l.b16 %v650
  %v2614 = vunpack.c.h.b16 %v650
  %v2615 = vunpack.c.l.b16 %v651
  %v2616 = vunpack.c.h.b16 %v651
  %v2617 = vunpack.c.l.b16 %v652
  %v2618 = vunpack.c.h.b16 %v652
  %v2619 = vunpack.c.l.b16 %v653
  %v2620 = vunpack.c.h.b16 %v653
  %v2621 = vunpack.c.l.b16 %v654
  %v2622 = vunpack.c.h.b16 %v654
  %v2623 = vunpack.c.l.b16 %v655
  %v2624 = vunpack.c.h.b16 %v655
  %v2625 = vunpack.c.l.b16 %v656
  %v2626 = vunpack.c.l.b16 %v657
  %v2627 = vunpack.c.h.b16 %v657
  %v2628 = vunpack.c.l.b16 %v658
  %v2629 = vunpack.c.h.b16 %v658
  %v2630 = vunpack.c.l.b16 %v659
  %v2631 = vunpack.c.h.b16 %v659
  %v2632 = vunpack.c.l.b16 %v660
  %v2633 = vunpack.c.h.b16 %v660
  %v2634 = vunpack.c.l.b16 %v661
  %v2635 = vunpack.c.h.b16 %v661
  %v2636 = vunpack.c.l.b16 %v662
  %v2637 = vunpack.c.h.b16 %v662
  %v2638 = vunpack.c.l.b16 %v663
  %v2639 = vunpack.c.l.b16 %v664
  %v2640 = vunpack.c.h.b16 %v664
  %v2641 = vunpack.c.l.b16 %v665
  %v2642 = vunpack.c.h.b16 %v665
  %v2643 = vunpack.c.l.b16 %v666
  %v2644 = vunpack.c.h.b16 %v666
  %v2645 = vunpack.c.l.b16 %v667
  %v2646 = vunpack.c.h.b16 %v667
  %v2647 = vunpack.c.l.b16 %v668
  %v2648 = vunpack.c.h.b16 %v668
  %v2649 = vunpack.c.l.b16 %v669
  %v2650 = vunpack.c.h.b16 %v669
  %v2651 = vunpack.c.l.b16 %v670
  %v2652 = vunpack.c.l.b16 %v671
  %v2653 = vunpack.c.h.b16 %v671
  %v2654 = vunpack.c.l.b16 %v672
  %v2655 = vunpack.c.h.b16 %v672
  %v2656 = vunpack.c.l.b16 %v673
  %v2657 = vunpack.c.h.b16 %v673
  %v2658 = vunpack.c.l.b16 %v674
  %v2659 = vunpack.c.h.b16 %v674
  %v2660 = vunpack.c.l.b16 %v675
  %v2661 = vunpack.c.h.b16 %v675
  %v2662 = vunpack.c.l.b16 %v676
  %v2663 = vunpack.c.h.b16 %v676
  %v2664 = vunpack.c.l.b16 %v677
  %v2665 = vunpack.c.l.b16 %v678
  %v2666 = vunpack.c.h.b16 %v678
  %v2667 = vunpack.c.l.b16 %v679
  %v2668 = vunpack.c.h.b16 %v679
  %v2669 = vunpack.c.l.b16 %v680
  %v2670 = vunpack.c.h.b16 %v680
  %v2671 = vunpack.c.l.b16 %v681
  %v2672 = vunpack.c.h.b16 %v681
  %v2673 = vunpack.c.l.b16 %v682
  %v2674 = vunpack.c.h.b16 %v682
  %v2675 = vunpack.c.l.b16 %v683
  %v2676 = vunpack.c.h.b16 %v683
  %v2677 = vunpack.c.l.b16 %v684
  %v2678 = vunpack.c.l.b16 %v685
  %v2679 = vunpack.c.h.b16 %v685
  %v2680 = vunpack.c.l.b16 %v686
  %v2681 = vunpack.c.h.b16 %v686
  %v2682 = vunpack.c.l.b16 %v687
  %v2683 = vunpack.c.h.b16 %v687
  %v2684 = vunpack.c.l.b16 %v688
  %v2685 = vunpack.c.h.b16 %v688
  %v2686 = vunpack.c.l.b16 %v689
  %v2687 = vunpack.c.h.b16 %v689
  %v2688 = vunpack.c.l.b16 %v690
  %v2689 = vunpack.c.h.b16 %v690
  %v2690 = vunpack.c.l.b16 %v691
  %v2691 = vunpack.c.l.b16 %v692
  %v2692 = vunpack.c.h.b16 %v692
  %v2693 = vunpack.c.l.b16 %v693
  %v2694 = vunpack.c.h.b16 %v693
  %v2695 = vunpack.c.l.b16 %v694
  %v2696 = vunpack.c.h.b16 %v694
  %v2697 = vunpack.c.l.b16 %v695
  %v2698 = vunpack.c.h.b16 %v695
  %v2699 = vunpack.c.l.b16 %v696
  %v2700 = vunpack.c.h.b16 %v696
  %v2701 = vunpack.c.l.b16 %v697
  %v2702 = vunpack.c.h.b16 %v697
  %v2703 = vunpack.c.l.b16 %v698
  %v2704 = vunpack.c.l.b16 %v699
  %v2705 = vunpack.c.h.b16 %v699
  %v2706 = vunpack.c.l.b16 %v700
  %v2707 = vunpack.c.h.b16 %v700
  %v2708 = vunpack.c.l.b16 %v701
  %v2709 = vunpack.c.h.b16 %v701
  %v2710 = vunpack.c.l.b16 %v702
  %v2711 = vunpack.c.h.b16 %v702
  %v2712 = vunpack.c.l.b16 %v703
  %v2713 = vunpack.c.h.b16 %v703
  %v2714 = vunpack.c.l.b16 %v704
  %v2715 = vunpack.c.h.b16 %v704
  %v2716 = vunpack.c.l.b16 %v705
  %v2717 = vunpack.c.l.b16 %v706
  %v2718 = vunpack.c.h.b16 %v706
  %v2719 = vunpack.c.l.b16 %v707
  %v2720 = vunpack.c.h.b16 %v707
  %v2721 = vunpack.c.l.b16 %v708
  %v2722 = vunpack.c.h.b16 %v708
  %v2723 = vunpack.c.l.b16 %v709
  %v2724 = vunpack.c.h.b16 %v709
  %v2725 = vunpack.c.l.b16 %v710
  %v2726 = vunpack.c.h.b16 %v710
  %v2727 = vunpack.c.l.b16 %v711
  %v2728 = vunpack.c.h.b16 %v711
  %v2729 = vunpack.c.l.b16 %v712
  %v2730 = vunpack.c.l.b16 %v713
  %v2731 = vunpack.c.h.b16 %v713
  %v2732 = vunpack.c.l.b16 %v714
  %v2733 = vunpack.c.h.b16 %v714
  %v2734 = vunpack.c.l.b16 %v715
  %v2735 = vunpack.c.h.b16 %v715
  %v2736 = vunpack.c.l.b16 %v716
  %v2737 = vunpack.c.h.b16 %v716
  %v2738 = vunpack.c.l.b16 %v717
  %v2739 = vunpack.c.h.b16 %v717
  %v2740 = vunpack.c.l.b16 %v718
  %v2741 = vunpack.c.h.b16 %v718
  %v2742 = vunpack.c.l.b16 %v719
  %v2743 = vunpack.c.l.b16 %v720
  %v2744 = vunpack.c.h.b16 %v720
  %v2745 = vunpack.c.l.b16 %v721
  %v2746 = vunpack.c.h.b16 %v721
  %v2747 = vunpack.c.l.b16 %v722
  %v2748 = vunpack.c.h.b16 %v722
  %v2749 = vunpack.c.l.b16 %v723
  %v2750 = vunpack.c.h.b16 %v723
  %v2751 = vunpack.c.l.b16 %v724
  %v2752 = vunpack.c.h.b16 %v724
  %v2753 = vunpack.c.l.b16 %v725
  %v2754 = vunpack.c.h.b16 %v725
  %v2755 = vunpack.c.l.b16 %v726
  %v2756 = vpack.c.b16 %v1495, %v1482
  %v2757 = vpack.c.b16 %v1496, %v1483
  %v2758 = vpack.c.b16 %v1497, %v1484
  %v2759 = vpack.c.b16 %v1498, %v1485
  %v2760 = vpack.c.b16 %v1499, %v1486
  %v2761 = vpack.c.b16 %v1500, %v1487
  %v2762 = vpack.c.b16 %v1501, %v1488
  %v2763 = vpack.c.b16 %v1502, %v1489
  %v2764 = vpack.c.b16 %v1503, %v1490
  %v2765 = vpack.c.b16 %v1504, %v1491
  %v2766 = vpack.c.b16 %v1505, %v1492
  %v2767 = vpack.c.b16 %v1506, %v1493
  %v2768 = vpack.c.b16 %v1507, %v1494
  %v2769 = vpack.c.b16 %v1521, %v1508
  %v2770 = vpack.c.b16 %v1522, %v1509
  %v2771 = vpack.c.b16 %v1523, %v1510
  %v2772 = vpack.c.b16 %v1524, %v1511
  %v2773 = vpack.c.b16 %v1525, %v1512
  %v2774 = vpack.c.b16 %v1526, %v1513
  %v2775 = vpack.c.b16 %v1527, %v1514
  %v2776 = vpack.c.b16 %v1528, %v1515
  %v2777 = vpack.c.b16 %v1529, %v1516
  %v2778 = vpack.c.b16 %v1530, %v1517
  %v2779 = vpack.c.b16 %v1531, %v1518
  %v2780 = vpack.c.b16 %v1532, %v1519
  %v2781 = vpack.c.b16 %v1533, %v1520
  %v2782 = vpack.c.b16 %v1547, %v1534
  %v2783 = vpack.c.b16 %v1548, %v1535
  %v2784 = vpack.c.b16 %v1549, %v1536
  %v2785 = vpack.c.b16 %v1550, %v1537
  %v2786 = vpack.c.b16 %v1551, %v1538
  %v2787 = vpack.c.b16 %v1552, %v1539
  %v2788 = vpack.c.b16 %v1553, %v1540
  %v2789 = vpack.c.b16 %v1554, %v1541
  %v2790 = vpack.c.b16 %v1555, %v1542
  %v2791 = vpack.c.b16 %v1556, %v1543
  %v2792 = vpack.c.b16 %v1557, %v1544
  %v2793 = vpack.c.b16 %v1558, %v1545
  %v2794 = vpack.c.b16 %v1559, %v1546
  %v2795 = vpack.c.b16 %v1573, %v1560
  %v2796 = vpack.c.b16 %v1574, %v1561
  %v2797 = vpack.c.b16 %v1575, %v1562
  %v2798 = vpack.c.b16 %v1576, %v1563
  %v2799 = vpack.c.b16 %v1577, %v1564
  %v2800 = vpack.c.b16 %v1578, %v1565
  %v2801 = vpack.c.b16 %v1579, %v1566
  %v2802 = vpack.c.b16 %v1580, %v1567
  %v2803 = vpack.c.b16 %v1581, %v1568
  %v2804 = vpack.c.b16 %v1582, %v1569
  %v2805 = vpack.c.b16 %v1583, %v1570
  %v2806 = vpack.c.b16 %v1584, %v1571
  %v2807 = vpack.c.b16 %v1585, %v1572
  %v2808 = vpack.c.b16 %v1599, %v1586
  %v2809 = vpack.c.b16 %v1600, %v1587
  %v2810 = vpack.c.b16 %v1601, %v1588
  %v2811 = vpack.c.b16 %v1602, %v1589
  %v2812 = vpack.c.b16 %v1603, %v1590
  %v2813 = vpack.c.b16 %v1604, %v1591
  %v2814 = vpack.c.b16 %v1605, %v1592
  %v2815 = vpack.c.b16 %v1606, %v1593
  %v2816 = vpack.c.b16 %v1607, %v1594
  %v2817 = vpack.c.b16 %v1608, %v1595
  %v2818 = vpack.c.b16 %v1609, %v1596
  %v2819 = vpack.c.b16 %v1610, %v1597
  %v2820 = vpack.c.b16 %v1611, %v1598
  %v2821 = vpack.c.b16 %v1625, %v1612
  %v2822 = vpack.c.b16 %v1626, %v1613
  %v2823 = vpack.c.b16 %v1627, %v1614
  %v2824 = vpack.c.b16 %v1628, %v1615
  %v2825 = vpack.c.b16 %v1629, %v1616
  %v2826 = vpack.c.b16 %v1630, %v1617
  %v2827 = vpack.c.b16 %v1631, %v1618
  %v2828 = vpack.c.b16 %v1632, %v1619
  %v2829 = vpack.c.b16 %v1633, %v1620
  %v2830 = vpack.c.b16 %v1634, %v1621
  %v2831 = vpack.c.b16 %v1635, %v1622
  %v2832 = vpack.c.b16 %v1636, %v1623
  %v2833 = vpack.c.b16 %v1637, %v1624
  %v2834 = vpack.c.b16 %v1651, %v1638
  %v2835 = vpack.c.b16 %v1652, %v1639
  %v2836 = vpack.c.b16 %v1653, %v1640
  %v2837 = vpack.c.b16 %v1654, %v1641
  %v2838 = vpack.c.b16 %v1655, %v1642
  %v2839 = vpack.c.b16 %v1656, %v1643
  %v2840 = vpack.c.b16 %v1657, %v1644
  %v2841 = vpack.c.b16 %v1658, %v1645
  %v2842 = vpack.c.b16 %v1659, %v1646
  %v2843 = vpack.c.b16 %v1660, %v1647
  %v2844 = vpack.c.b16 %v1661, %v1648
  %v2845 = vpack.c.b16 %v1662, %v1649
  %v2846 = vpack.c.b16 %v1663, %v1650
  %v2847 = vpack.c.b16 %v1677, %v1664
  %v2848 = vpack.c.b16 %v1678, %v1665
  %v2849 = vpack.c.b16 %v1679, %v1666
  %v2850 = vpack.c.b16 %v1680, %v1667
  %v2851 = vpack.c.b16 %v1681, %v1668
  %v2852 = vpack.c.b16 %v1682, %v1669
  %v2853 = vpack.c.b16 %v1683, %v1670
  %v2854 = vpack.c.b16 %v1684, %v1671
  %v2855 = vpack.c.b16 %v1685, %v1672
  %v2856 = vpack.c.b16 %v1686, %v1673
  %v2857 = vpack.c.b16 %v1687, %v1674
  %v2858 = vpack.c.b16 %v1688, %v1675
  %v2859 = vpack.c.b16 %v1689, %v1676
  %v2860 = vpack.c.b16 %v1703, %v1690
  %v2861 = vpack.c.b16 %v1704, %v1691
  %v2862 = vpack.c.b16 %v1705, %v1692
  %v2863 = vpack.c.b16 %v1706, %v1693
  %v2864 = vpack.c.b16 %v1707, %v1694
  %v2865 = vpack.c.b16 %v1708, %v1695
  %v2866 = vpack.c.b16 %v1709, %v1696
  %v2867 = vpack.c.b16 %v1710, %v1697
  %v2868 = vpack.c.b16 %v1711, %v1698
  %v2869 = vpack.c.b16 %v1712, %v1699
  %v2870 = vpack.c.b16 %v1713, %v1700
  %v2871 = vpack.c.b16 %v1714, %v1701
  %v2872 = vpack.c.b16 %v1715, %v1702
  %v2873 = vpack.c.b16 %v1729, %v1716
  %v2874 = vpack.c.b16 %v1730, %v1717
  %v2875 = vpack.c.b16 %v1731, %v1718
  %v2876 = vpack.c.b16 %v1732, %v1719
  %v2877 = vpack.c.b16 %v1733, %v1720
  %v2878 = vpack.c.b16 %v1734, %v1721
  %v2879 = vpack.c.b16 %v1735, %v1722
  %v2880 = vpack.c.b16 %v1736, %v1723
  %v2881 = vpack.c.b16 %v1737, %v1724
  %v2882 = vpack.c.b16 %v1738, %v1725
  %v2883 = vpack.c.b16 %v1739, %v1726
  %v2884 = vpack.c.b16 %v1740, %v1727
  %v2885 = vpack.c.b16 %v1741, %v1728
  %v2886 = vpack.c.b16 %v1755, %v1742
  %v2887 = vpack.c.b16 %v1756, %v1743
  %v2888 = vpack.c.b16 %v1757, %v1744
  %v2889 = vpack.c.b16 %v1758, %v1745
  %v2890 = vpack.c.b16 %v1759, %v1746
  %v2891 = vpack.c.b16 %v1760, %v1747
  %v2892 = vpack.c.b16 %v1761, %v1748
  %v2893 = vpack.c.b16 %v1762, %v1749
  %v2894 = vpack.c.b16 %v1763, %v1750
  %v2895 = vpack.c.b16 %v1764, %v1751
  %v2896 = vpack.c.b16 %v1765, %v1752
  %v2897 = vpack.c.b16 %v1766, %v1753
  %v2898 = vpack.c.b16 %v1767, %v1754
  %v2899 = vpack.c.b16 %v1781, %v1768
  %v2900 = vpack.c.b16 %v1782, %v1769
  %v2901 = vpack.c.b16 %v1783, %v1770
  %v2902 = vpack.c.b16 %v1784, %v1771
  %v2903 = vpack.c.b16 %v1785, %v1772
  %v2904 = vpack.c.b16 %v1786, %v1773
  %v2905 = vpack.c.b16 %v1787, %v1774
  %v2906 = vpack.c.b16 %v1788, %v1775
  %v2907 = vpack.c.b16 %v1789, %v1776
  %v2908 = vpack.c.b16 %v1790, %v1777
  %v2909 = vpack.c.b16 %v1791, %v1778
  %v2910 = vpack.c.b16 %v1792, %v1779
  %v2911 = vpack.c.b16 %v1793, %v1780
  %v2912 = vpack.c.b16 %v1807, %v1794
  %v2913 = vpack.c.b16 %v1808, %v1795
  %v2914 = vpack.c.b16 %v1809, %v1796
  %v2915 = vpack.c.b16 %v1810, %v1797
  %v2916 = vpack.c.b16 %v1811, %v1798
  %v2917 = vpack.c.b16 %v1812, %v1799
  %v2918 = vpack.c.b16 %v1813, %v1800
  %v2919 = vpack.c.b16 %v1814, %v1801
  %v2920 = vpack.c.b16 %v1815, %v1802
  %v2921 = vpack.c.b16 %v1816, %v1803
  %v2922 = vpack.c.b16 %v1817, %v1804
  %v2923 = vpack.c.b16 %v1818, %v1805
  %v2924 = vpack.c.b16 %v1819, %v1806
  %v2925 = vpack.c.b16 %v1833, %v1820
  %v2926 = vpack.c.b16 %v1834, %v1821
  %v2927 = vpack.c.b16 %v1835, %v1822
  %v2928 = vpack.c.b16 %v1836, %v1823
  %v2929 = vpack.c.b16 %v1837, %v1824
  %v2930 = vpack.c.b16 %v1838, %v1825
  %v2931 = vpack.c.b16 %v1839, %v1826
  %v2932 = vpack.c.b16 %v1840, %v1827
  %v2933 = vpack.c.b16 %v1841, %v1828
  %v2934 = vpack.c.b16 %v1842, %v1829
  %v2935 = vpack.c.b16 %v1843, %v1830
  %v2936 = vpack.c.b16 %v1844, %v1831
  %v2937 = vpack.c.b16 %v1845, %v1832
  %v2938 = vpack.c.b16 %v1859, %v1846
  %v2939 = vpack.c.b16 %v1860, %v1847
  %v2940 = vpack.c.b16 %v1861, %v1848
  %v2941 = vpack.c.b16 %v1862, %v1849
  %v2942 = vpack.c.b16 %v1863, %v1850
  %v2943 = vpack.c.b16 %v1864, %v1851
  %v2944 = vpack.c.b16 %v1865, %v1852
  %v2945 = vpack.c.b16 %v1866, %v1853
  %v2946 = vpack.c.b16 %v1867, %v1854
  %v2947 = vpack.c.b16 %v1868, %v1855
  %v2948 = vpack.c.b16 %v1869, %v1856
  %v2949 = vpack.c.b16 %v1870, %v1857
  %v2950 = vpack.c.b16 %v1871, %v1858
  %v2951 = vpack.c.b16 %v1885, %v1872
  %v2952 = vpack.c.b16 %v1886, %v1873
  %v2953 = vpack.c.b16 %v1887, %v1874
  %v2954 = vpack.c.b16 %v1888, %v1875
  %v2955 = vpack.c.b16 %v1889, %v1876
  %v2956 = vpack.c.b16 %v1890, %v1877
  %v2957 = vpack.c.b16 %v1891, %v1878
  %v2958 = vpack.c.b16 %v1892, %v1879
  %v2959 = vpack.c.b16 %v1893, %v1880
  %v2960 = vpack.c.b16 %v1894, %v1881
  %v2961 = vpack.c.b16 %v1895, %v1882
  %v2962 = vpack.c.b16 %v1896, %v1883
  %v2963 = vpack.c.b16 %v1897, %v1884
  %v2964 = vpack.c.b16 %v1911, %v1898
  %v2965 = vpack.c.b16 %v1912, %v1899
  %v2966 = vpack.c.b16 %v1913, %v1900
  %v2967 = vpack.c.b16 %v1914, %v1901
  %v2968 = vpack.c.b16 %v1915, %v1902
  %v2969 = vpack.c.b16 %v1916, %v1903
  %v2970 = vpack.c.b16 %v1917, %v1904
  %v2971 = vpack.c.b16 %v1918, %v1905
  %v2972 = vpack.c.b16 %v1919, %v1906
  %v2973 = vpack.c.b16 %v1920, %v1907
  %v2974 = vpack.c.b16 %v1921, %v1908
  %v2975 = vpack.c.b16 %v1922, %v1909
  %v2976 = vpack.c.b16 %v1923, %v1910
  %v2977 = vpack.c.b16 %v1937, %v1924
  %v2978 = vpack.c.b16 %v1938, %v1925
  %v2979 = vpack.c.b16 %v1939, %v1926
  %v2980 = vpack.c.b16 %v1940, %v1927
  %v2981 = vpack.c.b16 %v1941, %v1928
  %v2982 = vpack.c.b16 %v1942, %v1929
  %v2983 = vpack.c.b16 %v1943, %v1930
  %v2984 = vpack.c.b16 %v1944, %v1931
  %v2985 = vpack.c.b16 %v1945, %v1932
  %v2986 = vpack.c.b16 %v1946, %v1933
  %v2987 = vpack.c.b16 %v1947, %v1934
  %v2988 = vpack.c.b16 %v1948, %v1935
  %v2989 = vpack.c.b16 %v1949, %v1936
  %v2990 = vpack.c.b16 %v1963, %v1950
  %v2991 = vpack.c.b16 %v1964, %v1951
  %v2992 = vpack.c.b16 %v1965, %v1952
  %v2993 = vpack.c.b16 %v1966, %v1953
  %v2994 = vpack.c.b16 %v1967, %v1954
  %v2995 = vpack.c.b16 %v1968, %v1955
  %v2996 = vpack.c.b16 %v1969, %v1956
  %v2997 = vpack.c.b16 %v1970, %v1957
  %v2998 = vpack.c.b16 %v1971, %v1958
  %v2999 = vpack.c.b16 %v1972, %v1959
  %v3000 = vpack.c.b16 %v1973, %v1960
  %v3001 = vpack.c.b16 %v1974, %v1961
  %v3002 = vpack.c.b16 %v1975, %v1962
  %v3003 = vpack.c.b16 %v1989, %v1976
  %v3004 = vpack.c.b16 %v1990, %v1977
  %v3005 = vpack.c.b16 %v1991, %v1978
  %v3006 = vpack.c.b16 %v1992, %v1979
  %v3007 = vpack.c.b16 %v1993, %v1980
  %v3008 = vpack.c.b16 %v1994, %v1981
  %v3009 = vpack.c.b16 %v1995, %v1982
  %v3010 = vpack.c.b16 %v1996, %v1983
  %v3011 = vpack.c.b16 %v1997, %v1984
  %v3012 = vpack.c.b16 %v1998, %v1985
  %v3013 = vpack.c.b16 %v1999, %v1986
  %v3014 = vpack.c.b16 %v2000, %v1987
  %v3015 = vpack.c.b16 %v2001, %v1988
  %v3016 = vpack.c.b16 %v2015, %v2002
  %v3017 = vpack.c.b16 %v2016, %v2003
  %v3018 = vpack.c.b16 %v2017, %v2004
  %v3019 = vpack.c.b16 %v2018, %v2005
  %v3020 = vpack.c.b16 %v2019, %v2006
  %v3021 = vpack.c.b16 %v2020, %v2007
  %v3022 = vpack.c.b16 %v2021, %v2008
  %v3023 = vpack.c.b16 %v2022, %v2009
  %v3024 = vpack.c.b16 %v2023, %v2010
  %v3025 = vpack.c.b16 %v2024, %v2011
  %v3026 = vpack.c.b16 %v2025, %v2012
  %v3027 = vpack.c.b16 %v2026, %v2013
  %v3028 = vpack.c.b16 %v2027, %v2014
  %v3029 = vpack.c.b16 %v2041, %v2028
  %v3030 = vpack.c.b16 %v2042, %v2029
  %v3031 = vpack.c.b16 %v2043, %v2030
  %v3032 = vpack.c.b16 %v2044, %v2031
  %v3033 = vpack.c.b16 %v2045, %v2032
  %v3034 = vpack.c.b16 %v2046, %v2033
  %v3035 = vpack.c.b16 %v2047, %v2034
  %v3036 = vpack.c.b16 %v2048, %v2035
  %v3037 = vpack.c.b16 %v2049, %v2036
  %v3038 = vpack.c.b16 %v2050, %v2037
  %v3039 = vpack.c.b16 %v2051, %v2038
  %v3040 = vpack.c.b16 %v2052, %v2039
  %v3041 = vpack.c.b16 %v2053, %v2040
  %v3042 = vpack.c.b16 %v2067, %v2054
  %v3043 = vpack.c.b16 %v2068, %v2055
  %v3044 = vpack.c.b16 %v2069, %v2056
  %v3045 = vpack.c.b16 %v2070, %v2057
  %v3046 = vpack.c.b16 %v2071, %v2058
  %v3047 = vpack.c.b16 %v2072, %v2059
  %v3048 = vpack.c.b16 %v2073, %v2060
  %v3049 = vpack.c.b16 %v2074, %v2061
  %v3050 = vpack.c.b16 %v2075, %v2062
  %v3051 = vpack.c.b16 %v2076, %v2063
  %v3052 = vpack.c.b16 %v2077, %v2064
  %v3053 = vpack.c.b16 %v2078, %v2065
  %v3054 = vpack.c.b16 %v2079, %v2066
  %v3055 = vpack.c.b16 %v2093, %v2080
  %v3056 = vpack.c.b16 %v2094, %v2081
  %v3057 = vpack.c.b16 %v2095, %v2082
  %v3058 = vpack.c.b16 %v2096, %v2083
  %v3059 = vpack.c.b16 %v2097, %v2084
  %v3060 = vpack.c.b16 %v2098, %v2085
  %v3061 = vpack.c.b16 %v2099, %v2086
  %v3062 = vpack.c.b16 %v2100, %v2087
  %v3063 = vpack.c.b16 %v2101, %v2088
  %v3064 = vpack.c.b16 %v2102, %v2089
  %v3065 = vpack.c.b16 %v2103, %v2090
  %v3066 = vpack.c.b16 %v2104, %v2091
  %v3067 = vpack.c.b16 %v2105, %v2092
  %v3068 = vpack.c.b16 %v2119, %v2106
  %v3069 = vpack.c.b16 %v2120, %v2107
  %v3070 = vpack.c.b16 %v2121, %v2108
  %v3071 = vpack.c.b16 %v2122, %v2109
  %v3072 = vpack.c.b16 %v2123, %v2110
  %v3073 = vpack.c.b16 %v2124, %v2111
  %v3074 = vpack.c.b16 %v2125, %v2112
  %v3075 = vpack.c.b16 %v2126, %v2113
  %v3076 = vpack.c.b16 %v2127, %v2114
  %v3077 = vpack.c.b16 %v2128, %v2115
  %v3078 = vpack.c.b16 %v2129, %v2116
  %v3079 = vpack.c.b16 %v2130, %v2117
  %v3080 = vpack.c.b16 %v2131, %v2118
  %v3081 = vpack.c.b16 %v2145, %v2132
  %v3082 = vpack.c.b16 %v2146, %v2133
  %v3083 = vpack.c.b16 %v2147, %v2134
  %v3084 = vpack.c.b16 %v2148, %v2135
  %v3085 = vpack.c.b16 %v2149, %v2136
  %v3086 = vpack.c.b16 %v2150, %v2137
  %v3087 = vpack.c.b16 %v2151, %v2138
  %v3088 = vpack.c.b16 %v2152, %v2139
  %v3089 = vpack.c.b16 %v2153, %v2140
  %v3090 = vpack.c.b16 %v2154, %v2141
  %v3091 = vpack.c.b16 %v2155, %v2142
  %v3092 = vpack.c.b16 %v2156, %v2143
  %v3093 = vpack.c.b16 %v2157, %v2144
  %v3094 = vpack.c.b16 %v2171, %v2158
  %v3095 = vpack.c.b16 %v2172, %v2159
  %v3096 = vpack.c.b16 %v2173, %v2160
  %v3097 = vpack.c.b16 %v2174, %v2161
  %v3098 = vpack.c.b16 %v2175, %v2162
  %v3099 = vpack.c.b16 %v2176, %v2163
  %v3100 = vpack.c.b16 %v2177, %v2164
  %v3101 = vpack.c.b16 %v2178, %v2165
  %v3102 = vpack.c.b16 %v2179, %v2166
  %v3103 = vpack.c.b16 %v2180, %v2167
  %v3104 = vpack.c.b16 %v2181, %v2168
  %v3105 = vpack.c.b16 %v2182, %v2169
  %v3106 = vpack.c.b16 %v2183, %v2170
  %v3107 = vpack.c.b16 %v2197, %v2184
  %v3108 = vpack.c.b16 %v2198, %v2185
  %v3109 = vpack.c.b16 %v2199, %v2186
  %v3110 = vpack.c.b16 %v2200, %v2187
  %v3111 = vpack.c.b16 %v2201, %v2188
  %v3112 = vpack.c.b16 %v2202, %v2189
  %v3113 = vpack.c.b16 %v2203, %v2190
  %v3114 = vpack.c.b16 %v2204, %v2191
  %v3115 = vpack.c.b16 %v2205, %v2192
  %v3116 = vpack.c.b16 %v2206, %v2193
  %v3117 = vpack.c.b16 %v2207, %v2194
  %v3118 = vpack.c.b16 %v2208, %v2195
  %v3119 = vpack.c.b16 %v2209, %v2196
  %v3120 = vpack.c.b16 %v2223, %v2210
  %v3121 = vpack.c.b16 %v2224, %v2211
  %v3122 = vpack.c.b16 %v2225, %v2212
  %v3123 = vpack.c.b16 %v2226, %v2213
  %v3124 = vpack.c.b16 %v2227, %v2214
  %v3125 = vpack.c.b16 %v2228, %v2215
  %v3126 = vpack.c.b16 %v2229, %v2216
  %v3127 = vpack.c.b16 %v2230, %v2217
  %v3128 = vpack.c.b16 %v2231, %v2218
  %v3129 = vpack.c.b16 %v2232, %v2219
  %v3130 = vpack.c.b16 %v2233, %v2220
  %v3131 = vpack.c.b16 %v2234, %v2221
  %v3132 = vpack.c.b16 %v2235, %v2222
  %v3133 = vpack.c.b16 %v2249, %v2236
  %v3134 = vpack.c.b16 %v2250, %v2237
  %v3135 = vpack.c.b16 %v2251, %v2238
  %v3136 = vpack.c.b16 %v2252, %v2239
  %v3137 = vpack.c.b16 %v2253, %v2240
  %v3138 = vpack.c.b16 %v2254, %v2241
  %v3139 = vpack.c.b16 %v2255, %v2242
  %v3140 = vpack.c.b16 %v2256, %v2243
  %v3141 = vpack.c.b16 %v2257, %v2244
  %v3142 = vpack.c.b16 %v2258, %v2245
  %v3143 = vpack.c.b16 %v2259, %v2246
  %v3144 = vpack.c.b16 %v2260, %v2247
  %v3145 = vpack.c.b16 %v2261, %v2248
  %v3146 = vpack.c.b16 %v2275, %v2262
  %v3147 = vpack.c.b16 %v2276, %v2263
  %v3148 = vpack.c.b16 %v2277, %v2264
  %v3149 = vpack.c.b16 %v2278, %v2265
  %v3150 = vpack.c.b16 %v2279, %v2266
  %v3151 = vpack.c.b16 %v2280, %v2267
  %v3152 = vpack.c.b16 %v2281, %v2268
  %v3153 = vpack.c.b16 %v2282, %v2269
  %v3154 = vpack.c.b16 %v2283, %v2270
  %v3155 = vpack.c.b16 %v2284, %v2271
  %v3156 = vpack.c.b16 %v2285, %v2272
  %v3157 = vpack.c.b16 %v2286, %v2273
  %v3158 = vpack.c.b16 %v2287, %v2274
  %v3159 = vpack.c.b16 %v2301, %v2288
  %v3160 = vpack.c.b16 %v2302, %v2289
  %v3161 = vpack.c.b16 %v2303, %v2290
  %v3162 = vpack.c.b16 %v2304, %v2291
  %v3163 = vpack.c.b16 %v2305, %v2292
  %v3164 = vpack.c.b16 %v2306, %v2293
  %v3165 = vpack.c.b16 %v2307, %v2294
  %v3166 = vpack.c.b16 %v2308, %v2295
  %v3167 = vpack.c.b16 %v2309, %v2296
  %v3168 = vpack.c.b16 %v2310, %v2297
  %v3169 = vpack.c.b16 %v2311, %v2298
  %v3170 = vpack.c.b16 %v2312, %v2299
  %v3171 = vpack.c.b16 %v2313, %v2300
  %v3172 = vpack.c.b16 %v2327, %v2314
  %v3173 = vpack.c.b16 %v2328, %v2315
  %v3174 = vpack.c.b16 %v2329, %v2316
  %v3175 = vpack.c.b16 %v2330, %v2317
  %v3176 = vpack.c.b16 %v2331, %v2318
  %v3177 = vpack.c.b16 %v2332, %v2319
  %v3178 = vpack.c.b16 %v2333, %v2320
  %v3179 = vpack.c.b16 %v2334, %v2321
  %v3180 = vpack.c.b16 %v2335, %v2322
  %v3181 = vpack.c.b16 %v2336, %v2323
  %v3182 = vpack.c.b16 %v2337, %v2324
  %v3183 = vpack.c.b16 %v2338, %v2325
  %v3184 = vpack.c.b16 %v2339, %v2326
  %v3185 = vpack.c.b16 %v2353, %v2340
  %v3186 = vpack.c.b16 %v2354, %v2341
  %v3187 = vpack.c.b16 %v2355, %v2342
  %v3188 = vpack.c.b16 %v2356, %v2343
  %v3189 = vpack.c.b16 %v2357, %v2344
  %v3190 = vpack.c.b16 %v2358, %v2345
  %v3191 = vpack.c.b16 %v2359, %v2346
  %v3192 = vpack.c.b16 %v2360, %v2347
  %v3193 = vpack.c.b16 %v2361, %v2348
  %v3194 = vpack.c.b16 %v2362, %v2349
  %v3195 = vpack.c.b16 %v2363, %v2350
  %v3196 = vpack.c.b16 %v2364, %v2351
  %v3197 = vpack.c.b16 %v2365, %v2352
  %v3198 = vpack.c.b16 %v2379, %v2366
  %v3199 = vpack.c.b16 %v2380, %v2367
  %v3200 = vpack.c.b16 %v2381, %v2368
  %v3201 = vpack.c.b16 %v2382, %v2369
  %v3202 = vpack.c.b16 %v2383, %v2370
  %v3203 = vpack.c.b16 %v2384, %v2371
  %v3204 = vpack.c.b16 %v2385, %v2372
  %v3205 = vpack.c.b16 %v2386, %v2373
  %v3206 = vpack.c.b16 %v2387, %v2374
  %v3207 = vpack.c.b16 %v2388, %v2375
  %v3208 = vpack.c.b16 %v2389, %v2376
  %v3209 = vpack.c.b16 %v2390, %v2377
  %v3210 = vpack.c.b16 %v2391, %v2378
  %v3211 = vpack.c.b16 %v2405, %v2392
  %v3212 = vpack.c.b16 %v2406, %v2393
  %v3213 = vpack.c.b16 %v2407, %v2394
  %v3214 = vpack.c.b16 %v2408, %v2395
  %v3215 = vpack.c.b16 %v2409, %v2396
  %v3216 = vpack.c.b16 %v2410, %v2397
  %v3217 = vpack.c.b16 %v2411, %v2398
  %v3218 = vpack.c.b16 %v2412, %v2399
  %v3219 = vpack.c.b16 %v2413, %v2400
  %v3220 = vpack.c.b16 %v2414, %v2401
  %v3221 = vpack.c.b16 %v2415, %v2402
  %v3222 = vpack.c.b16 %v2416, %v2403
  %v3223 = vpack.c.b16 %v2417, %v2404
  %v3224 = vpack.c.b16 %v2431, %v2418
  %v3225 = vpack.c.b16 %v2432, %v2419
  %v3226 = vpack.c.b16 %v2433, %v2420
  %v3227 = vpack.c.b16 %v2434, %v2421
  %v3228 = vpack.c.b16 %v2435, %v2422
  %v3229 = vpack.c.b16 %v2436, %v2423
  %v3230 = vpack.c.b16 %v2437, %v2424
  %v3231 = vpack.c.b16 %v2438, %v2425
  %v3232 = vpack.c.b16 %v2439, %v2426
  %v3233 = vpack.c.b16 %v2440, %v2427
  %v3234 = vpack.c.b16 %v2441, %v2428
  %v3235 = vpack.c.b16 %v2442, %v2429
  %v3236 = vpack.c.b16 %v2443, %v2430
  %v3237 = vpack.c.b16 %v2457, %v2444
  %v3238 = vpack.c.b16 %v2458, %v2445
  %v3239 = vpack.c.b16 %v2459, %v2446
  %v3240 = vpack.c.b16 %v2460, %v2447
  %v3241 = vpack.c.b16 %v2461, %v2448
  %v3242 = vpack.c.b16 %v2462, %v2449
  %v3243 = vpack.c.b16 %v2463, %v2450
  %v3244 = vpack.c.b16 %v2464, %v2451
  %v3245 = vpack.c.b16 %v2465, %v2452
  %v3246 = vpack.c.b16 %v2466, %v2453
  %v3247 = vpack.c.b16 %v2467, %v2454
  %v3248 = vpack.c.b16 %v2468, %v2455
  %v3249 = vpack.c.b16 %v2469, %v2456
  %v3250 = vpack.c.b16 %v2483, %v2470
  %v3251 = vpack.c.b16 %v2484, %v2471
  %v3252 = vpack.c.b16 %v2485, %v2472
  %v3253 = vpack.c.b16 %v2486, %v2473
  %v3254 = vpack.c.b16 %v2487, %v2474
  %v3255 = vpack.c.b16 %v2488, %v2475
  %v3256 = vpack.c.b16 %v2489, %v2476
  %v3257 = vpack.c.b16 %v2490, %v2477
  %v3258 = vpack.c.b16 %v2491, %v2478
  %v3259 = vpack.c.b16 %v2492, %v2479
  %v3260 = vpack.c.b16 %v2493, %v2480
  %v3261 = vpack.c.b16 %v2494, %v2481
  %v3262 = vpack.c.b16 %v2495, %v2482
  %v3263 = vpack.c.b16 %v2509, %v2496
  %v3264 = vpack.c.b16 %v2510, %v2497
  %v3265 = vpack.c.b16 %v2511, %v2498
  %v3266 = vpack.c.b16 %v2512, %v2499
  %v3267 = vpack.c.b16 %v2513, %v2500
  %v3268 = vpack.c.b16 %v2514, %v2501
  %v3269 = vpack.c.b16 %v2515, %v2502
  %v3270 = vpack.c.b16 %v2516, %v2503
  %v3271 = vpack.c.b16 %v2517, %v2504
  %v3272 = vpack.c.b16 %v2518, %v2505
  %v3273 = vpack.c.b16 %v2519, %v2506
  %v3274 = vpack.c.b16 %v2520, %v2507
  %v3275 = vpack.c.b16 %v2521, %v2508
  %v3276 = vpack.c.b16 %v2535, %v2522
  %v3277 = vpack.c.b16 %v2536, %v2523
  %v3278 = vpack.c.b16 %v2537, %v2524
  %v3279 = vpack.c.b16 %v2538, %v2525
  %v3280 = vpack.c.b16 %v2539, %v2526
  %v3281 = vpack.c.b16 %v2540, %v2527
  %v3282 = vpack.c.b16 %v2541, %v2528
  %v3283 = vpack.c.b16 %v2542, %v2529
  %v3284 = vpack.c.b16 %v2543, %v2530
  %v3285 = vpack.c.b16 %v2544, %v2531
  %v3286 = vpack.c.b16 %v2545, %v2532
  %v3287 = vpack.c.b16 %v2546, %v2533
  %v3288 = vpack.c.b16 %v2547, %v2534
  %v3289 = vpack.c.b16 %v2561, %v2548
  %v3290 = vpack.c.b16 %v2562, %v2549
  %v3291 = vpack.c.b16 %v2563, %v2550
  %v3292 = vpack.c.b16 %v2564, %v2551
  %v3293 = vpack.c.b16 %v2565, %v2552
  %v3294 = vpack.c.b16 %v2566, %v2553
  %v3295 = vpack.c.b16 %v2567, %v2554
  %v3296 = vpack.c.b16 %v2568, %v2555
  %v3297 = vpack.c.b16 %v2569, %v2556
  %v3298 = vpack.c.b16 %v2570, %v2557
  %v3299 = vpack.c.b16 %v2571, %v2558
  %v3300 = vpack.c.b16 %v2572, %v2559
  %v3301 = vpack.c.b16 %v2573, %v2560
  %v3302 = vpack.c.b16 %v2587, %v2574
  %v3303 = vpack.c.b16 %v2588, %v2575
  %v3304 = vpack.c.b16 %v2589, %v2576
  %v3305 = vpack.c.b16 %v2590, %v2577
  %v3306 = vpack.c.b16 %v2591, %v2578
  %v3307 = vpack.c.b16 %v2592, %v2579
  %v3308 = vpack.c.b16 %v2593, %v2580
  %v3309 = vpack.c.b16 %v2594, %v2581
  %v3310 = vpack.c.b16 %v2595, %v2582
  %v3311 = vpack.c.b16 %v2596, %v2583
  %v3312 = vpack.c.b16 %v2597, %v2584
  %v3313 = vpack.c.b16 %v2598, %v2585
  %v3314 = vpack.c.b16 %v2599, %v2586
  %v3315 = vpack.c.b16 %v2613, %v2600
  %v3316 = vpack.c.b16 %v2614, %v2601
  %v3317 = vpack.c.b16 %v2615, %v2602
  %v3318 = vpack.c.b16 %v2616, %v2603
  %v3319 = vpack.c.b16 %v2617, %v2604
  %v3320 = vpack.c.b16 %v2618, %v2605
  %v3321 = vpack.c.b16 %v2619, %v2606
  %v3322 = vpack.c.b16 %v2620, %v2607
  %v3323 = vpack.c.b16 %v2621, %v2608
  %v3324 = vpack.c.b16 %v2622, %v2609
  %v3325 = vpack.c.b16 %v2623, %v2610
  %v3326 = vpack.c.b16 %v2624, %v2611
  %v3327 = vpack.c.b16 %v2625, %v2612
  %v3328 = vpack.c.b16 %v2639, %v2626
  %v3329 = vpack.c.b16 %v2640, %v2627
  %v3330 = vpack.c.b16 %v2641, %v2628
  %v3331 = vpack.c.b16 %v2642, %v2629
  %v3332 = vpack.c.b16 %v2643, %v2630
  %v3333 = vpack.c.b16 %v2644, %v2631
  %v3334 = vpack.c.b16 %v2645, %v2632
  %v3335 = vpack.c.b16 %v2646, %v2633
  %v3336 = vpack.c.b16 %v2647, %v2634
  %v3337 = vpack.c.b16 %v2648, %v2635
  %v3338 = vpack.c.b16 %v2649, %v2636
  %v3339 = vpack.c.b16 %v2650, %v2637
  %v3340 = vpack.c.b16 %v2651, %v2638
  %v3341 = vpack.c.b16 %v2665, %v2652
  %v3342 = vpack.c.b16 %v2666, %v2653
  %v3343 = vpack.c.b16 %v2667, %v2654
  %v3344 = vpack.c.b16 %v2668, %v2655
  %v3345 = vpack.c.b16 %v2669, %v2656
  %v3346 = vpack.c.b16 %v2670, %v2657
  %v3347 = vpack.c.b16 %v2671, %v2658
  %v3348 = vpack.c.b16 %v2672, %v2659
  %v3349 = vpack.c.b16 %v2673, %v2660
  %v3350 = vpack.c.b16 %v2674, %v2661
  %v3351 = vpack.c.b16 %v2675, %v2662
  %v3352 = vpack.c.b16 %v2676, %v2663
  %v3353 = vpack.c.b16 %v2677, %v2664
  %v3354 = vpack.c.b16 %v2691, %v2678
  %v3355 = vpack.c.b16 %v2692, %v2679
  %v3356 = vpack.c.b16 %v2693, %v2680
  %v3357 = vpack.c.b16 %v2694, %v2681
  %v3358 = vpack.c.b16 %v2695, %v2682
  %v3359 = vpack.c.b16 %v2696, %v2683
  %v3360 = vpack.c.b16 %v2697, %v2684
  %v3361 = vpack.c.b16 %v2698, %v2685
  %v3362 = vpack.c.b16 %v2699, %v2686
  %v3363 = vpack.c.b16 %v2700, %v2687
  %v3364 = vpack.c.b16 %v2701, %v2688
  %v3365 = vpack.c.b16 %v2702, %v2689
  %v3366 = vpack.c.b16 %v2703, %v2690
  %v3367 = vpack.c.b16 %v2717, %v2704
  %v3368 = vpack.c.b16 %v2718, %v2705
  %v3369 = vpack.c.b16 %v2719, %v2706
  %v3370 = vpack.c.b16 %v2720, %v2707
  %v3371 = vpack.c.b16 %v2721, %v2708
  %v3372 = vpack.c.b16 %v2722, %v2709
  %v3373 = vpack.c.b16 %v2723, %v2710
  %v3374 = vpack.c.b16 %v2724, %v2711
  %v3375 = vpack.c.b16 %v2725, %v2712
  %v3376 = vpack.c.b16 %v2726, %v2713
  %v3377 = vpack.c.b16 %v2727, %v2714
  %v3378 = vpack.c.b16 %v2728, %v2715
  %v3379 = vpack.c.b16 %v2729, %v2716
  %v3380 = vpack.c.b16 %v2743, %v2730
  %v3381 = vpack.c.b16 %v2744, %v2731
  %v3382 = vpack.c.b16 %v2745, %v2732
  %v3383 = vpack.c.b16 %v2746, %v2733
  %v3384 = vpack.c.b16 %v2747, %v2734
  %v3385 = vpack.c.b16 %v2748, %v2735
  %v3386 = vpack.c.b16 %v2749, %v2736
  %v3387 = vpack.c.b16 %v2750, %v2737
  %v3388 = vpack.c.b16 %v2751, %v2738
  %v3389 = vpack.c.b16 %v2752, %v2739
  %v3390 = vpack.c.b16 %v2753, %v2740
  %v3391 = vpack.c.b16 %v2754, %v2741
  %v3392 = vpack.c.b16 %v2755, %v2742
  %vm4030 = vcmask 130048
  %v4032 = vsel %vm4030, %v40, 0
  %4034 = vmatprep.subr.bf16.mxu0 %v2848
  %4035 = vmatpush1.bf16.msra.mxu0 %v2847
  %4036 = vmatprep.subr.bf16.mxu0 %v2835
  %4037 = vmatpush1.bf16.msra.mxu0 %v2834
  %4038 = vmatprep.subr.bf16.mxu0 %v2822
  %4039 = vmatpush1.bf16.msra.mxu0 %v2821
  %4040 = vmatprep.subr.bf16.mxu0 %v2809
  %4041 = vmatpush1.bf16.msra.mxu0 %v2808
  %4042 = vmatprep.subr.bf16.mxu0 %v2796
  %4043 = vmatpush1.bf16.msra.mxu0 %v2795
  %4044 = vmatprep.subr.bf16.mxu0 %v2783
  %4045 = vmatpush1.bf16.msra.mxu0 %v2782
  %4046 = vmatprep.subr.bf16.mxu0 %v2770
  %4047 = vmatpush1.bf16.msra.mxu0 %v2769
  %4048 = vmatprep.subr.bf16.mxu0 %v2757
  %4049 = vmatpush1.bf16.msra.mxu0 %v2756
  %4050 = vmatprep.subr.bf16.mxu0 %v2952
  %4051 = vmatpush2.bf16.msra.mxu0 %v2951
  %4052 = vmatprep.subr.bf16.mxu0 %v2939
  %4053 = vmatpush2.bf16.msra.mxu0 %v2938
  %4054 = vmatprep.subr.bf16.mxu0 %v2926
  %4055 = vmatpush2.bf16.msra.mxu0 %v2925
  %4056 = vmatprep.subr.bf16.mxu0 %v2913
  %4057 = vmatpush2.bf16.msra.mxu0 %v2912
  %4058 = vmatprep.subr.bf16.mxu0 %v2900
  %4059 = vmatpush2.bf16.msra.mxu0 %v2899
  %4060 = vmatprep.subr.bf16.mxu0 %v2887
  %4061 = vmatpush2.bf16.msra.mxu0 %v2886
  %4062 = vmatprep.subr.bf16.mxu0 %v2874
  %4063 = vmatpush2.bf16.msra.mxu0 %v2873
  %4064 = vmatprep.subr.bf16.mxu0 %v2861
  %4065 = vmatpush2.bf16.msra.mxu0 %v2860
  %4066 = vmatprep.mubr.bf16.mxu0 %v35
  %4067 = vmatmul.mubr.bf16.gmra.mxu0 %v34
  %v4068 = vpop.f32.mrf.mxu0
  %v4069 = vadd.f32 %v734, %v4068
  %v4070 = vpop.f32.mrf.mxu0
  %v4071 = vadd.f32 %v738, %v4070
  %v4072 = vpop.f32.mrf.mxu0
  %v4073 = vpop.f32.mrf.mxu0
  %4074 = vdwg.mxu0
  %4075 = vmatprep.subr.bf16.mxu0 %v3056
  %4076 = vmatpush1.bf16.msra.mxu0 %v3055
  %4077 = vmatprep.subr.bf16.mxu0 %v3043
  %4078 = vmatpush1.bf16.msra.mxu0 %v3042
  %4079 = vmatprep.subr.bf16.mxu0 %v3030
  %4080 = vmatpush1.bf16.msra.mxu0 %v3029
  %4081 = vmatprep.subr.bf16.mxu0 %v3017
  %4082 = vmatpush1.bf16.msra.mxu0 %v3016
  %4083 = vmatprep.subr.bf16.mxu0 %v3004
  %4084 = vmatpush1.bf16.msra.mxu0 %v3003
  %4085 = vmatprep.subr.bf16.mxu0 %v2991
  %4086 = vmatpush1.bf16.msra.mxu0 %v2990
  %4087 = vmatprep.subr.bf16.mxu0 %v2978
  %4088 = vmatpush1.bf16.msra.mxu0 %v2977
  %4089 = vmatprep.subr.bf16.mxu0 %v2965
  %4090 = vmatpush1.bf16.msra.mxu0 %v2964
  %4091 = vmatprep.subr.bf16.mxu0 %v3160
  %4092 = vmatpush2.bf16.msra.mxu0 %v3159
  %4093 = vmatprep.subr.bf16.mxu0 %v3147
  %4094 = vmatpush2.bf16.msra.mxu0 %v3146
  %4095 = vmatprep.subr.bf16.mxu0 %v3134
  %4096 = vmatpush2.bf16.msra.mxu0 %v3133
  %4097 = vmatprep.subr.bf16.mxu0 %v3121
  %4098 = vmatpush2.bf16.msra.mxu0 %v3120
  %4099 = vmatprep.subr.bf16.mxu0 %v3108
  %4100 = vmatpush2.bf16.msra.mxu0 %v3107
  %4101 = vmatprep.subr.bf16.mxu0 %v3095
  %4102 = vmatpush2.bf16.msra.mxu0 %v3094
  %4103 = vmatprep.subr.bf16.mxu0 %v3082
  %4104 = vmatpush2.bf16.msra.mxu0 %v3081
  %4105 = vmatprep.subr.bf16.mxu0 %v3069
  %4106 = vmatpush2.bf16.msra.mxu0 %v3068
  %4107 = vmatprep.mubr.bf16.mxu0 %v37
  %4108 = vmatmul.mubr.bf16.gmra.mxu0 %v36
  %v4109 = vpop.f32.mrf.mxu0
  %v4110 = vadd.f32 %v4069, %v4109
  %v4111 = vpop.f32.mrf.mxu0
  %v4112 = vadd.f32 %v4071, %v4111
  %v4113 = vpop.f32.mrf.mxu0
  %v4114 = vpop.f32.mrf.mxu0
  %4115 = vdwg.mxu0
  %4116 = vmatprep.subr.bf16.mxu0 %v3264
  %4117 = vmatpush1.bf16.msra.mxu0 %v3263
  %4118 = vmatprep.subr.bf16.mxu0 %v3251
  %4119 = vmatpush1.bf16.msra.mxu0 %v3250
  %4120 = vmatprep.subr.bf16.mxu0 %v3238
  %4121 = vmatpush1.bf16.msra.mxu0 %v3237
  %4122 = vmatprep.subr.bf16.mxu0 %v3225
  %4123 = vmatpush1.bf16.msra.mxu0 %v3224
  %4124 = vmatprep.subr.bf16.mxu0 %v3212
  %4125 = vmatpush1.bf16.msra.mxu0 %v3211
  %4126 = vmatprep.subr.bf16.mxu0 %v3199
  %4127 = vmatpush1.bf16.msra.mxu0 %v3198
  %4128 = vmatprep.subr.bf16.mxu0 %v3186
  %4129 = vmatpush1.bf16.msra.mxu0 %v3185
  %4130 = vmatprep.subr.bf16.mxu0 %v3173
  %4131 = vmatpush1.bf16.msra.mxu0 %v3172
  %4132 = vmatprep.subr.bf16.mxu0 %v3368
  %4133 = vmatpush2.bf16.msra.mxu0 %v3367
  %4134 = vmatprep.subr.bf16.mxu0 %v3355
  %4135 = vmatpush2.bf16.msra.mxu0 %v3354
  %4136 = vmatprep.subr.bf16.mxu0 %v3342
  %4137 = vmatpush2.bf16.msra.mxu0 %v3341
  %4138 = vmatprep.subr.bf16.mxu0 %v3329
  %4139 = vmatpush2.bf16.msra.mxu0 %v3328
  %4140 = vmatprep.subr.bf16.mxu0 %v3316
  %4141 = vmatpush2.bf16.msra.mxu0 %v3315
  %4142 = vmatprep.subr.bf16.mxu0 %v3303
  %4143 = vmatpush2.bf16.msra.mxu0 %v3302
  %4144 = vmatprep.subr.bf16.mxu0 %v3290
  %4145 = vmatpush2.bf16.msra.mxu0 %v3289
  %4146 = vmatprep.subr.bf16.mxu0 %v3277
  %4147 = vmatpush2.bf16.msra.mxu0 %v3276
  %4148 = vmatprep.mubr.bf16.mxu0 %v39
  %4149 = vmatmul.mubr.bf16.gmra.mxu0 %v38
  %v4150 = vpop.f32.mrf.mxu0
  %v4151 = vadd.f32 %v4110, %v4150
  %v4152 = vpop.f32.mrf.mxu0
  %v4153 = vadd.f32 %v4112, %v4152
  %v4154 = vpop.f32.mrf.mxu0
  %v4155 = vpop.f32.mrf.mxu0
  %4156 = vdwg.mxu0
  %4157 = vmatprep.subr.bf16.mxu0 0
  %4158 = vmatpush1.bf16.msra.mxu0 0
  %4159 = vmatprep.subr.bf16.mxu0 0
  %4160 = vmatpush1.bf16.msra.mxu0 0
  %4161 = vmatprep.subr.bf16.mxu0 0
  %4162 = vmatpush1.bf16.msra.mxu0 0
  %4163 = vmatprep.subr.bf16.mxu0 0
  %4164 = vmatpush1.bf16.msra.mxu0 0
  %4165 = vmatprep.subr.bf16.mxu0 0
  %4166 = vmatpush1.bf16.msra.mxu0 0
  %4167 = vmatprep.subr.bf16.mxu0 0
  %4168 = vmatpush1.bf16.msra.mxu0 0
  %4169 = vmatprep.subr.bf16.mxu0 0
  %4170 = vmatpush1.bf16.msra.mxu0 0
  %4171 = vmatprep.subr.bf16.mxu0 %v3381
  %4172 = vmatpush1.bf16.msra.mxu0 %v3380
  %4173 = vmatprep.subr.bf16.mxu0 0
  %4174 = vmatpush2.bf16.msra.mxu0 0
  %4175 = vmatprep.subr.bf16.mxu0 0
  %4176 = vmatpush2.bf16.msra.mxu0 0
  %4177 = vmatprep.subr.bf16.mxu0 0
  %4178 = vmatpush2.bf16.msra.mxu0 0
  %4179 = vmatprep.subr.bf16.mxu0 0
  %4180 = vmatpush2.bf16.msra.mxu0 0
  %4181 = vmatprep.subr.bf16.mxu0 0
  %4182 = vmatpush2.bf16.msra.mxu0 0
  %4183 = vmatprep.subr.bf16.mxu0 0
  %4184 = vmatpush2.bf16.msra.mxu0 0
  %4185 = vmatprep.subr.bf16.mxu0 0
  %4186 = vmatpush2.bf16.msra.mxu0 0
  %4187 = vmatprep.subr.bf16.mxu0 0
  %4188 = vmatpush2.bf16.msra.mxu0 0
  %4189 = vmatprep.mubr.bf16.mxu0 0
  %4190 = vmatmul.mubr.bf16.gmra.mxu0 %v4032
  %v4191 = vpop.f32.mrf.mxu0
  %v4192 = vadd.f32 %v4151, %v4191
  %v4193 = vpop.f32.mrf.mxu0
  %v4194 = vadd.f32 %v4153, %v4193
  %v4195 = vpop.f32.mrf.mxu0
  %v4196 = vpop.f32.mrf.mxu0
  %4197 = vdwg.mxu0
  %4198 = vmatprep.subr.bf16.mxu0 %v2850
  %4199 = vmatpush1.bf16.msra.mxu0 %v2849
  %4200 = vmatprep.subr.bf16.mxu0 %v2837
  %4201 = vmatpush1.bf16.msra.mxu0 %v2836
  %4202 = vmatprep.subr.bf16.mxu0 %v2824
  %4203 = vmatpush1.bf16.msra.mxu0 %v2823
  %4204 = vmatprep.subr.bf16.mxu0 %v2811
  %4205 = vmatpush1.bf16.msra.mxu0 %v2810
  %4206 = vmatprep.subr.bf16.mxu0 %v2798
  %4207 = vmatpush1.bf16.msra.mxu0 %v2797
  %4208 = vmatprep.subr.bf16.mxu0 %v2785
  %4209 = vmatpush1.bf16.msra.mxu0 %v2784
  %4210 = vmatprep.subr.bf16.mxu0 %v2772
  %4211 = vmatpush1.bf16.msra.mxu0 %v2771
  %4212 = vmatprep.subr.bf16.mxu0 %v2759
  %4213 = vmatpush1.bf16.msra.mxu0 %v2758
  %4214 = vmatprep.subr.bf16.mxu0 %v2954
  %4215 = vmatpush2.bf16.msra.mxu0 %v2953
  %4216 = vmatprep.subr.bf16.mxu0 %v2941
  %4217 = vmatpush2.bf16.msra.mxu0 %v2940
  %4218 = vmatprep.subr.bf16.mxu0 %v2928
  %4219 = vmatpush2.bf16.msra.mxu0 %v2927
  %4220 = vmatprep.subr.bf16.mxu0 %v2915
  %4221 = vmatpush2.bf16.msra.mxu0 %v2914
  %4222 = vmatprep.subr.bf16.mxu0 %v2902
  %4223 = vmatpush2.bf16.msra.mxu0 %v2901
  %4224 = vmatprep.subr.bf16.mxu0 %v2889
  %4225 = vmatpush2.bf16.msra.mxu0 %v2888
  %4226 = vmatprep.subr.bf16.mxu0 %v2876
  %4227 = vmatpush2.bf16.msra.mxu0 %v2875
  %4228 = vmatprep.subr.bf16.mxu0 %v2863
  %4229 = vmatpush2.bf16.msra.mxu0 %v2862
  %4230 = vmatprep.mubr.bf16.mxu0 %v35
  %4231 = vmatmul.mubr.bf16.gmra.mxu0 %v34
  %v4232 = vpop.f32.mrf.mxu0
  %v4233 = vadd.f32 %v742, %v4232
  %v4234 = vpop.f32.mrf.mxu0
  %v4235 = vadd.f32 %v746, %v4234
  %v4236 = vpop.f32.mrf.mxu0
  %v4237 = vpop.f32.mrf.mxu0
  %4238 = vdwg.mxu0
  %4239 = vmatprep.subr.bf16.mxu0 %v3058
  %4240 = vmatpush1.bf16.msra.mxu0 %v3057
  %4241 = vmatprep.subr.bf16.mxu0 %v3045
  %4242 = vmatpush1.bf16.msra.mxu0 %v3044
  %4243 = vmatprep.subr.bf16.mxu0 %v3032
  %4244 = vmatpush1.bf16.msra.mxu0 %v3031
  %4245 = vmatprep.subr.bf16.mxu0 %v3019
  %4246 = vmatpush1.bf16.msra.mxu0 %v3018
  %4247 = vmatprep.subr.bf16.mxu0 %v3006
  %4248 = vmatpush1.bf16.msra.mxu0 %v3005
  %4249 = vmatprep.subr.bf16.mxu0 %v2993
  %4250 = vmatpush1.bf16.msra.mxu0 %v2992
  %4251 = vmatprep.subr.bf16.mxu0 %v2980
  %4252 = vmatpush1.bf16.msra.mxu0 %v2979
  %4253 = vmatprep.subr.bf16.mxu0 %v2967
  %4254 = vmatpush1.bf16.msra.mxu0 %v2966
  %4255 = vmatprep.subr.bf16.mxu0 %v3162
  %4256 = vmatpush2.bf16.msra.mxu0 %v3161
  %4257 = vmatprep.subr.bf16.mxu0 %v3149
  %4258 = vmatpush2.bf16.msra.mxu0 %v3148
  %4259 = vmatprep.subr.bf16.mxu0 %v3136
  %4260 = vmatpush2.bf16.msra.mxu0 %v3135
  %4261 = vmatprep.subr.bf16.mxu0 %v3123
  %4262 = vmatpush2.bf16.msra.mxu0 %v3122
  %4263 = vmatprep.subr.bf16.mxu0 %v3110
  %4264 = vmatpush2.bf16.msra.mxu0 %v3109
  %4265 = vmatprep.subr.bf16.mxu0 %v3097
  %4266 = vmatpush2.bf16.msra.mxu0 %v3096
  %4267 = vmatprep.subr.bf16.mxu0 %v3084
  %4268 = vmatpush2.bf16.msra.mxu0 %v3083
  %4269 = vmatprep.subr.bf16.mxu0 %v3071
  %4270 = vmatpush2.bf16.msra.mxu0 %v3070
  %4271 = vmatprep.mubr.bf16.mxu0 %v37
  %4272 = vmatmul.mubr.bf16.gmra.mxu0 %v36
  %v4273 = vpop.f32.mrf.mxu0
  %v4274 = vadd.f32 %v4233, %v4273
  %v4275 = vpop.f32.mrf.mxu0
  %v4276 = vadd.f32 %v4235, %v4275
  %v4277 = vpop.f32.mrf.mxu0
  %v4278 = vpop.f32.mrf.mxu0
  %4279 = vdwg.mxu0
  %4280 = vmatprep.subr.bf16.mxu0 %v3266
  %4281 = vmatpush1.bf16.msra.mxu0 %v3265
  %4282 = vmatprep.subr.bf16.mxu0 %v3253
  %4283 = vmatpush1.bf16.msra.mxu0 %v3252
  %4284 = vmatprep.subr.bf16.mxu0 %v3240
  %4285 = vmatpush1.bf16.msra.mxu0 %v3239
  %4286 = vmatprep.subr.bf16.mxu0 %v3227
  %4287 = vmatpush1.bf16.msra.mxu0 %v3226
  %4288 = vmatprep.subr.bf16.mxu0 %v3214
  %4289 = vmatpush1.bf16.msra.mxu0 %v3213
  %4290 = vmatprep.subr.bf16.mxu0 %v3201
  %4291 = vmatpush1.bf16.msra.mxu0 %v3200
  %4292 = vmatprep.subr.bf16.mxu0 %v3188
  %4293 = vmatpush1.bf16.msra.mxu0 %v3187
  %4294 = vmatprep.subr.bf16.mxu0 %v3175
  %4295 = vmatpush1.bf16.msra.mxu0 %v3174
  %4296 = vmatprep.subr.bf16.mxu0 %v3370
  %4297 = vmatpush2.bf16.msra.mxu0 %v3369
  %4298 = vmatprep.subr.bf16.mxu0 %v3357
  %4299 = vmatpush2.bf16.msra.mxu0 %v3356
  %4300 = vmatprep.subr.bf16.mxu0 %v3344
  %4301 = vmatpush2.bf16.msra.mxu0 %v3343
  %4302 = vmatprep.subr.bf16.mxu0 %v3331
  %4303 = vmatpush2.bf16.msra.mxu0 %v3330
  %4304 = vmatprep.subr.bf16.mxu0 %v3318
  %4305 = vmatpush2.bf16.msra.mxu0 %v3317
  %4306 = vmatprep.subr.bf16.mxu0 %v3305
  %4307 = vmatpush2.bf16.msra.mxu0 %v3304
  %4308 = vmatprep.subr.bf16.mxu0 %v3292
  %4309 = vmatpush2.bf16.msra.mxu0 %v3291
  %4310 = vmatprep.subr.bf16.mxu0 %v3279
  %4311 = vmatpush2.bf16.msra.mxu0 %v3278
  %4312 = vmatprep.mubr.bf16.mxu0 %v39
  %4313 = vmatmul.mubr.bf16.gmra.mxu0 %v38
  %v4314 = vpop.f32.mrf.mxu0
  %v4315 = vadd.f32 %v4274, %v4314
  %v4316 = vpop.f32.mrf.mxu0
  %v4317 = vadd.f32 %v4276, %v4316
  %v4318 = vpop.f32.mrf.mxu0
  %v4319 = vpop.f32.mrf.mxu0
  %4320 = vdwg.mxu0
  %4321 = vmatprep.subr.bf16.mxu0 0
  %4322 = vmatpush1.bf16.msra.mxu0 0
  %4323 = vmatprep.subr.bf16.mxu0 0
  %4324 = vmatpush1.bf16.msra.mxu0 0
  %4325 = vmatprep.subr.bf16.mxu0 0
  %4326 = vmatpush1.bf16.msra.mxu0 0
  %4327 = vmatprep.subr.bf16.mxu0 0
  %4328 = vmatpush1.bf16.msra.mxu0 0
  %4329 = vmatprep.subr.bf16.mxu0 0
  %4330 = vmatpush1.bf16.msra.mxu0 0
  %4331 = vmatprep.subr.bf16.mxu0 0
  %4332 = vmatpush1.bf16.msra.mxu0 0
  %4333 = vmatprep.subr.bf16.mxu0 0
  %4334 = vmatpush1.bf16.msra.mxu0 0
  %4335 = vmatprep.subr.bf16.mxu0 %v3383
  %4336 = vmatpush1.bf16.msra.mxu0 %v3382
  %4337 = vmatprep.subr.bf16.mxu0 0
  %4338 = vmatpush2.bf16.msra.mxu0 0
  %4339 = vmatprep.subr.bf16.mxu0 0
  %4340 = vmatpush2.bf16.msra.mxu0 0
  %4341 = vmatprep.subr.bf16.mxu0 0
  %4342 = vmatpush2.bf16.msra.mxu0 0
  %4343 = vmatprep.subr.bf16.mxu0 0
  %4344 = vmatpush2.bf16.msra.mxu0 0
  %4345 = vmatprep.subr.bf16.mxu0 0
  %4346 = vmatpush2.bf16.msra.mxu0 0
  %4347 = vmatprep.subr.bf16.mxu0 0
  %4348 = vmatpush2.bf16.msra.mxu0 0
  %4349 = vmatprep.subr.bf16.mxu0 0
  %4350 = vmatpush2.bf16.msra.mxu0 0
  %4351 = vmatprep.subr.bf16.mxu0 0
  %4352 = vmatpush2.bf16.msra.mxu0 0
  %4353 = vmatprep.mubr.bf16.mxu0 0
  %4354 = vmatmul.mubr.bf16.gmra.mxu0 %v4032
  %v4355 = vpop.f32.mrf.mxu0
  %v4356 = vadd.f32 %v4315, %v4355
  %v4357 = vpop.f32.mrf.mxu0
  %v4358 = vadd.f32 %v4317, %v4357
  %v4359 = vpop.f32.mrf.mxu0
  %v4360 = vpop.f32.mrf.mxu0
  %4361 = vdwg.mxu0
  %4362 = vmatprep.subr.bf16.mxu0 %v2852
  %4363 = vmatpush1.bf16.msra.mxu0 %v2851
  %4364 = vmatprep.subr.bf16.mxu0 %v2839
  %4365 = vmatpush1.bf16.msra.mxu0 %v2838
  %4366 = vmatprep.subr.bf16.mxu0 %v2826
  %4367 = vmatpush1.bf16.msra.mxu0 %v2825
  %4368 = vmatprep.subr.bf16.mxu0 %v2813
  %4369 = vmatpush1.bf16.msra.mxu0 %v2812
  %4370 = vmatprep.subr.bf16.mxu0 %v2800
  %4371 = vmatpush1.bf16.msra.mxu0 %v2799
  %4372 = vmatprep.subr.bf16.mxu0 %v2787
  %4373 = vmatpush1.bf16.msra.mxu0 %v2786
  %4374 = vmatprep.subr.bf16.mxu0 %v2774
  %4375 = vmatpush1.bf16.msra.mxu0 %v2773
  %4376 = vmatprep.subr.bf16.mxu0 %v2761
  %4377 = vmatpush1.bf16.msra.mxu0 %v2760
  %4378 = vmatprep.subr.bf16.mxu0 %v2956
  %4379 = vmatpush2.bf16.msra.mxu0 %v2955
  %4380 = vmatprep.subr.bf16.mxu0 %v2943
  %4381 = vmatpush2.bf16.msra.mxu0 %v2942
  %4382 = vmatprep.subr.bf16.mxu0 %v2930
  %4383 = vmatpush2.bf16.msra.mxu0 %v2929
  %4384 = vmatprep.subr.bf16.mxu0 %v2917
  %4385 = vmatpush2.bf16.msra.mxu0 %v2916
  %4386 = vmatprep.subr.bf16.mxu0 %v2904
  %4387 = vmatpush2.bf16.msra.mxu0 %v2903
  %4388 = vmatprep.subr.bf16.mxu0 %v2891
  %4389 = vmatpush2.bf16.msra.mxu0 %v2890
  %4390 = vmatprep.subr.bf16.mxu0 %v2878
  %4391 = vmatpush2.bf16.msra.mxu0 %v2877
  %4392 = vmatprep.subr.bf16.mxu0 %v2865
  %4393 = vmatpush2.bf16.msra.mxu0 %v2864
  %4394 = vmatprep.mubr.bf16.mxu0 %v35
  %4395 = vmatmul.mubr.bf16.gmra.mxu0 %v34
  %v4396 = vpop.f32.mrf.mxu0
  %v4397 = vadd.f32 %v750, %v4396
  %v4398 = vpop.f32.mrf.mxu0
  %v4399 = vadd.f32 %v754, %v4398
  %v4400 = vpop.f32.mrf.mxu0
  %v4401 = vpop.f32.mrf.mxu0
  %4402 = vdwg.mxu0
  %4403 = vmatprep.subr.bf16.mxu0 %v3060
  %4404 = vmatpush1.bf16.msra.mxu0 %v3059
  %4405 = vmatprep.subr.bf16.mxu0 %v3047
  %4406 = vmatpush1.bf16.msra.mxu0 %v3046
  %4407 = vmatprep.subr.bf16.mxu0 %v3034
  %4408 = vmatpush1.bf16.msra.mxu0 %v3033
  %4409 = vmatprep.subr.bf16.mxu0 %v3021
  %4410 = vmatpush1.bf16.msra.mxu0 %v3020
  %4411 = vmatprep.subr.bf16.mxu0 %v3008
  %4412 = vmatpush1.bf16.msra.mxu0 %v3007
  %4413 = vmatprep.subr.bf16.mxu0 %v2995
  %4414 = vmatpush1.bf16.msra.mxu0 %v2994
  %4415 = vmatprep.subr.bf16.mxu0 %v2982
  %4416 = vmatpush1.bf16.msra.mxu0 %v2981
  %4417 = vmatprep.subr.bf16.mxu0 %v2969
  %4418 = vmatpush1.bf16.msra.mxu0 %v2968
  %4419 = vmatprep.subr.bf16.mxu0 %v3164
  %4420 = vmatpush2.bf16.msra.mxu0 %v3163
  %4421 = vmatprep.subr.bf16.mxu0 %v3151
  %4422 = vmatpush2.bf16.msra.mxu0 %v3150
  %4423 = vmatprep.subr.bf16.mxu0 %v3138
  %4424 = vmatpush2.bf16.msra.mxu0 %v3137
  %4425 = vmatprep.subr.bf16.mxu0 %v3125
  %4426 = vmatpush2.bf16.msra.mxu0 %v3124
  %4427 = vmatprep.subr.bf16.mxu0 %v3112
  %4428 = vmatpush2.bf16.msra.mxu0 %v3111
  %4429 = vmatprep.subr.bf16.mxu0 %v3099
  %4430 = vmatpush2.bf16.msra.mxu0 %v3098
  %4431 = vmatprep.subr.bf16.mxu0 %v3086
  %4432 = vmatpush2.bf16.msra.mxu0 %v3085
  %4433 = vmatprep.subr.bf16.mxu0 %v3073
  %4434 = vmatpush2.bf16.msra.mxu0 %v3072
  %4435 = vmatprep.mubr.bf16.mxu0 %v37
  %4436 = vmatmul.mubr.bf16.gmra.mxu0 %v36
  %v4437 = vpop.f32.mrf.mxu0
  %v4438 = vadd.f32 %v4397, %v4437
  %v4439 = vpop.f32.mrf.mxu0
  %v4440 = vadd.f32 %v4399, %v4439
  %v4441 = vpop.f32.mrf.mxu0
  %v4442 = vpop.f32.mrf.mxu0
  %4443 = vdwg.mxu0
  %4444 = vmatprep.subr.bf16.mxu0 %v3268
  %4445 = vmatpush1.bf16.msra.mxu0 %v3267
  %4446 = vmatprep.subr.bf16.mxu0 %v3255
  %4447 = vmatpush1.bf16.msra.mxu0 %v3254
  %4448 = vmatprep.subr.bf16.mxu0 %v3242
  %4449 = vmatpush1.bf16.msra.mxu0 %v3241
  %4450 = vmatprep.subr.bf16.mxu0 %v3229
  %4451 = vmatpush1.bf16.msra.mxu0 %v3228
  %4452 = vmatprep.subr.bf16.mxu0 %v3216
  %4453 = vmatpush1.bf16.msra.mxu0 %v3215
  %4454 = vmatprep.subr.bf16.mxu0 %v3203
  %4455 = vmatpush1.bf16.msra.mxu0 %v3202
  %4456 = vmatprep.subr.bf16.mxu0 %v3190
  %4457 = vmatpush1.bf16.msra.mxu0 %v3189
  %4458 = vmatprep.subr.bf16.mxu0 %v3177
  %4459 = vmatpush1.bf16.msra.mxu0 %v3176
  %4460 = vmatprep.subr.bf16.mxu0 %v3372
  %4461 = vmatpush2.bf16.msra.mxu0 %v3371
  %4462 = vmatprep.subr.bf16.mxu0 %v3359
  %4463 = vmatpush2.bf16.msra.mxu0 %v3358
  %4464 = vmatprep.subr.bf16.mxu0 %v3346
  %4465 = vmatpush2.bf16.msra.mxu0 %v3345
  %4466 = vmatprep.subr.bf16.mxu0 %v3333
  %4467 = vmatpush2.bf16.msra.mxu0 %v3332
  %4468 = vmatprep.subr.bf16.mxu0 %v3320
  %4469 = vmatpush2.bf16.msra.mxu0 %v3319
  %4470 = vmatprep.subr.bf16.mxu0 %v3307
  %4471 = vmatpush2.bf16.msra.mxu0 %v3306
  %4472 = vmatprep.subr.bf16.mxu0 %v3294
  %4473 = vmatpush2.bf16.msra.mxu0 %v3293
  %4474 = vmatprep.subr.bf16.mxu0 %v3281
  %4475 = vmatpush2.bf16.msra.mxu0 %v3280
  %4476 = vmatprep.mubr.bf16.mxu0 %v39
  %4477 = vmatmul.mubr.bf16.gmra.mxu0 %v38
  %v4478 = vpop.f32.mrf.mxu0
  %v4479 = vadd.f32 %v4438, %v4478
  %v4480 = vpop.f32.mrf.mxu0
  %v4481 = vadd.f32 %v4440, %v4480
  %v4482 = vpop.f32.mrf.mxu0
  %v4483 = vpop.f32.mrf.mxu0
  %4484 = vdwg.mxu0
  %4485 = vmatprep.subr.bf16.mxu0 0
  %4486 = vmatpush1.bf16.msra.mxu0 0
  %4487 = vmatprep.subr.bf16.mxu0 0
  %4488 = vmatpush1.bf16.msra.mxu0 0
  %4489 = vmatprep.subr.bf16.mxu0 0
  %4490 = vmatpush1.bf16.msra.mxu0 0
  %4491 = vmatprep.subr.bf16.mxu0 0
  %4492 = vmatpush1.bf16.msra.mxu0 0
  %4493 = vmatprep.subr.bf16.mxu0 0
  %4494 = vmatpush1.bf16.msra.mxu0 0
  %4495 = vmatprep.subr.bf16.mxu0 0
  %4496 = vmatpush1.bf16.msra.mxu0 0
  %4497 = vmatprep.subr.bf16.mxu0 0
  %4498 = vmatpush1.bf16.msra.mxu0 0
  %4499 = vmatprep.subr.bf16.mxu0 %v3385
  %4500 = vmatpush1.bf16.msra.mxu0 %v3384
  %4501 = vmatprep.subr.bf16.mxu0 0
  %4502 = vmatpush2.bf16.msra.mxu0 0
  %4503 = vmatprep.subr.bf16.mxu0 0
  %4504 = vmatpush2.bf16.msra.mxu0 0
  %4505 = vmatprep.subr.bf16.mxu0 0
  %4506 = vmatpush2.bf16.msra.mxu0 0
  %4507 = vmatprep.subr.bf16.mxu0 0
  %4508 = vmatpush2.bf16.msra.mxu0 0
  %4509 = vmatprep.subr.bf16.mxu0 0
  %4510 = vmatpush2.bf16.msra.mxu0 0
  %4511 = vmatprep.subr.bf16.mxu0 0
  %4512 = vmatpush2.bf16.msra.mxu0 0
  %4513 = vmatprep.subr.bf16.mxu0 0
  %4514 = vmatpush2.bf16.msra.mxu0 0
  %4515 = vmatprep.subr.bf16.mxu0 0
  %4516 = vmatpush2.bf16.msra.mxu0 0
  %4517 = vmatprep.mubr.bf16.mxu0 0
  %4518 = vmatmul.mubr.bf16.gmra.mxu0 %v4032
  %v4519 = vpop.f32.mrf.mxu0
  %v4520 = vadd.f32 %v4479, %v4519
  %v4521 = vpop.f32.mrf.mxu0
  %v4522 = vadd.f32 %v4481, %v4521
  %v4523 = vpop.f32.mrf.mxu0
  %v4524 = vpop.f32.mrf.mxu0
  %4525 = vdwg.mxu0
  %4526 = vmatprep.subr.bf16.mxu0 %v2854
  %4527 = vmatpush1.bf16.msra.mxu0 %v2853
  %4528 = vmatprep.subr.bf16.mxu0 %v2841
  %4529 = vmatpush1.bf16.msra.mxu0 %v2840
  %4530 = vmatprep.subr.bf16.mxu0 %v2828
  %4531 = vmatpush1.bf16.msra.mxu0 %v2827
  %4532 = vmatprep.subr.bf16.mxu0 %v2815
  %4533 = vmatpush1.bf16.msra.mxu0 %v2814
  %4534 = vmatprep.subr.bf16.mxu0 %v2802
  %4535 = vmatpush1.bf16.msra.mxu0 %v2801
  %4536 = vmatprep.subr.bf16.mxu0 %v2789
  %4537 = vmatpush1.bf16.msra.mxu0 %v2788
  %4538 = vmatprep.subr.bf16.mxu0 %v2776
  %4539 = vmatpush1.bf16.msra.mxu0 %v2775
  %4540 = vmatprep.subr.bf16.mxu0 %v2763
  %4541 = vmatpush1.bf16.msra.mxu0 %v2762
  %4542 = vmatprep.subr.bf16.mxu0 %v2958
  %4543 = vmatpush2.bf16.msra.mxu0 %v2957
  %4544 = vmatprep.subr.bf16.mxu0 %v2945
  %4545 = vmatpush2.bf16.msra.mxu0 %v2944
  %4546 = vmatprep.subr.bf16.mxu0 %v2932
  %4547 = vmatpush2.bf16.msra.mxu0 %v2931
  %4548 = vmatprep.subr.bf16.mxu0 %v2919
  %4549 = vmatpush2.bf16.msra.mxu0 %v2918
  %4550 = vmatprep.subr.bf16.mxu0 %v2906
  %4551 = vmatpush2.bf16.msra.mxu0 %v2905
  %4552 = vmatprep.subr.bf16.mxu0 %v2893
  %4553 = vmatpush2.bf16.msra.mxu0 %v2892
  %4554 = vmatprep.subr.bf16.mxu0 %v2880
  %4555 = vmatpush2.bf16.msra.mxu0 %v2879
  %4556 = vmatprep.subr.bf16.mxu0 %v2867
  %4557 = vmatpush2.bf16.msra.mxu0 %v2866
  %4558 = vmatprep.mubr.bf16.mxu0 %v35
  %4559 = vmatmul.mubr.bf16.gmra.mxu0 %v34
  %v4560 = vpop.f32.mrf.mxu0
  %v4561 = vadd.f32 %v758, %v4560
  %v4562 = vpop.f32.mrf.mxu0
  %v4563 = vadd.f32 %v762, %v4562
  %v4564 = vpop.f32.mrf.mxu0
  %v4565 = vpop.f32.mrf.mxu0
  %4566 = vdwg.mxu0
  %4567 = vmatprep.subr.bf16.mxu0 %v3062
  %4568 = vmatpush1.bf16.msra.mxu0 %v3061
  %4569 = vmatprep.subr.bf16.mxu0 %v3049
  %4570 = vmatpush1.bf16.msra.mxu0 %v3048
  %4571 = vmatprep.subr.bf16.mxu0 %v3036
  %4572 = vmatpush1.bf16.msra.mxu0 %v3035
  %4573 = vmatprep.subr.bf16.mxu0 %v3023
  %4574 = vmatpush1.bf16.msra.mxu0 %v3022
  %4575 = vmatprep.subr.bf16.mxu0 %v3010
  %4576 = vmatpush1.bf16.msra.mxu0 %v3009
  %4577 = vmatprep.subr.bf16.mxu0 %v2997
  %4578 = vmatpush1.bf16.msra.mxu0 %v2996
  %4579 = vmatprep.subr.bf16.mxu0 %v2984
  %4580 = vmatpush1.bf16.msra.mxu0 %v2983
  %4581 = vmatprep.subr.bf16.mxu0 %v2971
  %4582 = vmatpush1.bf16.msra.mxu0 %v2970
  %4583 = vmatprep.subr.bf16.mxu0 %v3166
  %4584 = vmatpush2.bf16.msra.mxu0 %v3165
  %4585 = vmatprep.subr.bf16.mxu0 %v3153
  %4586 = vmatpush2.bf16.msra.mxu0 %v3152
  %4587 = vmatprep.subr.bf16.mxu0 %v3140
  %4588 = vmatpush2.bf16.msra.mxu0 %v3139
  %4589 = vmatprep.subr.bf16.mxu0 %v3127
  %4590 = vmatpush2.bf16.msra.mxu0 %v3126
  %4591 = vmatprep.subr.bf16.mxu0 %v3114
  %4592 = vmatpush2.bf16.msra.mxu0 %v3113
  %4593 = vmatprep.subr.bf16.mxu0 %v3101
  %4594 = vmatpush2.bf16.msra.mxu0 %v3100
  %4595 = vmatprep.subr.bf16.mxu0 %v3088
  %4596 = vmatpush2.bf16.msra.mxu0 %v3087
  %4597 = vmatprep.subr.bf16.mxu0 %v3075
  %4598 = vmatpush2.bf16.msra.mxu0 %v3074
  %4599 = vmatprep.mubr.bf16.mxu0 %v37
  %4600 = vmatmul.mubr.bf16.gmra.mxu0 %v36
  %v4601 = vpop.f32.mrf.mxu0
  %v4602 = vadd.f32 %v4561, %v4601
  %v4603 = vpop.f32.mrf.mxu0
  %v4604 = vadd.f32 %v4563, %v4603
  %v4605 = vpop.f32.mrf.mxu0
  %v4606 = vpop.f32.mrf.mxu0
  %4607 = vdwg.mxu0
  %4608 = vmatprep.subr.bf16.mxu0 %v3270
  %4609 = vmatpush1.bf16.msra.mxu0 %v3269
  %4610 = vmatprep.subr.bf16.mxu0 %v3257
  %4611 = vmatpush1.bf16.msra.mxu0 %v3256
  %4612 = vmatprep.subr.bf16.mxu0 %v3244
  %4613 = vmatpush1.bf16.msra.mxu0 %v3243
  %4614 = vmatprep.subr.bf16.mxu0 %v3231
  %4615 = vmatpush1.bf16.msra.mxu0 %v3230
  %4616 = vmatprep.subr.bf16.mxu0 %v3218
  %4617 = vmatpush1.bf16.msra.mxu0 %v3217
  %4618 = vmatprep.subr.bf16.mxu0 %v3205
  %4619 = vmatpush1.bf16.msra.mxu0 %v3204
  %4620 = vmatprep.subr.bf16.mxu0 %v3192
  %4621 = vmatpush1.bf16.msra.mxu0 %v3191
  %4622 = vmatprep.subr.bf16.mxu0 %v3179
  %4623 = vmatpush1.bf16.msra.mxu0 %v3178
  %4624 = vmatprep.subr.bf16.mxu0 %v3374
  %4625 = vmatpush2.bf16.msra.mxu0 %v3373
  %4626 = vmatprep.subr.bf16.mxu0 %v3361
  %4627 = vmatpush2.bf16.msra.mxu0 %v3360
  %4628 = vmatprep.subr.bf16.mxu0 %v3348
  %4629 = vmatpush2.bf16.msra.mxu0 %v3347
  %4630 = vmatprep.subr.bf16.mxu0 %v3335
  %4631 = vmatpush2.bf16.msra.mxu0 %v3334
  %4632 = vmatprep.subr.bf16.mxu0 %v3322
  %4633 = vmatpush2.bf16.msra.mxu0 %v3321
  %4634 = vmatprep.subr.bf16.mxu0 %v3309
  %4635 = vmatpush2.bf16.msra.mxu0 %v3308
  %4636 = vmatprep.subr.bf16.mxu0 %v3296
  %4637 = vmatpush2.bf16.msra.mxu0 %v3295
  %4638 = vmatprep.subr.bf16.mxu0 %v3283
  %4639 = vmatpush2.bf16.msra.mxu0 %v3282
  %4640 = vmatprep.mubr.bf16.mxu0 %v39
  %4641 = vmatmul.mubr.bf16.gmra.mxu0 %v38
  %v4642 = vpop.f32.mrf.mxu0
  %v4643 = vadd.f32 %v4602, %v4642
  %v4644 = vpop.f32.mrf.mxu0
  %v4645 = vadd.f32 %v4604, %v4644
  %v4646 = vpop.f32.mrf.mxu0
  %v4647 = vpop.f32.mrf.mxu0
  %4648 = vdwg.mxu0
  %4649 = vmatprep.subr.bf16.mxu0 0
  %4650 = vmatpush1.bf16.msra.mxu0 0
  %4651 = vmatprep.subr.bf16.mxu0 0
  %4652 = vmatpush1.bf16.msra.mxu0 0
  %4653 = vmatprep.subr.bf16.mxu0 0
  %4654 = vmatpush1.bf16.msra.mxu0 0
  %4655 = vmatprep.subr.bf16.mxu0 0
  %4656 = vmatpush1.bf16.msra.mxu0 0
  %4657 = vmatprep.subr.bf16.mxu0 0
  %4658 = vmatpush1.bf16.msra.mxu0 0
  %4659 = vmatprep.subr.bf16.mxu0 0
  %4660 = vmatpush1.bf16.msra.mxu0 0
  %4661 = vmatprep.subr.bf16.mxu0 0
  %4662 = vmatpush1.bf16.msra.mxu0 0
  %4663 = vmatprep.subr.bf16.mxu0 %v3387
  %4664 = vmatpush1.bf16.msra.mxu0 %v3386
  %4665 = vmatprep.subr.bf16.mxu0 0
  %4666 = vmatpush2.bf16.msra.mxu0 0
  %4667 = vmatprep.subr.bf16.mxu0 0
  %4668 = vmatpush2.bf16.msra.mxu0 0
  %4669 = vmatprep.subr.bf16.mxu0 0
  %4670 = vmatpush2.bf16.msra.mxu0 0
  %4671 = vmatprep.subr.bf16.mxu0 0
  %4672 = vmatpush2.bf16.msra.mxu0 0
  %4673 = vmatprep.subr.bf16.mxu0 0
  %4674 = vmatpush2.bf16.msra.mxu0 0
  %4675 = vmatprep.subr.bf16.mxu0 0
  %4676 = vmatpush2.bf16.msra.mxu0 0
  %4677 = vmatprep.subr.bf16.mxu0 0
  %4678 = vmatpush2.bf16.msra.mxu0 0
  %4679 = vmatprep.subr.bf16.mxu0 0
  %4680 = vmatpush2.bf16.msra.mxu0 0
  %4681 = vmatprep.mubr.bf16.mxu0 0
  %4682 = vmatmul.mubr.bf16.gmra.mxu0 %v4032
  %v4683 = vpop.f32.mrf.mxu0
  %v4684 = vadd.f32 %v4643, %v4683
  %v4685 = vpop.f32.mrf.mxu0
  %v4686 = vadd.f32 %v4645, %v4685
  %v4687 = vpop.f32.mrf.mxu0
  %v4688 = vpop.f32.mrf.mxu0
  %4689 = vdwg.mxu0
  %4690 = vmatprep.subr.bf16.mxu0 %v2856
  %4691 = vmatpush1.bf16.msra.mxu0 %v2855
  %4692 = vmatprep.subr.bf16.mxu0 %v2843
  %4693 = vmatpush1.bf16.msra.mxu0 %v2842
  %4694 = vmatprep.subr.bf16.mxu0 %v2830
  %4695 = vmatpush1.bf16.msra.mxu0 %v2829
  %4696 = vmatprep.subr.bf16.mxu0 %v2817
  %4697 = vmatpush1.bf16.msra.mxu0 %v2816
  %4698 = vmatprep.subr.bf16.mxu0 %v2804
  %4699 = vmatpush1.bf16.msra.mxu0 %v2803
  %4700 = vmatprep.subr.bf16.mxu0 %v2791
  %4701 = vmatpush1.bf16.msra.mxu0 %v2790
  %4702 = vmatprep.subr.bf16.mxu0 %v2778
  %4703 = vmatpush1.bf16.msra.mxu0 %v2777
  %4704 = vmatprep.subr.bf16.mxu0 %v2765
  %4705 = vmatpush1.bf16.msra.mxu0 %v2764
  %4706 = vmatprep.subr.bf16.mxu0 %v2960
  %4707 = vmatpush2.bf16.msra.mxu0 %v2959
  %4708 = vmatprep.subr.bf16.mxu0 %v2947
  %4709 = vmatpush2.bf16.msra.mxu0 %v2946
  %4710 = vmatprep.subr.bf16.mxu0 %v2934
  %4711 = vmatpush2.bf16.msra.mxu0 %v2933
  %4712 = vmatprep.subr.bf16.mxu0 %v2921
  %4713 = vmatpush2.bf16.msra.mxu0 %v2920
  %4714 = vmatprep.subr.bf16.mxu0 %v2908
  %4715 = vmatpush2.bf16.msra.mxu0 %v2907
  %4716 = vmatprep.subr.bf16.mxu0 %v2895
  %4717 = vmatpush2.bf16.msra.mxu0 %v2894
  %4718 = vmatprep.subr.bf16.mxu0 %v2882
  %4719 = vmatpush2.bf16.msra.mxu0 %v2881
  %4720 = vmatprep.subr.bf16.mxu0 %v2869
  %4721 = vmatpush2.bf16.msra.mxu0 %v2868
  %4722 = vmatprep.mubr.bf16.mxu0 %v35
  %4723 = vmatmul.mubr.bf16.gmra.mxu0 %v34
  %v4724 = vpop.f32.mrf.mxu0
  %v4725 = vadd.f32 %v766, %v4724
  %v4726 = vpop.f32.mrf.mxu0
  %v4727 = vadd.f32 %v770, %v4726
  %v4728 = vpop.f32.mrf.mxu0
  %v4729 = vpop.f32.mrf.mxu0
  %4730 = vdwg.mxu0
  %4731 = vmatprep.subr.bf16.mxu0 %v3064
  %4732 = vmatpush1.bf16.msra.mxu0 %v3063
  %4733 = vmatprep.subr.bf16.mxu0 %v3051
  %4734 = vmatpush1.bf16.msra.mxu0 %v3050
  %4735 = vmatprep.subr.bf16.mxu0 %v3038
  %4736 = vmatpush1.bf16.msra.mxu0 %v3037
  %4737 = vmatprep.subr.bf16.mxu0 %v3025
  %4738 = vmatpush1.bf16.msra.mxu0 %v3024
  %4739 = vmatprep.subr.bf16.mxu0 %v3012
  %4740 = vmatpush1.bf16.msra.mxu0 %v3011
  %4741 = vmatprep.subr.bf16.mxu0 %v2999
  %4742 = vmatpush1.bf16.msra.mxu0 %v2998
  %4743 = vmatprep.subr.bf16.mxu0 %v2986
  %4744 = vmatpush1.bf16.msra.mxu0 %v2985
  %4745 = vmatprep.subr.bf16.mxu0 %v2973
  %4746 = vmatpush1.bf16.msra.mxu0 %v2972
  %4747 = vmatprep.subr.bf16.mxu0 %v3168
  %4748 = vmatpush2.bf16.msra.mxu0 %v3167
  %4749 = vmatprep.subr.bf16.mxu0 %v3155
  %4750 = vmatpush2.bf16.msra.mxu0 %v3154
  %4751 = vmatprep.subr.bf16.mxu0 %v3142
  %4752 = vmatpush2.bf16.msra.mxu0 %v3141
  %4753 = vmatprep.subr.bf16.mxu0 %v3129
  %4754 = vmatpush2.bf16.msra.mxu0 %v3128
  %4755 = vmatprep.subr.bf16.mxu0 %v3116
  %4756 = vmatpush2.bf16.msra.mxu0 %v3115
  %4757 = vmatprep.subr.bf16.mxu0 %v3103
  %4758 = vmatpush2.bf16.msra.mxu0 %v3102
  %4759 = vmatprep.subr.bf16.mxu0 %v3090
  %4760 = vmatpush2.bf16.msra.mxu0 %v3089
  %4761 = vmatprep.subr.bf16.mxu0 %v3077
  %4762 = vmatpush2.bf16.msra.mxu0 %v3076
  %4763 = vmatprep.mubr.bf16.mxu0 %v37
  %4764 = vmatmul.mubr.bf16.gmra.mxu0 %v36
  %v4765 = vpop.f32.mrf.mxu0
  %v4766 = vadd.f32 %v4725, %v4765
  %v4767 = vpop.f32.mrf.mxu0
  %v4768 = vadd.f32 %v4727, %v4767
  %v4769 = vpop.f32.mrf.mxu0
  %v4770 = vpop.f32.mrf.mxu0
  %4771 = vdwg.mxu0
  %4772 = vmatprep.subr.bf16.mxu0 %v3272
  %4773 = vmatpush1.bf16.msra.mxu0 %v3271
  %4774 = vmatprep.subr.bf16.mxu0 %v3259
  %4775 = vmatpush1.bf16.msra.mxu0 %v3258
  %4776 = vmatprep.subr.bf16.mxu0 %v3246
  %4777 = vmatpush1.bf16.msra.mxu0 %v3245
  %4778 = vmatprep.subr.bf16.mxu0 %v3233
  %4779 = vmatpush1.bf16.msra.mxu0 %v3232
  %4780 = vmatprep.subr.bf16.mxu0 %v3220
  %4781 = vmatpush1.bf16.msra.mxu0 %v3219
  %4782 = vmatprep.subr.bf16.mxu0 %v3207
  %4783 = vmatpush1.bf16.msra.mxu0 %v3206
  %4784 = vmatprep.subr.bf16.mxu0 %v3194
  %4785 = vmatpush1.bf16.msra.mxu0 %v3193
  %4786 = vmatprep.subr.bf16.mxu0 %v3181
  %4787 = vmatpush1.bf16.msra.mxu0 %v3180
  %4788 = vmatprep.subr.bf16.mxu0 %v3376
  %4789 = vmatpush2.bf16.msra.mxu0 %v3375
  %4790 = vmatprep.subr.bf16.mxu0 %v3363
  %4791 = vmatpush2.bf16.msra.mxu0 %v3362
  %4792 = vmatprep.subr.bf16.mxu0 %v3350
  %4793 = vmatpush2.bf16.msra.mxu0 %v3349
  %4794 = vmatprep.subr.bf16.mxu0 %v3337
  %4795 = vmatpush2.bf16.msra.mxu0 %v3336
  %4796 = vmatprep.subr.bf16.mxu0 %v3324
  %4797 = vmatpush2.bf16.msra.mxu0 %v3323
  %4798 = vmatprep.subr.bf16.mxu0 %v3311
  %4799 = vmatpush2.bf16.msra.mxu0 %v3310
  %4800 = vmatprep.subr.bf16.mxu0 %v3298
  %4801 = vmatpush2.bf16.msra.mxu0 %v3297
  %4802 = vmatprep.subr.bf16.mxu0 %v3285
  %4803 = vmatpush2.bf16.msra.mxu0 %v3284
  %4804 = vmatprep.mubr.bf16.mxu0 %v39
  %4805 = vmatmul.mubr.bf16.gmra.mxu0 %v38
  %v4806 = vpop.f32.mrf.mxu0
  %v4807 = vadd.f32 %v4766, %v4806
  %v4808 = vpop.f32.mrf.mxu0
  %v4809 = vadd.f32 %v4768, %v4808
  %v4810 = vpop.f32.mrf.mxu0
  %v4811 = vpop.f32.mrf.mxu0
  %4812 = vdwg.mxu0
  %4813 = vmatprep.subr.bf16.mxu0 0
  %4814 = vmatpush1.bf16.msra.mxu0 0
  %4815 = vmatprep.subr.bf16.mxu0 0
  %4816 = vmatpush1.bf16.msra.mxu0 0
  %4817 = vmatprep.subr.bf16.mxu0 0
  %4818 = vmatpush1.bf16.msra.mxu0 0
  %4819 = vmatprep.subr.bf16.mxu0 0
  %4820 = vmatpush1.bf16.msra.mxu0 0
  %4821 = vmatprep.subr.bf16.mxu0 0
  %4822 = vmatpush1.bf16.msra.mxu0 0
  %4823 = vmatprep.subr.bf16.mxu0 0
  %4824 = vmatpush1.bf16.msra.mxu0 0
  %4825 = vmatprep.subr.bf16.mxu0 0
  %4826 = vmatpush1.bf16.msra.mxu0 0
  %4827 = vmatprep.subr.bf16.mxu0 %v3389
  %4828 = vmatpush1.bf16.msra.mxu0 %v3388
  %4829 = vmatprep.subr.bf16.mxu0 0
  %4830 = vmatpush2.bf16.msra.mxu0 0
  %4831 = vmatprep.subr.bf16.mxu0 0
  %4832 = vmatpush2.bf16.msra.mxu0 0
  %4833 = vmatprep.subr.bf16.mxu0 0
  %4834 = vmatpush2.bf16.msra.mxu0 0
  %4835 = vmatprep.subr.bf16.mxu0 0
  %4836 = vmatpush2.bf16.msra.mxu0 0
  %4837 = vmatprep.subr.bf16.mxu0 0
  %4838 = vmatpush2.bf16.msra.mxu0 0
  %4839 = vmatprep.subr.bf16.mxu0 0
  %4840 = vmatpush2.bf16.msra.mxu0 0
  %4841 = vmatprep.subr.bf16.mxu0 0
  %4842 = vmatpush2.bf16.msra.mxu0 0
  %4843 = vmatprep.subr.bf16.mxu0 0
  %4844 = vmatpush2.bf16.msra.mxu0 0
  %4845 = vmatprep.mubr.bf16.mxu0 0
  %4846 = vmatmul.mubr.bf16.gmra.mxu0 %v4032
  %v4847 = vpop.f32.mrf.mxu0
  %v4848 = vadd.f32 %v4807, %v4847
  %v4849 = vpop.f32.mrf.mxu0
  %v4850 = vadd.f32 %v4809, %v4849
  %v4851 = vpop.f32.mrf.mxu0
  %v4852 = vpop.f32.mrf.mxu0
  %4853 = vdwg.mxu0
  %4854 = vmatprep.subr.bf16.mxu0 %v2858
  %4855 = vmatpush1.bf16.msra.mxu0 %v2857
  %4856 = vmatprep.subr.bf16.mxu0 %v2845
  %4857 = vmatpush1.bf16.msra.mxu0 %v2844
  %4858 = vmatprep.subr.bf16.mxu0 %v2832
  %4859 = vmatpush1.bf16.msra.mxu0 %v2831
  %4860 = vmatprep.subr.bf16.mxu0 %v2819
  %4861 = vmatpush1.bf16.msra.mxu0 %v2818
  %4862 = vmatprep.subr.bf16.mxu0 %v2806
  %4863 = vmatpush1.bf16.msra.mxu0 %v2805
  %4864 = vmatprep.subr.bf16.mxu0 %v2793
  %4865 = vmatpush1.bf16.msra.mxu0 %v2792
  %4866 = vmatprep.subr.bf16.mxu0 %v2780
  %4867 = vmatpush1.bf16.msra.mxu0 %v2779
  %4868 = vmatprep.subr.bf16.mxu0 %v2767
  %4869 = vmatpush1.bf16.msra.mxu0 %v2766
  %4870 = vmatprep.subr.bf16.mxu0 %v2962
  %4871 = vmatpush2.bf16.msra.mxu0 %v2961
  %4872 = vmatprep.subr.bf16.mxu0 %v2949
  %4873 = vmatpush2.bf16.msra.mxu0 %v2948
  %4874 = vmatprep.subr.bf16.mxu0 %v2936
  %4875 = vmatpush2.bf16.msra.mxu0 %v2935
  %4876 = vmatprep.subr.bf16.mxu0 %v2923
  %4877 = vmatpush2.bf16.msra.mxu0 %v2922
  %4878 = vmatprep.subr.bf16.mxu0 %v2910
  %4879 = vmatpush2.bf16.msra.mxu0 %v2909
  %4880 = vmatprep.subr.bf16.mxu0 %v2897
  %4881 = vmatpush2.bf16.msra.mxu0 %v2896
  %4882 = vmatprep.subr.bf16.mxu0 %v2884
  %4883 = vmatpush2.bf16.msra.mxu0 %v2883
  %4884 = vmatprep.subr.bf16.mxu0 %v2871
  %4885 = vmatpush2.bf16.msra.mxu0 %v2870
  %4886 = vmatprep.mubr.bf16.mxu0 %v35
  %4887 = vmatmul.mubr.bf16.gmra.mxu0 %v34
  %v4888 = vpop.f32.mrf.mxu0
  %v4889 = vadd.f32 %v774, %v4888
  %v4890 = vpop.f32.mrf.mxu0
  %v4891 = vadd.f32 %v778, %v4890
  %v4892 = vpop.f32.mrf.mxu0
  %v4893 = vpop.f32.mrf.mxu0
  %4894 = vdwg.mxu0
  %4895 = vmatprep.subr.bf16.mxu0 %v3066
  %4896 = vmatpush1.bf16.msra.mxu0 %v3065
  %4897 = vmatprep.subr.bf16.mxu0 %v3053
  %4898 = vmatpush1.bf16.msra.mxu0 %v3052
  %4899 = vmatprep.subr.bf16.mxu0 %v3040
  %4900 = vmatpush1.bf16.msra.mxu0 %v3039
  %4901 = vmatprep.subr.bf16.mxu0 %v3027
  %4902 = vmatpush1.bf16.msra.mxu0 %v3026
  %4903 = vmatprep.subr.bf16.mxu0 %v3014
  %4904 = vmatpush1.bf16.msra.mxu0 %v3013
  %4905 = vmatprep.subr.bf16.mxu0 %v3001
  %4906 = vmatpush1.bf16.msra.mxu0 %v3000
  %4907 = vmatprep.subr.bf16.mxu0 %v2988
  %4908 = vmatpush1.bf16.msra.mxu0 %v2987
  %4909 = vmatprep.subr.bf16.mxu0 %v2975
  %4910 = vmatpush1.bf16.msra.mxu0 %v2974
  %4911 = vmatprep.subr.bf16.mxu0 %v3170
  %4912 = vmatpush2.bf16.msra.mxu0 %v3169
  %4913 = vmatprep.subr.bf16.mxu0 %v3157
  %4914 = vmatpush2.bf16.msra.mxu0 %v3156
  %4915 = vmatprep.subr.bf16.mxu0 %v3144
  %4916 = vmatpush2.bf16.msra.mxu0 %v3143
  %4917 = vmatprep.subr.bf16.mxu0 %v3131
  %4918 = vmatpush2.bf16.msra.mxu0 %v3130
  %4919 = vmatprep.subr.bf16.mxu0 %v3118
  %4920 = vmatpush2.bf16.msra.mxu0 %v3117
  %4921 = vmatprep.subr.bf16.mxu0 %v3105
  %4922 = vmatpush2.bf16.msra.mxu0 %v3104
  %4923 = vmatprep.subr.bf16.mxu0 %v3092
  %4924 = vmatpush2.bf16.msra.mxu0 %v3091
  %4925 = vmatprep.subr.bf16.mxu0 %v3079
  %4926 = vmatpush2.bf16.msra.mxu0 %v3078
  %4927 = vmatprep.mubr.bf16.mxu0 %v37
  %4928 = vmatmul.mubr.bf16.gmra.mxu0 %v36
  %v4929 = vpop.f32.mrf.mxu0
  %v4930 = vadd.f32 %v4889, %v4929
  %v4931 = vpop.f32.mrf.mxu0
  %v4932 = vadd.f32 %v4891, %v4931
  %v4933 = vpop.f32.mrf.mxu0
  %v4934 = vpop.f32.mrf.mxu0
  %4935 = vdwg.mxu0
  %4936 = vmatprep.subr.bf16.mxu0 %v3274
  %4937 = vmatpush1.bf16.msra.mxu0 %v3273
  %4938 = vmatprep.subr.bf16.mxu0 %v3261
  %4939 = vmatpush1.bf16.msra.mxu0 %v3260
  %4940 = vmatprep.subr.bf16.mxu0 %v3248
  %4941 = vmatpush1.bf16.msra.mxu0 %v3247
  %4942 = vmatprep.subr.bf16.mxu0 %v3235
  %4943 = vmatpush1.bf16.msra.mxu0 %v3234
  %4944 = vmatprep.subr.bf16.mxu0 %v3222
  %4945 = vmatpush1.bf16.msra.mxu0 %v3221
  %4946 = vmatprep.subr.bf16.mxu0 %v3209
  %4947 = vmatpush1.bf16.msra.mxu0 %v3208
  %4948 = vmatprep.subr.bf16.mxu0 %v3196
  %4949 = vmatpush1.bf16.msra.mxu0 %v3195
  %4950 = vmatprep.subr.bf16.mxu0 %v3183
  %4951 = vmatpush1.bf16.msra.mxu0 %v3182
  %4952 = vmatprep.subr.bf16.mxu0 %v3378
  %4953 = vmatpush2.bf16.msra.mxu0 %v3377
  %4954 = vmatprep.subr.bf16.mxu0 %v3365
  %4955 = vmatpush2.bf16.msra.mxu0 %v3364
  %4956 = vmatprep.subr.bf16.mxu0 %v3352
  %4957 = vmatpush2.bf16.msra.mxu0 %v3351
  %4958 = vmatprep.subr.bf16.mxu0 %v3339
  %4959 = vmatpush2.bf16.msra.mxu0 %v3338
  %4960 = vmatprep.subr.bf16.mxu0 %v3326
  %4961 = vmatpush2.bf16.msra.mxu0 %v3325
  %4962 = vmatprep.subr.bf16.mxu0 %v3313
  %4963 = vmatpush2.bf16.msra.mxu0 %v3312
  %4964 = vmatprep.subr.bf16.mxu0 %v3300
  %4965 = vmatpush2.bf16.msra.mxu0 %v3299
  %4966 = vmatprep.subr.bf16.mxu0 %v3287
  %4967 = vmatpush2.bf16.msra.mxu0 %v3286
  %4968 = vmatprep.mubr.bf16.mxu0 %v39
  %4969 = vmatmul.mubr.bf16.gmra.mxu0 %v38
  %v4970 = vpop.f32.mrf.mxu0
  %v4971 = vadd.f32 %v4930, %v4970
  %v4972 = vpop.f32.mrf.mxu0
  %v4973 = vadd.f32 %v4932, %v4972
  %v4974 = vpop.f32.mrf.mxu0
  %v4975 = vpop.f32.mrf.mxu0
  %4976 = vdwg.mxu0
  %4977 = vmatprep.subr.bf16.mxu0 0
  %4978 = vmatpush1.bf16.msra.mxu0 0
  %4979 = vmatprep.subr.bf16.mxu0 0
  %4980 = vmatpush1.bf16.msra.mxu0 0
  %4981 = vmatprep.subr.bf16.mxu0 0
  %4982 = vmatpush1.bf16.msra.mxu0 0
  %4983 = vmatprep.subr.bf16.mxu0 0
  %4984 = vmatpush1.bf16.msra.mxu0 0
  %4985 = vmatprep.subr.bf16.mxu0 0
  %4986 = vmatpush1.bf16.msra.mxu0 0
  %4987 = vmatprep.subr.bf16.mxu0 0
  %4988 = vmatpush1.bf16.msra.mxu0 0
  %4989 = vmatprep.subr.bf16.mxu0 0
  %4990 = vmatpush1.bf16.msra.mxu0 0
  %4991 = vmatprep.subr.bf16.mxu0 %v3391
  %4992 = vmatpush1.bf16.msra.mxu0 %v3390
  %4993 = vmatprep.subr.bf16.mxu0 0
  %4994 = vmatpush2.bf16.msra.mxu0 0
  %4995 = vmatprep.subr.bf16.mxu0 0
  %4996 = vmatpush2.bf16.msra.mxu0 0
  %4997 = vmatprep.subr.bf16.mxu0 0
  %4998 = vmatpush2.bf16.msra.mxu0 0
  %4999 = vmatprep.subr.bf16.mxu0 0
  %5000 = vmatpush2.bf16.msra.mxu0 0
  %5001 = vmatprep.subr.bf16.mxu0 0
  %5002 = vmatpush2.bf16.msra.mxu0 0
  %5003 = vmatprep.subr.bf16.mxu0 0
  %5004 = vmatpush2.bf16.msra.mxu0 0
  %5005 = vmatprep.subr.bf16.mxu0 0
  %5006 = vmatpush2.bf16.msra.mxu0 0
  %5007 = vmatprep.subr.bf16.mxu0 0
  %5008 = vmatpush2.bf16.msra.mxu0 0
  %5009 = vmatprep.mubr.bf16.mxu0 0
  %5010 = vmatmul.mubr.bf16.gmra.mxu0 %v4032
  %v5011 = vpop.f32.mrf.mxu0
  %v5012 = vadd.f32 %v4971, %v5011
  %v5013 = vpop.f32.mrf.mxu0
  %v5014 = vadd.f32 %v4973, %v5013
  %v5015 = vpop.f32.mrf.mxu0
  %v5016 = vpop.f32.mrf.mxu0
  %5017 = vdwg.mxu0
  %5018 = vmatprep.subr.bf16.mxu0 0
  %5019 = vmatpush1.bf16.msra.mxu0 %v2859
  %5020 = vmatprep.subr.bf16.mxu0 0
  %5021 = vmatpush1.bf16.msra.mxu0 %v2846
  %5022 = vmatprep.subr.bf16.mxu0 0
  %5023 = vmatpush1.bf16.msra.mxu0 %v2833
  %5024 = vmatprep.subr.bf16.mxu0 0
  %5025 = vmatpush1.bf16.msra.mxu0 %v2820
  %5026 = vmatprep.subr.bf16.mxu0 0
  %5027 = vmatpush1.bf16.msra.mxu0 %v2807
  %5028 = vmatprep.subr.bf16.mxu0 0
  %5029 = vmatpush1.bf16.msra.mxu0 %v2794
  %5030 = vmatprep.subr.bf16.mxu0 0
  %5031 = vmatpush1.bf16.msra.mxu0 %v2781
  %5032 = vmatprep.subr.bf16.mxu0 0
  %5033 = vmatpush1.bf16.msra.mxu0 %v2768
  %5034 = vmatprep.subr.bf16.mxu0 0
  %5035 = vmatpush2.bf16.msra.mxu0 %v2963
  %5036 = vmatprep.subr.bf16.mxu0 0
  %5037 = vmatpush2.bf16.msra.mxu0 %v2950
  %5038 = vmatprep.subr.bf16.mxu0 0
  %5039 = vmatpush2.bf16.msra.mxu0 %v2937
  %5040 = vmatprep.subr.bf16.mxu0 0
  %5041 = vmatpush2.bf16.msra.mxu0 %v2924
  %5042 = vmatprep.subr.bf16.mxu0 0
  %5043 = vmatpush2.bf16.msra.mxu0 %v2911
  %5044 = vmatprep.subr.bf16.mxu0 0
  %5045 = vmatpush2.bf16.msra.mxu0 %v2898
  %5046 = vmatprep.subr.bf16.mxu0 0
  %5047 = vmatpush2.bf16.msra.mxu0 %v2885
  %5048 = vmatprep.subr.bf16.mxu0 0
  %5049 = vmatpush2.bf16.msra.mxu0 %v2872
  %5050 = vmatprep.mubr.bf16.mxu0 %v35
  %5051 = vmatmul.mubr.bf16.gmra.mxu0 %v34
  %v5052 = vpop.f32.mrf.mxu0
  %v5053 = vadd.f32 %v782, %v5052
  %v5054 = vpop.f32.mrf.mxu0
  %v5055 = vpop.f32.mrf.mxu0
  %v5056 = vpop.f32.mrf.mxu0
  %5057 = vdwg.mxu0
  %5058 = vmatprep.subr.bf16.mxu0 0
  %5059 = vmatpush1.bf16.msra.mxu0 %v3067
  %5060 = vmatprep.subr.bf16.mxu0 0
  %5061 = vmatpush1.bf16.msra.mxu0 %v3054
  %5062 = vmatprep.subr.bf16.mxu0 0
  %5063 = vmatpush1.bf16.msra.mxu0 %v3041
  %5064 = vmatprep.subr.bf16.mxu0 0
  %5065 = vmatpush1.bf16.msra.mxu0 %v3028
  %5066 = vmatprep.subr.bf16.mxu0 0
  %5067 = vmatpush1.bf16.msra.mxu0 %v3015
  %5068 = vmatprep.subr.bf16.mxu0 0
  %5069 = vmatpush1.bf16.msra.mxu0 %v3002
  %5070 = vmatprep.subr.bf16.mxu0 0
  %5071 = vmatpush1.bf16.msra.mxu0 %v2989
  %5072 = vmatprep.subr.bf16.mxu0 0
  %5073 = vmatpush1.bf16.msra.mxu0 %v2976
  %5074 = vmatprep.subr.bf16.mxu0 0
  %5075 = vmatpush2.bf16.msra.mxu0 %v3171
  %5076 = vmatprep.subr.bf16.mxu0 0
  %5077 = vmatpush2.bf16.msra.mxu0 %v3158
  %5078 = vmatprep.subr.bf16.mxu0 0
  %5079 = vmatpush2.bf16.msra.mxu0 %v3145
  %5080 = vmatprep.subr.bf16.mxu0 0
  %5081 = vmatpush2.bf16.msra.mxu0 %v3132
  %5082 = vmatprep.subr.bf16.mxu0 0
  %5083 = vmatpush2.bf16.msra.mxu0 %v3119
  %5084 = vmatprep.subr.bf16.mxu0 0
  %5085 = vmatpush2.bf16.msra.mxu0 %v3106
  %5086 = vmatprep.subr.bf16.mxu0 0
  %5087 = vmatpush2.bf16.msra.mxu0 %v3093
  %5088 = vmatprep.subr.bf16.mxu0 0
  %5089 = vmatpush2.bf16.msra.mxu0 %v3080
  %5090 = vmatprep.mubr.bf16.mxu0 %v37
  %5091 = vmatmul.mubr.bf16.gmra.mxu0 %v36
  %v5092 = vpop.f32.mrf.mxu0
  %v5093 = vadd.f32 %v5053, %v5092
  %v5094 = vpop.f32.mrf.mxu0
  %v5095 = vpop.f32.mrf.mxu0
  %v5096 = vpop.f32.mrf.mxu0
  %5097 = vdwg.mxu0
  %5098 = vmatprep.subr.bf16.mxu0 0
  %5099 = vmatpush1.bf16.msra.mxu0 %v3275
  %5100 = vmatprep.subr.bf16.mxu0 0
  %5101 = vmatpush1.bf16.msra.mxu0 %v3262
  %5102 = vmatprep.subr.bf16.mxu0 0
  %5103 = vmatpush1.bf16.msra.mxu0 %v3249
  %5104 = vmatprep.subr.bf16.mxu0 0
  %5105 = vmatpush1.bf16.msra.mxu0 %v3236
  %5106 = vmatprep.subr.bf16.mxu0 0
  %5107 = vmatpush1.bf16.msra.mxu0 %v3223
  %5108 = vmatprep.subr.bf16.mxu0 0
  %5109 = vmatpush1.bf16.msra.mxu0 %v3210
  %5110 = vmatprep.subr.bf16.mxu0 0
  %5111 = vmatpush1.bf16.msra.mxu0 %v3197
  %5112 = vmatprep.subr.bf16.mxu0 0
  %5113 = vmatpush1.bf16.msra.mxu0 %v3184
  %5114 = vmatprep.subr.bf16.mxu0 0
  %5115 = vmatpush2.bf16.msra.mxu0 %v3379
  %5116 = vmatprep.subr.bf16.mxu0 0
  %5117 = vmatpush2.bf16.msra.mxu0 %v3366
  %5118 = vmatprep.subr.bf16.mxu0 0
  %5119 = vmatpush2.bf16.msra.mxu0 %v3353
  %5120 = vmatprep.subr.bf16.mxu0 0
  %5121 = vmatpush2.bf16.msra.mxu0 %v3340
  %5122 = vmatprep.subr.bf16.mxu0 0
  %5123 = vmatpush2.bf16.msra.mxu0 %v3327
  %5124 = vmatprep.subr.bf16.mxu0 0
  %5125 = vmatpush2.bf16.msra.mxu0 %v3314
  %5126 = vmatprep.subr.bf16.mxu0 0
  %5127 = vmatpush2.bf16.msra.mxu0 %v3301
  %5128 = vmatprep.subr.bf16.mxu0 0
  %5129 = vmatpush2.bf16.msra.mxu0 %v3288
  %5130 = vmatprep.mubr.bf16.mxu0 %v39
  %5131 = vmatmul.mubr.bf16.gmra.mxu0 %v38
  %v5132 = vpop.f32.mrf.mxu0
  %v5133 = vadd.f32 %v5093, %v5132
  %v5134 = vpop.f32.mrf.mxu0
  %v5135 = vpop.f32.mrf.mxu0
  %v5136 = vpop.f32.mrf.mxu0
  %5137 = vdwg.mxu0
  %5138 = vmatprep.subr.bf16.mxu0 0
  %5139 = vmatpush1.bf16.msra.mxu0 0
  %5140 = vmatprep.subr.bf16.mxu0 0
  %5141 = vmatpush1.bf16.msra.mxu0 0
  %5142 = vmatprep.subr.bf16.mxu0 0
  %5143 = vmatpush1.bf16.msra.mxu0 0
  %5144 = vmatprep.subr.bf16.mxu0 0
  %5145 = vmatpush1.bf16.msra.mxu0 0
  %5146 = vmatprep.subr.bf16.mxu0 0
  %5147 = vmatpush1.bf16.msra.mxu0 0
  %5148 = vmatprep.subr.bf16.mxu0 0
  %5149 = vmatpush1.bf16.msra.mxu0 0
  %5150 = vmatprep.subr.bf16.mxu0 0
  %5151 = vmatpush1.bf16.msra.mxu0 0
  %5152 = vmatprep.subr.bf16.mxu0 0
  %5153 = vmatpush1.bf16.msra.mxu0 %v3392
  %5154 = vmatprep.subr.bf16.mxu0 0
  %5155 = vmatpush2.bf16.msra.mxu0 0
  %5156 = vmatprep.subr.bf16.mxu0 0
  %5157 = vmatpush2.bf16.msra.mxu0 0
  %5158 = vmatprep.subr.bf16.mxu0 0
  %5159 = vmatpush2.bf16.msra.mxu0 0
  %5160 = vmatprep.subr.bf16.mxu0 0
  %5161 = vmatpush2.bf16.msra.mxu0 0
  %5162 = vmatprep.subr.bf16.mxu0 0
  %5163 = vmatpush2.bf16.msra.mxu0 0
  %5164 = vmatprep.subr.bf16.mxu0 0
  %5165 = vmatpush2.bf16.msra.mxu0 0
  %5166 = vmatprep.subr.bf16.mxu0 0
  %5167 = vmatpush2.bf16.msra.mxu0 0
  %5168 = vmatprep.subr.bf16.mxu0 0
  %5169 = vmatpush2.bf16.msra.mxu0 0
  %5170 = vmatprep.mubr.bf16.mxu0 0
  %5171 = vmatmul.mubr.bf16.gmra.mxu0 %v4032
  %v5172 = vpop.f32.mrf.mxu0
  %v5173 = vadd.f32 %v5133, %v5172
  %v5174 = vpop.f32.mrf.mxu0
  %v5175 = vpop.f32.mrf.mxu0
  %v5176 = vpop.f32.mrf.mxu0
  %5177 = vdwg.mxu0
  %v5178 = vmax.f32 %v4192, 0.0
  %v5179 = vmax.f32 %v4194, 0.0
  %v5180 = vmax.f32 %v4356, 0.0
  %v5181 = vmax.f32 %v4358, 0.0
  %v5182 = vmax.f32 %v4520, 0.0
  %v5183 = vmax.f32 %v4522, 0.0
  %v5184 = vmax.f32 %v4684, 0.0
  %v5185 = vmax.f32 %v4686, 0.0
  %v5186 = vmax.f32 %v4848, 0.0
  %v5187 = vmax.f32 %v4850, 0.0
  %v5188 = vmax.f32 %v5012, 0.0
  %v5189 = vmax.f32 %v5014, 0.0
  %v5190 = vmax.f32 %v5173, 0.0
  %v5191 = vpack.c.bf16 %v5178, %v5178
  %v5192 = vpack.c.bf16 %v5179, %v5179
  %v5193 = vpack.c.bf16 %v5180, %v5180
  %v5194 = vpack.c.bf16 %v5181, %v5181
  %v5195 = vpack.c.bf16 %v5182, %v5182
  %v5196 = vpack.c.bf16 %v5183, %v5183
  %v5197 = vpack.c.bf16 %v5184, %v5184
  %v5198 = vpack.c.bf16 %v5185, %v5185
  %v5199 = vpack.c.bf16 %v5186, %v5186
  %v5200 = vpack.c.bf16 %v5187, %v5187
  %v5201 = vpack.c.bf16 %v5188, %v5188
  %v5202 = vpack.c.bf16 %v5189, %v5189
  %v5203 = vpack.c.bf16 %v5190, %v5190
  %v5204 = vld [vmem:[%s2] sm:$0xff]
  %v5205 = vld [vmem:[%s2 + $0x8] sm:$0xff]
  %v5206 = vld [vmem:[%s2 + $0x10] sm:$0xff]
  %v5207 = vld [vmem:[%s2 + $0x18] sm:$0xf]
  %v5208 = vld [vmem:[%s2 + $0x1c] sm:$0xff]
  %v5209 = vld [vmem:[%s2 + $0x24] sm:$0xff]
  %v5210 = vld [vmem:[%s2 + $0x2c] sm:$0xff]
  %v5211 = vld [vmem:[%s2 + $0x34] sm:$0xf]
  %v5212 = vld [vmem:[%s2 + $0x38] sm:$0xff]
  %v5213 = vld [vmem:[%s2 + $0x40] sm:$0xff]
  %v5214 = vld [vmem:[%s2 + $0x48] sm:$0xff]
  %v5215 = vld [vmem:[%s2 + $0x50] sm:$0xf]
  %v5216 = vld [vmem:[%s2 + $0x54] sm:$0xff]
  %v5217 = vld [vmem:[%s2 + $0x5c] sm:$0xff]
  %v5218 = vld [vmem:[%s2 + $0x64] sm:$0xff]
  %v5219 = vld [vmem:[%s2 + $0x6c] sm:$0xf]
  %v5220 = vld [vmem:[%s2 + $0x70] sm:$0xff]
  %v5221 = vld [vmem:[%s2 + $0x78] sm:$0xff]
  %v5222 = vld [vmem:[%s2 + $0x80] sm:$0xff]
  %v5223 = vld [vmem:[%s2 + $0x88] sm:$0xf]
  %v5224 = vld [vmem:[%s2 + $0x8c] sm:$0xff]
  %v5225 = vld [vmem:[%s2 + $0x94] sm:$0xff]
  %v5226 = vld [vmem:[%s2 + $0x9c] sm:$0xff]
  %v5227 = vld [vmem:[%s2 + $0xa4] sm:$0xf]
  %v5228 = vld [vmem:[%s2 + $0xa8] sm:$0xff]
  %v5229 = vld [vmem:[%s2 + $0xb0] sm:$0xff]
  %v5230 = vld [vmem:[%s2 + $0xb8] sm:$0xff]
  %v5231 = vld [vmem:[%s2 + $0xc0] sm:$0xf]
  %v5232 = vld [vmem:[%s2 + $0xc4] sm:$0xff]
  %v5233 = vld [vmem:[%s2 + $0xcc] sm:$0xff]
  %v5234 = vld [vmem:[%s2 + $0xd4] sm:$0xff]
  %v5235 = vld [vmem:[%s2 + $0xdc] sm:$0xf]
  %v5236 = vld [vmem:[%s2 + $0xe0] sm:$0xff]
  %v5237 = vld [vmem:[%s2 + $0xe8] sm:$0xff]
  %v5238 = vld [vmem:[%s2 + $0xf0] sm:$0xff]
  %v5239 = vld [vmem:[%s2 + $0xf8] sm:$0xf]
  %v5240 = vld [vmem:[%s2 + $0xfc] sm:$0xff]
  %v5241 = vld [vmem:[%s2 + $0x104] sm:$0xff]
  %v5242 = vld [vmem:[%s2 + $0x10c] sm:$0xff]
  %v5243 = vld [vmem:[%s2 + $0x114] sm:$0xf]
  %v5244 = vld [vmem:[%s2 + $0x118] sm:$0xff]
  %v5245 = vld [vmem:[%s2 + $0x120] sm:$0xff]
  %v5246 = vld [vmem:[%s2 + $0x128] sm:$0xff]
  %v5247 = vld [vmem:[%s2 + $0x130] sm:$0xf]
  %v5248 = vld [vmem:[%s2 + $0x134] sm:$0xff]
  %v5249 = vld [vmem:[%s2 + $0x13c] sm:$0xff]
  %v5250 = vld [vmem:[%s2 + $0x144] sm:$0xff]
  %v5251 = vld [vmem:[%s2 + $0x14c] sm:$0xf]
  %v5252 = vld [vmem:[%s2 + $0x150] sm:$0xff]
  %v5253 = vld [vmem:[%s2 + $0x158] sm:$0xff]
  %v5254 = vld [vmem:[%s2 + $0x160] sm:$0xff]
  %v5255 = vld [vmem:[%s2 + $0x168] sm:$0xf]
  %v5256 = vld [vmem:[%s2 + $0x16c] sm:$0xff]
  %v5257 = vld [vmem:[%s2 + $0x174] sm:$0xff]
  %v5258 = vld [vmem:[%s2 + $0x17c] sm:$0xff]
  %v5259 = vld [vmem:[%s2 + $0x184] sm:$0xf]
  %v5260 = vld [vmem:[%s2 + $0x188] sm:$0xff]
  %v5261 = vld [vmem:[%s2 + $0x190] sm:$0xff]
  %v5262 = vld [vmem:[%s2 + $0x198] sm:$0xff]
  %v5263 = vld [vmem:[%s2 + $0x1a0] sm:$0xf]
  %v5264 = vld [vmem:[%s2 + $0x1a4] sm:$0xff]
  %v5265 = vld [vmem:[%s2 + $0x1ac] sm:$0xff]
  %v5266 = vld [vmem:[%s2 + $0x1b4] sm:$0xff]
  %v5267 = vld [vmem:[%s2 + $0x1bc] sm:$0xf]
  %v5268 = vld [vmem:[%s2 + $0x1c0] sm:$0xff]
  %v5269 = vld [vmem:[%s2 + $0x1c8] sm:$0xff]
  %v5270 = vld [vmem:[%s2 + $0x1d0] sm:$0xff]
  %v5271 = vld [vmem:[%s2 + $0x1d8] sm:$0xf]
  %v5272 = vld [vmem:[%s2 + $0x1dc] sm:$0xff]
  %v5273 = vld [vmem:[%s2 + $0x1e4] sm:$0xff]
  %v5274 = vld [vmem:[%s2 + $0x1ec] sm:$0xff]
  %v5275 = vld [vmem:[%s2 + $0x1f4] sm:$0xf]
  %v5276 = vld [vmem:[%s2 + $0x1f8] sm:$0xff]
  %v5277 = vld [vmem:[%s2 + $0x200] sm:$0xff]
  %v5278 = vld [vmem:[%s2 + $0x208] sm:$0xff]
  %v5279 = vld [vmem:[%s2 + $0x210] sm:$0xf]
  %v5280 = vld [vmem:[%s2 + $0x214] sm:$0xff]
  %v5281 = vld [vmem:[%s2 + $0x21c] sm:$0xff]
  %v5282 = vld [vmem:[%s2 + $0x224] sm:$0xff]
  %v5283 = vld [vmem:[%s2 + $0x22c] sm:$0xf]
  %v5284 = vld [vmem:[%s2 + $0x230] sm:$0xff]
  %v5285 = vld [vmem:[%s2 + $0x238] sm:$0xff]
  %v5286 = vld [vmem:[%s2 + $0x240] sm:$0xff]
  %v5287 = vld [vmem:[%s2 + $0x248] sm:$0xf]
  %v5288 = vld [vmem:[%s2 + $0x24c] sm:$0xff]
  %v5289 = vld [vmem:[%s2 + $0x254] sm:$0xff]
  %v5290 = vld [vmem:[%s2 + $0x25c] sm:$0xff]
  %v5291 = vld [vmem:[%s2 + $0x264] sm:$0xf]
  %v5292 = vld [vmem:[%s2 + $0x268] sm:$0xff]
  %v5293 = vld [vmem:[%s2 + $0x270] sm:$0xff]
  %v5294 = vld [vmem:[%s2 + $0x278] sm:$0xff]
  %v5295 = vld [vmem:[%s2 + $0x280] sm:$0xf]
  %v5296 = vld [vmem:[%s2 + $0x284] sm:$0xff]
  %v5297 = vld [vmem:[%s2 + $0x28c] sm:$0xff]
  %v5298 = vld [vmem:[%s2 + $0x294] sm:$0xff]
  %v5299 = vld [vmem:[%s2 + $0x29c] sm:$0xf]
  %v5300 = vld [vmem:[%s2 + $0x2a0] sm:$0xff]
  %v5301 = vld [vmem:[%s2 + $0x2a8] sm:$0xff]
  %v5302 = vld [vmem:[%s2 + $0x2b0] sm:$0xff]
  %v5303 = vld [vmem:[%s2 + $0x2b8] sm:$0xf]
  %v5304 = vld [vmem:[%s2 + $0x2bc] sm:$0xff]
  %v5305 = vld [vmem:[%s2 + $0x2c4] sm:$0xff]
  %v5306 = vld [vmem:[%s2 + $0x2cc] sm:$0xff]
  %v5307 = vld [vmem:[%s2 + $0x2d4] sm:$0xf]
  %v5308 = vld [vmem:[%s2 + $0x2d8] sm:$0xff]
  %v5309 = vld [vmem:[%s2 + $0x2e0] sm:$0xff]
  %v5310 = vld [vmem:[%s2 + $0x2e8] sm:$0xff]
  %v5311 = vld [vmem:[%s2 + $0x2f0] sm:$0xf]
  %v5312 = vld [vmem:[%s2 + $0x2f4] sm:$0xff]
  %v5313 = vld [vmem:[%s2 + $0x2fc] sm:$0xff]
  %v5314 = vld [vmem:[%s2 + $0x304] sm:$0xff]
  %v5315 = vld [vmem:[%s2 + $0x30c] sm:$0xf]
  %v5316 = vld [vmem:[%s2 + $0x310] sm:$0xff]
  %v5317 = vld [vmem:[%s2 + $0x318] sm:$0xff]
  %v5318 = vld [vmem:[%s2 + $0x320] sm:$0xff]
  %v5319 = vld [vmem:[%s2 + $0x328] sm:$0xf]
  %v5320 = vld [vmem:[%s2 + $0x32c] sm:$0xff]
  %v5321 = vld [vmem:[%s2 + $0x334] sm:$0xff]
  %v5322 = vld [vmem:[%s2 + $0x33c] sm:$0xff]
  %v5323 = vld [vmem:[%s2 + $0x344] sm:$0xf]
  %v5324 = vld [vmem:[%s2 + $0x348] sm:$0xff]
  %v5325 = vld [vmem:[%s2 + $0x350] sm:$0xff]
  %v5326 = vld [vmem:[%s2 + $0x358] sm:$0xff]
  %v5327 = vld [vmem:[%s2 + $0x360] sm:$0xf]
  %v5328 = vld [vmem:[%s2 + $0x364] sm:$0xff]
  %v5329 = vld [vmem:[%s2 + $0x36c] sm:$0xff]
  %v5330 = vld [vmem:[%s2 + $0x374] sm:$0xff]
  %v5331 = vld [vmem:[%s2 + $0x37c] sm:$0xf]
  %v5332 = vld [vmem:[%s2 + $0x380] sm:$0xff]
  %v5333 = vld [vmem:[%s2 + $0x388] sm:$0xff]
  %v5334 = vld [vmem:[%s2 + $0x390] sm:$0xff]
  %v5335 = vld [vmem:[%s2 + $0x398] sm:$0xf]
  %v5336 = vld [vmem:[%s2 + $0x39c] sm:$0xff]
  %v5337 = vld [vmem:[%s2 + $0x3a4] sm:$0xff]
  %v5338 = vld [vmem:[%s2 + $0x3ac] sm:$0xff]
  %v5339 = vld [vmem:[%s2 + $0x3b4] sm:$0xf]
  %v5340 = vld [vmem:[%s2 + $0x3b8] sm:$0xff]
  %v5341 = vld [vmem:[%s2 + $0x3c0] sm:$0xff]
  %v5342 = vld [vmem:[%s2 + $0x3c8] sm:$0xff]
  %v5343 = vld [vmem:[%s2 + $0x3d0] sm:$0xf]
  %v5344 = vld [vmem:[%s2 + $0x3d4] sm:$0xff]
  %v5345 = vld [vmem:[%s2 + $0x3dc] sm:$0xff]
  %v5346 = vld [vmem:[%s2 + $0x3e4] sm:$0xff]
  %v5347 = vld [vmem:[%s2 + $0x3ec] sm:$0xf]
  %v5348 = vld [vmem:[%s2 + $0x3f0] sm:$0xff]
  %v5349 = vld [vmem:[%s2 + $0x3f8] sm:$0xff]
  %v5350 = vld [vmem:[%s2 + $0x400] sm:$0xff]
  %v5351 = vld [vmem:[%s2 + $0x408] sm:$0xf]
  %v5352 = vld [vmem:[%s2 + $0x40c] sm:$0xff]
  %v5353 = vld [vmem:[%s2 + $0x414] sm:$0xff]
  %v5354 = vld [vmem:[%s2 + $0x41c] sm:$0xff]
  %v5355 = vld [vmem:[%s2 + $0x424] sm:$0xf]
  %v5356 = vld [vmem:[%s2 + $0x428] sm:$0xff]
  %v5357 = vld [vmem:[%s2 + $0x430] sm:$0xff]
  %v5358 = vld [vmem:[%s2 + $0x438] sm:$0xff]
  %v5359 = vld [vmem:[%s2 + $0x440] sm:$0xf]
  %v5360 = vld [vmem:[%s2 + $0x444] sm:$0xff]
  %v5361 = vld [vmem:[%s2 + $0x44c] sm:$0xff]
  %v5362 = vld [vmem:[%s2 + $0x454] sm:$0xff]
  %v5363 = vld [vmem:[%s2 + $0x45c] sm:$0xf]
  %v5364 = vld [vmem:[%s2 + $0x460] sm:$0xff]
  %v5365 = vld [vmem:[%s2 + $0x468] sm:$0xff]
  %v5366 = vld [vmem:[%s2 + $0x470] sm:$0xff]
  %v5367 = vld [vmem:[%s2 + $0x478] sm:$0xf]
  %v5368 = vld [vmem:[%s2 + $0x47c] sm:$0xff]
  %v5369 = vld [vmem:[%s2 + $0x484] sm:$0xff]
  %v5370 = vld [vmem:[%s2 + $0x48c] sm:$0xff]
  %v5371 = vld [vmem:[%s2 + $0x494] sm:$0xf]
  %v5372 = vld [vmem:[%s2 + $0x498] sm:$0xff]
  %v5373 = vld [vmem:[%s2 + $0x4a0] sm:$0xff]
  %v5374 = vld [vmem:[%s2 + $0x4a8] sm:$0xff]
  %v5375 = vld [vmem:[%s2 + $0x4b0] sm:$0xf]
  %v5376 = vld [vmem:[%s2 + $0x4b4] sm:$0xff]
  %v5377 = vld [vmem:[%s2 + $0x4bc] sm:$0xff]
  %v5378 = vld [vmem:[%s2 + $0x4c4] sm:$0xff]
  %v5379 = vld [vmem:[%s2 + $0x4cc] sm:$0xf]
  %v5380 = vld [vmem:[%s2 + $0x4d0] sm:$0xff]
  %v5381 = vld [vmem:[%s2 + $0x4d8] sm:$0xff]
  %v5382 = vld [vmem:[%s2 + $0x4e0] sm:$0xff]
  %v5383 = vld [vmem:[%s2 + $0x4e8] sm:$0xf]
  %v5384 = vld [vmem:[%s2 + $0x4ec] sm:$0xff]
  %v5385 = vld [vmem:[%s2 + $0x4f4] sm:$0xff]
  %v5386 = vld [vmem:[%s2 + $0x4fc] sm:$0xff]
  %v5387 = vld [vmem:[%s2 + $0x504] sm:$0xf]
  %v5388 = vld [vmem:[%s2 + $0x508] sm:$0xff]
  %v5389 = vld [vmem:[%s2 + $0x510] sm:$0xff]
  %v5390 = vld [vmem:[%s2 + $0x518] sm:$0xff]
  %v5391 = vld [vmem:[%s2 + $0x520] sm:$0xf]
  %v5392 = vld [vmem:[%s2 + $0x524] sm:$0xff]
  %v5393 = vld [vmem:[%s2 + $0x52c] sm:$0xff]
  %v5394 = vld [vmem:[%s2 + $0x534] sm:$0xff]
  %v5395 = vld [vmem:[%s2 + $0x53c] sm:$0xf]
  %v5396 = vld [vmem:[%s2 + $0x540] sm:$0xff]
  %v5397 = vld [vmem:[%s2 + $0x548] sm:$0xff]
  %v5398 = vld [vmem:[%s2 + $0x550] sm:$0xff]
  %v5399 = vld [vmem:[%s2 + $0x558] sm:$0xf]
  %v5400 = vld [vmem:[%s2 + $0x55c] sm:$0xff]
  %v5401 = vld [vmem:[%s2 + $0x564] sm:$0xff]
  %v5402 = vld [vmem:[%s2 + $0x56c] sm:$0xff]
  %v5403 = vld [vmem:[%s2 + $0x574] sm:$0xf]
  %v5404 = vld [vmem:[%s2 + $0x578] sm:$0xff]
  %v5405 = vld [vmem:[%s2 + $0x580] sm:$0xff]
  %v5406 = vld [vmem:[%s2 + $0x588] sm:$0xff]
  %v5407 = vld [vmem:[%s2 + $0x590] sm:$0xf]
  %v5408 = vld [vmem:[%s2 + $0x594] sm:$0xff]
  %v5409 = vld [vmem:[%s2 + $0x59c] sm:$0xff]
  %v5410 = vld [vmem:[%s2 + $0x5a4] sm:$0xff]
  %v5411 = vld [vmem:[%s2 + $0x5ac] sm:$0xf]
  %v5412 = vld [vmem:[%s2 + $0x5b0] sm:$0xff]
  %v5413 = vld [vmem:[%s2 + $0x5b8] sm:$0xff]
  %v5414 = vld [vmem:[%s2 + $0x5c0] sm:$0xff]
  %v5415 = vld [vmem:[%s2 + $0x5c8] sm:$0xf]
  %v5416 = vld [vmem:[%s2 + $0x5cc] sm:$0xff]
  %v5417 = vld [vmem:[%s2 + $0x5d4] sm:$0xff]
  %v5418 = vld [vmem:[%s2 + $0x5dc] sm:$0xff]
  %v5419 = vld [vmem:[%s2 + $0x5e4] sm:$0xf]
  %v5420 = vld [vmem:[%s2 + $0x5e8] sm:$0xff]
  %v5421 = vld [vmem:[%s2 + $0x5f0] sm:$0xff]
  %v5422 = vld [vmem:[%s2 + $0x5f8] sm:$0xff]
  %v5423 = vld [vmem:[%s2 + $0x600] sm:$0xf]
  %v5424 = vld [vmem:[%s2 + $0x604] sm:$0xff]
  %v5425 = vld [vmem:[%s2 + $0x60c] sm:$0xff]
  %v5426 = vld [vmem:[%s2 + $0x614] sm:$0xff]
  %v5427 = vld [vmem:[%s2 + $0x61c] sm:$0xf]
  %v5428 = vld [vmem:[%s2 + $0x620] sm:$0xff]
  %v5429 = vld [vmem:[%s2 + $0x628] sm:$0xff]
  %v5430 = vld [vmem:[%s2 + $0x630] sm:$0xff]
  %v5431 = vld [vmem:[%s2 + $0x638] sm:$0xf]
  %v5432 = vld [vmem:[%s2 + $0x63c] sm:$0xff]
  %v5433 = vld [vmem:[%s2 + $0x644] sm:$0xff]
  %v5434 = vld [vmem:[%s2 + $0x64c] sm:$0xff]
  %v5435 = vld [vmem:[%s2 + $0x654] sm:$0xf]
  %v5436 = vld [vmem:[%s2 + $0x658] sm:$0xff]
  %v5437 = vld [vmem:[%s2 + $0x660] sm:$0xff]
  %v5438 = vld [vmem:[%s2 + $0x668] sm:$0xff]
  %v5439 = vld [vmem:[%s2 + $0x670] sm:$0xf]
  %v5440 = vld [vmem:[%s2 + $0x674] sm:$0xff]
  %v5441 = vld [vmem:[%s2 + $0x67c] sm:$0xff]
  %v5442 = vld [vmem:[%s2 + $0x684] sm:$0xff]
  %v5443 = vld [vmem:[%s2 + $0x68c] sm:$0xf]
  %v5444 = vld [vmem:[%s2 + $0x690] sm:$0xff]
  %v5445 = vld [vmem:[%s2 + $0x698] sm:$0xff]
  %v5446 = vld [vmem:[%s2 + $0x6a0] sm:$0xff]
  %v5447 = vld [vmem:[%s2 + $0x6a8] sm:$0xf]
  %v5448 = vld [vmem:[%s2 + $0x6ac] sm:$0xff]
  %v5449 = vld [vmem:[%s2 + $0x6b4] sm:$0xff]
  %v5450 = vld [vmem:[%s2 + $0x6bc] sm:$0xff]
  %v5451 = vld [vmem:[%s2 + $0x6c4] sm:$0xf]
  %v5452 = vld [vmem:[%s2 + $0x6c8] sm:$0xff]
  %v5453 = vld [vmem:[%s2 + $0x6d0] sm:$0xff]
  %v5454 = vld [vmem:[%s2 + $0x6d8] sm:$0xff]
  %v5455 = vld [vmem:[%s2 + $0x6e0] sm:$0xf]
  %v5456 = vld [vmem:[%s2 + $0x6e4] sm:$0xff]
  %v5457 = vld [vmem:[%s2 + $0x6ec] sm:$0xff]
  %v5458 = vld [vmem:[%s2 + $0x6f4] sm:$0xff]
  %v5459 = vld [vmem:[%s2 + $0x6fc] sm:$0xf]
  %v5460 = vld [vmem:[%s2 + $0x700] sm:$0xff]
  %v5461 = vld [vmem:[%s2 + $0x708] sm:$0xff]
  %v5462 = vld [vmem:[%s2 + $0x710] sm:$0xff]
  %v5463 = vld [vmem:[%s2 + $0x718] sm:$0xf]
  %v5464 = vld [vmem:[%s2 + $0x71c] sm:$0xff]
  %v5465 = vld [vmem:[%s2 + $0x724] sm:$0xff]
  %v5466 = vld [vmem:[%s2 + $0x72c] sm:$0xff]
  %v5467 = vld [vmem:[%s2 + $0x734] sm:$0xf]
  %v5468 = vld [vmem:[%s2 + $0x738] sm:$0xff]
  %v5469 = vld [vmem:[%s2 + $0x740] sm:$0xff]
  %v5470 = vld [vmem:[%s2 + $0x748] sm:$0xff]
  %v5471 = vld [vmem:[%s2 + $0x750] sm:$0xf]
  %v5472 = vld [vmem:[%s2 + $0x754] sm:$0xff]
  %v5473 = vld [vmem:[%s2 + $0x75c] sm:$0xff]
  %v5474 = vld [vmem:[%s2 + $0x764] sm:$0xff]
  %v5475 = vld [vmem:[%s2 + $0x76c] sm:$0xf]
  %v5476 = vld [vmem:[%s2 + $0x770] sm:$0xff]
  %v5477 = vld [vmem:[%s2 + $0x778] sm:$0xff]
  %v5478 = vld [vmem:[%s2 + $0x780] sm:$0xff]
  %v5479 = vld [vmem:[%s2 + $0x788] sm:$0xf]
  %v5480 = vld [vmem:[%s2 + $0x78c] sm:$0xff]
  %v5481 = vld [vmem:[%s2 + $0x794] sm:$0xff]
  %v5482 = vld [vmem:[%s2 + $0x79c] sm:$0xff]
  %v5483 = vld [vmem:[%s2 + $0x7a4] sm:$0xf]
  %v5484 = vld [vmem:[%s2 + $0x7a8] sm:$0xff]
  %v5485 = vld [vmem:[%s2 + $0x7b0] sm:$0xff]
  %v5486 = vld [vmem:[%s2 + $0x7b8] sm:$0xff]
  %v5487 = vld [vmem:[%s2 + $0x7c0] sm:$0xf]
  %v5488 = vld [vmem:[%s2 + $0x7c4] sm:$0xff]
  %v5489 = vld [vmem:[%s2 + $0x7cc] sm:$0xff]
  %v5490 = vld [vmem:[%s2 + $0x7d4] sm:$0xff]
  %v5491 = vld [vmem:[%s2 + $0x7dc] sm:$0xf]
  %v5492 = vld [vmem:[%s2 + $0x7e0] sm:$0xff]
  %v5493 = vld [vmem:[%s2 + $0x7e8] sm:$0xff]
  %v5494 = vld [vmem:[%s2 + $0x7f0] sm:$0xff]
  %v5495 = vld [vmem:[%s2 + $0x7f8] sm:$0xf]
  %v5496 = vld [vmem:[%s2 + $0x7fc] sm:$0xff]
  %v5497 = vld [vmem:[%s2 + $0x804] sm:$0xff]
  %v5498 = vld [vmem:[%s2 + $0x80c] sm:$0xff]
  %v5499 = vld [vmem:[%s2 + $0x814] sm:$0xf]
  %v5500 = vld [vmem:[%s2 + $0x818] sm:$0xff]
  %v5501 = vld [vmem:[%s2 + $0x820] sm:$0xff]
  %v5502 = vld [vmem:[%s2 + $0x828] sm:$0xff]
  %v5503 = vld [vmem:[%s2 + $0x830] sm:$0xf]
  %v5504 = vld [vmem:[%s2 + $0x834] sm:$0xff]
  %v5505 = vld [vmem:[%s2 + $0x83c] sm:$0xff]
  %v5506 = vld [vmem:[%s2 + $0x844] sm:$0xff]
  %v5507 = vld [vmem:[%s2 + $0x84c] sm:$0xf]
  %v5508 = vld [vmem:[%s2 + $0x850] sm:$0xff]
  %v5509 = vld [vmem:[%s2 + $0x858] sm:$0xff]
  %v5510 = vld [vmem:[%s2 + $0x860] sm:$0xff]
  %v5511 = vld [vmem:[%s2 + $0x868] sm:$0xf]
  %v5512 = vld [vmem:[%s2 + $0x86c] sm:$0xff]
  %v5513 = vld [vmem:[%s2 + $0x874] sm:$0xff]
  %v5514 = vld [vmem:[%s2 + $0x87c] sm:$0xff]
  %v5515 = vld [vmem:[%s2 + $0x884] sm:$0xf]
  %v5516 = vld [vmem:[%s2 + $0x888] sm:$0xff]
  %v5517 = vld [vmem:[%s2 + $0x890] sm:$0xff]
  %v5518 = vld [vmem:[%s2 + $0x898] sm:$0xff]
  %v5519 = vld [vmem:[%s2 + $0x8a0] sm:$0xf]
  %v5520 = vld [vmem:[%s2 + $0x8a4] sm:$0xff]
  %v5521 = vld [vmem:[%s2 + $0x8ac] sm:$0xff]
  %v5522 = vld [vmem:[%s2 + $0x8b4] sm:$0xff]
  %v5523 = vld [vmem:[%s2 + $0x8bc] sm:$0xf]
  %v5524 = vld [vmem:[%s2 + $0x8c0] sm:$0xff]
  %v5525 = vld [vmem:[%s2 + $0x8c8] sm:$0xff]
  %v5526 = vld [vmem:[%s2 + $0x8d0] sm:$0xff]
  %v5527 = vld [vmem:[%s2 + $0x8d8] sm:$0xf]
  %v5528 = vld [vmem:[%s2 + $0x8dc] sm:$0xff]
  %v5529 = vld [vmem:[%s2 + $0x8e4] sm:$0xff]
  %v5530 = vld [vmem:[%s2 + $0x8ec] sm:$0xff]
  %v5531 = vld [vmem:[%s2 + $0x8f4] sm:$0xf]
  %v5532 = vld [vmem:[%s2 + $0x8f8] sm:$0xff]
  %v5533 = vld [vmem:[%s2 + $0x900] sm:$0xff]
  %v5534 = vld [vmem:[%s2 + $0x908] sm:$0xff]
  %v5535 = vld [vmem:[%s2 + $0x910] sm:$0xf]
  %v5536 = vld [vmem:[%s2 + $0x914] sm:$0xff]
  %v5537 = vld [vmem:[%s2 + $0x91c] sm:$0xff]
  %v5538 = vld [vmem:[%s2 + $0x924] sm:$0xff]
  %v5539 = vld [vmem:[%s2 + $0x92c] sm:$0xf]
  %v5540 = vld [vmem:[%s2 + $0x930] sm:$0xff]
  %v5541 = vld [vmem:[%s2 + $0x938] sm:$0xff]
  %v5542 = vld [vmem:[%s2 + $0x940] sm:$0xff]
  %v5543 = vld [vmem:[%s2 + $0x948] sm:$0xf]
  %v5544 = vld [vmem:[%s2 + $0x94c] sm:$0xff]
  %v5545 = vld [vmem:[%s2 + $0x954] sm:$0xff]
  %v5546 = vld [vmem:[%s2 + $0x95c] sm:$0xff]
  %v5547 = vld [vmem:[%s2 + $0x964] sm:$0xf]
  %v5548 = vld [vmem:[%s2 + $0x968] sm:$0xff]
  %v5549 = vld [vmem:[%s2 + $0x970] sm:$0xff]
  %v5550 = vld [vmem:[%s2 + $0x978] sm:$0xff]
  %v5551 = vld [vmem:[%s2 + $0x980] sm:$0xf]
  %v5552 = vld [vmem:[%s2 + $0x984] sm:$0xff]
  %v5553 = vld [vmem:[%s2 + $0x98c] sm:$0xff]
  %v5554 = vld [vmem:[%s2 + $0x994] sm:$0xff]
  %v5555 = vld [vmem:[%s2 + $0x99c] sm:$0xf]
  %v5556 = vld [vmem:[%s2 + $0x9a0] sm:$0xff]
  %v5557 = vld [vmem:[%s2 + $0x9a8] sm:$0xff]
  %v5558 = vld [vmem:[%s2 + $0x9b0] sm:$0xff]
  %v5559 = vld [vmem:[%s2 + $0x9b8] sm:$0xf]
  %v5560 = vld [vmem:[%s2 + $0x9bc] sm:$0xff]
  %v5561 = vld [vmem:[%s2 + $0x9c4] sm:$0xff]
  %v5562 = vld [vmem:[%s2 + $0x9cc] sm:$0xff]
  %v5563 = vld [vmem:[%s2 + $0x9d4] sm:$0xf]
  %v5564 = vld [vmem:[%s2 + $0x9d8] sm:$0xff]
  %v5565 = vld [vmem:[%s2 + $0x9e0] sm:$0xff]
  %v5566 = vld [vmem:[%s2 + $0x9e8] sm:$0xff]
  %v5567 = vld [vmem:[%s2 + $0x9f0] sm:$0xf]
  %v5568 = vld [vmem:[%s2 + $0x9f4] sm:$0xff]
  %v5569 = vld [vmem:[%s2 + $0x9fc] sm:$0xff]
  %v5570 = vld [vmem:[%s2 + $0xa04] sm:$0xff]
  %v5571 = vld [vmem:[%s2 + $0xa0c] sm:$0xf]
  %v5572 = vld [vmem:[%s2 + $0xa10] sm:$0xff]
  %v5573 = vld [vmem:[%s2 + $0xa18] sm:$0xff]
  %v5574 = vld [vmem:[%s2 + $0xa20] sm:$0xff]
  %v5575 = vld [vmem:[%s2 + $0xa28] sm:$0xf]
  %v5576 = vld [vmem:[%s2 + $0xa2c] sm:$0xff]
  %v5577 = vld [vmem:[%s2 + $0xa34] sm:$0xff]
  %v5578 = vld [vmem:[%s2 + $0xa3c] sm:$0xff]
  %v5579 = vld [vmem:[%s2 + $0xa44] sm:$0xf]
  %v5580 = vld [vmem:[%s2 + $0xa48] sm:$0xff]
  %v5581 = vld [vmem:[%s2 + $0xa50] sm:$0xff]
  %v5582 = vld [vmem:[%s2 + $0xa58] sm:$0xff]
  %v5583 = vld [vmem:[%s2 + $0xa60] sm:$0xf]
  %v5584 = vld [vmem:[%s2 + $0xa64] sm:$0xff]
  %v5585 = vld [vmem:[%s2 + $0xa6c] sm:$0xff]
  %v5586 = vld [vmem:[%s2 + $0xa74] sm:$0xff]
  %v5587 = vld [vmem:[%s2 + $0xa7c] sm:$0xf]
  %v5588 = vld [vmem:[%s2 + $0xa80] sm:$0xff]
  %v5589 = vld [vmem:[%s2 + $0xa88] sm:$0xff]
  %v5590 = vld [vmem:[%s2 + $0xa90] sm:$0xff]
  %v5591 = vld [vmem:[%s2 + $0xa98] sm:$0xf]
  %v5592 = vld [vmem:[%s2 + $0xa9c] sm:$0xff]
  %v5593 = vld [vmem:[%s2 + $0xaa4] sm:$0xff]
  %v5594 = vld [vmem:[%s2 + $0xaac] sm:$0xff]
  %v5595 = vld [vmem:[%s2 + $0xab4] sm:$0xf]
  %v5596 = vld [vmem:[%s2 + $0xab8] sm:$0xff]
  %v5597 = vld [vmem:[%s2 + $0xac0] sm:$0xff]
  %v5598 = vld [vmem:[%s2 + $0xac8] sm:$0xff]
  %v5599 = vld [vmem:[%s2 + $0xad0] sm:$0xf]
  %v5600 = vld [vmem:[%s2 + $0xad4] sm:$0xff]
  %v5601 = vld [vmem:[%s2 + $0xadc] sm:$0xff]
  %v5602 = vld [vmem:[%s2 + $0xae4] sm:$0xff]
  %v5603 = vld [vmem:[%s2 + $0xaec] sm:$0xf]
  %v5604 = vld [vmem:[%s2 + $0xaf0] sm:$0xff]
  %v5605 = vld [vmem:[%s2 + $0xaf8] sm:$0xff]
  %v5606 = vld [vmem:[%s2 + $0xb00] sm:$0xff]
  %v5607 = vld [vmem:[%s2 + $0xb08] sm:$0xf]
  %v5608 = vld [vmem:[%s2 + $0xb0c] sm:$0xff]
  %v5609 = vld [vmem:[%s2 + $0xb14] sm:$0xff]
  %v5610 = vld [vmem:[%s2 + $0xb1c] sm:$0xff]
  %v5611 = vld [vmem:[%s2 + $0xb24] sm:$0xf]
  %v5612 = vld [vmem:[%s2 + $0xb28] sm:$0xff]
  %v5613 = vld [vmem:[%s2 + $0xb30] sm:$0xff]
  %v5614 = vld [vmem:[%s2 + $0xb38] sm:$0xff]
  %v5615 = vld [vmem:[%s2 + $0xb40] sm:$0xf]
  %v5616 = vld [vmem:[%s2 + $0xb44] sm:$0xff]
  %v5617 = vld [vmem:[%s2 + $0xb4c] sm:$0xff]
  %v5618 = vld [vmem:[%s2 + $0xb54] sm:$0xff]
  %v5619 = vld [vmem:[%s2 + $0xb5c] sm:$0xf]
  %v5620 = vld [vmem:[%s2 + $0xb60] sm:$0xff]
  %v5621 = vld [vmem:[%s2 + $0xb68] sm:$0xff]
  %v5622 = vld [vmem:[%s2 + $0xb70] sm:$0xff]
  %v5623 = vld [vmem:[%s2 + $0xb78] sm:$0xf]
  %v5624 = vld [vmem:[%s2 + $0xb7c] sm:$0xff]
  %v5625 = vld [vmem:[%s2 + $0xb84] sm:$0xff]
  %v5626 = vld [vmem:[%s2 + $0xb8c] sm:$0xff]
  %v5627 = vld [vmem:[%s2 + $0xb94] sm:$0xf]
  %v5628 = vld [vmem:[%s2 + $0xb98] sm:$0xff]
  %v5629 = vld [vmem:[%s2 + $0xba0] sm:$0xff]
  %v5630 = vld [vmem:[%s2 + $0xba8] sm:$0xff]
  %v5631 = vld [vmem:[%s2 + $0xbb0] sm:$0xf]
  %v5632 = vld [vmem:[%s2 + $0xbb4] sm:$0xff]
  %v5633 = vld [vmem:[%s2 + $0xbbc] sm:$0xff]
  %v5634 = vld [vmem:[%s2 + $0xbc4] sm:$0xff]
  %v5635 = vld [vmem:[%s2 + $0xbcc] sm:$0xf]
  %v5636 = vld [vmem:[%s2 + $0xbd0] sm:$0xff]
  %v5637 = vld [vmem:[%s2 + $0xbd8] sm:$0xff]
  %v5638 = vld [vmem:[%s2 + $0xbe0] sm:$0xff]
  %v5639 = vld [vmem:[%s2 + $0xbe8] sm:$0xf]
  %v5640 = vld [vmem:[%s2 + $0xbec] sm:$0xff]
  %v5641 = vld [vmem:[%s2 + $0xbf4] sm:$0xff]
  %v5642 = vld [vmem:[%s2 + $0xbfc] sm:$0xff]
  %v5643 = vld [vmem:[%s2 + $0xc04] sm:$0xf]
  %v5644 = vld [vmem:[%s2 + $0xc08] sm:$0xff]
  %v5645 = vld [vmem:[%s2 + $0xc10] sm:$0xff]
  %v5646 = vld [vmem:[%s2 + $0xc18] sm:$0xff]
  %v5647 = vld [vmem:[%s2 + $0xc20] sm:$0xf]
  %v5648 = vld [vmem:[%s2 + $0xc24] sm:$0xff]
  %v5649 = vld [vmem:[%s2 + $0xc2c] sm:$0xff]
  %v5650 = vld [vmem:[%s2 + $0xc34] sm:$0xff]
  %v5651 = vld [vmem:[%s2 + $0xc3c] sm:$0xf]
  %v5652 = vld [vmem:[%s2 + $0xc40] sm:$0xff]
  %v5653 = vld [vmem:[%s2 + $0xc48] sm:$0xff]
  %v5654 = vld [vmem:[%s2 + $0xc50] sm:$0xff]
  %v5655 = vld [vmem:[%s2 + $0xc58] sm:$0xf]
  %v5656 = vld [vmem:[%s2 + $0xc5c] sm:$0xff]
  %v5657 = vld [vmem:[%s2 + $0xc64] sm:$0xff]
  %v5658 = vld [vmem:[%s2 + $0xc6c] sm:$0xff]
  %v5659 = vld [vmem:[%s2 + $0xc74] sm:$0xf]
  %v5660 = vld [vmem:[%s2 + $0xc78] sm:$0xff]
  %v5661 = vld [vmem:[%s2 + $0xc80] sm:$0xff]
  %v5662 = vld [vmem:[%s2 + $0xc88] sm:$0xff]
  %v5663 = vld [vmem:[%s2 + $0xc90] sm:$0xf]
  %v5664 = vld [vmem:[%s2 + $0xc94] sm:$0xff]
  %v5665 = vld [vmem:[%s2 + $0xc9c] sm:$0xff]
  %v5666 = vld [vmem:[%s2 + $0xca4] sm:$0xff]
  %v5667 = vld [vmem:[%s2 + $0xcac] sm:$0xf]
  %v5668 = vld [vmem:[%s2 + $0xcb0] sm:$0xff]
  %v5669 = vld [vmem:[%s2 + $0xcb8] sm:$0xff]
  %v5670 = vld [vmem:[%s2 + $0xcc0] sm:$0xff]
  %v5671 = vld [vmem:[%s2 + $0xcc8] sm:$0xf]
  %v5672 = vld [vmem:[%s2 + $0xccc] sm:$0xff]
  %v5673 = vld [vmem:[%s2 + $0xcd4] sm:$0xff]
  %v5674 = vld [vmem:[%s2 + $0xcdc] sm:$0xff]
  %v5675 = vld [vmem:[%s2 + $0xce4] sm:$0xf]
  %v5676 = vld [vmem:[%s2 + $0xce8] sm:$0xff]
  %v5677 = vld [vmem:[%s2 + $0xcf0] sm:$0xff]
  %v5678 = vld [vmem:[%s2 + $0xcf8] sm:$0xff]
  %v5679 = vld [vmem:[%s2 + $0xd00] sm:$0xf]
  %v5680 = vld [vmem:[%s2 + $0xd04] sm:$0xff]
  %v5681 = vld [vmem:[%s2 + $0xd0c] sm:$0xff]
  %v5682 = vld [vmem:[%s2 + $0xd14] sm:$0xff]
  %v5683 = vld [vmem:[%s2 + $0xd1c] sm:$0xf]
  %v5684 = vld [vmem:[%s2 + $0xd20] sm:$0xff]
  %v5685 = vld [vmem:[%s2 + $0xd28] sm:$0xff]
  %v5686 = vld [vmem:[%s2 + $0xd30] sm:$0xff]
  %v5687 = vld [vmem:[%s2 + $0xd38] sm:$0xf]
  %v5688 = vld [vmem:[%s2 + $0xd3c] sm:$0xff]
  %v5689 = vld [vmem:[%s2 + $0xd44] sm:$0xff]
  %v5690 = vld [vmem:[%s2 + $0xd4c] sm:$0xff]
  %v5691 = vld [vmem:[%s2 + $0xd54] sm:$0xf]
  %v5692 = vld [vmem:[%s2 + $0xd58] sm:$0xff]
  %v5693 = vld [vmem:[%s2 + $0xd60] sm:$0xff]
  %v5694 = vld [vmem:[%s2 + $0xd68] sm:$0xff]
  %v5695 = vld [vmem:[%s2 + $0xd70] sm:$0xf]
  %v5696 = vld [vmem:[%s2 + $0xd74] sm:$0xff]
  %v5697 = vld [vmem:[%s2 + $0xd7c] sm:$0xff]
  %v5698 = vld [vmem:[%s2 + $0xd84] sm:$0xff]
  %v5699 = vld [vmem:[%s2 + $0xd8c] sm:$0xf]
  %v5700 = vld [vmem:[%s2 + $0xd90] sm:$0xff]
  %v5701 = vld [vmem:[%s2 + $0xd98] sm:$0xff]
  %v5702 = vld [vmem:[%s2 + $0xda0] sm:$0xff]
  %v5703 = vld [vmem:[%s2 + $0xda8] sm:$0xf]
  %v5704 = vld [vmem:[%s2 + $0xdac] sm:$0xff]
  %v5705 = vld [vmem:[%s2 + $0xdb4] sm:$0xff]
  %v5706 = vld [vmem:[%s2 + $0xdbc] sm:$0xff]
  %v5707 = vld [vmem:[%s2 + $0xdc4] sm:$0xf]
  %v5708 = vld [vmem:[%s2 + $0xdc8] sm:$0xff]
  %v5709 = vld [vmem:[%s2 + $0xdd0] sm:$0xff]
  %v5710 = vld [vmem:[%s2 + $0xdd8] sm:$0xff]
  %v5711 = vld [vmem:[%s2 + $0xde0] sm:$0xf]
  %v5712 = vld [vmem:[%s2 + $0xde4] sm:$0xff]
  %v5713 = vld [vmem:[%s2 + $0xdec] sm:$0xff]
  %v5714 = vld [vmem:[%s2 + $0xdf4] sm:$0xff]
  %v5715 = vld [vmem:[%s2 + $0xdfc] sm:$0xf]
  %v5716 = vld [vmem:[%s2 + $0xe00] sm:$0xff]
  %v5717 = vld [vmem:[%s2 + $0xe08] sm:$0xff]
  %v5718 = vld [vmem:[%s2 + $0xe10] sm:$0xff]
  %v5719 = vld [vmem:[%s2 + $0xe18] sm:$0xf]
  %v5720 = vld [vmem:[%s2 + $0xe1c] sm:$0xff]
  %v5721 = vld [vmem:[%s2 + $0xe24] sm:$0xff]
  %v5722 = vld [vmem:[%s2 + $0xe2c] sm:$0xff]
  %v5723 = vld [vmem:[%s2 + $0xe34] sm:$0xf]
  %v5724 = vld [vmem:[%s2 + $0xe38] sm:$0xff]
  %v5725 = vld [vmem:[%s2 + $0xe40] sm:$0xff]
  %v5726 = vld [vmem:[%s2 + $0xe48] sm:$0xff]
  %v5727 = vld [vmem:[%s2 + $0xe50] sm:$0xf]
  %v5728 = vld [vmem:[%s2 + $0xe54] sm:$0xff]
  %v5729 = vld [vmem:[%s2 + $0xe5c] sm:$0xff]
  %v5730 = vld [vmem:[%s2 + $0xe64] sm:$0xff]
  %v5731 = vld [vmem:[%s2 + $0xe6c] sm:$0xf]
  %v5732 = vld [vmem:[%s2 + $0xe70] sm:$0xff]
  %v5733 = vld [vmem:[%s2 + $0xe78] sm:$0xff]
  %v5734 = vld [vmem:[%s2 + $0xe80] sm:$0xff]
  %v5735 = vld [vmem:[%s2 + $0xe88] sm:$0xf]
  %v5736 = vld [vmem:[%s2 + $0xe8c] sm:$0xff]
  %v5737 = vld [vmem:[%s2 + $0xe94] sm:$0xff]
  %v5738 = vld [vmem:[%s2 + $0xe9c] sm:$0xff]
  %v5739 = vld [vmem:[%s2 + $0xea4] sm:$0xf]
  %v5740 = vld [vmem:[%s2 + $0xea8] sm:$0xff]
  %v5741 = vld [vmem:[%s2 + $0xeb0] sm:$0xff]
  %v5742 = vld [vmem:[%s2 + $0xeb8] sm:$0xff]
  %v5743 = vld [vmem:[%s2 + $0xec0] sm:$0xf]
  %v5744 = vld [vmem:[%s2 + $0xec4] sm:$0xff]
  %v5745 = vld [vmem:[%s2 + $0xecc] sm:$0xff]
  %v5746 = vld [vmem:[%s2 + $0xed4] sm:$0xff]
  %v5747 = vld [vmem:[%s2 + $0xedc] sm:$0xf]
  %v5748 = vld [vmem:[%s2 + $0xee0] sm:$0xff]
  %v5749 = vld [vmem:[%s2 + $0xee8] sm:$0xff]
  %v5750 = vld [vmem:[%s2 + $0xef0] sm:$0xff]
  %v5751 = vld [vmem:[%s2 + $0xef8] sm:$0xf]
  %v5752 = vld [vmem:[%s2 + $0xefc] sm:$0xff]
  %v5753 = vld [vmem:[%s2 + $0xf04] sm:$0xff]
  %v5754 = vld [vmem:[%s2 + $0xf0c] sm:$0xff]
  %v5755 = vld [vmem:[%s2 + $0xf14] sm:$0xf]
  %v5756 = vld [vmem:[%s2 + $0xf18] sm:$0xff]
  %v5757 = vld [vmem:[%s2 + $0xf20] sm:$0xff]
  %v5758 = vld [vmem:[%s2 + $0xf28] sm:$0xff]
  %v5759 = vld [vmem:[%s2 + $0xf30] sm:$0xf]
  %v5760 = vld [vmem:[%s2 + $0xf34] sm:$0xff]
  %v5761 = vld [vmem:[%s2 + $0xf3c] sm:$0xff]
  %v5762 = vld [vmem:[%s2 + $0xf44] sm:$0xff]
  %v5763 = vld [vmem:[%s2 + $0xf4c] sm:$0xf]
  %v5764 = vld [vmem:[%s2 + $0xf50] sm:$0xff]
  %v5765 = vld [vmem:[%s2 + $0xf58] sm:$0xff]
  %v5766 = vld [vmem:[%s2 + $0xf60] sm:$0xff]
  %v5767 = vld [vmem:[%s2 + $0xf68] sm:$0xf]
  %v5768 = vld [vmem:[%s2 + $0xf6c] sm:$0xff]
  %v5769 = vld [vmem:[%s2 + $0xf74] sm:$0xff]
  %v5770 = vld [vmem:[%s2 + $0xf7c] sm:$0xff]
  %v5771 = vld [vmem:[%s2 + $0xf84] sm:$0xf]
  %v5772 = vld [vmem:[%s2 + $0xf88] sm:$0xff]
  %v5773 = vld [vmem:[%s2 + $0xf90] sm:$0xff]
  %v5774 = vld [vmem:[%s2 + $0xf98] sm:$0xff]
  %v5775 = vld [vmem:[%s2 + $0xfa0] sm:$0xf]
  %v5776 = vld [vmem:[%s2 + $0xfa4] sm:$0xff]
  %v5777 = vld [vmem:[%s2 + $0xfac] sm:$0xff]
  %v5778 = vld [vmem:[%s2 + $0xfb4] sm:$0xff]
  %v5779 = vld [vmem:[%s2 + $0xfbc] sm:$0xf]
  %v5780 = vld [vmem:[%s2 + $0xfc0] sm:$0xff]
  %v5781 = vld [vmem:[%s2 + $0xfc8] sm:$0xff]
  %v5782 = vld [vmem:[%s2 + $0xfd0] sm:$0xff]
  %v5783 = vld [vmem:[%s2 + $0xfd8] sm:$0xf]
  %v5784 = vld [vmem:[%s2 + $0xfdc] sm:$0xff]
  %v5785 = vld [vmem:[%s2 + $0xfe4] sm:$0xff]
  %v5786 = vld [vmem:[%s2 + $0xfec] sm:$0xff]
  %v5787 = vld [vmem:[%s2 + $0xff4] sm:$0xf]
  %v5788 = vld [vmem:[%s2 + $0xff8] sm:$0xff]
  %v5789 = vld [vmem:[%s2 + $0x1000] sm:$0xff]
  %v5790 = vld [vmem:[%s2 + $0x1008] sm:$0xff]
  %v5791 = vld [vmem:[%s2 + $0x1010] sm:$0xf]
  %v5792 = vld [vmem:[%s2 + $0x1014] sm:$0xff]
  %v5793 = vld [vmem:[%s2 + $0x101c] sm:$0xff]
  %v5794 = vld [vmem:[%s2 + $0x1024] sm:$0xff]
  %v5795 = vld [vmem:[%s2 + $0x102c] sm:$0xf]
  %v5796 = vld [vmem:[%s2 + $0x1030] sm:$0xff]
  %v5797 = vld [vmem:[%s2 + $0x1038] sm:$0xff]
  %v5798 = vld [vmem:[%s2 + $0x1040] sm:$0xff]
  %v5799 = vld [vmem:[%s2 + $0x1048] sm:$0xf]
  %v5800 = vld [vmem:[%s2 + $0x104c] sm:$0xff]
  %v5801 = vld [vmem:[%s2 + $0x1054] sm:$0xff]
  %v5802 = vld [vmem:[%s2 + $0x105c] sm:$0xff]
  %v5803 = vld [vmem:[%s2 + $0x1064] sm:$0xf]
  %v5804 = vld [vmem:[%s2 + $0x1068] sm:$0xff]
  %v5805 = vld [vmem:[%s2 + $0x1070] sm:$0xff]
  %v5806 = vld [vmem:[%s2 + $0x1078] sm:$0xff]
  %v5807 = vld [vmem:[%s2 + $0x1080] sm:$0xf]
  %v5808 = vld [vmem:[%s2 + $0x1084] sm:$0xff]
  %v5809 = vld [vmem:[%s2 + $0x108c] sm:$0xff]
  %v5810 = vld [vmem:[%s2 + $0x1094] sm:$0xff]
  %v5811 = vld [vmem:[%s2 + $0x109c] sm:$0xf]
  %v5812 = vld [vmem:[%s2 + $0x10a0] sm:$0xff]
  %v5813 = vld [vmem:[%s2 + $0x10a8] sm:$0xff]
  %v5814 = vld [vmem:[%s2 + $0x10b0] sm:$0xff]
  %v5815 = vld [vmem:[%s2 + $0x10b8] sm:$0xf]
  %v5816 = vld [vmem:[%s2 + $0x10bc] sm:$0xff]
  %v5817 = vld [vmem:[%s2 + $0x10c4] sm:$0xff]
  %v5818 = vld [vmem:[%s2 + $0x10cc] sm:$0xff]
  %v5819 = vld [vmem:[%s2 + $0x10d4] sm:$0xf]
  %v5820 = vld [vmem:[%s2 + $0x10d8] sm:$0xff]
  %v5821 = vld [vmem:[%s2 + $0x10e0] sm:$0xff]
  %v5822 = vld [vmem:[%s2 + $0x10e8] sm:$0xff]
  %v5823 = vld [vmem:[%s2 + $0x10f0] sm:$0xf]
  %v5824 = vld [vmem:[%s2 + $0x10f4] sm:$0xff]
  %v5825 = vld [vmem:[%s2 + $0x10fc] sm:$0xff]
  %v5826 = vld [vmem:[%s2 + $0x1104] sm:$0xff]
  %v5827 = vld [vmem:[%s2 + $0x110c] sm:$0xf]
  %v5828 = vld [vmem:[%s2 + $0x1110] sm:$0xff]
  %v5829 = vld [vmem:[%s2 + $0x1118] sm:$0xff]
  %v5830 = vld [vmem:[%s2 + $0x1120] sm:$0xff]
  %v5831 = vld [vmem:[%s2 + $0x1128] sm:$0xf]
  %v5832 = vld [vmem:[%s2 + $0x112c] sm:$0xff]
  %v5833 = vld [vmem:[%s2 + $0x1134] sm:$0xff]
  %v5834 = vld [vmem:[%s2 + $0x113c] sm:$0xff]
  %v5835 = vld [vmem:[%s2 + $0x1144] sm:$0xf]
  %v5836 = vld [vmem:[%s2 + $0x1148] sm:$0xff]
  %v5837 = vld [vmem:[%s2 + $0x1150] sm:$0xff]
  %v5838 = vld [vmem:[%s2 + $0x1158] sm:$0xff]
  %v5839 = vld [vmem:[%s2 + $0x1160] sm:$0xf]
  %v5840 = vld [vmem:[%s2 + $0x1164] sm:$0xff]
  %v5841 = vld [vmem:[%s2 + $0x116c] sm:$0xff]
  %v5842 = vld [vmem:[%s2 + $0x1174] sm:$0xff]
  %v5843 = vld [vmem:[%s2 + $0x117c] sm:$0xf]
  %v5844 = vld [vmem:[%s2 + $0x1180] sm:$0xff]
  %v5845 = vld [vmem:[%s2 + $0x1188] sm:$0xff]
  %v5846 = vld [vmem:[%s2 + $0x1190] sm:$0xff]
  %v5847 = vld [vmem:[%s2 + $0x1198] sm:$0xf]
  %v5848 = vld [vmem:[%s2 + $0x119c] sm:$0xff]
  %v5849 = vld [vmem:[%s2 + $0x11a4] sm:$0xff]
  %v5850 = vld [vmem:[%s2 + $0x11ac] sm:$0xff]
  %v5851 = vld [vmem:[%s2 + $0x11b4] sm:$0xf]
  %v5852 = vld [vmem:[%s2 + $0x11b8] sm:$0xff]
  %v5853 = vld [vmem:[%s2 + $0x11c0] sm:$0xff]
  %v5854 = vld [vmem:[%s2 + $0x11c8] sm:$0xff]
  %v5855 = vld [vmem:[%s2 + $0x11d0] sm:$0xf]
  %v5856 = vld [vmem:[%s2 + $0x11d4] sm:$0xff]
  %v5857 = vld [vmem:[%s2 + $0x11dc] sm:$0xff]
  %v5858 = vld [vmem:[%s2 + $0x11e4] sm:$0xff]
  %v5859 = vld [vmem:[%s2 + $0x11ec] sm:$0xf]
  %v5860 = vld [vmem:[%s2 + $0x11f0] sm:$0xff]
  %v5861 = vld [vmem:[%s2 + $0x11f8] sm:$0xff]
  %v5862 = vld [vmem:[%s2 + $0x1200] sm:$0xff]
  %v5863 = vld [vmem:[%s2 + $0x1208] sm:$0xf]
  %v5864 = vld [vmem:[%s2 + $0x120c] sm:$0xff]
  %v5865 = vld [vmem:[%s2 + $0x1214] sm:$0xff]
  %v5866 = vld [vmem:[%s2 + $0x121c] sm:$0xff]
  %v5867 = vld [vmem:[%s2 + $0x1224] sm:$0xf]
  %v5868 = vld [vmem:[%s2 + $0x1228] sm:$0xff]
  %v5869 = vld [vmem:[%s2 + $0x1230] sm:$0xff]
  %v5870 = vld [vmem:[%s2 + $0x1238] sm:$0xff]
  %v5871 = vld [vmem:[%s2 + $0x1240] sm:$0xf]
  %v5872 = vld [vmem:[%s2 + $0x1244] sm:$0xff]
  %v5873 = vld [vmem:[%s2 + $0x124c] sm:$0xff]
  %v5874 = vld [vmem:[%s2 + $0x1254] sm:$0xff]
  %v5875 = vld [vmem:[%s2 + $0x125c] sm:$0xf]
  %v5876 = vld [vmem:[%s2 + $0x1260] sm:$0xff]
  %v5877 = vld [vmem:[%s2 + $0x1268] sm:$0xff]
  %v5878 = vld [vmem:[%s2 + $0x1270] sm:$0xff]
  %v5879 = vld [vmem:[%s2 + $0x1278] sm:$0xf]
  %v5880 = vld [vmem:[%s2 + $0x127c] sm:$0xff]
  %v5881 = vld [vmem:[%s2 + $0x1284] sm:$0xff]
  %v5882 = vld [vmem:[%s2 + $0x128c] sm:$0xff]
  %v5883 = vld [vmem:[%s2 + $0x1294] sm:$0xf]
  %v5884 = vld [vmem:[%s2 + $0x1298] sm:$0xff]
  %v5885 = vld [vmem:[%s2 + $0x12a0] sm:$0xff]
  %v5886 = vld [vmem:[%s2 + $0x12a8] sm:$0xff]
  %v5887 = vld [vmem:[%s2 + $0x12b0] sm:$0xf]
  %v5888 = vld [vmem:[%s2 + $0x12b4] sm:$0xff]
  %v5889 = vld [vmem:[%s2 + $0x12bc] sm:$0xff]
  %v5890 = vld [vmem:[%s2 + $0x12c4] sm:$0xff]
  %v5891 = vld [vmem:[%s2 + $0x12cc] sm:$0xf]
  %v5892 = vld [vmem:[%s2 + $0x12d0] sm:$0xff]
  %v5893 = vld [vmem:[%s2 + $0x12d8] sm:$0xff]
  %v5894 = vld [vmem:[%s2 + $0x12e0] sm:$0xff]
  %v5895 = vld [vmem:[%s2 + $0x12e8] sm:$0xf]
  %v5896 = vld [vmem:[%s2 + $0x12ec] sm:$0xff]
  %v5897 = vld [vmem:[%s2 + $0x12f4] sm:$0xff]
  %v5898 = vld [vmem:[%s2 + $0x12fc] sm:$0xff]
  %v5899 = vld [vmem:[%s2 + $0x1304] sm:$0xf]
  %v5900 = vld [vmem:[%s2 + $0x1308] sm:$0xff]
  %v5901 = vld [vmem:[%s2 + $0x1310] sm:$0xff]
  %v5902 = vld [vmem:[%s2 + $0x1318] sm:$0xff]
  %v5903 = vld [vmem:[%s2 + $0x1320] sm:$0xf]
  %v5904 = vld [vmem:[%s2 + $0x1324] sm:$0xff]
  %v5905 = vld [vmem:[%s2 + $0x132c] sm:$0xff]
  %v5906 = vld [vmem:[%s2 + $0x1334] sm:$0xff]
  %v5907 = vld [vmem:[%s2 + $0x133c] sm:$0xf]
  %v5908 = vld [vmem:[%s2 + $0x1340] sm:$0xff]
  %v5909 = vld [vmem:[%s2 + $0x1348] sm:$0xff]
  %v5910 = vld [vmem:[%s2 + $0x1350] sm:$0xff]
  %v5911 = vld [vmem:[%s2 + $0x1358] sm:$0xf]
  %v5912 = vld [vmem:[%s2 + $0x135c] sm:$0xff]
  %v5913 = vld [vmem:[%s2 + $0x1364] sm:$0xff]
  %v5914 = vld [vmem:[%s2 + $0x136c] sm:$0xff]
  %v5915 = vld [vmem:[%s2 + $0x1374] sm:$0xf]
  %v5916 = vld [vmem:[%s2 + $0x1378] sm:$0xff]
  %v5917 = vld [vmem:[%s2 + $0x1380] sm:$0xff]
  %v5918 = vld [vmem:[%s2 + $0x1388] sm:$0xff]
  %v5919 = vld [vmem:[%s2 + $0x1390] sm:$0xf]
  %v5920 = vld [vmem:[%s2 + $0x1394] sm:$0xff]
  %v5921 = vld [vmem:[%s2 + $0x139c] sm:$0xff]
  %v5922 = vld [vmem:[%s2 + $0x13a4] sm:$0xff]
  %v5923 = vld [vmem:[%s2 + $0x13ac] sm:$0xf]
  %v5924 = vld [vmem:[%s2 + $0x13b0] sm:$0xff]
  %v5925 = vld [vmem:[%s2 + $0x13b8] sm:$0xff]
  %v5926 = vld [vmem:[%s2 + $0x13c0] sm:$0xff]
  %v5927 = vld [vmem:[%s2 + $0x13c8] sm:$0xf]
  %v5928 = vld [vmem:[%s2 + $0x13cc] sm:$0xff]
  %v5929 = vld [vmem:[%s2 + $0x13d4] sm:$0xff]
  %v5930 = vld [vmem:[%s2 + $0x13dc] sm:$0xff]
  %v5931 = vld [vmem:[%s2 + $0x13e4] sm:$0xf]
  %v5932 = vld [vmem:[%s2 + $0x13e8] sm:$0xff]
  %v5933 = vld [vmem:[%s2 + $0x13f0] sm:$0xff]
  %v5934 = vld [vmem:[%s2 + $0x13f8] sm:$0xff]
  %v5935 = vld [vmem:[%s2 + $0x1400] sm:$0xf]
  %v5936 = vld [vmem:[%s2 + $0x1404] sm:$0xff]
  %v5937 = vld [vmem:[%s2 + $0x140c] sm:$0xff]
  %v5938 = vld [vmem:[%s2 + $0x1414] sm:$0xff]
  %v5939 = vld [vmem:[%s2 + $0x141c] sm:$0xf]
  %v5940 = vld [vmem:[%s2 + $0x1420] sm:$0xff]
  %v5941 = vld [vmem:[%s2 + $0x1428] sm:$0xff]
  %v5942 = vld [vmem:[%s2 + $0x1430] sm:$0xff]
  %v5943 = vld [vmem:[%s2 + $0x1438] sm:$0xf]
  %v5944 = vld [vmem:[%s2 + $0x143c] sm:$0xff]
  %v5945 = vld [vmem:[%s2 + $0x1444] sm:$0xff]
  %v5946 = vld [vmem:[%s2 + $0x144c] sm:$0xff]
  %v5947 = vld [vmem:[%s2 + $0x1454] sm:$0xf]
  %v5948 = vld [vmem:[%s2 + $0x1458] sm:$0xff]
  %v5949 = vld [vmem:[%s2 + $0x1460] sm:$0xff]
  %v5950 = vld [vmem:[%s2 + $0x1468] sm:$0xff]
  %v5951 = vld [vmem:[%s2 + $0x1470] sm:$0xf]
  %v5952 = vld [vmem:[%s2 + $0x1474] sm:$0xff]
  %v5953 = vld [vmem:[%s2 + $0x147c] sm:$0xff]
  %v5954 = vld [vmem:[%s2 + $0x1484] sm:$0xff]
  %v5955 = vld [vmem:[%s2 + $0x148c] sm:$0xf]
  %v5956 = vld [vmem:[%s2 + $0x1490] sm:$0xff]
  %v5957 = vld [vmem:[%s2 + $0x1498] sm:$0xff]
  %v5958 = vld [vmem:[%s2 + $0x14a0] sm:$0xff]
  %v5959 = vld [vmem:[%s2 + $0x14a8] sm:$0xf]
  %v5960 = vld [vmem:[%s2 + $0x14ac] sm:$0xff]
  %v5961 = vld [vmem:[%s2 + $0x14b4] sm:$0xff]
  %v5962 = vld [vmem:[%s2 + $0x14bc] sm:$0xff]
  %v5963 = vld [vmem:[%s2 + $0x14c4] sm:$0xf]
  %v5964 = vld [vmem:[%s2 + $0x14c8] sm:$0xff]
  %v5965 = vld [vmem:[%s2 + $0x14d0] sm:$0xff]
  %v5966 = vld [vmem:[%s2 + $0x14d8] sm:$0xff]
  %v5967 = vld [vmem:[%s2 + $0x14e0] sm:$0xf]
  %v5968 = vld [vmem:[%s2 + $0x14e4] sm:$0xff]
  %v5969 = vld [vmem:[%s2 + $0x14ec] sm:$0xff]
  %v5970 = vld [vmem:[%s2 + $0x14f4] sm:$0xff]
  %v5971 = vld [vmem:[%s2 + $0x14fc] sm:$0xf]
  %v5972 = vld [vmem:[%s2 + $0x1500] sm:$0xff]
  %v5973 = vld [vmem:[%s2 + $0x1508] sm:$0xff]
  %v5974 = vld [vmem:[%s2 + $0x1510] sm:$0xff]
  %v5975 = vld [vmem:[%s2 + $0x1518] sm:$0xf]
  %v5976 = vld [vmem:[%s2 + $0x151c] sm:$0xff]
  %v5977 = vld [vmem:[%s2 + $0x1524] sm:$0xff]
  %v5978 = vld [vmem:[%s2 + $0x152c] sm:$0xff]
  %v5979 = vld [vmem:[%s2 + $0x1534] sm:$0xf]
  %v5980 = vld [vmem:[%s2 + $0x1538] sm:$0xff]
  %v5981 = vld [vmem:[%s2 + $0x1540] sm:$0xff]
  %v5982 = vld [vmem:[%s2 + $0x1548] sm:$0xff]
  %v5983 = vld [vmem:[%s2 + $0x1550] sm:$0xf]
  %v5984 = vld [vmem:[%s2 + $0x1554] sm:$0xff]
  %v5985 = vld [vmem:[%s2 + $0x155c] sm:$0xff]
  %v5986 = vld [vmem:[%s2 + $0x1564] sm:$0xff]
  %v5987 = vld [vmem:[%s2 + $0x156c] sm:$0xf]
  %v5988 = vld [vmem:[%s5] sm:$0x7f]
  %v5990 = vlaneseq
  %v5991 = vshrl.u32 %v5990, 7
  %v5992 = vsub.s32 0, %v5991
  %v5993 = vrot.slane %v5988, %v5992
  %v5994 = vlaneseq
  %v5995 = vshrl.u32 %v5994, 7
  %v5996 = vsub.s32 1, %v5995
  %v5997 = vrot.slane %v5988, %v5996
  %v5998 = vlaneseq
  %v5999 = vshrl.u32 %v5998, 7
  %v6000 = vsub.s32 2, %v5999
  %v6001 = vrot.slane %v5988, %v6000
  %v6002 = vlaneseq
  %v6003 = vshrl.u32 %v6002, 7
  %v6004 = vsub.s32 3, %v6003
  %v6005 = vrot.slane %v5988, %v6004
  %v6006 = vlaneseq
  %v6007 = vshrl.u32 %v6006, 7
  %v6008 = vsub.s32 4, %v6007
  %v6009 = vrot.slane %v5988, %v6008
  %v6010 = vlaneseq
  %v6011 = vshrl.u32 %v6010, 7
  %v6012 = vsub.s32 5, %v6011
  %v6013 = vrot.slane %v5988, %v6012
  %v6014 = vlaneseq
  %v6015 = vshrl.u32 %v6014, 7
  %v6016 = vsub.s32 6, %v6015
  %v6017 = vrot.slane %v5988, %v6016
  %v6809 = vunpack.c.l.b16 %v5204
  %v6810 = vunpack.c.h.b16 %v5204
  %v6811 = vunpack.c.l.b16 %v5205
  %v6812 = vunpack.c.h.b16 %v5205
  %v6813 = vunpack.c.l.b16 %v5206
  %v6814 = vunpack.c.h.b16 %v5206
  %v6815 = vunpack.c.l.b16 %v5207
  %v6816 = vunpack.c.l.b16 %v5208
  %v6817 = vunpack.c.h.b16 %v5208
  %v6818 = vunpack.c.l.b16 %v5209
  %v6819 = vunpack.c.h.b16 %v5209
  %v6820 = vunpack.c.l.b16 %v5210
  %v6821 = vunpack.c.h.b16 %v5210
  %v6822 = vunpack.c.l.b16 %v5211
  %v6823 = vunpack.c.l.b16 %v5212
  %v6824 = vunpack.c.h.b16 %v5212
  %v6825 = vunpack.c.l.b16 %v5213
  %v6826 = vunpack.c.h.b16 %v5213
  %v6827 = vunpack.c.l.b16 %v5214
  %v6828 = vunpack.c.h.b16 %v5214
  %v6829 = vunpack.c.l.b16 %v5215
  %v6830 = vunpack.c.l.b16 %v5216
  %v6831 = vunpack.c.h.b16 %v5216
  %v6832 = vunpack.c.l.b16 %v5217
  %v6833 = vunpack.c.h.b16 %v5217
  %v6834 = vunpack.c.l.b16 %v5218
  %v6835 = vunpack.c.h.b16 %v5218
  %v6836 = vunpack.c.l.b16 %v5219
  %v6837 = vunpack.c.l.b16 %v5220
  %v6838 = vunpack.c.h.b16 %v5220
  %v6839 = vunpack.c.l.b16 %v5221
  %v6840 = vunpack.c.h.b16 %v5221
  %v6841 = vunpack.c.l.b16 %v5222
  %v6842 = vunpack.c.h.b16 %v5222
  %v6843 = vunpack.c.l.b16 %v5223
  %v6844 = vunpack.c.l.b16 %v5224
  %v6845 = vunpack.c.h.b16 %v5224
  %v6846 = vunpack.c.l.b16 %v5225
  %v6847 = vunpack.c.h.b16 %v5225
  %v6848 = vunpack.c.l.b16 %v5226
  %v6849 = vunpack.c.h.b16 %v5226
  %v6850 = vunpack.c.l.b16 %v5227
  %v6851 = vunpack.c.l.b16 %v5228
  %v6852 = vunpack.c.h.b16 %v5228
  %v6853 = vunpack.c.l.b16 %v5229
  %v6854 = vunpack.c.h.b16 %v5229
  %v6855 = vunpack.c.l.b16 %v5230
  %v6856 = vunpack.c.h.b16 %v5230
  %v6857 = vunpack.c.l.b16 %v5231
  %v6858 = vunpack.c.l.b16 %v5232
  %v6859 = vunpack.c.h.b16 %v5232
  %v6860 = vunpack.c.l.b16 %v5233
  %v6861 = vunpack.c.h.b16 %v5233
  %v6862 = vunpack.c.l.b16 %v5234
  %v6863 = vunpack.c.h.b16 %v5234
  %v6864 = vunpack.c.l.b16 %v5235
  %v6865 = vunpack.c.l.b16 %v5236
  %v6866 = vunpack.c.h.b16 %v5236
  %v6867 = vunpack.c.l.b16 %v5237
  %v6868 = vunpack.c.h.b16 %v5237
  %v6869 = vunpack.c.l.b16 %v5238
  %v6870 = vunpack.c.h.b16 %v5238
  %v6871 = vunpack.c.l.b16 %v5239
  %v6872 = vunpack.c.l.b16 %v5240
  %v6873 = vunpack.c.h.b16 %v5240
  %v6874 = vunpack.c.l.b16 %v5241
  %v6875 = vunpack.c.h.b16 %v5241
  %v6876 = vunpack.c.l.b16 %v5242
  %v6877 = vunpack.c.h.b16 %v5242
  %v6878 = vunpack.c.l.b16 %v5243
  %v6879 = vunpack.c.l.b16 %v5244
  %v6880 = vunpack.c.h.b16 %v5244
  %v6881 = vunpack.c.l.b16 %v5245
  %v6882 = vunpack.c.h.b16 %v5245
  %v6883 = vunpack.c.l.b16 %v5246
  %v6884 = vunpack.c.h.b16 %v5246
  %v6885 = vunpack.c.l.b16 %v5247
  %v6886 = vunpack.c.l.b16 %v5248
  %v6887 = vunpack.c.h.b16 %v5248
  %v6888 = vunpack.c.l.b16 %v5249
  %v6889 = vunpack.c.h.b16 %v5249
  %v6890 = vunpack.c.l.b16 %v5250
  %v6891 = vunpack.c.h.b16 %v5250
  %v6892 = vunpack.c.l.b16 %v5251
  %v6893 = vunpack.c.l.b16 %v5252
  %v6894 = vunpack.c.h.b16 %v5252
  %v6895 = vunpack.c.l.b16 %v5253
  %v6896 = vunpack.c.h.b16 %v5253
  %v6897 = vunpack.c.l.b16 %v5254
  %v6898 = vunpack.c.h.b16 %v5254
  %v6899 = vunpack.c.l.b16 %v5255
  %v6900 = vunpack.c.l.b16 %v5256
  %v6901 = vunpack.c.h.b16 %v5256
  %v6902 = vunpack.c.l.b16 %v5257
  %v6903 = vunpack.c.h.b16 %v5257
  %v6904 = vunpack.c.l.b16 %v5258
  %v6905 = vunpack.c.h.b16 %v5258
  %v6906 = vunpack.c.l.b16 %v5259
  %v6907 = vunpack.c.l.b16 %v5260
  %v6908 = vunpack.c.h.b16 %v5260
  %v6909 = vunpack.c.l.b16 %v5261
  %v6910 = vunpack.c.h.b16 %v5261
  %v6911 = vunpack.c.l.b16 %v5262
  %v6912 = vunpack.c.h.b16 %v5262
  %v6913 = vunpack.c.l.b16 %v5263
  %v6914 = vunpack.c.l.b16 %v5264
  %v6915 = vunpack.c.h.b16 %v5264
  %v6916 = vunpack.c.l.b16 %v5265
  %v6917 = vunpack.c.h.b16 %v5265
  %v6918 = vunpack.c.l.b16 %v5266
  %v6919 = vunpack.c.h.b16 %v5266
  %v6920 = vunpack.c.l.b16 %v5267
  %v6921 = vunpack.c.l.b16 %v5268
  %v6922 = vunpack.c.h.b16 %v5268
  %v6923 = vunpack.c.l.b16 %v5269
  %v6924 = vunpack.c.h.b16 %v5269
  %v6925 = vunpack.c.l.b16 %v5270
  %v6926 = vunpack.c.h.b16 %v5270
  %v6927 = vunpack.c.l.b16 %v5271
  %v6928 = vunpack.c.l.b16 %v5272
  %v6929 = vunpack.c.h.b16 %v5272
  %v6930 = vunpack.c.l.b16 %v5273
  %v6931 = vunpack.c.h.b16 %v5273
  %v6932 = vunpack.c.l.b16 %v5274
  %v6933 = vunpack.c.h.b16 %v5274
  %v6934 = vunpack.c.l.b16 %v5275
  %v6935 = vunpack.c.l.b16 %v5276
  %v6936 = vunpack.c.h.b16 %v5276
  %v6937 = vunpack.c.l.b16 %v5277
  %v6938 = vunpack.c.h.b16 %v5277
  %v6939 = vunpack.c.l.b16 %v5278
  %v6940 = vunpack.c.h.b16 %v5278
  %v6941 = vunpack.c.l.b16 %v5279
  %v6942 = vunpack.c.l.b16 %v5280
  %v6943 = vunpack.c.h.b16 %v5280
  %v6944 = vunpack.c.l.b16 %v5281
  %v6945 = vunpack.c.h.b16 %v5281
  %v6946 = vunpack.c.l.b16 %v5282
  %v6947 = vunpack.c.h.b16 %v5282
  %v6948 = vunpack.c.l.b16 %v5283
  %v6949 = vunpack.c.l.b16 %v5284
  %v6950 = vunpack.c.h.b16 %v5284
  %v6951 = vunpack.c.l.b16 %v5285
  %v6952 = vunpack.c.h.b16 %v5285
  %v6953 = vunpack.c.l.b16 %v5286
  %v6954 = vunpack.c.h.b16 %v5286
  %v6955 = vunpack.c.l.b16 %v5287
  %v6956 = vunpack.c.l.b16 %v5288
  %v6957 = vunpack.c.h.b16 %v5288
  %v6958 = vunpack.c.l.b16 %v5289
  %v6959 = vunpack.c.h.b16 %v5289
  %v6960 = vunpack.c.l.b16 %v5290
  %v6961 = vunpack.c.h.b16 %v5290
  %v6962 = vunpack.c.l.b16 %v5291
  %v6963 = vunpack.c.l.b16 %v5292
  %v6964 = vunpack.c.h.b16 %v5292
  %v6965 = vunpack.c.l.b16 %v5293
  %v6966 = vunpack.c.h.b16 %v5293
  %v6967 = vunpack.c.l.b16 %v5294
  %v6968 = vunpack.c.h.b16 %v5294
  %v6969 = vunpack.c.l.b16 %v5295
  %v6970 = vunpack.c.l.b16 %v5296
  %v6971 = vunpack.c.h.b16 %v5296
  %v6972 = vunpack.c.l.b16 %v5297
  %v6973 = vunpack.c.h.b16 %v5297
  %v6974 = vunpack.c.l.b16 %v5298
  %v6975 = vunpack.c.h.b16 %v5298
  %v6976 = vunpack.c.l.b16 %v5299
  %v6977 = vunpack.c.l.b16 %v5300
  %v6978 = vunpack.c.h.b16 %v5300
  %v6979 = vunpack.c.l.b16 %v5301
  %v6980 = vunpack.c.h.b16 %v5301
  %v6981 = vunpack.c.l.b16 %v5302
  %v6982 = vunpack.c.h.b16 %v5302
  %v6983 = vunpack.c.l.b16 %v5303
  %v6984 = vunpack.c.l.b16 %v5304
  %v6985 = vunpack.c.h.b16 %v5304
  %v6986 = vunpack.c.l.b16 %v5305
  %v6987 = vunpack.c.h.b16 %v5305
  %v6988 = vunpack.c.l.b16 %v5306
  %v6989 = vunpack.c.h.b16 %v5306
  %v6990 = vunpack.c.l.b16 %v5307
  %v6991 = vunpack.c.l.b16 %v5308
  %v6992 = vunpack.c.h.b16 %v5308
  %v6993 = vunpack.c.l.b16 %v5309
  %v6994 = vunpack.c.h.b16 %v5309
  %v6995 = vunpack.c.l.b16 %v5310
  %v6996 = vunpack.c.h.b16 %v5310
  %v6997 = vunpack.c.l.b16 %v5311
  %v6998 = vunpack.c.l.b16 %v5312
  %v6999 = vunpack.c.h.b16 %v5312
  %v7000 = vunpack.c.l.b16 %v5313
  %v7001 = vunpack.c.h.b16 %v5313
  %v7002 = vunpack.c.l.b16 %v5314
  %v7003 = vunpack.c.h.b16 %v5314
  %v7004 = vunpack.c.l.b16 %v5315
  %v7005 = vunpack.c.l.b16 %v5316
  %v7006 = vunpack.c.h.b16 %v5316
  %v7007 = vunpack.c.l.b16 %v5317
  %v7008 = vunpack.c.h.b16 %v5317
  %v7009 = vunpack.c.l.b16 %v5318
  %v7010 = vunpack.c.h.b16 %v5318
  %v7011 = vunpack.c.l.b16 %v5319
  %v7012 = vunpack.c.l.b16 %v5320
  %v7013 = vunpack.c.h.b16 %v5320
  %v7014 = vunpack.c.l.b16 %v5321
  %v7015 = vunpack.c.h.b16 %v5321
  %v7016 = vunpack.c.l.b16 %v5322
  %v7017 = vunpack.c.h.b16 %v5322
  %v7018 = vunpack.c.l.b16 %v5323
  %v7019 = vunpack.c.l.b16 %v5324
  %v7020 = vunpack.c.h.b16 %v5324
  %v7021 = vunpack.c.l.b16 %v5325
  %v7022 = vunpack.c.h.b16 %v5325
  %v7023 = vunpack.c.l.b16 %v5326
  %v7024 = vunpack.c.h.b16 %v5326
  %v7025 = vunpack.c.l.b16 %v5327
  %v7026 = vunpack.c.l.b16 %v5328
  %v7027 = vunpack.c.h.b16 %v5328
  %v7028 = vunpack.c.l.b16 %v5329
  %v7029 = vunpack.c.h.b16 %v5329
  %v7030 = vunpack.c.l.b16 %v5330
  %v7031 = vunpack.c.h.b16 %v5330
  %v7032 = vunpack.c.l.b16 %v5331
  %v7033 = vunpack.c.l.b16 %v5332
  %v7034 = vunpack.c.h.b16 %v5332
  %v7035 = vunpack.c.l.b16 %v5333
  %v7036 = vunpack.c.h.b16 %v5333
  %v7037 = vunpack.c.l.b16 %v5334
  %v7038 = vunpack.c.h.b16 %v5334
  %v7039 = vunpack.c.l.b16 %v5335
  %v7040 = vunpack.c.l.b16 %v5336
  %v7041 = vunpack.c.h.b16 %v5336
  %v7042 = vunpack.c.l.b16 %v5337
  %v7043 = vunpack.c.h.b16 %v5337
  %v7044 = vunpack.c.l.b16 %v5338
  %v7045 = vunpack.c.h.b16 %v5338
  %v7046 = vunpack.c.l.b16 %v5339
  %v7047 = vunpack.c.l.b16 %v5340
  %v7048 = vunpack.c.h.b16 %v5340
  %v7049 = vunpack.c.l.b16 %v5341
  %v7050 = vunpack.c.h.b16 %v5341
  %v7051 = vunpack.c.l.b16 %v5342
  %v7052 = vunpack.c.h.b16 %v5342
  %v7053 = vunpack.c.l.b16 %v5343
  %v7054 = vunpack.c.l.b16 %v5344
  %v7055 = vunpack.c.h.b16 %v5344
  %v7056 = vunpack.c.l.b16 %v5345
  %v7057 = vunpack.c.h.b16 %v5345
  %v7058 = vunpack.c.l.b16 %v5346
  %v7059 = vunpack.c.h.b16 %v5346
  %v7060 = vunpack.c.l.b16 %v5347
  %v7061 = vunpack.c.l.b16 %v5348
  %v7062 = vunpack.c.h.b16 %v5348
  %v7063 = vunpack.c.l.b16 %v5349
  %v7064 = vunpack.c.h.b16 %v5349
  %v7065 = vunpack.c.l.b16 %v5350
  %v7066 = vunpack.c.h.b16 %v5350
  %v7067 = vunpack.c.l.b16 %v5351
  %v7068 = vunpack.c.l.b16 %v5352
  %v7069 = vunpack.c.h.b16 %v5352
  %v7070 = vunpack.c.l.b16 %v5353
  %v7071 = vunpack.c.h.b16 %v5353
  %v7072 = vunpack.c.l.b16 %v5354
  %v7073 = vunpack.c.h.b16 %v5354
  %v7074 = vunpack.c.l.b16 %v5355
  %v7075 = vunpack.c.l.b16 %v5356
  %v7076 = vunpack.c.h.b16 %v5356
  %v7077 = vunpack.c.l.b16 %v5357
  %v7078 = vunpack.c.h.b16 %v5357
  %v7079 = vunpack.c.l.b16 %v5358
  %v7080 = vunpack.c.h.b16 %v5358
  %v7081 = vunpack.c.l.b16 %v5359
  %v7082 = vunpack.c.l.b16 %v5360
  %v7083 = vunpack.c.h.b16 %v5360
  %v7084 = vunpack.c.l.b16 %v5361
  %v7085 = vunpack.c.h.b16 %v5361
  %v7086 = vunpack.c.l.b16 %v5362
  %v7087 = vunpack.c.h.b16 %v5362
  %v7088 = vunpack.c.l.b16 %v5363
  %v7089 = vunpack.c.l.b16 %v5364
  %v7090 = vunpack.c.h.b16 %v5364
  %v7091 = vunpack.c.l.b16 %v5365
  %v7092 = vunpack.c.h.b16 %v5365
  %v7093 = vunpack.c.l.b16 %v5366
  %v7094 = vunpack.c.h.b16 %v5366
  %v7095 = vunpack.c.l.b16 %v5367
  %v7096 = vunpack.c.l.b16 %v5368
  %v7097 = vunpack.c.h.b16 %v5368
  %v7098 = vunpack.c.l.b16 %v5369
  %v7099 = vunpack.c.h.b16 %v5369
  %v7100 = vunpack.c.l.b16 %v5370
  %v7101 = vunpack.c.h.b16 %v5370
  %v7102 = vunpack.c.l.b16 %v5371
  %v7103 = vunpack.c.l.b16 %v5372
  %v7104 = vunpack.c.h.b16 %v5372
  %v7105 = vunpack.c.l.b16 %v5373
  %v7106 = vunpack.c.h.b16 %v5373
  %v7107 = vunpack.c.l.b16 %v5374
  %v7108 = vunpack.c.h.b16 %v5374
  %v7109 = vunpack.c.l.b16 %v5375
  %v7110 = vunpack.c.l.b16 %v5376
  %v7111 = vunpack.c.h.b16 %v5376
  %v7112 = vunpack.c.l.b16 %v5377
  %v7113 = vunpack.c.h.b16 %v5377
  %v7114 = vunpack.c.l.b16 %v5378
  %v7115 = vunpack.c.h.b16 %v5378
  %v7116 = vunpack.c.l.b16 %v5379
  %v7117 = vunpack.c.l.b16 %v5380
  %v7118 = vunpack.c.h.b16 %v5380
  %v7119 = vunpack.c.l.b16 %v5381
  %v7120 = vunpack.c.h.b16 %v5381
  %v7121 = vunpack.c.l.b16 %v5382
  %v7122 = vunpack.c.h.b16 %v5382
  %v7123 = vunpack.c.l.b16 %v5383
  %v7124 = vunpack.c.l.b16 %v5384
  %v7125 = vunpack.c.h.b16 %v5384
  %v7126 = vunpack.c.l.b16 %v5385
  %v7127 = vunpack.c.h.b16 %v5385
  %v7128 = vunpack.c.l.b16 %v5386
  %v7129 = vunpack.c.h.b16 %v5386
  %v7130 = vunpack.c.l.b16 %v5387
  %v7131 = vunpack.c.l.b16 %v5388
  %v7132 = vunpack.c.h.b16 %v5388
  %v7133 = vunpack.c.l.b16 %v5389
  %v7134 = vunpack.c.h.b16 %v5389
  %v7135 = vunpack.c.l.b16 %v5390
  %v7136 = vunpack.c.h.b16 %v5390
  %v7137 = vunpack.c.l.b16 %v5391
  %v7138 = vunpack.c.l.b16 %v5392
  %v7139 = vunpack.c.h.b16 %v5392
  %v7140 = vunpack.c.l.b16 %v5393
  %v7141 = vunpack.c.h.b16 %v5393
  %v7142 = vunpack.c.l.b16 %v5394
  %v7143 = vunpack.c.h.b16 %v5394
  %v7144 = vunpack.c.l.b16 %v5395
  %v7145 = vunpack.c.l.b16 %v5396
  %v7146 = vunpack.c.h.b16 %v5396
  %v7147 = vunpack.c.l.b16 %v5397
  %v7148 = vunpack.c.h.b16 %v5397
  %v7149 = vunpack.c.l.b16 %v5398
  %v7150 = vunpack.c.h.b16 %v5398
  %v7151 = vunpack.c.l.b16 %v5399
  %v7152 = vunpack.c.l.b16 %v5400
  %v7153 = vunpack.c.h.b16 %v5400
  %v7154 = vunpack.c.l.b16 %v5401
  %v7155 = vunpack.c.h.b16 %v5401
  %v7156 = vunpack.c.l.b16 %v5402
  %v7157 = vunpack.c.h.b16 %v5402
  %v7158 = vunpack.c.l.b16 %v5403
  %v7159 = vunpack.c.l.b16 %v5404
  %v7160 = vunpack.c.h.b16 %v5404
  %v7161 = vunpack.c.l.b16 %v5405
  %v7162 = vunpack.c.h.b16 %v5405
  %v7163 = vunpack.c.l.b16 %v5406
  %v7164 = vunpack.c.h.b16 %v5406
  %v7165 = vunpack.c.l.b16 %v5407
  %v7166 = vunpack.c.l.b16 %v5408
  %v7167 = vunpack.c.h.b16 %v5408
  %v7168 = vunpack.c.l.b16 %v5409
  %v7169 = vunpack.c.h.b16 %v5409
  %v7170 = vunpack.c.l.b16 %v5410
  %v7171 = vunpack.c.h.b16 %v5410
  %v7172 = vunpack.c.l.b16 %v5411
  %v7173 = vunpack.c.l.b16 %v5412
  %v7174 = vunpack.c.h.b16 %v5412
  %v7175 = vunpack.c.l.b16 %v5413
  %v7176 = vunpack.c.h.b16 %v5413
  %v7177 = vunpack.c.l.b16 %v5414
  %v7178 = vunpack.c.h.b16 %v5414
  %v7179 = vunpack.c.l.b16 %v5415
  %v7180 = vunpack.c.l.b16 %v5416
  %v7181 = vunpack.c.h.b16 %v5416
  %v7182 = vunpack.c.l.b16 %v5417
  %v7183 = vunpack.c.h.b16 %v5417
  %v7184 = vunpack.c.l.b16 %v5418
  %v7185 = vunpack.c.h.b16 %v5418
  %v7186 = vunpack.c.l.b16 %v5419
  %v7187 = vunpack.c.l.b16 %v5420
  %v7188 = vunpack.c.h.b16 %v5420
  %v7189 = vunpack.c.l.b16 %v5421
  %v7190 = vunpack.c.h.b16 %v5421
  %v7191 = vunpack.c.l.b16 %v5422
  %v7192 = vunpack.c.h.b16 %v5422
  %v7193 = vunpack.c.l.b16 %v5423
  %v7194 = vunpack.c.l.b16 %v5424
  %v7195 = vunpack.c.h.b16 %v5424
  %v7196 = vunpack.c.l.b16 %v5425
  %v7197 = vunpack.c.h.b16 %v5425
  %v7198 = vunpack.c.l.b16 %v5426
  %v7199 = vunpack.c.h.b16 %v5426
  %v7200 = vunpack.c.l.b16 %v5427
  %v7201 = vunpack.c.l.b16 %v5428
  %v7202 = vunpack.c.h.b16 %v5428
  %v7203 = vunpack.c.l.b16 %v5429
  %v7204 = vunpack.c.h.b16 %v5429
  %v7205 = vunpack.c.l.b16 %v5430
  %v7206 = vunpack.c.h.b16 %v5430
  %v7207 = vunpack.c.l.b16 %v5431
  %v7208 = vunpack.c.l.b16 %v5432
  %v7209 = vunpack.c.h.b16 %v5432
  %v7210 = vunpack.c.l.b16 %v5433
  %v7211 = vunpack.c.h.b16 %v5433
  %v7212 = vunpack.c.l.b16 %v5434
  %v7213 = vunpack.c.h.b16 %v5434
  %v7214 = vunpack.c.l.b16 %v5435
  %v7215 = vunpack.c.l.b16 %v5436
  %v7216 = vunpack.c.h.b16 %v5436
  %v7217 = vunpack.c.l.b16 %v5437
  %v7218 = vunpack.c.h.b16 %v5437
  %v7219 = vunpack.c.l.b16 %v5438
  %v7220 = vunpack.c.h.b16 %v5438
  %v7221 = vunpack.c.l.b16 %v5439
  %v7222 = vunpack.c.l.b16 %v5440
  %v7223 = vunpack.c.h.b16 %v5440
  %v7224 = vunpack.c.l.b16 %v5441
  %v7225 = vunpack.c.h.b16 %v5441
  %v7226 = vunpack.c.l.b16 %v5442
  %v7227 = vunpack.c.h.b16 %v5442
  %v7228 = vunpack.c.l.b16 %v5443
  %v7229 = vunpack.c.l.b16 %v5444
  %v7230 = vunpack.c.h.b16 %v5444
  %v7231 = vunpack.c.l.b16 %v5445
  %v7232 = vunpack.c.h.b16 %v5445
  %v7233 = vunpack.c.l.b16 %v5446
  %v7234 = vunpack.c.h.b16 %v5446
  %v7235 = vunpack.c.l.b16 %v5447
  %v7236 = vunpack.c.l.b16 %v5448
  %v7237 = vunpack.c.h.b16 %v5448
  %v7238 = vunpack.c.l.b16 %v5449
  %v7239 = vunpack.c.h.b16 %v5449
  %v7240 = vunpack.c.l.b16 %v5450
  %v7241 = vunpack.c.h.b16 %v5450
  %v7242 = vunpack.c.l.b16 %v5451
  %v7243 = vunpack.c.l.b16 %v5452
  %v7244 = vunpack.c.h.b16 %v5452
  %v7245 = vunpack.c.l.b16 %v5453
  %v7246 = vunpack.c.h.b16 %v5453
  %v7247 = vunpack.c.l.b16 %v5454
  %v7248 = vunpack.c.h.b16 %v5454
  %v7249 = vunpack.c.l.b16 %v5455
  %v7250 = vunpack.c.l.b16 %v5456
  %v7251 = vunpack.c.h.b16 %v5456
  %v7252 = vunpack.c.l.b16 %v5457
  %v7253 = vunpack.c.h.b16 %v5457
  %v7254 = vunpack.c.l.b16 %v5458
  %v7255 = vunpack.c.h.b16 %v5458
  %v7256 = vunpack.c.l.b16 %v5459
  %v7257 = vunpack.c.l.b16 %v5460
  %v7258 = vunpack.c.h.b16 %v5460
  %v7259 = vunpack.c.l.b16 %v5461
  %v7260 = vunpack.c.h.b16 %v5461
  %v7261 = vunpack.c.l.b16 %v5462
  %v7262 = vunpack.c.h.b16 %v5462
  %v7263 = vunpack.c.l.b16 %v5463
  %v7264 = vunpack.c.l.b16 %v5464
  %v7265 = vunpack.c.h.b16 %v5464
  %v7266 = vunpack.c.l.b16 %v5465
  %v7267 = vunpack.c.h.b16 %v5465
  %v7268 = vunpack.c.l.b16 %v5466
  %v7269 = vunpack.c.h.b16 %v5466
  %v7270 = vunpack.c.l.b16 %v5467
  %v7271 = vunpack.c.l.b16 %v5468
  %v7272 = vunpack.c.h.b16 %v5468
  %v7273 = vunpack.c.l.b16 %v5469
  %v7274 = vunpack.c.h.b16 %v5469
  %v7275 = vunpack.c.l.b16 %v5470
  %v7276 = vunpack.c.h.b16 %v5470
  %v7277 = vunpack.c.l.b16 %v5471
  %v7278 = vunpack.c.l.b16 %v5472
  %v7279 = vunpack.c.h.b16 %v5472
  %v7280 = vunpack.c.l.b16 %v5473
  %v7281 = vunpack.c.h.b16 %v5473
  %v7282 = vunpack.c.l.b16 %v5474
  %v7283 = vunpack.c.h.b16 %v5474
  %v7284 = vunpack.c.l.b16 %v5475
  %v7285 = vunpack.c.l.b16 %v5476
  %v7286 = vunpack.c.h.b16 %v5476
  %v7287 = vunpack.c.l.b16 %v5477
  %v7288 = vunpack.c.h.b16 %v5477
  %v7289 = vunpack.c.l.b16 %v5478
  %v7290 = vunpack.c.h.b16 %v5478
  %v7291 = vunpack.c.l.b16 %v5479
  %v7292 = vunpack.c.l.b16 %v5480
  %v7293 = vunpack.c.h.b16 %v5480
  %v7294 = vunpack.c.l.b16 %v5481
  %v7295 = vunpack.c.h.b16 %v5481
  %v7296 = vunpack.c.l.b16 %v5482
  %v7297 = vunpack.c.h.b16 %v5482
  %v7298 = vunpack.c.l.b16 %v5483
  %v7299 = vunpack.c.l.b16 %v5484
  %v7300 = vunpack.c.h.b16 %v5484
  %v7301 = vunpack.c.l.b16 %v5485
  %v7302 = vunpack.c.h.b16 %v5485
  %v7303 = vunpack.c.l.b16 %v5486
  %v7304 = vunpack.c.h.b16 %v5486
  %v7305 = vunpack.c.l.b16 %v5487
  %v7306 = vunpack.c.l.b16 %v5488
  %v7307 = vunpack.c.h.b16 %v5488
  %v7308 = vunpack.c.l.b16 %v5489
  %v7309 = vunpack.c.h.b16 %v5489
  %v7310 = vunpack.c.l.b16 %v5490
  %v7311 = vunpack.c.h.b16 %v5490
  %v7312 = vunpack.c.l.b16 %v5491
  %v7313 = vunpack.c.l.b16 %v5492
  %v7314 = vunpack.c.h.b16 %v5492
  %v7315 = vunpack.c.l.b16 %v5493
  %v7316 = vunpack.c.h.b16 %v5493
  %v7317 = vunpack.c.l.b16 %v5494
  %v7318 = vunpack.c.h.b16 %v5494
  %v7319 = vunpack.c.l.b16 %v5495
  %v7320 = vunpack.c.l.b16 %v5496
  %v7321 = vunpack.c.h.b16 %v5496
  %v7322 = vunpack.c.l.b16 %v5497
  %v7323 = vunpack.c.h.b16 %v5497
  %v7324 = vunpack.c.l.b16 %v5498
  %v7325 = vunpack.c.h.b16 %v5498
  %v7326 = vunpack.c.l.b16 %v5499
  %v7327 = vunpack.c.l.b16 %v5500
  %v7328 = vunpack.c.h.b16 %v5500
  %v7329 = vunpack.c.l.b16 %v5501
  %v7330 = vunpack.c.h.b16 %v5501
  %v7331 = vunpack.c.l.b16 %v5502
  %v7332 = vunpack.c.h.b16 %v5502
  %v7333 = vunpack.c.l.b16 %v5503
  %v7334 = vunpack.c.l.b16 %v5504
  %v7335 = vunpack.c.h.b16 %v5504
  %v7336 = vunpack.c.l.b16 %v5505
  %v7337 = vunpack.c.h.b16 %v5505
  %v7338 = vunpack.c.l.b16 %v5506
  %v7339 = vunpack.c.h.b16 %v5506
  %v7340 = vunpack.c.l.b16 %v5507
  %v7341 = vunpack.c.l.b16 %v5508
  %v7342 = vunpack.c.h.b16 %v5508
  %v7343 = vunpack.c.l.b16 %v5509
  %v7344 = vunpack.c.h.b16 %v5509
  %v7345 = vunpack.c.l.b16 %v5510
  %v7346 = vunpack.c.h.b16 %v5510
  %v7347 = vunpack.c.l.b16 %v5511
  %v7348 = vunpack.c.l.b16 %v5512
  %v7349 = vunpack.c.h.b16 %v5512
  %v7350 = vunpack.c.l.b16 %v5513
  %v7351 = vunpack.c.h.b16 %v5513
  %v7352 = vunpack.c.l.b16 %v5514
  %v7353 = vunpack.c.h.b16 %v5514
  %v7354 = vunpack.c.l.b16 %v5515
  %v7355 = vunpack.c.l.b16 %v5516
  %v7356 = vunpack.c.h.b16 %v5516
  %v7357 = vunpack.c.l.b16 %v5517
  %v7358 = vunpack.c.h.b16 %v5517
  %v7359 = vunpack.c.l.b16 %v5518
  %v7360 = vunpack.c.h.b16 %v5518
  %v7361 = vunpack.c.l.b16 %v5519
  %v7362 = vunpack.c.l.b16 %v5520
  %v7363 = vunpack.c.h.b16 %v5520
  %v7364 = vunpack.c.l.b16 %v5521
  %v7365 = vunpack.c.h.b16 %v5521
  %v7366 = vunpack.c.l.b16 %v5522
  %v7367 = vunpack.c.h.b16 %v5522
  %v7368 = vunpack.c.l.b16 %v5523
  %v7369 = vunpack.c.l.b16 %v5524
  %v7370 = vunpack.c.h.b16 %v5524
  %v7371 = vunpack.c.l.b16 %v5525
  %v7372 = vunpack.c.h.b16 %v5525
  %v7373 = vunpack.c.l.b16 %v5526
  %v7374 = vunpack.c.h.b16 %v5526
  %v7375 = vunpack.c.l.b16 %v5527
  %v7376 = vunpack.c.l.b16 %v5528
  %v7377 = vunpack.c.h.b16 %v5528
  %v7378 = vunpack.c.l.b16 %v5529
  %v7379 = vunpack.c.h.b16 %v5529
  %v7380 = vunpack.c.l.b16 %v5530
  %v7381 = vunpack.c.h.b16 %v5530
  %v7382 = vunpack.c.l.b16 %v5531
  %v7383 = vunpack.c.l.b16 %v5532
  %v7384 = vunpack.c.h.b16 %v5532
  %v7385 = vunpack.c.l.b16 %v5533
  %v7386 = vunpack.c.h.b16 %v5533
  %v7387 = vunpack.c.l.b16 %v5534
  %v7388 = vunpack.c.h.b16 %v5534
  %v7389 = vunpack.c.l.b16 %v5535
  %v7390 = vunpack.c.l.b16 %v5536
  %v7391 = vunpack.c.h.b16 %v5536
  %v7392 = vunpack.c.l.b16 %v5537
  %v7393 = vunpack.c.h.b16 %v5537
  %v7394 = vunpack.c.l.b16 %v5538
  %v7395 = vunpack.c.h.b16 %v5538
  %v7396 = vunpack.c.l.b16 %v5539
  %v7397 = vunpack.c.l.b16 %v5540
  %v7398 = vunpack.c.h.b16 %v5540
  %v7399 = vunpack.c.l.b16 %v5541
  %v7400 = vunpack.c.h.b16 %v5541
  %v7401 = vunpack.c.l.b16 %v5542
  %v7402 = vunpack.c.h.b16 %v5542
  %v7403 = vunpack.c.l.b16 %v5543
  %v7404 = vunpack.c.l.b16 %v5544
  %v7405 = vunpack.c.h.b16 %v5544
  %v7406 = vunpack.c.l.b16 %v5545
  %v7407 = vunpack.c.h.b16 %v5545
  %v7408 = vunpack.c.l.b16 %v5546
  %v7409 = vunpack.c.h.b16 %v5546
  %v7410 = vunpack.c.l.b16 %v5547
  %v7411 = vunpack.c.l.b16 %v5548
  %v7412 = vunpack.c.h.b16 %v5548
  %v7413 = vunpack.c.l.b16 %v5549
  %v7414 = vunpack.c.h.b16 %v5549
  %v7415 = vunpack.c.l.b16 %v5550
  %v7416 = vunpack.c.h.b16 %v5550
  %v7417 = vunpack.c.l.b16 %v5551
  %v7418 = vunpack.c.l.b16 %v5552
  %v7419 = vunpack.c.h.b16 %v5552
  %v7420 = vunpack.c.l.b16 %v5553
  %v7421 = vunpack.c.h.b16 %v5553
  %v7422 = vunpack.c.l.b16 %v5554
  %v7423 = vunpack.c.h.b16 %v5554
  %v7424 = vunpack.c.l.b16 %v5555
  %v7425 = vunpack.c.l.b16 %v5556
  %v7426 = vunpack.c.h.b16 %v5556
  %v7427 = vunpack.c.l.b16 %v5557
  %v7428 = vunpack.c.h.b16 %v5557
  %v7429 = vunpack.c.l.b16 %v5558
  %v7430 = vunpack.c.h.b16 %v5558
  %v7431 = vunpack.c.l.b16 %v5559
  %v7432 = vunpack.c.l.b16 %v5560
  %v7433 = vunpack.c.h.b16 %v5560
  %v7434 = vunpack.c.l.b16 %v5561
  %v7435 = vunpack.c.h.b16 %v5561
  %v7436 = vunpack.c.l.b16 %v5562
  %v7437 = vunpack.c.h.b16 %v5562
  %v7438 = vunpack.c.l.b16 %v5563
  %v7439 = vunpack.c.l.b16 %v5564
  %v7440 = vunpack.c.h.b16 %v5564
  %v7441 = vunpack.c.l.b16 %v5565
  %v7442 = vunpack.c.h.b16 %v5565
  %v7443 = vunpack.c.l.b16 %v5566
  %v7444 = vunpack.c.h.b16 %v5566
  %v7445 = vunpack.c.l.b16 %v5567
  %v7446 = vunpack.c.l.b16 %v5568
  %v7447 = vunpack.c.h.b16 %v5568
  %v7448 = vunpack.c.l.b16 %v5569
  %v7449 = vunpack.c.h.b16 %v5569
  %v7450 = vunpack.c.l.b16 %v5570
  %v7451 = vunpack.c.h.b16 %v5570
  %v7452 = vunpack.c.l.b16 %v5571
  %v7453 = vunpack.c.l.b16 %v5572
  %v7454 = vunpack.c.h.b16 %v5572
  %v7455 = vunpack.c.l.b16 %v5573
  %v7456 = vunpack.c.h.b16 %v5573
  %v7457 = vunpack.c.l.b16 %v5574
  %v7458 = vunpack.c.h.b16 %v5574
  %v7459 = vunpack.c.l.b16 %v5575
  %v7460 = vunpack.c.l.b16 %v5576
  %v7461 = vunpack.c.h.b16 %v5576
  %v7462 = vunpack.c.l.b16 %v5577
  %v7463 = vunpack.c.h.b16 %v5577
  %v7464 = vunpack.c.l.b16 %v5578
  %v7465 = vunpack.c.h.b16 %v5578
  %v7466 = vunpack.c.l.b16 %v5579
  %v7467 = vunpack.c.l.b16 %v5580
  %v7468 = vunpack.c.h.b16 %v5580
  %v7469 = vunpack.c.l.b16 %v5581
  %v7470 = vunpack.c.h.b16 %v5581
  %v7471 = vunpack.c.l.b16 %v5582
  %v7472 = vunpack.c.h.b16 %v5582
  %v7473 = vunpack.c.l.b16 %v5583
  %v7474 = vunpack.c.l.b16 %v5584
  %v7475 = vunpack.c.h.b16 %v5584
  %v7476 = vunpack.c.l.b16 %v5585
  %v7477 = vunpack.c.h.b16 %v5585
  %v7478 = vunpack.c.l.b16 %v5586
  %v7479 = vunpack.c.h.b16 %v5586
  %v7480 = vunpack.c.l.b16 %v5587
  %v7481 = vunpack.c.l.b16 %v5588
  %v7482 = vunpack.c.h.b16 %v5588
  %v7483 = vunpack.c.l.b16 %v5589
  %v7484 = vunpack.c.h.b16 %v5589
  %v7485 = vunpack.c.l.b16 %v5590
  %v7486 = vunpack.c.h.b16 %v5590
  %v7487 = vunpack.c.l.b16 %v5591
  %v7488 = vunpack.c.l.b16 %v5592
  %v7489 = vunpack.c.h.b16 %v5592
  %v7490 = vunpack.c.l.b16 %v5593
  %v7491 = vunpack.c.h.b16 %v5593
  %v7492 = vunpack.c.l.b16 %v5594
  %v7493 = vunpack.c.h.b16 %v5594
  %v7494 = vunpack.c.l.b16 %v5595
  %v7495 = vunpack.c.l.b16 %v5596
  %v7496 = vunpack.c.h.b16 %v5596
  %v7497 = vunpack.c.l.b16 %v5597
  %v7498 = vunpack.c.h.b16 %v5597
  %v7499 = vunpack.c.l.b16 %v5598
  %v7500 = vunpack.c.h.b16 %v5598
  %v7501 = vunpack.c.l.b16 %v5599
  %v7502 = vunpack.c.l.b16 %v5600
  %v7503 = vunpack.c.h.b16 %v5600
  %v7504 = vunpack.c.l.b16 %v5601
  %v7505 = vunpack.c.h.b16 %v5601
  %v7506 = vunpack.c.l.b16 %v5602
  %v7507 = vunpack.c.h.b16 %v5602
  %v7508 = vunpack.c.l.b16 %v5603
  %v7509 = vunpack.c.l.b16 %v5604
  %v7510 = vunpack.c.h.b16 %v5604
  %v7511 = vunpack.c.l.b16 %v5605
  %v7512 = vunpack.c.h.b16 %v5605
  %v7513 = vunpack.c.l.b16 %v5606
  %v7514 = vunpack.c.h.b16 %v5606
  %v7515 = vunpack.c.l.b16 %v5607
  %v7516 = vunpack.c.l.b16 %v5608
  %v7517 = vunpack.c.h.b16 %v5608
  %v7518 = vunpack.c.l.b16 %v5609
  %v7519 = vunpack.c.h.b16 %v5609
  %v7520 = vunpack.c.l.b16 %v5610
  %v7521 = vunpack.c.h.b16 %v5610
  %v7522 = vunpack.c.l.b16 %v5611
  %v7523 = vunpack.c.l.b16 %v5612
  %v7524 = vunpack.c.h.b16 %v5612
  %v7525 = vunpack.c.l.b16 %v5613
  %v7526 = vunpack.c.h.b16 %v5613
  %v7527 = vunpack.c.l.b16 %v5614
  %v7528 = vunpack.c.h.b16 %v5614
  %v7529 = vunpack.c.l.b16 %v5615
  %v7530 = vunpack.c.l.b16 %v5616
  %v7531 = vunpack.c.h.b16 %v5616
  %v7532 = vunpack.c.l.b16 %v5617
  %v7533 = vunpack.c.h.b16 %v5617
  %v7534 = vunpack.c.l.b16 %v5618
  %v7535 = vunpack.c.h.b16 %v5618
  %v7536 = vunpack.c.l.b16 %v5619
  %v7537 = vunpack.c.l.b16 %v5620
  %v7538 = vunpack.c.h.b16 %v5620
  %v7539 = vunpack.c.l.b16 %v5621
  %v7540 = vunpack.c.h.b16 %v5621
  %v7541 = vunpack.c.l.b16 %v5622
  %v7542 = vunpack.c.h.b16 %v5622
  %v7543 = vunpack.c.l.b16 %v5623
  %v7544 = vunpack.c.l.b16 %v5624
  %v7545 = vunpack.c.h.b16 %v5624
  %v7546 = vunpack.c.l.b16 %v5625
  %v7547 = vunpack.c.h.b16 %v5625
  %v7548 = vunpack.c.l.b16 %v5626
  %v7549 = vunpack.c.h.b16 %v5626
  %v7550 = vunpack.c.l.b16 %v5627
  %v7551 = vunpack.c.l.b16 %v5628
  %v7552 = vunpack.c.h.b16 %v5628
  %v7553 = vunpack.c.l.b16 %v5629
  %v7554 = vunpack.c.h.b16 %v5629
  %v7555 = vunpack.c.l.b16 %v5630
  %v7556 = vunpack.c.h.b16 %v5630
  %v7557 = vunpack.c.l.b16 %v5631
  %v7558 = vunpack.c.l.b16 %v5632
  %v7559 = vunpack.c.h.b16 %v5632
  %v7560 = vunpack.c.l.b16 %v5633
  %v7561 = vunpack.c.h.b16 %v5633
  %v7562 = vunpack.c.l.b16 %v5634
  %v7563 = vunpack.c.h.b16 %v5634
  %v7564 = vunpack.c.l.b16 %v5635
  %v7565 = vunpack.c.l.b16 %v5636
  %v7566 = vunpack.c.h.b16 %v5636
  %v7567 = vunpack.c.l.b16 %v5637
  %v7568 = vunpack.c.h.b16 %v5637
  %v7569 = vunpack.c.l.b16 %v5638
  %v7570 = vunpack.c.h.b16 %v5638
  %v7571 = vunpack.c.l.b16 %v5639
  %v7572 = vunpack.c.l.b16 %v5640
  %v7573 = vunpack.c.h.b16 %v5640
  %v7574 = vunpack.c.l.b16 %v5641
  %v7575 = vunpack.c.h.b16 %v5641
  %v7576 = vunpack.c.l.b16 %v5642
  %v7577 = vunpack.c.h.b16 %v5642
  %v7578 = vunpack.c.l.b16 %v5643
  %v7579 = vunpack.c.l.b16 %v5644
  %v7580 = vunpack.c.h.b16 %v5644
  %v7581 = vunpack.c.l.b16 %v5645
  %v7582 = vunpack.c.h.b16 %v5645
  %v7583 = vunpack.c.l.b16 %v5646
  %v7584 = vunpack.c.h.b16 %v5646
  %v7585 = vunpack.c.l.b16 %v5647
  %v7586 = vunpack.c.l.b16 %v5648
  %v7587 = vunpack.c.h.b16 %v5648
  %v7588 = vunpack.c.l.b16 %v5649
  %v7589 = vunpack.c.h.b16 %v5649
  %v7590 = vunpack.c.l.b16 %v5650
  %v7591 = vunpack.c.h.b16 %v5650
  %v7592 = vunpack.c.l.b16 %v5651
  %v7593 = vunpack.c.l.b16 %v5652
  %v7594 = vunpack.c.h.b16 %v5652
  %v7595 = vunpack.c.l.b16 %v5653
  %v7596 = vunpack.c.h.b16 %v5653
  %v7597 = vunpack.c.l.b16 %v5654
  %v7598 = vunpack.c.h.b16 %v5654
  %v7599 = vunpack.c.l.b16 %v5655
  %v7600 = vunpack.c.l.b16 %v5656
  %v7601 = vunpack.c.h.b16 %v5656
  %v7602 = vunpack.c.l.b16 %v5657
  %v7603 = vunpack.c.h.b16 %v5657
  %v7604 = vunpack.c.l.b16 %v5658
  %v7605 = vunpack.c.h.b16 %v5658
  %v7606 = vunpack.c.l.b16 %v5659
  %v7607 = vunpack.c.l.b16 %v5660
  %v7608 = vunpack.c.h.b16 %v5660
  %v7609 = vunpack.c.l.b16 %v5661
  %v7610 = vunpack.c.h.b16 %v5661
  %v7611 = vunpack.c.l.b16 %v5662
  %v7612 = vunpack.c.h.b16 %v5662
  %v7613 = vunpack.c.l.b16 %v5663
  %v7614 = vunpack.c.l.b16 %v5664
  %v7615 = vunpack.c.h.b16 %v5664
  %v7616 = vunpack.c.l.b16 %v5665
  %v7617 = vunpack.c.h.b16 %v5665
  %v7618 = vunpack.c.l.b16 %v5666
  %v7619 = vunpack.c.h.b16 %v5666
  %v7620 = vunpack.c.l.b16 %v5667
  %v7621 = vunpack.c.l.b16 %v5668
  %v7622 = vunpack.c.h.b16 %v5668
  %v7623 = vunpack.c.l.b16 %v5669
  %v7624 = vunpack.c.h.b16 %v5669
  %v7625 = vunpack.c.l.b16 %v5670
  %v7626 = vunpack.c.h.b16 %v5670
  %v7627 = vunpack.c.l.b16 %v5671
  %v7628 = vunpack.c.l.b16 %v5672
  %v7629 = vunpack.c.h.b16 %v5672
  %v7630 = vunpack.c.l.b16 %v5673
  %v7631 = vunpack.c.h.b16 %v5673
  %v7632 = vunpack.c.l.b16 %v5674
  %v7633 = vunpack.c.h.b16 %v5674
  %v7634 = vunpack.c.l.b16 %v5675
  %v7635 = vunpack.c.l.b16 %v5676
  %v7636 = vunpack.c.h.b16 %v5676
  %v7637 = vunpack.c.l.b16 %v5677
  %v7638 = vunpack.c.h.b16 %v5677
  %v7639 = vunpack.c.l.b16 %v5678
  %v7640 = vunpack.c.h.b16 %v5678
  %v7641 = vunpack.c.l.b16 %v5679
  %v7642 = vunpack.c.l.b16 %v5680
  %v7643 = vunpack.c.h.b16 %v5680
  %v7644 = vunpack.c.l.b16 %v5681
  %v7645 = vunpack.c.h.b16 %v5681
  %v7646 = vunpack.c.l.b16 %v5682
  %v7647 = vunpack.c.h.b16 %v5682
  %v7648 = vunpack.c.l.b16 %v5683
  %v7649 = vunpack.c.l.b16 %v5684
  %v7650 = vunpack.c.h.b16 %v5684
  %v7651 = vunpack.c.l.b16 %v5685
  %v7652 = vunpack.c.h.b16 %v5685
  %v7653 = vunpack.c.l.b16 %v5686
  %v7654 = vunpack.c.h.b16 %v5686
  %v7655 = vunpack.c.l.b16 %v5687
  %v7656 = vunpack.c.l.b16 %v5688
  %v7657 = vunpack.c.h.b16 %v5688
  %v7658 = vunpack.c.l.b16 %v5689
  %v7659 = vunpack.c.h.b16 %v5689
  %v7660 = vunpack.c.l.b16 %v5690
  %v7661 = vunpack.c.h.b16 %v5690
  %v7662 = vunpack.c.l.b16 %v5691
  %v7663 = vunpack.c.l.b16 %v5692
  %v7664 = vunpack.c.h.b16 %v5692
  %v7665 = vunpack.c.l.b16 %v5693
  %v7666 = vunpack.c.h.b16 %v5693
  %v7667 = vunpack.c.l.b16 %v5694
  %v7668 = vunpack.c.h.b16 %v5694
  %v7669 = vunpack.c.l.b16 %v5695
  %v7670 = vunpack.c.l.b16 %v5696
  %v7671 = vunpack.c.h.b16 %v5696
  %v7672 = vunpack.c.l.b16 %v5697
  %v7673 = vunpack.c.h.b16 %v5697
  %v7674 = vunpack.c.l.b16 %v5698
  %v7675 = vunpack.c.h.b16 %v5698
  %v7676 = vunpack.c.l.b16 %v5699
  %v7677 = vunpack.c.l.b16 %v5700
  %v7678 = vunpack.c.h.b16 %v5700
  %v7679 = vunpack.c.l.b16 %v5701
  %v7680 = vunpack.c.h.b16 %v5701
  %v7681 = vunpack.c.l.b16 %v5702
  %v7682 = vunpack.c.h.b16 %v5702
  %v7683 = vunpack.c.l.b16 %v5703
  %v7684 = vunpack.c.l.b16 %v5704
  %v7685 = vunpack.c.h.b16 %v5704
  %v7686 = vunpack.c.l.b16 %v5705
  %v7687 = vunpack.c.h.b16 %v5705
  %v7688 = vunpack.c.l.b16 %v5706
  %v7689 = vunpack.c.h.b16 %v5706
  %v7690 = vunpack.c.l.b16 %v5707
  %v7691 = vunpack.c.l.b16 %v5708
  %v7692 = vunpack.c.h.b16 %v5708
  %v7693 = vunpack.c.l.b16 %v5709
  %v7694 = vunpack.c.h.b16 %v5709
  %v7695 = vunpack.c.l.b16 %v5710
  %v7696 = vunpack.c.h.b16 %v5710
  %v7697 = vunpack.c.l.b16 %v5711
  %v7698 = vunpack.c.l.b16 %v5712
  %v7699 = vunpack.c.h.b16 %v5712
  %v7700 = vunpack.c.l.b16 %v5713
  %v7701 = vunpack.c.h.b16 %v5713
  %v7702 = vunpack.c.l.b16 %v5714
  %v7703 = vunpack.c.h.b16 %v5714
  %v7704 = vunpack.c.l.b16 %v5715
  %v7705 = vunpack.c.l.b16 %v5716
  %v7706 = vunpack.c.h.b16 %v5716
  %v7707 = vunpack.c.l.b16 %v5717
  %v7708 = vunpack.c.h.b16 %v5717
  %v7709 = vunpack.c.l.b16 %v5718
  %v7710 = vunpack.c.h.b16 %v5718
  %v7711 = vunpack.c.l.b16 %v5719
  %v7712 = vunpack.c.l.b16 %v5720
  %v7713 = vunpack.c.h.b16 %v5720
  %v7714 = vunpack.c.l.b16 %v5721
  %v7715 = vunpack.c.h.b16 %v5721
  %v7716 = vunpack.c.l.b16 %v5722
  %v7717 = vunpack.c.h.b16 %v5722
  %v7718 = vunpack.c.l.b16 %v5723
  %v7719 = vunpack.c.l.b16 %v5724
  %v7720 = vunpack.c.h.b16 %v5724
  %v7721 = vunpack.c.l.b16 %v5725
  %v7722 = vunpack.c.h.b16 %v5725
  %v7723 = vunpack.c.l.b16 %v5726
  %v7724 = vunpack.c.h.b16 %v5726
  %v7725 = vunpack.c.l.b16 %v5727
  %v7726 = vunpack.c.l.b16 %v5728
  %v7727 = vunpack.c.h.b16 %v5728
  %v7728 = vunpack.c.l.b16 %v5729
  %v7729 = vunpack.c.h.b16 %v5729
  %v7730 = vunpack.c.l.b16 %v5730
  %v7731 = vunpack.c.h.b16 %v5730
  %v7732 = vunpack.c.l.b16 %v5731
  %v7733 = vunpack.c.l.b16 %v5732
  %v7734 = vunpack.c.h.b16 %v5732
  %v7735 = vunpack.c.l.b16 %v5733
  %v7736 = vunpack.c.h.b16 %v5733
  %v7737 = vunpack.c.l.b16 %v5734
  %v7738 = vunpack.c.h.b16 %v5734
  %v7739 = vunpack.c.l.b16 %v5735
  %v7740 = vunpack.c.l.b16 %v5736
  %v7741 = vunpack.c.h.b16 %v5736
  %v7742 = vunpack.c.l.b16 %v5737
  %v7743 = vunpack.c.h.b16 %v5737
  %v7744 = vunpack.c.l.b16 %v5738
  %v7745 = vunpack.c.h.b16 %v5738
  %v7746 = vunpack.c.l.b16 %v5739
  %v7747 = vunpack.c.l.b16 %v5740
  %v7748 = vunpack.c.h.b16 %v5740
  %v7749 = vunpack.c.l.b16 %v5741
  %v7750 = vunpack.c.h.b16 %v5741
  %v7751 = vunpack.c.l.b16 %v5742
  %v7752 = vunpack.c.h.b16 %v5742
  %v7753 = vunpack.c.l.b16 %v5743
  %v7754 = vunpack.c.l.b16 %v5744
  %v7755 = vunpack.c.h.b16 %v5744
  %v7756 = vunpack.c.l.b16 %v5745
  %v7757 = vunpack.c.h.b16 %v5745
  %v7758 = vunpack.c.l.b16 %v5746
  %v7759 = vunpack.c.h.b16 %v5746
  %v7760 = vunpack.c.l.b16 %v5747
  %v7761 = vunpack.c.l.b16 %v5748
  %v7762 = vunpack.c.h.b16 %v5748
  %v7763 = vunpack.c.l.b16 %v5749
  %v7764 = vunpack.c.h.b16 %v5749
  %v7765 = vunpack.c.l.b16 %v5750
  %v7766 = vunpack.c.h.b16 %v5750
  %v7767 = vunpack.c.l.b16 %v5751
  %v7768 = vunpack.c.l.b16 %v5752
  %v7769 = vunpack.c.h.b16 %v5752
  %v7770 = vunpack.c.l.b16 %v5753
  %v7771 = vunpack.c.h.b16 %v5753
  %v7772 = vunpack.c.l.b16 %v5754
  %v7773 = vunpack.c.h.b16 %v5754
  %v7774 = vunpack.c.l.b16 %v5755
  %v7775 = vunpack.c.l.b16 %v5756
  %v7776 = vunpack.c.h.b16 %v5756
  %v7777 = vunpack.c.l.b16 %v5757
  %v7778 = vunpack.c.h.b16 %v5757
  %v7779 = vunpack.c.l.b16 %v5758
  %v7780 = vunpack.c.h.b16 %v5758
  %v7781 = vunpack.c.l.b16 %v5759
  %v7782 = vunpack.c.l.b16 %v5760
  %v7783 = vunpack.c.h.b16 %v5760
  %v7784 = vunpack.c.l.b16 %v5761
  %v7785 = vunpack.c.h.b16 %v5761
  %v7786 = vunpack.c.l.b16 %v5762
  %v7787 = vunpack.c.h.b16 %v5762
  %v7788 = vunpack.c.l.b16 %v5763
  %v7789 = vunpack.c.l.b16 %v5764
  %v7790 = vunpack.c.h.b16 %v5764
  %v7791 = vunpack.c.l.b16 %v5765
  %v7792 = vunpack.c.h.b16 %v5765
  %v7793 = vunpack.c.l.b16 %v5766
  %v7794 = vunpack.c.h.b16 %v5766
  %v7795 = vunpack.c.l.b16 %v5767
  %v7796 = vunpack.c.l.b16 %v5768
  %v7797 = vunpack.c.h.b16 %v5768
  %v7798 = vunpack.c.l.b16 %v5769
  %v7799 = vunpack.c.h.b16 %v5769
  %v7800 = vunpack.c.l.b16 %v5770
  %v7801 = vunpack.c.h.b16 %v5770
  %v7802 = vunpack.c.l.b16 %v5771
  %v7803 = vunpack.c.l.b16 %v5772
  %v7804 = vunpack.c.h.b16 %v5772
  %v7805 = vunpack.c.l.b16 %v5773
  %v7806 = vunpack.c.h.b16 %v5773
  %v7807 = vunpack.c.l.b16 %v5774
  %v7808 = vunpack.c.h.b16 %v5774
  %v7809 = vunpack.c.l.b16 %v5775
  %v7810 = vunpack.c.l.b16 %v5776
  %v7811 = vunpack.c.h.b16 %v5776
  %v7812 = vunpack.c.l.b16 %v5777
  %v7813 = vunpack.c.h.b16 %v5777
  %v7814 = vunpack.c.l.b16 %v5778
  %v7815 = vunpack.c.h.b16 %v5778
  %v7816 = vunpack.c.l.b16 %v5779
  %v7817 = vunpack.c.l.b16 %v5780
  %v7818 = vunpack.c.h.b16 %v5780
  %v7819 = vunpack.c.l.b16 %v5781
  %v7820 = vunpack.c.h.b16 %v5781
  %v7821 = vunpack.c.l.b16 %v5782
  %v7822 = vunpack.c.h.b16 %v5782
  %v7823 = vunpack.c.l.b16 %v5783
  %v7824 = vunpack.c.l.b16 %v5784
  %v7825 = vunpack.c.h.b16 %v5784
  %v7826 = vunpack.c.l.b16 %v5785
  %v7827 = vunpack.c.h.b16 %v5785
  %v7828 = vunpack.c.l.b16 %v5786
  %v7829 = vunpack.c.h.b16 %v5786
  %v7830 = vunpack.c.l.b16 %v5787
  %v7831 = vunpack.c.l.b16 %v5788
  %v7832 = vunpack.c.h.b16 %v5788
  %v7833 = vunpack.c.l.b16 %v5789
  %v7834 = vunpack.c.h.b16 %v5789
  %v7835 = vunpack.c.l.b16 %v5790
  %v7836 = vunpack.c.h.b16 %v5790
  %v7837 = vunpack.c.l.b16 %v5791
  %v7838 = vunpack.c.l.b16 %v5792
  %v7839 = vunpack.c.h.b16 %v5792
  %v7840 = vunpack.c.l.b16 %v5793
  %v7841 = vunpack.c.h.b16 %v5793
  %v7842 = vunpack.c.l.b16 %v5794
  %v7843 = vunpack.c.h.b16 %v5794
  %v7844 = vunpack.c.l.b16 %v5795
  %v7845 = vunpack.c.l.b16 %v5796
  %v7846 = vunpack.c.h.b16 %v5796
  %v7847 = vunpack.c.l.b16 %v5797
  %v7848 = vunpack.c.h.b16 %v5797
  %v7849 = vunpack.c.l.b16 %v5798
  %v7850 = vunpack.c.h.b16 %v5798
  %v7851 = vunpack.c.l.b16 %v5799
  %v7852 = vunpack.c.l.b16 %v5800
  %v7853 = vunpack.c.h.b16 %v5800
  %v7854 = vunpack.c.l.b16 %v5801
  %v7855 = vunpack.c.h.b16 %v5801
  %v7856 = vunpack.c.l.b16 %v5802
  %v7857 = vunpack.c.h.b16 %v5802
  %v7858 = vunpack.c.l.b16 %v5803
  %v7859 = vunpack.c.l.b16 %v5804
  %v7860 = vunpack.c.h.b16 %v5804
  %v7861 = vunpack.c.l.b16 %v5805
  %v7862 = vunpack.c.h.b16 %v5805
  %v7863 = vunpack.c.l.b16 %v5806
  %v7864 = vunpack.c.h.b16 %v5806
  %v7865 = vunpack.c.l.b16 %v5807
  %v7866 = vunpack.c.l.b16 %v5808
  %v7867 = vunpack.c.h.b16 %v5808
  %v7868 = vunpack.c.l.b16 %v5809
  %v7869 = vunpack.c.h.b16 %v5809
  %v7870 = vunpack.c.l.b16 %v5810
  %v7871 = vunpack.c.h.b16 %v5810
  %v7872 = vunpack.c.l.b16 %v5811
  %v7873 = vunpack.c.l.b16 %v5812
  %v7874 = vunpack.c.h.b16 %v5812
  %v7875 = vunpack.c.l.b16 %v5813
  %v7876 = vunpack.c.h.b16 %v5813
  %v7877 = vunpack.c.l.b16 %v5814
  %v7878 = vunpack.c.h.b16 %v5814
  %v7879 = vunpack.c.l.b16 %v5815
  %v7880 = vunpack.c.l.b16 %v5816
  %v7881 = vunpack.c.h.b16 %v5816
  %v7882 = vunpack.c.l.b16 %v5817
  %v7883 = vunpack.c.h.b16 %v5817
  %v7884 = vunpack.c.l.b16 %v5818
  %v7885 = vunpack.c.h.b16 %v5818
  %v7886 = vunpack.c.l.b16 %v5819
  %v7887 = vunpack.c.l.b16 %v5820
  %v7888 = vunpack.c.h.b16 %v5820
  %v7889 = vunpack.c.l.b16 %v5821
  %v7890 = vunpack.c.h.b16 %v5821
  %v7891 = vunpack.c.l.b16 %v5822
  %v7892 = vunpack.c.h.b16 %v5822
  %v7893 = vunpack.c.l.b16 %v5823
  %v7894 = vunpack.c.l.b16 %v5824
  %v7895 = vunpack.c.h.b16 %v5824
  %v7896 = vunpack.c.l.b16 %v5825
  %v7897 = vunpack.c.h.b16 %v5825
  %v7898 = vunpack.c.l.b16 %v5826
  %v7899 = vunpack.c.h.b16 %v5826
  %v7900 = vunpack.c.l.b16 %v5827
  %v7901 = vunpack.c.l.b16 %v5828
  %v7902 = vunpack.c.h.b16 %v5828
  %v7903 = vunpack.c.l.b16 %v5829
  %v7904 = vunpack.c.h.b16 %v5829
  %v7905 = vunpack.c.l.b16 %v5830
  %v7906 = vunpack.c.h.b16 %v5830
  %v7907 = vunpack.c.l.b16 %v5831
  %v7908 = vunpack.c.l.b16 %v5832
  %v7909 = vunpack.c.h.b16 %v5832
  %v7910 = vunpack.c.l.b16 %v5833
  %v7911 = vunpack.c.h.b16 %v5833
  %v7912 = vunpack.c.l.b16 %v5834
  %v7913 = vunpack.c.h.b16 %v5834
  %v7914 = vunpack.c.l.b16 %v5835
  %v7915 = vunpack.c.l.b16 %v5836
  %v7916 = vunpack.c.h.b16 %v5836
  %v7917 = vunpack.c.l.b16 %v5837
  %v7918 = vunpack.c.h.b16 %v5837
  %v7919 = vunpack.c.l.b16 %v5838
  %v7920 = vunpack.c.h.b16 %v5838
  %v7921 = vunpack.c.l.b16 %v5839
  %v7922 = vunpack.c.l.b16 %v5840
  %v7923 = vunpack.c.h.b16 %v5840
  %v7924 = vunpack.c.l.b16 %v5841
  %v7925 = vunpack.c.h.b16 %v5841
  %v7926 = vunpack.c.l.b16 %v5842
  %v7927 = vunpack.c.h.b16 %v5842
  %v7928 = vunpack.c.l.b16 %v5843
  %v7929 = vunpack.c.l.b16 %v5844
  %v7930 = vunpack.c.h.b16 %v5844
  %v7931 = vunpack.c.l.b16 %v5845
  %v7932 = vunpack.c.h.b16 %v5845
  %v7933 = vunpack.c.l.b16 %v5846
  %v7934 = vunpack.c.h.b16 %v5846
  %v7935 = vunpack.c.l.b16 %v5847
  %v7936 = vunpack.c.l.b16 %v5848
  %v7937 = vunpack.c.h.b16 %v5848
  %v7938 = vunpack.c.l.b16 %v5849
  %v7939 = vunpack.c.h.b16 %v5849
  %v7940 = vunpack.c.l.b16 %v5850
  %v7941 = vunpack.c.h.b16 %v5850
  %v7942 = vunpack.c.l.b16 %v5851
  %v7943 = vunpack.c.l.b16 %v5852
  %v7944 = vunpack.c.h.b16 %v5852
  %v7945 = vunpack.c.l.b16 %v5853
  %v7946 = vunpack.c.h.b16 %v5853
  %v7947 = vunpack.c.l.b16 %v5854
  %v7948 = vunpack.c.h.b16 %v5854
  %v7949 = vunpack.c.l.b16 %v5855
  %v7950 = vunpack.c.l.b16 %v5856
  %v7951 = vunpack.c.h.b16 %v5856
  %v7952 = vunpack.c.l.b16 %v5857
  %v7953 = vunpack.c.h.b16 %v5857
  %v7954 = vunpack.c.l.b16 %v5858
  %v7955 = vunpack.c.h.b16 %v5858
  %v7956 = vunpack.c.l.b16 %v5859
  %v7957 = vunpack.c.l.b16 %v5860
  %v7958 = vunpack.c.h.b16 %v5860
  %v7959 = vunpack.c.l.b16 %v5861
  %v7960 = vunpack.c.h.b16 %v5861
  %v7961 = vunpack.c.l.b16 %v5862
  %v7962 = vunpack.c.h.b16 %v5862
  %v7963 = vunpack.c.l.b16 %v5863
  %v7964 = vunpack.c.l.b16 %v5864
  %v7965 = vunpack.c.h.b16 %v5864
  %v7966 = vunpack.c.l.b16 %v5865
  %v7967 = vunpack.c.h.b16 %v5865
  %v7968 = vunpack.c.l.b16 %v5866
  %v7969 = vunpack.c.h.b16 %v5866
  %v7970 = vunpack.c.l.b16 %v5867
  %v7971 = vunpack.c.l.b16 %v5868
  %v7972 = vunpack.c.h.b16 %v5868
  %v7973 = vunpack.c.l.b16 %v5869
  %v7974 = vunpack.c.h.b16 %v5869
  %v7975 = vunpack.c.l.b16 %v5870
  %v7976 = vunpack.c.h.b16 %v5870
  %v7977 = vunpack.c.l.b16 %v5871
  %v7978 = vunpack.c.l.b16 %v5872
  %v7979 = vunpack.c.h.b16 %v5872
  %v7980 = vunpack.c.l.b16 %v5873
  %v7981 = vunpack.c.h.b16 %v5873
  %v7982 = vunpack.c.l.b16 %v5874
  %v7983 = vunpack.c.h.b16 %v5874
  %v7984 = vunpack.c.l.b16 %v5875
  %v7985 = vunpack.c.l.b16 %v5876
  %v7986 = vunpack.c.h.b16 %v5876
  %v7987 = vunpack.c.l.b16 %v5877
  %v7988 = vunpack.c.h.b16 %v5877
  %v7989 = vunpack.c.l.b16 %v5878
  %v7990 = vunpack.c.h.b16 %v5878
  %v7991 = vunpack.c.l.b16 %v5879
  %v7992 = vunpack.c.l.b16 %v5880
  %v7993 = vunpack.c.h.b16 %v5880
  %v7994 = vunpack.c.l.b16 %v5881
  %v7995 = vunpack.c.h.b16 %v5881
  %v7996 = vunpack.c.l.b16 %v5882
  %v7997 = vunpack.c.h.b16 %v5882
  %v7998 = vunpack.c.l.b16 %v5883
  %v7999 = vunpack.c.l.b16 %v5884
  %v8000 = vunpack.c.h.b16 %v5884
  %v8001 = vunpack.c.l.b16 %v5885
  %v8002 = vunpack.c.h.b16 %v5885
  %v8003 = vunpack.c.l.b16 %v5886
  %v8004 = vunpack.c.h.b16 %v5886
  %v8005 = vunpack.c.l.b16 %v5887
  %v8006 = vunpack.c.l.b16 %v5888
  %v8007 = vunpack.c.h.b16 %v5888
  %v8008 = vunpack.c.l.b16 %v5889
  %v8009 = vunpack.c.h.b16 %v5889
  %v8010 = vunpack.c.l.b16 %v5890
  %v8011 = vunpack.c.h.b16 %v5890
  %v8012 = vunpack.c.l.b16 %v5891
  %v8013 = vunpack.c.l.b16 %v5892
  %v8014 = vunpack.c.h.b16 %v5892
  %v8015 = vunpack.c.l.b16 %v5893
  %v8016 = vunpack.c.h.b16 %v5893
  %v8017 = vunpack.c.l.b16 %v5894
  %v8018 = vunpack.c.h.b16 %v5894
  %v8019 = vunpack.c.l.b16 %v5895
  %v8020 = vunpack.c.l.b16 %v5896
  %v8021 = vunpack.c.h.b16 %v5896
  %v8022 = vunpack.c.l.b16 %v5897
  %v8023 = vunpack.c.h.b16 %v5897
  %v8024 = vunpack.c.l.b16 %v5898
  %v8025 = vunpack.c.h.b16 %v5898
  %v8026 = vunpack.c.l.b16 %v5899
  %v8027 = vunpack.c.l.b16 %v5900
  %v8028 = vunpack.c.h.b16 %v5900
  %v8029 = vunpack.c.l.b16 %v5901
  %v8030 = vunpack.c.h.b16 %v5901
  %v8031 = vunpack.c.l.b16 %v5902
  %v8032 = vunpack.c.h.b16 %v5902
  %v8033 = vunpack.c.l.b16 %v5903
  %v8034 = vunpack.c.l.b16 %v5904
  %v8035 = vunpack.c.h.b16 %v5904
  %v8036 = vunpack.c.l.b16 %v5905
  %v8037 = vunpack.c.h.b16 %v5905
  %v8038 = vunpack.c.l.b16 %v5906
  %v8039 = vunpack.c.h.b16 %v5906
  %v8040 = vunpack.c.l.b16 %v5907
  %v8041 = vunpack.c.l.b16 %v5908
  %v8042 = vunpack.c.h.b16 %v5908
  %v8043 = vunpack.c.l.b16 %v5909
  %v8044 = vunpack.c.h.b16 %v5909
  %v8045 = vunpack.c.l.b16 %v5910
  %v8046 = vunpack.c.h.b16 %v5910
  %v8047 = vunpack.c.l.b16 %v5911
  %v8048 = vunpack.c.l.b16 %v5912
  %v8049 = vunpack.c.h.b16 %v5912
  %v8050 = vunpack.c.l.b16 %v5913
  %v8051 = vunpack.c.h.b16 %v5913
  %v8052 = vunpack.c.l.b16 %v5914
  %v8053 = vunpack.c.h.b16 %v5914
  %v8054 = vunpack.c.l.b16 %v5915
  %v8055 = vunpack.c.l.b16 %v5916
  %v8056 = vunpack.c.h.b16 %v5916
  %v8057 = vunpack.c.l.b16 %v5917
  %v8058 = vunpack.c.h.b16 %v5917
  %v8059 = vunpack.c.l.b16 %v5918
  %v8060 = vunpack.c.h.b16 %v5918
  %v8061 = vunpack.c.l.b16 %v5919
  %v8062 = vunpack.c.l.b16 %v5920
  %v8063 = vunpack.c.h.b16 %v5920
  %v8064 = vunpack.c.l.b16 %v5921
  %v8065 = vunpack.c.h.b16 %v5921
  %v8066 = vunpack.c.l.b16 %v5922
  %v8067 = vunpack.c.h.b16 %v5922
  %v8068 = vunpack.c.l.b16 %v5923
  %v8069 = vunpack.c.l.b16 %v5924
  %v8070 = vunpack.c.h.b16 %v5924
  %v8071 = vunpack.c.l.b16 %v5925
  %v8072 = vunpack.c.h.b16 %v5925
  %v8073 = vunpack.c.l.b16 %v5926
  %v8074 = vunpack.c.h.b16 %v5926
  %v8075 = vunpack.c.l.b16 %v5927
  %v8076 = vunpack.c.l.b16 %v5928
  %v8077 = vunpack.c.h.b16 %v5928
  %v8078 = vunpack.c.l.b16 %v5929
  %v8079 = vunpack.c.h.b16 %v5929
  %v8080 = vunpack.c.l.b16 %v5930
  %v8081 = vunpack.c.h.b16 %v5930
  %v8082 = vunpack.c.l.b16 %v5931
  %v8083 = vunpack.c.l.b16 %v5932
  %v8084 = vunpack.c.h.b16 %v5932
  %v8085 = vunpack.c.l.b16 %v5933
  %v8086 = vunpack.c.h.b16 %v5933
  %v8087 = vunpack.c.l.b16 %v5934
  %v8088 = vunpack.c.h.b16 %v5934
  %v8089 = vunpack.c.l.b16 %v5935
  %v8090 = vunpack.c.l.b16 %v5936
  %v8091 = vunpack.c.h.b16 %v5936
  %v8092 = vunpack.c.l.b16 %v5937
  %v8093 = vunpack.c.h.b16 %v5937
  %v8094 = vunpack.c.l.b16 %v5938
  %v8095 = vunpack.c.h.b16 %v5938
  %v8096 = vunpack.c.l.b16 %v5939
  %v8097 = vunpack.c.l.b16 %v5940
  %v8098 = vunpack.c.h.b16 %v5940
  %v8099 = vunpack.c.l.b16 %v5941
  %v8100 = vunpack.c.h.b16 %v5941
  %v8101 = vunpack.c.l.b16 %v5942
  %v8102 = vunpack.c.h.b16 %v5942
  %v8103 = vunpack.c.l.b16 %v5943
  %v8104 = vunpack.c.l.b16 %v5944
  %v8105 = vunpack.c.h.b16 %v5944
  %v8106 = vunpack.c.l.b16 %v5945
  %v8107 = vunpack.c.h.b16 %v5945
  %v8108 = vunpack.c.l.b16 %v5946
  %v8109 = vunpack.c.h.b16 %v5946
  %v8110 = vunpack.c.l.b16 %v5947
  %v8111 = vunpack.c.l.b16 %v5948
  %v8112 = vunpack.c.h.b16 %v5948
  %v8113 = vunpack.c.l.b16 %v5949
  %v8114 = vunpack.c.h.b16 %v5949
  %v8115 = vunpack.c.l.b16 %v5950
  %v8116 = vunpack.c.h.b16 %v5950
  %v8117 = vunpack.c.l.b16 %v5951
  %v8118 = vunpack.c.l.b16 %v5952
  %v8119 = vunpack.c.h.b16 %v5952
  %v8120 = vunpack.c.l.b16 %v5953
  %v8121 = vunpack.c.h.b16 %v5953
  %v8122 = vunpack.c.l.b16 %v5954
  %v8123 = vunpack.c.h.b16 %v5954
  %v8124 = vunpack.c.l.b16 %v5955
  %v8125 = vunpack.c.l.b16 %v5956
  %v8126 = vunpack.c.h.b16 %v5956
  %v8127 = vunpack.c.l.b16 %v5957
  %v8128 = vunpack.c.h.b16 %v5957
  %v8129 = vunpack.c.l.b16 %v5958
  %v8130 = vunpack.c.h.b16 %v5958
  %v8131 = vunpack.c.l.b16 %v5959
  %v8132 = vunpack.c.l.b16 %v5960
  %v8133 = vunpack.c.h.b16 %v5960
  %v8134 = vunpack.c.l.b16 %v5961
  %v8135 = vunpack.c.h.b16 %v5961
  %v8136 = vunpack.c.l.b16 %v5962
  %v8137 = vunpack.c.h.b16 %v5962
  %v8138 = vunpack.c.l.b16 %v5963
  %v8139 = vunpack.c.l.b16 %v5964
  %v8140 = vunpack.c.h.b16 %v5964
  %v8141 = vunpack.c.l.b16 %v5965
  %v8142 = vunpack.c.h.b16 %v5965
  %v8143 = vunpack.c.l.b16 %v5966
  %v8144 = vunpack.c.h.b16 %v5966
  %v8145 = vunpack.c.l.b16 %v5967
  %v8146 = vunpack.c.l.b16 %v5968
  %v8147 = vunpack.c.h.b16 %v5968
  %v8148 = vunpack.c.l.b16 %v5969
  %v8149 = vunpack.c.h.b16 %v5969
  %v8150 = vunpack.c.l.b16 %v5970
  %v8151 = vunpack.c.h.b16 %v5970
  %v8152 = vunpack.c.l.b16 %v5971
  %v8153 = vunpack.c.l.b16 %v5972
  %v8154 = vunpack.c.h.b16 %v5972
  %v8155 = vunpack.c.l.b16 %v5973
  %v8156 = vunpack.c.h.b16 %v5973
  %v8157 = vunpack.c.l.b16 %v5974
  %v8158 = vunpack.c.h.b16 %v5974
  %v8159 = vunpack.c.l.b16 %v5975
  %v8160 = vunpack.c.l.b16 %v5976
  %v8161 = vunpack.c.h.b16 %v5976
  %v8162 = vunpack.c.l.b16 %v5977
  %v8163 = vunpack.c.h.b16 %v5977
  %v8164 = vunpack.c.l.b16 %v5978
  %v8165 = vunpack.c.h.b16 %v5978
  %v8166 = vunpack.c.l.b16 %v5979
  %v8167 = vunpack.c.l.b16 %v5980
  %v8168 = vunpack.c.h.b16 %v5980
  %v8169 = vunpack.c.l.b16 %v5981
  %v8170 = vunpack.c.h.b16 %v5981
  %v8171 = vunpack.c.l.b16 %v5982
  %v8172 = vunpack.c.h.b16 %v5982
  %v8173 = vunpack.c.l.b16 %v5983
  %v8174 = vunpack.c.l.b16 %v5984
  %v8175 = vunpack.c.h.b16 %v5984
  %v8176 = vunpack.c.l.b16 %v5985
  %v8177 = vunpack.c.h.b16 %v5985
  %v8178 = vunpack.c.l.b16 %v5986
  %v8179 = vunpack.c.h.b16 %v5986
  %v8180 = vunpack.c.l.b16 %v5987
  %v8181 = vpack.c.b16 %v6816, %v6809
  %v8182 = vpack.c.b16 %v6817, %v6810
  %v8183 = vpack.c.b16 %v6818, %v6811
  %v8184 = vpack.c.b16 %v6819, %v6812
  %v8185 = vpack.c.b16 %v6820, %v6813
  %v8186 = vpack.c.b16 %v6821, %v6814
  %v8187 = vpack.c.b16 %v6822, %v6815
  %v8188 = vpack.c.b16 %v6830, %v6823
  %v8189 = vpack.c.b16 %v6831, %v6824
  %v8190 = vpack.c.b16 %v6832, %v6825
  %v8191 = vpack.c.b16 %v6833, %v6826
  %v8192 = vpack.c.b16 %v6834, %v6827
  %v8193 = vpack.c.b16 %v6835, %v6828
  %v8194 = vpack.c.b16 %v6836, %v6829
  %v8195 = vpack.c.b16 %v6844, %v6837
  %v8196 = vpack.c.b16 %v6845, %v6838
  %v8197 = vpack.c.b16 %v6846, %v6839
  %v8198 = vpack.c.b16 %v6847, %v6840
  %v8199 = vpack.c.b16 %v6848, %v6841
  %v8200 = vpack.c.b16 %v6849, %v6842
  %v8201 = vpack.c.b16 %v6850, %v6843
  %v8202 = vpack.c.b16 %v6858, %v6851
  %v8203 = vpack.c.b16 %v6859, %v6852
  %v8204 = vpack.c.b16 %v6860, %v6853
  %v8205 = vpack.c.b16 %v6861, %v6854
  %v8206 = vpack.c.b16 %v6862, %v6855
  %v8207 = vpack.c.b16 %v6863, %v6856
  %v8208 = vpack.c.b16 %v6864, %v6857
  %v8209 = vpack.c.b16 %v6872, %v6865
  %v8210 = vpack.c.b16 %v6873, %v6866
  %v8211 = vpack.c.b16 %v6874, %v6867
  %v8212 = vpack.c.b16 %v6875, %v6868
  %v8213 = vpack.c.b16 %v6876, %v6869
  %v8214 = vpack.c.b16 %v6877, %v6870
  %v8215 = vpack.c.b16 %v6878, %v6871
  %v8216 = vpack.c.b16 %v6886, %v6879
  %v8217 = vpack.c.b16 %v6887, %v6880
  %v8218 = vpack.c.b16 %v6888, %v6881
  %v8219 = vpack.c.b16 %v6889, %v6882
  %v8220 = vpack.c.b16 %v6890, %v6883
  %v8221 = vpack.c.b16 %v6891, %v6884
  %v8222 = vpack.c.b16 %v6892, %v6885
  %v8223 = vpack.c.b16 %v6900, %v6893
  %v8224 = vpack.c.b16 %v6901, %v6894
  %v8225 = vpack.c.b16 %v6902, %v6895
  %v8226 = vpack.c.b16 %v6903, %v6896
  %v8227 = vpack.c.b16 %v6904, %v6897
  %v8228 = vpack.c.b16 %v6905, %v6898
  %v8229 = vpack.c.b16 %v6906, %v6899
  %v8230 = vpack.c.b16 %v6914, %v6907
  %v8231 = vpack.c.b16 %v6915, %v6908
  %v8232 = vpack.c.b16 %v6916, %v6909
  %v8233 = vpack.c.b16 %v6917, %v6910
  %v8234 = vpack.c.b16 %v6918, %v6911
  %v8235 = vpack.c.b16 %v6919, %v6912
  %v8236 = vpack.c.b16 %v6920, %v6913
  %v8237 = vpack.c.b16 %v6928, %v6921
  %v8238 = vpack.c.b16 %v6929, %v6922
  %v8239 = vpack.c.b16 %v6930, %v6923
  %v8240 = vpack.c.b16 %v6931, %v6924
  %v8241 = vpack.c.b16 %v6932, %v6925
  %v8242 = vpack.c.b16 %v6933, %v6926
  %v8243 = vpack.c.b16 %v6934, %v6927
  %v8244 = vpack.c.b16 %v6942, %v6935
  %v8245 = vpack.c.b16 %v6943, %v6936
  %v8246 = vpack.c.b16 %v6944, %v6937
  %v8247 = vpack.c.b16 %v6945, %v6938
  %v8248 = vpack.c.b16 %v6946, %v6939
  %v8249 = vpack.c.b16 %v6947, %v6940
  %v8250 = vpack.c.b16 %v6948, %v6941
  %v8251 = vpack.c.b16 %v6956, %v6949
  %v8252 = vpack.c.b16 %v6957, %v6950
  %v8253 = vpack.c.b16 %v6958, %v6951
  %v8254 = vpack.c.b16 %v6959, %v6952
  %v8255 = vpack.c.b16 %v6960, %v6953
  %v8256 = vpack.c.b16 %v6961, %v6954
  %v8257 = vpack.c.b16 %v6962, %v6955
  %v8258 = vpack.c.b16 %v6970, %v6963
  %v8259 = vpack.c.b16 %v6971, %v6964
  %v8260 = vpack.c.b16 %v6972, %v6965
  %v8261 = vpack.c.b16 %v6973, %v6966
  %v8262 = vpack.c.b16 %v6974, %v6967
  %v8263 = vpack.c.b16 %v6975, %v6968
  %v8264 = vpack.c.b16 %v6976, %v6969
  %v8265 = vpack.c.b16 %v6984, %v6977
  %v8266 = vpack.c.b16 %v6985, %v6978
  %v8267 = vpack.c.b16 %v6986, %v6979
  %v8268 = vpack.c.b16 %v6987, %v6980
  %v8269 = vpack.c.b16 %v6988, %v6981
  %v8270 = vpack.c.b16 %v6989, %v6982
  %v8271 = vpack.c.b16 %v6990, %v6983
  %v8272 = vpack.c.b16 %v6998, %v6991
  %v8273 = vpack.c.b16 %v6999, %v6992
  %v8274 = vpack.c.b16 %v7000, %v6993
  %v8275 = vpack.c.b16 %v7001, %v6994
  %v8276 = vpack.c.b16 %v7002, %v6995
  %v8277 = vpack.c.b16 %v7003, %v6996
  %v8278 = vpack.c.b16 %v7004, %v6997
  %v8279 = vpack.c.b16 %v7012, %v7005
  %v8280 = vpack.c.b16 %v7013, %v7006
  %v8281 = vpack.c.b16 %v7014, %v7007
  %v8282 = vpack.c.b16 %v7015, %v7008
  %v8283 = vpack.c.b16 %v7016, %v7009
  %v8284 = vpack.c.b16 %v7017, %v7010
  %v8285 = vpack.c.b16 %v7018, %v7011
  %v8286 = vpack.c.b16 %v7026, %v7019
  %v8287 = vpack.c.b16 %v7027, %v7020
  %v8288 = vpack.c.b16 %v7028, %v7021
  %v8289 = vpack.c.b16 %v7029, %v7022
  %v8290 = vpack.c.b16 %v7030, %v7023
  %v8291 = vpack.c.b16 %v7031, %v7024
  %v8292 = vpack.c.b16 %v7032, %v7025
  %v8293 = vpack.c.b16 %v7040, %v7033
  %v8294 = vpack.c.b16 %v7041, %v7034
  %v8295 = vpack.c.b16 %v7042, %v7035
  %v8296 = vpack.c.b16 %v7043, %v7036
  %v8297 = vpack.c.b16 %v7044, %v7037
  %v8298 = vpack.c.b16 %v7045, %v7038
  %v8299 = vpack.c.b16 %v7046, %v7039
  %v8300 = vpack.c.b16 %v7054, %v7047
  %v8301 = vpack.c.b16 %v7055, %v7048
  %v8302 = vpack.c.b16 %v7056, %v7049
  %v8303 = vpack.c.b16 %v7057, %v7050
  %v8304 = vpack.c.b16 %v7058, %v7051
  %v8305 = vpack.c.b16 %v7059, %v7052
  %v8306 = vpack.c.b16 %v7060, %v7053
  %v8307 = vpack.c.b16 %v7068, %v7061
  %v8308 = vpack.c.b16 %v7069, %v7062
  %v8309 = vpack.c.b16 %v7070, %v7063
  %v8310 = vpack.c.b16 %v7071, %v7064
  %v8311 = vpack.c.b16 %v7072, %v7065
  %v8312 = vpack.c.b16 %v7073, %v7066
  %v8313 = vpack.c.b16 %v7074, %v7067
  %v8314 = vpack.c.b16 %v7082, %v7075
  %v8315 = vpack.c.b16 %v7083, %v7076
  %v8316 = vpack.c.b16 %v7084, %v7077
  %v8317 = vpack.c.b16 %v7085, %v7078
  %v8318 = vpack.c.b16 %v7086, %v7079
  %v8319 = vpack.c.b16 %v7087, %v7080
  %v8320 = vpack.c.b16 %v7088, %v7081
  %v8321 = vpack.c.b16 %v7096, %v7089
  %v8322 = vpack.c.b16 %v7097, %v7090
  %v8323 = vpack.c.b16 %v7098, %v7091
  %v8324 = vpack.c.b16 %v7099, %v7092
  %v8325 = vpack.c.b16 %v7100, %v7093
  %v8326 = vpack.c.b16 %v7101, %v7094
  %v8327 = vpack.c.b16 %v7102, %v7095
  %v8328 = vpack.c.b16 %v7110, %v7103
  %v8329 = vpack.c.b16 %v7111, %v7104
  %v8330 = vpack.c.b16 %v7112, %v7105
  %v8331 = vpack.c.b16 %v7113, %v7106
  %v8332 = vpack.c.b16 %v7114, %v7107
  %v8333 = vpack.c.b16 %v7115, %v7108
  %v8334 = vpack.c.b16 %v7116, %v7109
  %v8335 = vpack.c.b16 %v7124, %v7117
  %v8336 = vpack.c.b16 %v7125, %v7118
  %v8337 = vpack.c.b16 %v7126, %v7119
  %v8338 = vpack.c.b16 %v7127, %v7120
  %v8339 = vpack.c.b16 %v7128, %v7121
  %v8340 = vpack.c.b16 %v7129, %v7122
  %v8341 = vpack.c.b16 %v7130, %v7123
  %v8342 = vpack.c.b16 %v7138, %v7131
  %v8343 = vpack.c.b16 %v7139, %v7132
  %v8344 = vpack.c.b16 %v7140, %v7133
  %v8345 = vpack.c.b16 %v7141, %v7134
  %v8346 = vpack.c.b16 %v7142, %v7135
  %v8347 = vpack.c.b16 %v7143, %v7136
  %v8348 = vpack.c.b16 %v7144, %v7137
  %v8349 = vpack.c.b16 %v7152, %v7145
  %v8350 = vpack.c.b16 %v7153, %v7146
  %v8351 = vpack.c.b16 %v7154, %v7147
  %v8352 = vpack.c.b16 %v7155, %v7148
  %v8353 = vpack.c.b16 %v7156, %v7149
  %v8354 = vpack.c.b16 %v7157, %v7150
  %v8355 = vpack.c.b16 %v7158, %v7151
  %v8356 = vpack.c.b16 %v7166, %v7159
  %v8357 = vpack.c.b16 %v7167, %v7160
  %v8358 = vpack.c.b16 %v7168, %v7161
  %v8359 = vpack.c.b16 %v7169, %v7162
  %v8360 = vpack.c.b16 %v7170, %v7163
  %v8361 = vpack.c.b16 %v7171, %v7164
  %v8362 = vpack.c.b16 %v7172, %v7165
  %v8363 = vpack.c.b16 %v7180, %v7173
  %v8364 = vpack.c.b16 %v7181, %v7174
  %v8365 = vpack.c.b16 %v7182, %v7175
  %v8366 = vpack.c.b16 %v7183, %v7176
  %v8367 = vpack.c.b16 %v7184, %v7177
  %v8368 = vpack.c.b16 %v7185, %v7178
  %v8369 = vpack.c.b16 %v7186, %v7179
  %v8370 = vpack.c.b16 %v7194, %v7187
  %v8371 = vpack.c.b16 %v7195, %v7188
  %v8372 = vpack.c.b16 %v7196, %v7189
  %v8373 = vpack.c.b16 %v7197, %v7190
  %v8374 = vpack.c.b16 %v7198, %v7191
  %v8375 = vpack.c.b16 %v7199, %v7192
  %v8376 = vpack.c.b16 %v7200, %v7193
  %v8377 = vpack.c.b16 %v7208, %v7201
  %v8378 = vpack.c.b16 %v7209, %v7202
  %v8379 = vpack.c.b16 %v7210, %v7203
  %v8380 = vpack.c.b16 %v7211, %v7204
  %v8381 = vpack.c.b16 %v7212, %v7205
  %v8382 = vpack.c.b16 %v7213, %v7206
  %v8383 = vpack.c.b16 %v7214, %v7207
  %v8384 = vpack.c.b16 %v7222, %v7215
  %v8385 = vpack.c.b16 %v7223, %v7216
  %v8386 = vpack.c.b16 %v7224, %v7217
  %v8387 = vpack.c.b16 %v7225, %v7218
  %v8388 = vpack.c.b16 %v7226, %v7219
  %v8389 = vpack.c.b16 %v7227, %v7220
  %v8390 = vpack.c.b16 %v7228, %v7221
  %v8391 = vpack.c.b16 %v7236, %v7229
  %v8392 = vpack.c.b16 %v7237, %v7230
  %v8393 = vpack.c.b16 %v7238, %v7231
  %v8394 = vpack.c.b16 %v7239, %v7232
  %v8395 = vpack.c.b16 %v7240, %v7233
  %v8396 = vpack.c.b16 %v7241, %v7234
  %v8397 = vpack.c.b16 %v7242, %v7235
  %v8398 = vpack.c.b16 %v7250, %v7243
  %v8399 = vpack.c.b16 %v7251, %v7244
  %v8400 = vpack.c.b16 %v7252, %v7245
  %v8401 = vpack.c.b16 %v7253, %v7246
  %v8402 = vpack.c.b16 %v7254, %v7247
  %v8403 = vpack.c.b16 %v7255, %v7248
  %v8404 = vpack.c.b16 %v7256, %v7249
  %v8405 = vpack.c.b16 %v7264, %v7257
  %v8406 = vpack.c.b16 %v7265, %v7258
  %v8407 = vpack.c.b16 %v7266, %v7259
  %v8408 = vpack.c.b16 %v7267, %v7260
  %v8409 = vpack.c.b16 %v7268, %v7261
  %v8410 = vpack.c.b16 %v7269, %v7262
  %v8411 = vpack.c.b16 %v7270, %v7263
  %v8412 = vpack.c.b16 %v7278, %v7271
  %v8413 = vpack.c.b16 %v7279, %v7272
  %v8414 = vpack.c.b16 %v7280, %v7273
  %v8415 = vpack.c.b16 %v7281, %v7274
  %v8416 = vpack.c.b16 %v7282, %v7275
  %v8417 = vpack.c.b16 %v7283, %v7276
  %v8418 = vpack.c.b16 %v7284, %v7277
  %v8419 = vpack.c.b16 %v7292, %v7285
  %v8420 = vpack.c.b16 %v7293, %v7286
  %v8421 = vpack.c.b16 %v7294, %v7287
  %v8422 = vpack.c.b16 %v7295, %v7288
  %v8423 = vpack.c.b16 %v7296, %v7289
  %v8424 = vpack.c.b16 %v7297, %v7290
  %v8425 = vpack.c.b16 %v7298, %v7291
  %v8426 = vpack.c.b16 %v7306, %v7299
  %v8427 = vpack.c.b16 %v7307, %v7300
  %v8428 = vpack.c.b16 %v7308, %v7301
  %v8429 = vpack.c.b16 %v7309, %v7302
  %v8430 = vpack.c.b16 %v7310, %v7303
  %v8431 = vpack.c.b16 %v7311, %v7304
  %v8432 = vpack.c.b16 %v7312, %v7305
  %v8433 = vpack.c.b16 %v7320, %v7313
  %v8434 = vpack.c.b16 %v7321, %v7314
  %v8435 = vpack.c.b16 %v7322, %v7315
  %v8436 = vpack.c.b16 %v7323, %v7316
  %v8437 = vpack.c.b16 %v7324, %v7317
  %v8438 = vpack.c.b16 %v7325, %v7318
  %v8439 = vpack.c.b16 %v7326, %v7319
  %v8440 = vpack.c.b16 %v7334, %v7327
  %v8441 = vpack.c.b16 %v7335, %v7328
  %v8442 = vpack.c.b16 %v7336, %v7329
  %v8443 = vpack.c.b16 %v7337, %v7330
  %v8444 = vpack.c.b16 %v7338, %v7331
  %v8445 = vpack.c.b16 %v7339, %v7332
  %v8446 = vpack.c.b16 %v7340, %v7333
  %v8447 = vpack.c.b16 %v7348, %v7341
  %v8448 = vpack.c.b16 %v7349, %v7342
  %v8449 = vpack.c.b16 %v7350, %v7343
  %v8450 = vpack.c.b16 %v7351, %v7344
  %v8451 = vpack.c.b16 %v7352, %v7345
  %v8452 = vpack.c.b16 %v7353, %v7346
  %v8453 = vpack.c.b16 %v7354, %v7347
  %v8454 = vpack.c.b16 %v7362, %v7355
  %v8455 = vpack.c.b16 %v7363, %v7356
  %v8456 = vpack.c.b16 %v7364, %v7357
  %v8457 = vpack.c.b16 %v7365, %v7358
  %v8458 = vpack.c.b16 %v7366, %v7359
  %v8459 = vpack.c.b16 %v7367, %v7360
  %v8460 = vpack.c.b16 %v7368, %v7361
  %v8461 = vpack.c.b16 %v7376, %v7369
  %v8462 = vpack.c.b16 %v7377, %v7370
  %v8463 = vpack.c.b16 %v7378, %v7371
  %v8464 = vpack.c.b16 %v7379, %v7372
  %v8465 = vpack.c.b16 %v7380, %v7373
  %v8466 = vpack.c.b16 %v7381, %v7374
  %v8467 = vpack.c.b16 %v7382, %v7375
  %v8468 = vpack.c.b16 %v7390, %v7383
  %v8469 = vpack.c.b16 %v7391, %v7384
  %v8470 = vpack.c.b16 %v7392, %v7385
  %v8471 = vpack.c.b16 %v7393, %v7386
  %v8472 = vpack.c.b16 %v7394, %v7387
  %v8473 = vpack.c.b16 %v7395, %v7388
  %v8474 = vpack.c.b16 %v7396, %v7389
  %v8475 = vpack.c.b16 %v7404, %v7397
  %v8476 = vpack.c.b16 %v7405, %v7398
  %v8477 = vpack.c.b16 %v7406, %v7399
  %v8478 = vpack.c.b16 %v7407, %v7400
  %v8479 = vpack.c.b16 %v7408, %v7401
  %v8480 = vpack.c.b16 %v7409, %v7402
  %v8481 = vpack.c.b16 %v7410, %v7403
  %v8482 = vpack.c.b16 %v7418, %v7411
  %v8483 = vpack.c.b16 %v7419, %v7412
  %v8484 = vpack.c.b16 %v7420, %v7413
  %v8485 = vpack.c.b16 %v7421, %v7414
  %v8486 = vpack.c.b16 %v7422, %v7415
  %v8487 = vpack.c.b16 %v7423, %v7416
  %v8488 = vpack.c.b16 %v7424, %v7417
  %v8489 = vpack.c.b16 %v7432, %v7425
  %v8490 = vpack.c.b16 %v7433, %v7426
  %v8491 = vpack.c.b16 %v7434, %v7427
  %v8492 = vpack.c.b16 %v7435, %v7428
  %v8493 = vpack.c.b16 %v7436, %v7429
  %v8494 = vpack.c.b16 %v7437, %v7430
  %v8495 = vpack.c.b16 %v7438, %v7431
  %v8496 = vpack.c.b16 %v7446, %v7439
  %v8497 = vpack.c.b16 %v7447, %v7440
  %v8498 = vpack.c.b16 %v7448, %v7441
  %v8499 = vpack.c.b16 %v7449, %v7442
  %v8500 = vpack.c.b16 %v7450, %v7443
  %v8501 = vpack.c.b16 %v7451, %v7444
  %v8502 = vpack.c.b16 %v7452, %v7445
  %v8503 = vpack.c.b16 %v7460, %v7453
  %v8504 = vpack.c.b16 %v7461, %v7454
  %v8505 = vpack.c.b16 %v7462, %v7455
  %v8506 = vpack.c.b16 %v7463, %v7456
  %v8507 = vpack.c.b16 %v7464, %v7457
  %v8508 = vpack.c.b16 %v7465, %v7458
  %v8509 = vpack.c.b16 %v7466, %v7459
  %v8510 = vpack.c.b16 %v7474, %v7467
  %v8511 = vpack.c.b16 %v7475, %v7468
  %v8512 = vpack.c.b16 %v7476, %v7469
  %v8513 = vpack.c.b16 %v7477, %v7470
  %v8514 = vpack.c.b16 %v7478, %v7471
  %v8515 = vpack.c.b16 %v7479, %v7472
  %v8516 = vpack.c.b16 %v7480, %v7473
  %v8517 = vpack.c.b16 %v7488, %v7481
  %v8518 = vpack.c.b16 %v7489, %v7482
  %v8519 = vpack.c.b16 %v7490, %v7483
  %v8520 = vpack.c.b16 %v7491, %v7484
  %v8521 = vpack.c.b16 %v7492, %v7485
  %v8522 = vpack.c.b16 %v7493, %v7486
  %v8523 = vpack.c.b16 %v7494, %v7487
  %v8524 = vpack.c.b16 %v7502, %v7495
  %v8525 = vpack.c.b16 %v7503, %v7496
  %v8526 = vpack.c.b16 %v7504, %v7497
  %v8527 = vpack.c.b16 %v7505, %v7498
  %v8528 = vpack.c.b16 %v7506, %v7499
  %v8529 = vpack.c.b16 %v7507, %v7500
  %v8530 = vpack.c.b16 %v7508, %v7501
  %v8531 = vpack.c.b16 %v7516, %v7509
  %v8532 = vpack.c.b16 %v7517, %v7510
  %v8533 = vpack.c.b16 %v7518, %v7511
  %v8534 = vpack.c.b16 %v7519, %v7512
  %v8535 = vpack.c.b16 %v7520, %v7513
  %v8536 = vpack.c.b16 %v7521, %v7514
  %v8537 = vpack.c.b16 %v7522, %v7515
  %v8538 = vpack.c.b16 %v7530, %v7523
  %v8539 = vpack.c.b16 %v7531, %v7524
  %v8540 = vpack.c.b16 %v7532, %v7525
  %v8541 = vpack.c.b16 %v7533, %v7526
  %v8542 = vpack.c.b16 %v7534, %v7527
  %v8543 = vpack.c.b16 %v7535, %v7528
  %v8544 = vpack.c.b16 %v7536, %v7529
  %v8545 = vpack.c.b16 %v7544, %v7537
  %v8546 = vpack.c.b16 %v7545, %v7538
  %v8547 = vpack.c.b16 %v7546, %v7539
  %v8548 = vpack.c.b16 %v7547, %v7540
  %v8549 = vpack.c.b16 %v7548, %v7541
  %v8550 = vpack.c.b16 %v7549, %v7542
  %v8551 = vpack.c.b16 %v7550, %v7543
  %v8552 = vpack.c.b16 %v7558, %v7551
  %v8553 = vpack.c.b16 %v7559, %v7552
  %v8554 = vpack.c.b16 %v7560, %v7553
  %v8555 = vpack.c.b16 %v7561, %v7554
  %v8556 = vpack.c.b16 %v7562, %v7555
  %v8557 = vpack.c.b16 %v7563, %v7556
  %v8558 = vpack.c.b16 %v7564, %v7557
  %v8559 = vpack.c.b16 %v7572, %v7565
  %v8560 = vpack.c.b16 %v7573, %v7566
  %v8561 = vpack.c.b16 %v7574, %v7567
  %v8562 = vpack.c.b16 %v7575, %v7568
  %v8563 = vpack.c.b16 %v7576, %v7569
  %v8564 = vpack.c.b16 %v7577, %v7570
  %v8565 = vpack.c.b16 %v7578, %v7571
  %v8566 = vpack.c.b16 %v7586, %v7579
  %v8567 = vpack.c.b16 %v7587, %v7580
  %v8568 = vpack.c.b16 %v7588, %v7581
  %v8569 = vpack.c.b16 %v7589, %v7582
  %v8570 = vpack.c.b16 %v7590, %v7583
  %v8571 = vpack.c.b16 %v7591, %v7584
  %v8572 = vpack.c.b16 %v7592, %v7585
  %v8573 = vpack.c.b16 %v7600, %v7593
  %v8574 = vpack.c.b16 %v7601, %v7594
  %v8575 = vpack.c.b16 %v7602, %v7595
  %v8576 = vpack.c.b16 %v7603, %v7596
  %v8577 = vpack.c.b16 %v7604, %v7597
  %v8578 = vpack.c.b16 %v7605, %v7598
  %v8579 = vpack.c.b16 %v7606, %v7599
  %v8580 = vpack.c.b16 %v7614, %v7607
  %v8581 = vpack.c.b16 %v7615, %v7608
  %v8582 = vpack.c.b16 %v7616, %v7609
  %v8583 = vpack.c.b16 %v7617, %v7610
  %v8584 = vpack.c.b16 %v7618, %v7611
  %v8585 = vpack.c.b16 %v7619, %v7612
  %v8586 = vpack.c.b16 %v7620, %v7613
  %v8587 = vpack.c.b16 %v7628, %v7621
  %v8588 = vpack.c.b16 %v7629, %v7622
  %v8589 = vpack.c.b16 %v7630, %v7623
  %v8590 = vpack.c.b16 %v7631, %v7624
  %v8591 = vpack.c.b16 %v7632, %v7625
  %v8592 = vpack.c.b16 %v7633, %v7626
  %v8593 = vpack.c.b16 %v7634, %v7627
  %v8594 = vpack.c.b16 %v7642, %v7635
  %v8595 = vpack.c.b16 %v7643, %v7636
  %v8596 = vpack.c.b16 %v7644, %v7637
  %v8597 = vpack.c.b16 %v7645, %v7638
  %v8598 = vpack.c.b16 %v7646, %v7639
  %v8599 = vpack.c.b16 %v7647, %v7640
  %v8600 = vpack.c.b16 %v7648, %v7641
  %v8601 = vpack.c.b16 %v7656, %v7649
  %v8602 = vpack.c.b16 %v7657, %v7650
  %v8603 = vpack.c.b16 %v7658, %v7651
  %v8604 = vpack.c.b16 %v7659, %v7652
  %v8605 = vpack.c.b16 %v7660, %v7653
  %v8606 = vpack.c.b16 %v7661, %v7654
  %v8607 = vpack.c.b16 %v7662, %v7655
  %v8608 = vpack.c.b16 %v7670, %v7663
  %v8609 = vpack.c.b16 %v7671, %v7664
  %v8610 = vpack.c.b16 %v7672, %v7665
  %v8611 = vpack.c.b16 %v7673, %v7666
  %v8612 = vpack.c.b16 %v7674, %v7667
  %v8613 = vpack.c.b16 %v7675, %v7668
  %v8614 = vpack.c.b16 %v7676, %v7669
  %v8615 = vpack.c.b16 %v7684, %v7677
  %v8616 = vpack.c.b16 %v7685, %v7678
  %v8617 = vpack.c.b16 %v7686, %v7679
  %v8618 = vpack.c.b16 %v7687, %v7680
  %v8619 = vpack.c.b16 %v7688, %v7681
  %v8620 = vpack.c.b16 %v7689, %v7682
  %v8621 = vpack.c.b16 %v7690, %v7683
  %v8622 = vpack.c.b16 %v7698, %v7691
  %v8623 = vpack.c.b16 %v7699, %v7692
  %v8624 = vpack.c.b16 %v7700, %v7693
  %v8625 = vpack.c.b16 %v7701, %v7694
  %v8626 = vpack.c.b16 %v7702, %v7695
  %v8627 = vpack.c.b16 %v7703, %v7696
  %v8628 = vpack.c.b16 %v7704, %v7697
  %v8629 = vpack.c.b16 %v7712, %v7705
  %v8630 = vpack.c.b16 %v7713, %v7706
  %v8631 = vpack.c.b16 %v7714, %v7707
  %v8632 = vpack.c.b16 %v7715, %v7708
  %v8633 = vpack.c.b16 %v7716, %v7709
  %v8634 = vpack.c.b16 %v7717, %v7710
  %v8635 = vpack.c.b16 %v7718, %v7711
  %v8636 = vpack.c.b16 %v7726, %v7719
  %v8637 = vpack.c.b16 %v7727, %v7720
  %v8638 = vpack.c.b16 %v7728, %v7721
  %v8639 = vpack.c.b16 %v7729, %v7722
  %v8640 = vpack.c.b16 %v7730, %v7723
  %v8641 = vpack.c.b16 %v7731, %v7724
  %v8642 = vpack.c.b16 %v7732, %v7725
  %v8643 = vpack.c.b16 %v7740, %v7733
  %v8644 = vpack.c.b16 %v7741, %v7734
  %v8645 = vpack.c.b16 %v7742, %v7735
  %v8646 = vpack.c.b16 %v7743, %v7736
  %v8647 = vpack.c.b16 %v7744, %v7737
  %v8648 = vpack.c.b16 %v7745, %v7738
  %v8649 = vpack.c.b16 %v7746, %v7739
  %v8650 = vpack.c.b16 %v7754, %v7747
  %v8651 = vpack.c.b16 %v7755, %v7748
  %v8652 = vpack.c.b16 %v7756, %v7749
  %v8653 = vpack.c.b16 %v7757, %v7750
  %v8654 = vpack.c.b16 %v7758, %v7751
  %v8655 = vpack.c.b16 %v7759, %v7752
  %v8656 = vpack.c.b16 %v7760, %v7753
  %v8657 = vpack.c.b16 %v7768, %v7761
  %v8658 = vpack.c.b16 %v7769, %v7762
  %v8659 = vpack.c.b16 %v7770, %v7763
  %v8660 = vpack.c.b16 %v7771, %v7764
  %v8661 = vpack.c.b16 %v7772, %v7765
  %v8662 = vpack.c.b16 %v7773, %v7766
  %v8663 = vpack.c.b16 %v7774, %v7767
  %v8664 = vpack.c.b16 %v7782, %v7775
  %v8665 = vpack.c.b16 %v7783, %v7776
  %v8666 = vpack.c.b16 %v7784, %v7777
  %v8667 = vpack.c.b16 %v7785, %v7778
  %v8668 = vpack.c.b16 %v7786, %v7779
  %v8669 = vpack.c.b16 %v7787, %v7780
  %v8670 = vpack.c.b16 %v7788, %v7781
  %v8671 = vpack.c.b16 %v7796, %v7789
  %v8672 = vpack.c.b16 %v7797, %v7790
  %v8673 = vpack.c.b16 %v7798, %v7791
  %v8674 = vpack.c.b16 %v7799, %v7792
  %v8675 = vpack.c.b16 %v7800, %v7793
  %v8676 = vpack.c.b16 %v7801, %v7794
  %v8677 = vpack.c.b16 %v7802, %v7795
  %v8678 = vpack.c.b16 %v7810, %v7803
  %v8679 = vpack.c.b16 %v7811, %v7804
  %v8680 = vpack.c.b16 %v7812, %v7805
  %v8681 = vpack.c.b16 %v7813, %v7806
  %v8682 = vpack.c.b16 %v7814, %v7807
  %v8683 = vpack.c.b16 %v7815, %v7808
  %v8684 = vpack.c.b16 %v7816, %v7809
  %v8685 = vpack.c.b16 %v7824, %v7817
  %v8686 = vpack.c.b16 %v7825, %v7818
  %v8687 = vpack.c.b16 %v7826, %v7819
  %v8688 = vpack.c.b16 %v7827, %v7820
  %v8689 = vpack.c.b16 %v7828, %v7821
  %v8690 = vpack.c.b16 %v7829, %v7822
  %v8691 = vpack.c.b16 %v7830, %v7823
  %v8692 = vpack.c.b16 %v7838, %v7831
  %v8693 = vpack.c.b16 %v7839, %v7832
  %v8694 = vpack.c.b16 %v7840, %v7833
  %v8695 = vpack.c.b16 %v7841, %v7834
  %v8696 = vpack.c.b16 %v7842, %v7835
  %v8697 = vpack.c.b16 %v7843, %v7836
  %v8698 = vpack.c.b16 %v7844, %v7837
  %v8699 = vpack.c.b16 %v7852, %v7845
  %v8700 = vpack.c.b16 %v7853, %v7846
  %v8701 = vpack.c.b16 %v7854, %v7847
  %v8702 = vpack.c.b16 %v7855, %v7848
  %v8703 = vpack.c.b16 %v7856, %v7849
  %v8704 = vpack.c.b16 %v7857, %v7850
  %v8705 = vpack.c.b16 %v7858, %v7851
  %v8706 = vpack.c.b16 %v7866, %v7859
  %v8707 = vpack.c.b16 %v7867, %v7860
  %v8708 = vpack.c.b16 %v7868, %v7861
  %v8709 = vpack.c.b16 %v7869, %v7862
  %v8710 = vpack.c.b16 %v7870, %v7863
  %v8711 = vpack.c.b16 %v7871, %v7864
  %v8712 = vpack.c.b16 %v7872, %v7865
  %v8713 = vpack.c.b16 %v7880, %v7873
  %v8714 = vpack.c.b16 %v7881, %v7874
  %v8715 = vpack.c.b16 %v7882, %v7875
  %v8716 = vpack.c.b16 %v7883, %v7876
  %v8717 = vpack.c.b16 %v7884, %v7877
  %v8718 = vpack.c.b16 %v7885, %v7878
  %v8719 = vpack.c.b16 %v7886, %v7879
  %v8720 = vpack.c.b16 %v7894, %v7887
  %v8721 = vpack.c.b16 %v7895, %v7888
  %v8722 = vpack.c.b16 %v7896, %v7889
  %v8723 = vpack.c.b16 %v7897, %v7890
  %v8724 = vpack.c.b16 %v7898, %v7891
  %v8725 = vpack.c.b16 %v7899, %v7892
  %v8726 = vpack.c.b16 %v7900, %v7893
  %v8727 = vpack.c.b16 %v7908, %v7901
  %v8728 = vpack.c.b16 %v7909, %v7902
  %v8729 = vpack.c.b16 %v7910, %v7903
  %v8730 = vpack.c.b16 %v7911, %v7904
  %v8731 = vpack.c.b16 %v7912, %v7905
  %v8732 = vpack.c.b16 %v7913, %v7906
  %v8733 = vpack.c.b16 %v7914, %v7907
  %v8734 = vpack.c.b16 %v7922, %v7915
  %v8735 = vpack.c.b16 %v7923, %v7916
  %v8736 = vpack.c.b16 %v7924, %v7917
  %v8737 = vpack.c.b16 %v7925, %v7918
  %v8738 = vpack.c.b16 %v7926, %v7919
  %v8739 = vpack.c.b16 %v7927, %v7920
  %v8740 = vpack.c.b16 %v7928, %v7921
  %v8741 = vpack.c.b16 %v7936, %v7929
  %v8742 = vpack.c.b16 %v7937, %v7930
  %v8743 = vpack.c.b16 %v7938, %v7931
  %v8744 = vpack.c.b16 %v7939, %v7932
  %v8745 = vpack.c.b16 %v7940, %v7933
  %v8746 = vpack.c.b16 %v7941, %v7934
  %v8747 = vpack.c.b16 %v7942, %v7935
  %v8748 = vpack.c.b16 %v7950, %v7943
  %v8749 = vpack.c.b16 %v7951, %v7944
  %v8750 = vpack.c.b16 %v7952, %v7945
  %v8751 = vpack.c.b16 %v7953, %v7946
  %v8752 = vpack.c.b16 %v7954, %v7947
  %v8753 = vpack.c.b16 %v7955, %v7948
  %v8754 = vpack.c.b16 %v7956, %v7949
  %v8755 = vpack.c.b16 %v7964, %v7957
  %v8756 = vpack.c.b16 %v7965, %v7958
  %v8757 = vpack.c.b16 %v7966, %v7959
  %v8758 = vpack.c.b16 %v7967, %v7960
  %v8759 = vpack.c.b16 %v7968, %v7961
  %v8760 = vpack.c.b16 %v7969, %v7962
  %v8761 = vpack.c.b16 %v7970, %v7963
  %v8762 = vpack.c.b16 %v7978, %v7971
  %v8763 = vpack.c.b16 %v7979, %v7972
  %v8764 = vpack.c.b16 %v7980, %v7973
  %v8765 = vpack.c.b16 %v7981, %v7974
  %v8766 = vpack.c.b16 %v7982, %v7975
  %v8767 = vpack.c.b16 %v7983, %v7976
  %v8768 = vpack.c.b16 %v7984, %v7977
  %v8769 = vpack.c.b16 %v7992, %v7985
  %v8770 = vpack.c.b16 %v7993, %v7986
  %v8771 = vpack.c.b16 %v7994, %v7987
  %v8772 = vpack.c.b16 %v7995, %v7988
  %v8773 = vpack.c.b16 %v7996, %v7989
  %v8774 = vpack.c.b16 %v7997, %v7990
  %v8775 = vpack.c.b16 %v7998, %v7991
  %v8776 = vpack.c.b16 %v8006, %v7999
  %v8777 = vpack.c.b16 %v8007, %v8000
  %v8778 = vpack.c.b16 %v8008, %v8001
  %v8779 = vpack.c.b16 %v8009, %v8002
  %v8780 = vpack.c.b16 %v8010, %v8003
  %v8781 = vpack.c.b16 %v8011, %v8004
  %v8782 = vpack.c.b16 %v8012, %v8005
  %v8783 = vpack.c.b16 %v8020, %v8013
  %v8784 = vpack.c.b16 %v8021, %v8014
  %v8785 = vpack.c.b16 %v8022, %v8015
  %v8786 = vpack.c.b16 %v8023, %v8016
  %v8787 = vpack.c.b16 %v8024, %v8017
  %v8788 = vpack.c.b16 %v8025, %v8018
  %v8789 = vpack.c.b16 %v8026, %v8019
  %v8790 = vpack.c.b16 %v8034, %v8027
  %v8791 = vpack.c.b16 %v8035, %v8028
  %v8792 = vpack.c.b16 %v8036, %v8029
  %v8793 = vpack.c.b16 %v8037, %v8030
  %v8794 = vpack.c.b16 %v8038, %v8031
  %v8795 = vpack.c.b16 %v8039, %v8032
  %v8796 = vpack.c.b16 %v8040, %v8033
  %v8797 = vpack.c.b16 %v8048, %v8041
  %v8798 = vpack.c.b16 %v8049, %v8042
  %v8799 = vpack.c.b16 %v8050, %v8043
  %v8800 = vpack.c.b16 %v8051, %v8044
  %v8801 = vpack.c.b16 %v8052, %v8045
  %v8802 = vpack.c.b16 %v8053, %v8046
  %v8803 = vpack.c.b16 %v8054, %v8047
  %v8804 = vpack.c.b16 %v8062, %v8055
  %v8805 = vpack.c.b16 %v8063, %v8056
  %v8806 = vpack.c.b16 %v8064, %v8057
  %v8807 = vpack.c.b16 %v8065, %v8058
  %v8808 = vpack.c.b16 %v8066, %v8059
  %v8809 = vpack.c.b16 %v8067, %v8060
  %v8810 = vpack.c.b16 %v8068, %v8061
  %v8811 = vpack.c.b16 %v8076, %v8069
  %v8812 = vpack.c.b16 %v8077, %v8070
  %v8813 = vpack.c.b16 %v8078, %v8071
  %v8814 = vpack.c.b16 %v8079, %v8072
  %v8815 = vpack.c.b16 %v8080, %v8073
  %v8816 = vpack.c.b16 %v8081, %v8074
  %v8817 = vpack.c.b16 %v8082, %v8075
  %v8818 = vpack.c.b16 %v8090, %v8083
  %v8819 = vpack.c.b16 %v8091, %v8084
  %v8820 = vpack.c.b16 %v8092, %v8085
  %v8821 = vpack.c.b16 %v8093, %v8086
  %v8822 = vpack.c.b16 %v8094, %v8087
  %v8823 = vpack.c.b16 %v8095, %v8088
  %v8824 = vpack.c.b16 %v8096, %v8089
  %v8825 = vpack.c.b16 %v8104, %v8097
  %v8826 = vpack.c.b16 %v8105, %v8098
  %v8827 = vpack.c.b16 %v8106, %v8099
  %v8828 = vpack.c.b16 %v8107, %v8100
  %v8829 = vpack.c.b16 %v8108, %v8101
  %v8830 = vpack.c.b16 %v8109, %v8102
  %v8831 = vpack.c.b16 %v8110, %v8103
  %v8832 = vpack.c.b16 %v8118, %v8111
  %v8833 = vpack.c.b16 %v8119, %v8112
  %v8834 = vpack.c.b16 %v8120, %v8113
  %v8835 = vpack.c.b16 %v8121, %v8114
  %v8836 = vpack.c.b16 %v8122, %v8115
  %v8837 = vpack.c.b16 %v8123, %v8116
  %v8838 = vpack.c.b16 %v8124, %v8117
  %v8839 = vpack.c.b16 %v8132, %v8125
  %v8840 = vpack.c.b16 %v8133, %v8126
  %v8841 = vpack.c.b16 %v8134, %v8127
  %v8842 = vpack.c.b16 %v8135, %v8128
  %v8843 = vpack.c.b16 %v8136, %v8129
  %v8844 = vpack.c.b16 %v8137, %v8130
  %v8845 = vpack.c.b16 %v8138, %v8131
  %v8846 = vpack.c.b16 %v8146, %v8139
  %v8847 = vpack.c.b16 %v8147, %v8140
  %v8848 = vpack.c.b16 %v8148, %v8141
  %v8849 = vpack.c.b16 %v8149, %v8142
  %v8850 = vpack.c.b16 %v8150, %v8143
  %v8851 = vpack.c.b16 %v8151, %v8144
  %v8852 = vpack.c.b16 %v8152, %v8145
  %v8853 = vpack.c.b16 %v8160, %v8153
  %v8854 = vpack.c.b16 %v8161, %v8154
  %v8855 = vpack.c.b16 %v8162, %v8155
  %v8856 = vpack.c.b16 %v8163, %v8156
  %v8857 = vpack.c.b16 %v8164, %v8157
  %v8858 = vpack.c.b16 %v8165, %v8158
  %v8859 = vpack.c.b16 %v8166, %v8159
  %v8860 = vpack.c.b16 %v8174, %v8167
  %v8861 = vpack.c.b16 %v8175, %v8168
  %v8862 = vpack.c.b16 %v8176, %v8169
  %v8863 = vpack.c.b16 %v8177, %v8170
  %v8864 = vpack.c.b16 %v8178, %v8171
  %v8865 = vpack.c.b16 %v8179, %v8172
  %v8866 = vpack.c.b16 %v8180, %v8173
  %vm9553 = vcmask 261120
  %v9555 = vsel %vm9553, %v5203, 0
  %9557 = vmatprep.subr.bf16.mxu0 %v8231
  %9558 = vmatpush1.bf16.msra.mxu0 %v8230
  %9559 = vmatprep.subr.bf16.mxu0 %v8224
  %9560 = vmatpush1.bf16.msra.mxu0 %v8223
  %9561 = vmatprep.subr.bf16.mxu0 %v8217
  %9562 = vmatpush1.bf16.msra.mxu0 %v8216
  %9563 = vmatprep.subr.bf16.mxu0 %v8210
  %9564 = vmatpush1.bf16.msra.mxu0 %v8209
  %9565 = vmatprep.subr.bf16.mxu0 %v8203
  %9566 = vmatpush1.bf16.msra.mxu0 %v8202
  %9567 = vmatprep.subr.bf16.mxu0 %v8196
  %9568 = vmatpush1.bf16.msra.mxu0 %v8195
  %9569 = vmatprep.subr.bf16.mxu0 %v8189
  %9570 = vmatpush1.bf16.msra.mxu0 %v8188
  %9571 = vmatprep.subr.bf16.mxu0 %v8182
  %9572 = vmatpush1.bf16.msra.mxu0 %v8181
  %9573 = vmatprep.subr.bf16.mxu0 %v8287
  %9574 = vmatpush2.bf16.msra.mxu0 %v8286
  %9575 = vmatprep.subr.bf16.mxu0 %v8280
  %9576 = vmatpush2.bf16.msra.mxu0 %v8279
  %9577 = vmatprep.subr.bf16.mxu0 %v8273
  %9578 = vmatpush2.bf16.msra.mxu0 %v8272
  %9579 = vmatprep.subr.bf16.mxu0 %v8266
  %9580 = vmatpush2.bf16.msra.mxu0 %v8265
  %9581 = vmatprep.subr.bf16.mxu0 %v8259
  %9582 = vmatpush2.bf16.msra.mxu0 %v8258
  %9583 = vmatprep.subr.bf16.mxu0 %v8252
  %9584 = vmatpush2.bf16.msra.mxu0 %v8251
  %9585 = vmatprep.subr.bf16.mxu0 %v8245
  %9586 = vmatpush2.bf16.msra.mxu0 %v8244
  %9587 = vmatprep.subr.bf16.mxu0 %v8238
  %9588 = vmatpush2.bf16.msra.mxu0 %v8237
  %9589 = vmatprep.mubr.bf16.mxu0 %v5192
  %9590 = vmatmul.mubr.bf16.gmra.mxu0 %v5191
  %v9591 = vpop.f32.mrf.mxu0
  %v9592 = vadd.f32 %v5993, %v9591
  %v9593 = vpop.f32.mrf.mxu0
  %v9594 = vadd.f32 %v5997, %v9593
  %v9595 = vpop.f32.mrf.mxu0
  %v9596 = vpop.f32.mrf.mxu0
  %9597 = vdwg.mxu0
  %9598 = vmatprep.subr.bf16.mxu0 %v8343
  %9599 = vmatpush1.bf16.msra.mxu0 %v8342
  %9600 = vmatprep.subr.bf16.mxu0 %v8336
  %9601 = vmatpush1.bf16.msra.mxu0 %v8335
  %9602 = vmatprep.subr.bf16.mxu0 %v8329
  %9603 = vmatpush1.bf16.msra.mxu0 %v8328
  %9604 = vmatprep.subr.bf16.mxu0 %v8322
  %9605 = vmatpush1.bf16.msra.mxu0 %v8321
  %9606 = vmatprep.subr.bf16.mxu0 %v8315
  %9607 = vmatpush1.bf16.msra.mxu0 %v8314
  %9608 = vmatprep.subr.bf16.mxu0 %v8308
  %9609 = vmatpush1.bf16.msra.mxu0 %v8307
  %9610 = vmatprep.subr.bf16.mxu0 %v8301
  %9611 = vmatpush1.bf16.msra.mxu0 %v8300
  %9612 = vmatprep.subr.bf16.mxu0 %v8294
  %9613 = vmatpush1.bf16.msra.mxu0 %v8293
  %9614 = vmatprep.subr.bf16.mxu0 %v8399
  %9615 = vmatpush2.bf16.msra.mxu0 %v8398
  %9616 = vmatprep.subr.bf16.mxu0 %v8392
  %9617 = vmatpush2.bf16.msra.mxu0 %v8391
  %9618 = vmatprep.subr.bf16.mxu0 %v8385
  %9619 = vmatpush2.bf16.msra.mxu0 %v8384
  %9620 = vmatprep.subr.bf16.mxu0 %v8378
  %9621 = vmatpush2.bf16.msra.mxu0 %v8377
  %9622 = vmatprep.subr.bf16.mxu0 %v8371
  %9623 = vmatpush2.bf16.msra.mxu0 %v8370
  %9624 = vmatprep.subr.bf16.mxu0 %v8364
  %9625 = vmatpush2.bf16.msra.mxu0 %v8363
  %9626 = vmatprep.subr.bf16.mxu0 %v8357
  %9627 = vmatpush2.bf16.msra.mxu0 %v8356
  %9628 = vmatprep.subr.bf16.mxu0 %v8350
  %9629 = vmatpush2.bf16.msra.mxu0 %v8349
  %9630 = vmatprep.mubr.bf16.mxu0 %v5194
  %9631 = vmatmul.mubr.bf16.gmra.mxu0 %v5193
  %v9632 = vpop.f32.mrf.mxu0
  %v9633 = vadd.f32 %v9592, %v9632
  %v9634 = vpop.f32.mrf.mxu0
  %v9635 = vadd.f32 %v9594, %v9634
  %v9636 = vpop.f32.mrf.mxu0
  %v9637 = vpop.f32.mrf.mxu0
  %9638 = vdwg.mxu0
  %9639 = vmatprep.subr.bf16.mxu0 %v8455
  %9640 = vmatpush1.bf16.msra.mxu0 %v8454
  %9641 = vmatprep.subr.bf16.mxu0 %v8448
  %9642 = vmatpush1.bf16.msra.mxu0 %v8447
  %9643 = vmatprep.subr.bf16.mxu0 %v8441
  %9644 = vmatpush1.bf16.msra.mxu0 %v8440
  %9645 = vmatprep.subr.bf16.mxu0 %v8434
  %9646 = vmatpush1.bf16.msra.mxu0 %v8433
  %9647 = vmatprep.subr.bf16.mxu0 %v8427
  %9648 = vmatpush1.bf16.msra.mxu0 %v8426
  %9649 = vmatprep.subr.bf16.mxu0 %v8420
  %9650 = vmatpush1.bf16.msra.mxu0 %v8419
  %9651 = vmatprep.subr.bf16.mxu0 %v8413
  %9652 = vmatpush1.bf16.msra.mxu0 %v8412
  %9653 = vmatprep.subr.bf16.mxu0 %v8406
  %9654 = vmatpush1.bf16.msra.mxu0 %v8405
  %9655 = vmatprep.subr.bf16.mxu0 %v8511
  %9656 = vmatpush2.bf16.msra.mxu0 %v8510
  %9657 = vmatprep.subr.bf16.mxu0 %v8504
  %9658 = vmatpush2.bf16.msra.mxu0 %v8503
  %9659 = vmatprep.subr.bf16.mxu0 %v8497
  %9660 = vmatpush2.bf16.msra.mxu0 %v8496
  %9661 = vmatprep.subr.bf16.mxu0 %v8490
  %9662 = vmatpush2.bf16.msra.mxu0 %v8489
  %9663 = vmatprep.subr.bf16.mxu0 %v8483
  %9664 = vmatpush2.bf16.msra.mxu0 %v8482
  %9665 = vmatprep.subr.bf16.mxu0 %v8476
  %9666 = vmatpush2.bf16.msra.mxu0 %v8475
  %9667 = vmatprep.subr.bf16.mxu0 %v8469
  %9668 = vmatpush2.bf16.msra.mxu0 %v8468
  %9669 = vmatprep.subr.bf16.mxu0 %v8462
  %9670 = vmatpush2.bf16.msra.mxu0 %v8461
  %9671 = vmatprep.mubr.bf16.mxu0 %v5196
  %9672 = vmatmul.mubr.bf16.gmra.mxu0 %v5195
  %v9673 = vpop.f32.mrf.mxu0
  %v9674 = vadd.f32 %v9633, %v9673
  %v9675 = vpop.f32.mrf.mxu0
  %v9676 = vadd.f32 %v9635, %v9675
  %v9677 = vpop.f32.mrf.mxu0
  %v9678 = vpop.f32.mrf.mxu0
  %9679 = vdwg.mxu0
  %9680 = vmatprep.subr.bf16.mxu0 %v8567
  %9681 = vmatpush1.bf16.msra.mxu0 %v8566
  %9682 = vmatprep.subr.bf16.mxu0 %v8560
  %9683 = vmatpush1.bf16.msra.mxu0 %v8559
  %9684 = vmatprep.subr.bf16.mxu0 %v8553
  %9685 = vmatpush1.bf16.msra.mxu0 %v8552
  %9686 = vmatprep.subr.bf16.mxu0 %v8546
  %9687 = vmatpush1.bf16.msra.mxu0 %v8545
  %9688 = vmatprep.subr.bf16.mxu0 %v8539
  %9689 = vmatpush1.bf16.msra.mxu0 %v8538
  %9690 = vmatprep.subr.bf16.mxu0 %v8532
  %9691 = vmatpush1.bf16.msra.mxu0 %v8531
  %9692 = vmatprep.subr.bf16.mxu0 %v8525
  %9693 = vmatpush1.bf16.msra.mxu0 %v8524
  %9694 = vmatprep.subr.bf16.mxu0 %v8518
  %9695 = vmatpush1.bf16.msra.mxu0 %v8517
  %9696 = vmatprep.subr.bf16.mxu0 %v8623
  %9697 = vmatpush2.bf16.msra.mxu0 %v8622
  %9698 = vmatprep.subr.bf16.mxu0 %v8616
  %9699 = vmatpush2.bf16.msra.mxu0 %v8615
  %9700 = vmatprep.subr.bf16.mxu0 %v8609
  %9701 = vmatpush2.bf16.msra.mxu0 %v8608
  %9702 = vmatprep.subr.bf16.mxu0 %v8602
  %9703 = vmatpush2.bf16.msra.mxu0 %v8601
  %9704 = vmatprep.subr.bf16.mxu0 %v8595
  %9705 = vmatpush2.bf16.msra.mxu0 %v8594
  %9706 = vmatprep.subr.bf16.mxu0 %v8588
  %9707 = vmatpush2.bf16.msra.mxu0 %v8587
  %9708 = vmatprep.subr.bf16.mxu0 %v8581
  %9709 = vmatpush2.bf16.msra.mxu0 %v8580
  %9710 = vmatprep.subr.bf16.mxu0 %v8574
  %9711 = vmatpush2.bf16.msra.mxu0 %v8573
  %9712 = vmatprep.mubr.bf16.mxu0 %v5198
  %9713 = vmatmul.mubr.bf16.gmra.mxu0 %v5197
  %v9714 = vpop.f32.mrf.mxu0
  %v9715 = vadd.f32 %v9674, %v9714
  %v9716 = vpop.f32.mrf.mxu0
  %v9717 = vadd.f32 %v9676, %v9716
  %v9718 = vpop.f32.mrf.mxu0
  %v9719 = vpop.f32.mrf.mxu0
  %9720 = vdwg.mxu0
  %9721 = vmatprep.subr.bf16.mxu0 %v8679
  %9722 = vmatpush1.bf16.msra.mxu0 %v8678
  %9723 = vmatprep.subr.bf16.mxu0 %v8672
  %9724 = vmatpush1.bf16.msra.mxu0 %v8671
  %9725 = vmatprep.subr.bf16.mxu0 %v8665
  %9726 = vmatpush1.bf16.msra.mxu0 %v8664
  %9727 = vmatprep.subr.bf16.mxu0 %v8658
  %9728 = vmatpush1.bf16.msra.mxu0 %v8657
  %9729 = vmatprep.subr.bf16.mxu0 %v8651
  %9730 = vmatpush1.bf16.msra.mxu0 %v8650
  %9731 = vmatprep.subr.bf16.mxu0 %v8644
  %9732 = vmatpush1.bf16.msra.mxu0 %v8643
  %9733 = vmatprep.subr.bf16.mxu0 %v8637
  %9734 = vmatpush1.bf16.msra.mxu0 %v8636
  %9735 = vmatprep.subr.bf16.mxu0 %v8630
  %9736 = vmatpush1.bf16.msra.mxu0 %v8629
  %9737 = vmatprep.subr.bf16.mxu0 %v8735
  %9738 = vmatpush2.bf16.msra.mxu0 %v8734
  %9739 = vmatprep.subr.bf16.mxu0 %v8728
  %9740 = vmatpush2.bf16.msra.mxu0 %v8727
  %9741 = vmatprep.subr.bf16.mxu0 %v8721
  %9742 = vmatpush2.bf16.msra.mxu0 %v8720
  %9743 = vmatprep.subr.bf16.mxu0 %v8714
  %9744 = vmatpush2.bf16.msra.mxu0 %v8713
  %9745 = vmatprep.subr.bf16.mxu0 %v8707
  %9746 = vmatpush2.bf16.msra.mxu0 %v8706
  %9747 = vmatprep.subr.bf16.mxu0 %v8700
  %9748 = vmatpush2.bf16.msra.mxu0 %v8699
  %9749 = vmatprep.subr.bf16.mxu0 %v8693
  %9750 = vmatpush2.bf16.msra.mxu0 %v8692
  %9751 = vmatprep.subr.bf16.mxu0 %v8686
  %9752 = vmatpush2.bf16.msra.mxu0 %v8685
  %9753 = vmatprep.mubr.bf16.mxu0 %v5200
  %9754 = vmatmul.mubr.bf16.gmra.mxu0 %v5199
  %v9755 = vpop.f32.mrf.mxu0
  %v9756 = vadd.f32 %v9715, %v9755
  %v9757 = vpop.f32.mrf.mxu0
  %v9758 = vadd.f32 %v9717, %v9757
  %v9759 = vpop.f32.mrf.mxu0
  %v9760 = vpop.f32.mrf.mxu0
  %9761 = vdwg.mxu0
  %9762 = vmatprep.subr.bf16.mxu0 %v8791
  %9763 = vmatpush1.bf16.msra.mxu0 %v8790
  %9764 = vmatprep.subr.bf16.mxu0 %v8784
  %9765 = vmatpush1.bf16.msra.mxu0 %v8783
  %9766 = vmatprep.subr.bf16.mxu0 %v8777
  %9767 = vmatpush1.bf16.msra.mxu0 %v8776
  %9768 = vmatprep.subr.bf16.mxu0 %v8770
  %9769 = vmatpush1.bf16.msra.mxu0 %v8769
  %9770 = vmatprep.subr.bf16.mxu0 %v8763
  %9771 = vmatpush1.bf16.msra.mxu0 %v8762
  %9772 = vmatprep.subr.bf16.mxu0 %v8756
  %9773 = vmatpush1.bf16.msra.mxu0 %v8755
  %9774 = vmatprep.subr.bf16.mxu0 %v8749
  %9775 = vmatpush1.bf16.msra.mxu0 %v8748
  %9776 = vmatprep.subr.bf16.mxu0 %v8742
  %9777 = vmatpush1.bf16.msra.mxu0 %v8741
  %9778 = vmatprep.subr.bf16.mxu0 %v8847
  %9779 = vmatpush2.bf16.msra.mxu0 %v8846
  %9780 = vmatprep.subr.bf16.mxu0 %v8840
  %9781 = vmatpush2.bf16.msra.mxu0 %v8839
  %9782 = vmatprep.subr.bf16.mxu0 %v8833
  %9783 = vmatpush2.bf16.msra.mxu0 %v8832
  %9784 = vmatprep.subr.bf16.mxu0 %v8826
  %9785 = vmatpush2.bf16.msra.mxu0 %v8825
  %9786 = vmatprep.subr.bf16.mxu0 %v8819
  %9787 = vmatpush2.bf16.msra.mxu0 %v8818
  %9788 = vmatprep.subr.bf16.mxu0 %v8812
  %9789 = vmatpush2.bf16.msra.mxu0 %v8811
  %9790 = vmatprep.subr.bf16.mxu0 %v8805
  %9791 = vmatpush2.bf16.msra.mxu0 %v8804
  %9792 = vmatprep.subr.bf16.mxu0 %v8798
  %9793 = vmatpush2.bf16.msra.mxu0 %v8797
  %9794 = vmatprep.mubr.bf16.mxu0 %v5202
  %9795 = vmatmul.mubr.bf16.gmra.mxu0 %v5201
  %v9796 = vpop.f32.mrf.mxu0
  %v9797 = vadd.f32 %v9756, %v9796
  %v9798 = vpop.f32.mrf.mxu0
  %v9799 = vadd.f32 %v9758, %v9798
  %v9800 = vpop.f32.mrf.mxu0
  %v9801 = vpop.f32.mrf.mxu0
  %9802 = vdwg.mxu0
  %9803 = vmatprep.subr.bf16.mxu0 0
  %9804 = vmatpush1.bf16.msra.mxu0 0
  %9805 = vmatprep.subr.bf16.mxu0 0
  %9806 = vmatpush1.bf16.msra.mxu0 0
  %9807 = vmatprep.subr.bf16.mxu0 0
  %9808 = vmatpush1.bf16.msra.mxu0 0
  %9809 = vmatprep.subr.bf16.mxu0 0
  %9810 = vmatpush1.bf16.msra.mxu0 0
  %9811 = vmatprep.subr.bf16.mxu0 0
  %9812 = vmatpush1.bf16.msra.mxu0 0
  %9813 = vmatprep.subr.bf16.mxu0 0
  %9814 = vmatpush1.bf16.msra.mxu0 0
  %9815 = vmatprep.subr.bf16.mxu0 %v8861
  %9816 = vmatpush1.bf16.msra.mxu0 %v8860
  %9817 = vmatprep.subr.bf16.mxu0 %v8854
  %9818 = vmatpush1.bf16.msra.mxu0 %v8853
  %9819 = vmatprep.subr.bf16.mxu0 0
  %9820 = vmatpush2.bf16.msra.mxu0 0
  %9821 = vmatprep.subr.bf16.mxu0 0
  %9822 = vmatpush2.bf16.msra.mxu0 0
  %9823 = vmatprep.subr.bf16.mxu0 0
  %9824 = vmatpush2.bf16.msra.mxu0 0
  %9825 = vmatprep.subr.bf16.mxu0 0
  %9826 = vmatpush2.bf16.msra.mxu0 0
  %9827 = vmatprep.subr.bf16.mxu0 0
  %9828 = vmatpush2.bf16.msra.mxu0 0
  %9829 = vmatprep.subr.bf16.mxu0 0
  %9830 = vmatpush2.bf16.msra.mxu0 0
  %9831 = vmatprep.subr.bf16.mxu0 0
  %9832 = vmatpush2.bf16.msra.mxu0 0
  %9833 = vmatprep.subr.bf16.mxu0 0
  %9834 = vmatpush2.bf16.msra.mxu0 0
  %9835 = vmatprep.mubr.bf16.mxu0 0
  %9836 = vmatmul.mubr.bf16.gmra.mxu0 %v9555
  %v9837 = vpop.f32.mrf.mxu0
  %v9838 = vadd.f32 %v9797, %v9837
  %v9839 = vpop.f32.mrf.mxu0
  %v9840 = vadd.f32 %v9799, %v9839
  %v9841 = vpop.f32.mrf.mxu0
  %v9842 = vpop.f32.mrf.mxu0
  %9843 = vdwg.mxu0
  %9844 = vmatprep.subr.bf16.mxu0 %v8233
  %9845 = vmatpush1.bf16.msra.mxu0 %v8232
  %9846 = vmatprep.subr.bf16.mxu0 %v8226
  %9847 = vmatpush1.bf16.msra.mxu0 %v8225
  %9848 = vmatprep.subr.bf16.mxu0 %v8219
  %9849 = vmatpush1.bf16.msra.mxu0 %v8218
  %9850 = vmatprep.subr.bf16.mxu0 %v8212
  %9851 = vmatpush1.bf16.msra.mxu0 %v8211
  %9852 = vmatprep.subr.bf16.mxu0 %v8205
  %9853 = vmatpush1.bf16.msra.mxu0 %v8204
  %9854 = vmatprep.subr.bf16.mxu0 %v8198
  %9855 = vmatpush1.bf16.msra.mxu0 %v8197
  %9856 = vmatprep.subr.bf16.mxu0 %v8191
  %9857 = vmatpush1.bf16.msra.mxu0 %v8190
  %9858 = vmatprep.subr.bf16.mxu0 %v8184
  %9859 = vmatpush1.bf16.msra.mxu0 %v8183
  %9860 = vmatprep.subr.bf16.mxu0 %v8289
  %9861 = vmatpush2.bf16.msra.mxu0 %v8288
  %9862 = vmatprep.subr.bf16.mxu0 %v8282
  %9863 = vmatpush2.bf16.msra.mxu0 %v8281
  %9864 = vmatprep.subr.bf16.mxu0 %v8275
  %9865 = vmatpush2.bf16.msra.mxu0 %v8274
  %9866 = vmatprep.subr.bf16.mxu0 %v8268
  %9867 = vmatpush2.bf16.msra.mxu0 %v8267
  %9868 = vmatprep.subr.bf16.mxu0 %v8261
  %9869 = vmatpush2.bf16.msra.mxu0 %v8260
  %9870 = vmatprep.subr.bf16.mxu0 %v8254
  %9871 = vmatpush2.bf16.msra.mxu0 %v8253
  %9872 = vmatprep.subr.bf16.mxu0 %v8247
  %9873 = vmatpush2.bf16.msra.mxu0 %v8246
  %9874 = vmatprep.subr.bf16.mxu0 %v8240
  %9875 = vmatpush2.bf16.msra.mxu0 %v8239
  %9876 = vmatprep.mubr.bf16.mxu0 %v5192
  %9877 = vmatmul.mubr.bf16.gmra.mxu0 %v5191
  %v9878 = vpop.f32.mrf.mxu0
  %v9879 = vadd.f32 %v6001, %v9878
  %v9880 = vpop.f32.mrf.mxu0
  %v9881 = vadd.f32 %v6005, %v9880
  %v9882 = vpop.f32.mrf.mxu0
  %v9883 = vpop.f32.mrf.mxu0
  %9884 = vdwg.mxu0
  %9885 = vmatprep.subr.bf16.mxu0 %v8345
  %9886 = vmatpush1.bf16.msra.mxu0 %v8344
  %9887 = vmatprep.subr.bf16.mxu0 %v8338
  %9888 = vmatpush1.bf16.msra.mxu0 %v8337
  %9889 = vmatprep.subr.bf16.mxu0 %v8331
  %9890 = vmatpush1.bf16.msra.mxu0 %v8330
  %9891 = vmatprep.subr.bf16.mxu0 %v8324
  %9892 = vmatpush1.bf16.msra.mxu0 %v8323
  %9893 = vmatprep.subr.bf16.mxu0 %v8317
  %9894 = vmatpush1.bf16.msra.mxu0 %v8316
  %9895 = vmatprep.subr.bf16.mxu0 %v8310
  %9896 = vmatpush1.bf16.msra.mxu0 %v8309
  %9897 = vmatprep.subr.bf16.mxu0 %v8303
  %9898 = vmatpush1.bf16.msra.mxu0 %v8302
  %9899 = vmatprep.subr.bf16.mxu0 %v8296
  %9900 = vmatpush1.bf16.msra.mxu0 %v8295
  %9901 = vmatprep.subr.bf16.mxu0 %v8401
  %9902 = vmatpush2.bf16.msra.mxu0 %v8400
  %9903 = vmatprep.subr.bf16.mxu0 %v8394
  %9904 = vmatpush2.bf16.msra.mxu0 %v8393
  %9905 = vmatprep.subr.bf16.mxu0 %v8387
  %9906 = vmatpush2.bf16.msra.mxu0 %v8386
  %9907 = vmatprep.subr.bf16.mxu0 %v8380
  %9908 = vmatpush2.bf16.msra.mxu0 %v8379
  %9909 = vmatprep.subr.bf16.mxu0 %v8373
  %9910 = vmatpush2.bf16.msra.mxu0 %v8372
  %9911 = vmatprep.subr.bf16.mxu0 %v8366
  %9912 = vmatpush2.bf16.msra.mxu0 %v8365
  %9913 = vmatprep.subr.bf16.mxu0 %v8359
  %9914 = vmatpush2.bf16.msra.mxu0 %v8358
  %9915 = vmatprep.subr.bf16.mxu0 %v8352
  %9916 = vmatpush2.bf16.msra.mxu0 %v8351
  %9917 = vmatprep.mubr.bf16.mxu0 %v5194
  %9918 = vmatmul.mubr.bf16.gmra.mxu0 %v5193
  %v9919 = vpop.f32.mrf.mxu0
  %v9920 = vadd.f32 %v9879, %v9919
  %v9921 = vpop.f32.mrf.mxu0
  %v9922 = vadd.f32 %v9881, %v9921
  %v9923 = vpop.f32.mrf.mxu0
  %v9924 = vpop.f32.mrf.mxu0
  %9925 = vdwg.mxu0
  %9926 = vmatprep.subr.bf16.mxu0 %v8457
  %9927 = vmatpush1.bf16.msra.mxu0 %v8456
  %9928 = vmatprep.subr.bf16.mxu0 %v8450
  %9929 = vmatpush1.bf16.msra.mxu0 %v8449
  %9930 = vmatprep.subr.bf16.mxu0 %v8443
  %9931 = vmatpush1.bf16.msra.mxu0 %v8442
  %9932 = vmatprep.subr.bf16.mxu0 %v8436
  %9933 = vmatpush1.bf16.msra.mxu0 %v8435
  %9934 = vmatprep.subr.bf16.mxu0 %v8429
  %9935 = vmatpush1.bf16.msra.mxu0 %v8428
  %9936 = vmatprep.subr.bf16.mxu0 %v8422
  %9937 = vmatpush1.bf16.msra.mxu0 %v8421
  %9938 = vmatprep.subr.bf16.mxu0 %v8415
  %9939 = vmatpush1.bf16.msra.mxu0 %v8414
  %9940 = vmatprep.subr.bf16.mxu0 %v8408
  %9941 = vmatpush1.bf16.msra.mxu0 %v8407
  %9942 = vmatprep.subr.bf16.mxu0 %v8513
  %9943 = vmatpush2.bf16.msra.mxu0 %v8512
  %9944 = vmatprep.subr.bf16.mxu0 %v8506
  %9945 = vmatpush2.bf16.msra.mxu0 %v8505
  %9946 = vmatprep.subr.bf16.mxu0 %v8499
  %9947 = vmatpush2.bf16.msra.mxu0 %v8498
  %9948 = vmatprep.subr.bf16.mxu0 %v8492
  %9949 = vmatpush2.bf16.msra.mxu0 %v8491
  %9950 = vmatprep.subr.bf16.mxu0 %v8485
  %9951 = vmatpush2.bf16.msra.mxu0 %v8484
  %9952 = vmatprep.subr.bf16.mxu0 %v8478
  %9953 = vmatpush2.bf16.msra.mxu0 %v8477
  %9954 = vmatprep.subr.bf16.mxu0 %v8471
  %9955 = vmatpush2.bf16.msra.mxu0 %v8470
  %9956 = vmatprep.subr.bf16.mxu0 %v8464
  %9957 = vmatpush2.bf16.msra.mxu0 %v8463
  %9958 = vmatprep.mubr.bf16.mxu0 %v5196
  %9959 = vmatmul.mubr.bf16.gmra.mxu0 %v5195
  %v9960 = vpop.f32.mrf.mxu0
  %v9961 = vadd.f32 %v9920, %v9960
  %v9962 = vpop.f32.mrf.mxu0
  %v9963 = vadd.f32 %v9922, %v9962
  %v9964 = vpop.f32.mrf.mxu0
  %v9965 = vpop.f32.mrf.mxu0
  %9966 = vdwg.mxu0
  %9967 = vmatprep.subr.bf16.mxu0 %v8569
  %9968 = vmatpush1.bf16.msra.mxu0 %v8568
  %9969 = vmatprep.subr.bf16.mxu0 %v8562
  %9970 = vmatpush1.bf16.msra.mxu0 %v8561
  %9971 = vmatprep.subr.bf16.mxu0 %v8555
  %9972 = vmatpush1.bf16.msra.mxu0 %v8554
  %9973 = vmatprep.subr.bf16.mxu0 %v8548
  %9974 = vmatpush1.bf16.msra.mxu0 %v8547
  %9975 = vmatprep.subr.bf16.mxu0 %v8541
  %9976 = vmatpush1.bf16.msra.mxu0 %v8540
  %9977 = vmatprep.subr.bf16.mxu0 %v8534
  %9978 = vmatpush1.bf16.msra.mxu0 %v8533
  %9979 = vmatprep.subr.bf16.mxu0 %v8527
  %9980 = vmatpush1.bf16.msra.mxu0 %v8526
  %9981 = vmatprep.subr.bf16.mxu0 %v8520
  %9982 = vmatpush1.bf16.msra.mxu0 %v8519
  %9983 = vmatprep.subr.bf16.mxu0 %v8625
  %9984 = vmatpush2.bf16.msra.mxu0 %v8624
  %9985 = vmatprep.subr.bf16.mxu0 %v8618
  %9986 = vmatpush2.bf16.msra.mxu0 %v8617
  %9987 = vmatprep.subr.bf16.mxu0 %v8611
  %9988 = vmatpush2.bf16.msra.mxu0 %v8610
  %9989 = vmatprep.subr.bf16.mxu0 %v8604
  %9990 = vmatpush2.bf16.msra.mxu0 %v8603
  %9991 = vmatprep.subr.bf16.mxu0 %v8597
  %9992 = vmatpush2.bf16.msra.mxu0 %v8596
  %9993 = vmatprep.subr.bf16.mxu0 %v8590
  %9994 = vmatpush2.bf16.msra.mxu0 %v8589
  %9995 = vmatprep.subr.bf16.mxu0 %v8583
  %9996 = vmatpush2.bf16.msra.mxu0 %v8582
  %9997 = vmatprep.subr.bf16.mxu0 %v8576
  %9998 = vmatpush2.bf16.msra.mxu0 %v8575
  %9999 = vmatprep.mubr.bf16.mxu0 %v5198
  %10000 = vmatmul.mubr.bf16.gmra.mxu0 %v5197
  %v10001 = vpop.f32.mrf.mxu0
  %v10002 = vadd.f32 %v9961, %v10001
  %v10003 = vpop.f32.mrf.mxu0
  %v10004 = vadd.f32 %v9963, %v10003
  %v10005 = vpop.f32.mrf.mxu0
  %v10006 = vpop.f32.mrf.mxu0
  %10007 = vdwg.mxu0
  %10008 = vmatprep.subr.bf16.mxu0 %v8681
  %10009 = vmatpush1.bf16.msra.mxu0 %v8680
  %10010 = vmatprep.subr.bf16.mxu0 %v8674
  %10011 = vmatpush1.bf16.msra.mxu0 %v8673
  %10012 = vmatprep.subr.bf16.mxu0 %v8667
  %10013 = vmatpush1.bf16.msra.mxu0 %v8666
  %10014 = vmatprep.subr.bf16.mxu0 %v8660
  %10015 = vmatpush1.bf16.msra.mxu0 %v8659
  %10016 = vmatprep.subr.bf16.mxu0 %v8653
  %10017 = vmatpush1.bf16.msra.mxu0 %v8652
  %10018 = vmatprep.subr.bf16.mxu0 %v8646
  %10019 = vmatpush1.bf16.msra.mxu0 %v8645
  %10020 = vmatprep.subr.bf16.mxu0 %v8639
  %10021 = vmatpush1.bf16.msra.mxu0 %v8638
  %10022 = vmatprep.subr.bf16.mxu0 %v8632
  %10023 = vmatpush1.bf16.msra.mxu0 %v8631
  %10024 = vmatprep.subr.bf16.mxu0 %v8737
  %10025 = vmatpush2.bf16.msra.mxu0 %v8736
  %10026 = vmatprep.subr.bf16.mxu0 %v8730
  %10027 = vmatpush2.bf16.msra.mxu0 %v8729
  %10028 = vmatprep.subr.bf16.mxu0 %v8723
  %10029 = vmatpush2.bf16.msra.mxu0 %v8722
  %10030 = vmatprep.subr.bf16.mxu0 %v8716
  %10031 = vmatpush2.bf16.msra.mxu0 %v8715
  %10032 = vmatprep.subr.bf16.mxu0 %v8709
  %10033 = vmatpush2.bf16.msra.mxu0 %v8708
  %10034 = vmatprep.subr.bf16.mxu0 %v8702
  %10035 = vmatpush2.bf16.msra.mxu0 %v8701
  %10036 = vmatprep.subr.bf16.mxu0 %v8695
  %10037 = vmatpush2.bf16.msra.mxu0 %v8694
  %10038 = vmatprep.subr.bf16.mxu0 %v8688
  %10039 = vmatpush2.bf16.msra.mxu0 %v8687
  %10040 = vmatprep.mubr.bf16.mxu0 %v5200
  %10041 = vmatmul.mubr.bf16.gmra.mxu0 %v5199
  %v10042 = vpop.f32.mrf.mxu0
  %v10043 = vadd.f32 %v10002, %v10042
  %v10044 = vpop.f32.mrf.mxu0
  %v10045 = vadd.f32 %v10004, %v10044
  %v10046 = vpop.f32.mrf.mxu0
  %v10047 = vpop.f32.mrf.mxu0
  %10048 = vdwg.mxu0
  %10049 = vmatprep.subr.bf16.mxu0 %v8793
  %10050 = vmatpush1.bf16.msra.mxu0 %v8792
  %10051 = vmatprep.subr.bf16.mxu0 %v8786
  %10052 = vmatpush1.bf16.msra.mxu0 %v8785
  %10053 = vmatprep.subr.bf16.mxu0 %v8779
  %10054 = vmatpush1.bf16.msra.mxu0 %v8778
  %10055 = vmatprep.subr.bf16.mxu0 %v8772
  %10056 = vmatpush1.bf16.msra.mxu0 %v8771
  %10057 = vmatprep.subr.bf16.mxu0 %v8765
  %10058 = vmatpush1.bf16.msra.mxu0 %v8764
  %10059 = vmatprep.subr.bf16.mxu0 %v8758
  %10060 = vmatpush1.bf16.msra.mxu0 %v8757
  %10061 = vmatprep.subr.bf16.mxu0 %v8751
  %10062 = vmatpush1.bf16.msra.mxu0 %v8750
  %10063 = vmatprep.subr.bf16.mxu0 %v8744
  %10064 = vmatpush1.bf16.msra.mxu0 %v8743
  %10065 = vmatprep.subr.bf16.mxu0 %v8849
  %10066 = vmatpush2.bf16.msra.mxu0 %v8848
  %10067 = vmatprep.subr.bf16.mxu0 %v8842
  %10068 = vmatpush2.bf16.msra.mxu0 %v8841
  %10069 = vmatprep.subr.bf16.mxu0 %v8835
  %10070 = vmatpush2.bf16.msra.mxu0 %v8834
  %10071 = vmatprep.subr.bf16.mxu0 %v8828
  %10072 = vmatpush2.bf16.msra.mxu0 %v8827
  %10073 = vmatprep.subr.bf16.mxu0 %v8821
  %10074 = vmatpush2.bf16.msra.mxu0 %v8820
  %10075 = vmatprep.subr.bf16.mxu0 %v8814
  %10076 = vmatpush2.bf16.msra.mxu0 %v8813
  %10077 = vmatprep.subr.bf16.mxu0 %v8807
  %10078 = vmatpush2.bf16.msra.mxu0 %v8806
  %10079 = vmatprep.subr.bf16.mxu0 %v8800
  %10080 = vmatpush2.bf16.msra.mxu0 %v8799
  %10081 = vmatprep.mubr.bf16.mxu0 %v5202
  %10082 = vmatmul.mubr.bf16.gmra.mxu0 %v5201
  %v10083 = vpop.f32.mrf.mxu0
  %v10084 = vadd.f32 %v10043, %v10083
  %v10085 = vpop.f32.mrf.mxu0
  %v10086 = vadd.f32 %v10045, %v10085
  %v10087 = vpop.f32.mrf.mxu0
  %v10088 = vpop.f32.mrf.mxu0
  %10089 = vdwg.mxu0
  %10090 = vmatprep.subr.bf16.mxu0 0
  %10091 = vmatpush1.bf16.msra.mxu0 0
  %10092 = vmatprep.subr.bf16.mxu0 0
  %10093 = vmatpush1.bf16.msra.mxu0 0
  %10094 = vmatprep.subr.bf16.mxu0 0
  %10095 = vmatpush1.bf16.msra.mxu0 0
  %10096 = vmatprep.subr.bf16.mxu0 0
  %10097 = vmatpush1.bf16.msra.mxu0 0
  %10098 = vmatprep.subr.bf16.mxu0 0
  %10099 = vmatpush1.bf16.msra.mxu0 0
  %10100 = vmatprep.subr.bf16.mxu0 0
  %10101 = vmatpush1.bf16.msra.mxu0 0
  %10102 = vmatprep.subr.bf16.mxu0 %v8863
  %10103 = vmatpush1.bf16.msra.mxu0 %v8862
  %10104 = vmatprep.subr.bf16.mxu0 %v8856
  %10105 = vmatpush1.bf16.msra.mxu0 %v8855
  %10106 = vmatprep.subr.bf16.mxu0 0
  %10107 = vmatpush2.bf16.msra.mxu0 0
  %10108 = vmatprep.subr.bf16.mxu0 0
  %10109 = vmatpush2.bf16.msra.mxu0 0
  %10110 = vmatprep.subr.bf16.mxu0 0
  %10111 = vmatpush2.bf16.msra.mxu0 0
  %10112 = vmatprep.subr.bf16.mxu0 0
  %10113 = vmatpush2.bf16.msra.mxu0 0
  %10114 = vmatprep.subr.bf16.mxu0 0
  %10115 = vmatpush2.bf16.msra.mxu0 0
  %10116 = vmatprep.subr.bf16.mxu0 0
  %10117 = vmatpush2.bf16.msra.mxu0 0
  %10118 = vmatprep.subr.bf16.mxu0 0
  %10119 = vmatpush2.bf16.msra.mxu0 0
  %10120 = vmatprep.subr.bf16.mxu0 0
  %10121 = vmatpush2.bf16.msra.mxu0 0
  %10122 = vmatprep.mubr.bf16.mxu0 0
  %10123 = vmatmul.mubr.bf16.gmra.mxu0 %v9555
  %v10124 = vpop.f32.mrf.mxu0
  %v10125 = vadd.f32 %v10084, %v10124
  %v10126 = vpop.f32.mrf.mxu0
  %v10127 = vadd.f32 %v10086, %v10126
  %v10128 = vpop.f32.mrf.mxu0
  %v10129 = vpop.f32.mrf.mxu0
  %10130 = vdwg.mxu0
  %10131 = vmatprep.subr.bf16.mxu0 %v8235
  %10132 = vmatpush1.bf16.msra.mxu0 %v8234
  %10133 = vmatprep.subr.bf16.mxu0 %v8228
  %10134 = vmatpush1.bf16.msra.mxu0 %v8227
  %10135 = vmatprep.subr.bf16.mxu0 %v8221
  %10136 = vmatpush1.bf16.msra.mxu0 %v8220
  %10137 = vmatprep.subr.bf16.mxu0 %v8214
  %10138 = vmatpush1.bf16.msra.mxu0 %v8213
  %10139 = vmatprep.subr.bf16.mxu0 %v8207
  %10140 = vmatpush1.bf16.msra.mxu0 %v8206
  %10141 = vmatprep.subr.bf16.mxu0 %v8200
  %10142 = vmatpush1.bf16.msra.mxu0 %v8199
  %10143 = vmatprep.subr.bf16.mxu0 %v8193
  %10144 = vmatpush1.bf16.msra.mxu0 %v8192
  %10145 = vmatprep.subr.bf16.mxu0 %v8186
  %10146 = vmatpush1.bf16.msra.mxu0 %v8185
  %10147 = vmatprep.subr.bf16.mxu0 %v8291
  %10148 = vmatpush2.bf16.msra.mxu0 %v8290
  %10149 = vmatprep.subr.bf16.mxu0 %v8284
  %10150 = vmatpush2.bf16.msra.mxu0 %v8283
  %10151 = vmatprep.subr.bf16.mxu0 %v8277
  %10152 = vmatpush2.bf16.msra.mxu0 %v8276
  %10153 = vmatprep.subr.bf16.mxu0 %v8270
  %10154 = vmatpush2.bf16.msra.mxu0 %v8269
  %10155 = vmatprep.subr.bf16.mxu0 %v8263
  %10156 = vmatpush2.bf16.msra.mxu0 %v8262
  %10157 = vmatprep.subr.bf16.mxu0 %v8256
  %10158 = vmatpush2.bf16.msra.mxu0 %v8255
  %10159 = vmatprep.subr.bf16.mxu0 %v8249
  %10160 = vmatpush2.bf16.msra.mxu0 %v8248
  %10161 = vmatprep.subr.bf16.mxu0 %v8242
  %10162 = vmatpush2.bf16.msra.mxu0 %v8241
  %10163 = vmatprep.mubr.bf16.mxu0 %v5192
  %10164 = vmatmul.mubr.bf16.gmra.mxu0 %v5191
  %v10165 = vpop.f32.mrf.mxu0
  %v10166 = vadd.f32 %v6009, %v10165
  %v10167 = vpop.f32.mrf.mxu0
  %v10168 = vadd.f32 %v6013, %v10167
  %v10169 = vpop.f32.mrf.mxu0
  %v10170 = vpop.f32.mrf.mxu0
  %10171 = vdwg.mxu0
  %10172 = vmatprep.subr.bf16.mxu0 %v8347
  %10173 = vmatpush1.bf16.msra.mxu0 %v8346
  %10174 = vmatprep.subr.bf16.mxu0 %v8340
  %10175 = vmatpush1.bf16.msra.mxu0 %v8339
  %10176 = vmatprep.subr.bf16.mxu0 %v8333
  %10177 = vmatpush1.bf16.msra.mxu0 %v8332
  %10178 = vmatprep.subr.bf16.mxu0 %v8326
  %10179 = vmatpush1.bf16.msra.mxu0 %v8325
  %10180 = vmatprep.subr.bf16.mxu0 %v8319
  %10181 = vmatpush1.bf16.msra.mxu0 %v8318
  %10182 = vmatprep.subr.bf16.mxu0 %v8312
  %10183 = vmatpush1.bf16.msra.mxu0 %v8311
  %10184 = vmatprep.subr.bf16.mxu0 %v8305
  %10185 = vmatpush1.bf16.msra.mxu0 %v8304
  %10186 = vmatprep.subr.bf16.mxu0 %v8298
  %10187 = vmatpush1.bf16.msra.mxu0 %v8297
  %10188 = vmatprep.subr.bf16.mxu0 %v8403
  %10189 = vmatpush2.bf16.msra.mxu0 %v8402
  %10190 = vmatprep.subr.bf16.mxu0 %v8396
  %10191 = vmatpush2.bf16.msra.mxu0 %v8395
  %10192 = vmatprep.subr.bf16.mxu0 %v8389
  %10193 = vmatpush2.bf16.msra.mxu0 %v8388
  %10194 = vmatprep.subr.bf16.mxu0 %v8382
  %10195 = vmatpush2.bf16.msra.mxu0 %v8381
  %10196 = vmatprep.subr.bf16.mxu0 %v8375
  %10197 = vmatpush2.bf16.msra.mxu0 %v8374
  %10198 = vmatprep.subr.bf16.mxu0 %v8368
  %10199 = vmatpush2.bf16.msra.mxu0 %v8367
  %10200 = vmatprep.subr.bf16.mxu0 %v8361
  %10201 = vmatpush2.bf16.msra.mxu0 %v8360
  %10202 = vmatprep.subr.bf16.mxu0 %v8354
  %10203 = vmatpush2.bf16.msra.mxu0 %v8353
  %10204 = vmatprep.mubr.bf16.mxu0 %v5194
  %10205 = vmatmul.mubr.bf16.gmra.mxu0 %v5193
  %v10206 = vpop.f32.mrf.mxu0
  %v10207 = vadd.f32 %v10166, %v10206
  %v10208 = vpop.f32.mrf.mxu0
  %v10209 = vadd.f32 %v10168, %v10208
  %v10210 = vpop.f32.mrf.mxu0
  %v10211 = vpop.f32.mrf.mxu0
  %10212 = vdwg.mxu0
  %10213 = vmatprep.subr.bf16.mxu0 %v8459
  %10214 = vmatpush1.bf16.msra.mxu0 %v8458
  %10215 = vmatprep.subr.bf16.mxu0 %v8452
  %10216 = vmatpush1.bf16.msra.mxu0 %v8451
  %10217 = vmatprep.subr.bf16.mxu0 %v8445
  %10218 = vmatpush1.bf16.msra.mxu0 %v8444
  %10219 = vmatprep.subr.bf16.mxu0 %v8438
  %10220 = vmatpush1.bf16.msra.mxu0 %v8437
  %10221 = vmatprep.subr.bf16.mxu0 %v8431
  %10222 = vmatpush1.bf16.msra.mxu0 %v8430
  %10223 = vmatprep.subr.bf16.mxu0 %v8424
  %10224 = vmatpush1.bf16.msra.mxu0 %v8423
  %10225 = vmatprep.subr.bf16.mxu0 %v8417
  %10226 = vmatpush1.bf16.msra.mxu0 %v8416
  %10227 = vmatprep.subr.bf16.mxu0 %v8410
  %10228 = vmatpush1.bf16.msra.mxu0 %v8409
  %10229 = vmatprep.subr.bf16.mxu0 %v8515
  %10230 = vmatpush2.bf16.msra.mxu0 %v8514
  %10231 = vmatprep.subr.bf16.mxu0 %v8508
  %10232 = vmatpush2.bf16.msra.mxu0 %v8507
  %10233 = vmatprep.subr.bf16.mxu0 %v8501
  %10234 = vmatpush2.bf16.msra.mxu0 %v8500
  %10235 = vmatprep.subr.bf16.mxu0 %v8494
  %10236 = vmatpush2.bf16.msra.mxu0 %v8493
  %10237 = vmatprep.subr.bf16.mxu0 %v8487
  %10238 = vmatpush2.bf16.msra.mxu0 %v8486
  %10239 = vmatprep.subr.bf16.mxu0 %v8480
  %10240 = vmatpush2.bf16.msra.mxu0 %v8479
  %10241 = vmatprep.subr.bf16.mxu0 %v8473
  %10242 = vmatpush2.bf16.msra.mxu0 %v8472
  %10243 = vmatprep.subr.bf16.mxu0 %v8466
  %10244 = vmatpush2.bf16.msra.mxu0 %v8465
  %10245 = vmatprep.mubr.bf16.mxu0 %v5196
  %10246 = vmatmul.mubr.bf16.gmra.mxu0 %v5195
  %v10247 = vpop.f32.mrf.mxu0
  %v10248 = vadd.f32 %v10207, %v10247
  %v10249 = vpop.f32.mrf.mxu0
  %v10250 = vadd.f32 %v10209, %v10249
  %v10251 = vpop.f32.mrf.mxu0
  %v10252 = vpop.f32.mrf.mxu0
  %10253 = vdwg.mxu0
  %10254 = vmatprep.subr.bf16.mxu0 %v8571
  %10255 = vmatpush1.bf16.msra.mxu0 %v8570
  %10256 = vmatprep.subr.bf16.mxu0 %v8564
  %10257 = vmatpush1.bf16.msra.mxu0 %v8563
  %10258 = vmatprep.subr.bf16.mxu0 %v8557
  %10259 = vmatpush1.bf16.msra.mxu0 %v8556
  %10260 = vmatprep.subr.bf16.mxu0 %v8550
  %10261 = vmatpush1.bf16.msra.mxu0 %v8549
  %10262 = vmatprep.subr.bf16.mxu0 %v8543
  %10263 = vmatpush1.bf16.msra.mxu0 %v8542
  %10264 = vmatprep.subr.bf16.mxu0 %v8536
  %10265 = vmatpush1.bf16.msra.mxu0 %v8535
  %10266 = vmatprep.subr.bf16.mxu0 %v8529
  %10267 = vmatpush1.bf16.msra.mxu0 %v8528
  %10268 = vmatprep.subr.bf16.mxu0 %v8522
  %10269 = vmatpush1.bf16.msra.mxu0 %v8521
  %10270 = vmatprep.subr.bf16.mxu0 %v8627
  %10271 = vmatpush2.bf16.msra.mxu0 %v8626
  %10272 = vmatprep.subr.bf16.mxu0 %v8620
  %10273 = vmatpush2.bf16.msra.mxu0 %v8619
  %10274 = vmatprep.subr.bf16.mxu0 %v8613
  %10275 = vmatpush2.bf16.msra.mxu0 %v8612
  %10276 = vmatprep.subr.bf16.mxu0 %v8606
  %10277 = vmatpush2.bf16.msra.mxu0 %v8605
  %10278 = vmatprep.subr.bf16.mxu0 %v8599
  %10279 = vmatpush2.bf16.msra.mxu0 %v8598
  %10280 = vmatprep.subr.bf16.mxu0 %v8592
  %10281 = vmatpush2.bf16.msra.mxu0 %v8591
  %10282 = vmatprep.subr.bf16.mxu0 %v8585
  %10283 = vmatpush2.bf16.msra.mxu0 %v8584
  %10284 = vmatprep.subr.bf16.mxu0 %v8578
  %10285 = vmatpush2.bf16.msra.mxu0 %v8577
  %10286 = vmatprep.mubr.bf16.mxu0 %v5198
  %10287 = vmatmul.mubr.bf16.gmra.mxu0 %v5197
  %v10288 = vpop.f32.mrf.mxu0
  %v10289 = vadd.f32 %v10248, %v10288
  %v10290 = vpop.f32.mrf.mxu0
  %v10291 = vadd.f32 %v10250, %v10290
  %v10292 = vpop.f32.mrf.mxu0
  %v10293 = vpop.f32.mrf.mxu0
  %10294 = vdwg.mxu0
  %10295 = vmatprep.subr.bf16.mxu0 %v8683
  %10296 = vmatpush1.bf16.msra.mxu0 %v8682
  %10297 = vmatprep.subr.bf16.mxu0 %v8676
  %10298 = vmatpush1.bf16.msra.mxu0 %v8675
  %10299 = vmatprep.subr.bf16.mxu0 %v8669
  %10300 = vmatpush1.bf16.msra.mxu0 %v8668
  %10301 = vmatprep.subr.bf16.mxu0 %v8662
  %10302 = vmatpush1.bf16.msra.mxu0 %v8661
  %10303 = vmatprep.subr.bf16.mxu0 %v8655
  %10304 = vmatpush1.bf16.msra.mxu0 %v8654
  %10305 = vmatprep.subr.bf16.mxu0 %v8648
  %10306 = vmatpush1.bf16.msra.mxu0 %v8647
  %10307 = vmatprep.subr.bf16.mxu0 %v8641
  %10308 = vmatpush1.bf16.msra.mxu0 %v8640
  %10309 = vmatprep.subr.bf16.mxu0 %v8634
  %10310 = vmatpush1.bf16.msra.mxu0 %v8633
  %10311 = vmatprep.subr.bf16.mxu0 %v8739
  %10312 = vmatpush2.bf16.msra.mxu0 %v8738
  %10313 = vmatprep.subr.bf16.mxu0 %v8732
  %10314 = vmatpush2.bf16.msra.mxu0 %v8731
  %10315 = vmatprep.subr.bf16.mxu0 %v8725
  %10316 = vmatpush2.bf16.msra.mxu0 %v8724
  %10317 = vmatprep.subr.bf16.mxu0 %v8718
  %10318 = vmatpush2.bf16.msra.mxu0 %v8717
  %10319 = vmatprep.subr.bf16.mxu0 %v8711
  %10320 = vmatpush2.bf16.msra.mxu0 %v8710
  %10321 = vmatprep.subr.bf16.mxu0 %v8704
  %10322 = vmatpush2.bf16.msra.mxu0 %v8703
  %10323 = vmatprep.subr.bf16.mxu0 %v8697
  %10324 = vmatpush2.bf16.msra.mxu0 %v8696
  %10325 = vmatprep.subr.bf16.mxu0 %v8690
  %10326 = vmatpush2.bf16.msra.mxu0 %v8689
  %10327 = vmatprep.mubr.bf16.mxu0 %v5200
  %10328 = vmatmul.mubr.bf16.gmra.mxu0 %v5199
  %v10329 = vpop.f32.mrf.mxu0
  %v10330 = vadd.f32 %v10289, %v10329
  %v10331 = vpop.f32.mrf.mxu0
  %v10332 = vadd.f32 %v10291, %v10331
  %v10333 = vpop.f32.mrf.mxu0
  %v10334 = vpop.f32.mrf.mxu0
  %10335 = vdwg.mxu0
  %10336 = vmatprep.subr.bf16.mxu0 %v8795
  %10337 = vmatpush1.bf16.msra.mxu0 %v8794
  %10338 = vmatprep.subr.bf16.mxu0 %v8788
  %10339 = vmatpush1.bf16.msra.mxu0 %v8787
  %10340 = vmatprep.subr.bf16.mxu0 %v8781
  %10341 = vmatpush1.bf16.msra.mxu0 %v8780
  %10342 = vmatprep.subr.bf16.mxu0 %v8774
  %10343 = vmatpush1.bf16.msra.mxu0 %v8773
  %10344 = vmatprep.subr.bf16.mxu0 %v8767
  %10345 = vmatpush1.bf16.msra.mxu0 %v8766
  %10346 = vmatprep.subr.bf16.mxu0 %v8760
  %10347 = vmatpush1.bf16.msra.mxu0 %v8759
  %10348 = vmatprep.subr.bf16.mxu0 %v8753
  %10349 = vmatpush1.bf16.msra.mxu0 %v8752
  %10350 = vmatprep.subr.bf16.mxu0 %v8746
  %10351 = vmatpush1.bf16.msra.mxu0 %v8745
  %10352 = vmatprep.subr.bf16.mxu0 %v8851
  %10353 = vmatpush2.bf16.msra.mxu0 %v8850
  %10354 = vmatprep.subr.bf16.mxu0 %v8844
  %10355 = vmatpush2.bf16.msra.mxu0 %v8843
  %10356 = vmatprep.subr.bf16.mxu0 %v8837
  %10357 = vmatpush2.bf16.msra.mxu0 %v8836
  %10358 = vmatprep.subr.bf16.mxu0 %v8830
  %10359 = vmatpush2.bf16.msra.mxu0 %v8829
  %10360 = vmatprep.subr.bf16.mxu0 %v8823
  %10361 = vmatpush2.bf16.msra.mxu0 %v8822
  %10362 = vmatprep.subr.bf16.mxu0 %v8816
  %10363 = vmatpush2.bf16.msra.mxu0 %v8815
  %10364 = vmatprep.subr.bf16.mxu0 %v8809
  %10365 = vmatpush2.bf16.msra.mxu0 %v8808
  %10366 = vmatprep.subr.bf16.mxu0 %v8802
  %10367 = vmatpush2.bf16.msra.mxu0 %v8801
  %10368 = vmatprep.mubr.bf16.mxu0 %v5202
  %10369 = vmatmul.mubr.bf16.gmra.mxu0 %v5201
  %v10370 = vpop.f32.mrf.mxu0
  %v10371 = vadd.f32 %v10330, %v10370
  %v10372 = vpop.f32.mrf.mxu0
  %v10373 = vadd.f32 %v10332, %v10372
  %v10374 = vpop.f32.mrf.mxu0
  %v10375 = vpop.f32.mrf.mxu0
  %10376 = vdwg.mxu0
  %10377 = vmatprep.subr.bf16.mxu0 0
  %10378 = vmatpush1.bf16.msra.mxu0 0
  %10379 = vmatprep.subr.bf16.mxu0 0
  %10380 = vmatpush1.bf16.msra.mxu0 0
  %10381 = vmatprep.subr.bf16.mxu0 0
  %10382 = vmatpush1.bf16.msra.mxu0 0
  %10383 = vmatprep.subr.bf16.mxu0 0
  %10384 = vmatpush1.bf16.msra.mxu0 0
  %10385 = vmatprep.subr.bf16.mxu0 0
  %10386 = vmatpush1.bf16.msra.mxu0 0
  %10387 = vmatprep.subr.bf16.mxu0 0
  %10388 = vmatpush1.bf16.msra.mxu0 0
  %10389 = vmatprep.subr.bf16.mxu0 %v8865
  %10390 = vmatpush1.bf16.msra.mxu0 %v8864
  %10391 = vmatprep.subr.bf16.mxu0 %v8858
  %10392 = vmatpush1.bf16.msra.mxu0 %v8857
  %10393 = vmatprep.subr.bf16.mxu0 0
  %10394 = vmatpush2.bf16.msra.mxu0 0
  %10395 = vmatprep.subr.bf16.mxu0 0
  %10396 = vmatpush2.bf16.msra.mxu0 0
  %10397 = vmatprep.subr.bf16.mxu0 0
  %10398 = vmatpush2.bf16.msra.mxu0 0
  %10399 = vmatprep.subr.bf16.mxu0 0
  %10400 = vmatpush2.bf16.msra.mxu0 0
  %10401 = vmatprep.subr.bf16.mxu0 0
  %10402 = vmatpush2.bf16.msra.mxu0 0
  %10403 = vmatprep.subr.bf16.mxu0 0
  %10404 = vmatpush2.bf16.msra.mxu0 0
  %10405 = vmatprep.subr.bf16.mxu0 0
  %10406 = vmatpush2.bf16.msra.mxu0 0
  %10407 = vmatprep.subr.bf16.mxu0 0
  %10408 = vmatpush2.bf16.msra.mxu0 0
  %10409 = vmatprep.mubr.bf16.mxu0 0
  %10410 = vmatmul.mubr.bf16.gmra.mxu0 %v9555
  %v10411 = vpop.f32.mrf.mxu0
  %v10412 = vadd.f32 %v10371, %v10411
  %v10413 = vpop.f32.mrf.mxu0
  %v10414 = vadd.f32 %v10373, %v10413
  %v10415 = vpop.f32.mrf.mxu0
  %v10416 = vpop.f32.mrf.mxu0
  %10417 = vdwg.mxu0
  %10418 = vmatprep.subr.bf16.mxu0 0
  %10419 = vmatpush1.bf16.msra.mxu0 %v8236
  %10420 = vmatprep.subr.bf16.mxu0 0
  %10421 = vmatpush1.bf16.msra.mxu0 %v8229
  %10422 = vmatprep.subr.bf16.mxu0 0
  %10423 = vmatpush1.bf16.msra.mxu0 %v8222
  %10424 = vmatprep.subr.bf16.mxu0 0
  %10425 = vmatpush1.bf16.msra.mxu0 %v8215
  %10426 = vmatprep.subr.bf16.mxu0 0
  %10427 = vmatpush1.bf16.msra.mxu0 %v8208
  %10428 = vmatprep.subr.bf16.mxu0 0
  %10429 = vmatpush1.bf16.msra.mxu0 %v8201
  %10430 = vmatprep.subr.bf16.mxu0 0
  %10431 = vmatpush1.bf16.msra.mxu0 %v8194
  %10432 = vmatprep.subr.bf16.mxu0 0
  %10433 = vmatpush1.bf16.msra.mxu0 %v8187
  %10434 = vmatprep.subr.bf16.mxu0 0
  %10435 = vmatpush2.bf16.msra.mxu0 %v8292
  %10436 = vmatprep.subr.bf16.mxu0 0
  %10437 = vmatpush2.bf16.msra.mxu0 %v8285
  %10438 = vmatprep.subr.bf16.mxu0 0
  %10439 = vmatpush2.bf16.msra.mxu0 %v8278
  %10440 = vmatprep.subr.bf16.mxu0 0
  %10441 = vmatpush2.bf16.msra.mxu0 %v8271
  %10442 = vmatprep.subr.bf16.mxu0 0
  %10443 = vmatpush2.bf16.msra.mxu0 %v8264
  %10444 = vmatprep.subr.bf16.mxu0 0
  %10445 = vmatpush2.bf16.msra.mxu0 %v8257
  %10446 = vmatprep.subr.bf16.mxu0 0
  %10447 = vmatpush2.bf16.msra.mxu0 %v8250
  %10448 = vmatprep.subr.bf16.mxu0 0
  %10449 = vmatpush2.bf16.msra.mxu0 %v8243
  %10450 = vmatprep.mubr.bf16.mxu0 %v5192
  %10451 = vmatmul.mubr.bf16.gmra.mxu0 %v5191
  %v10452 = vpop.f32.mrf.mxu0
  %v10453 = vadd.f32 %v6017, %v10452
  %v10454 = vpop.f32.mrf.mxu0
  %v10455 = vpop.f32.mrf.mxu0
  %v10456 = vpop.f32.mrf.mxu0
  %10457 = vdwg.mxu0
  %10458 = vmatprep.subr.bf16.mxu0 0
  %10459 = vmatpush1.bf16.msra.mxu0 %v8348
  %10460 = vmatprep.subr.bf16.mxu0 0
  %10461 = vmatpush1.bf16.msra.mxu0 %v8341
  %10462 = vmatprep.subr.bf16.mxu0 0
  %10463 = vmatpush1.bf16.msra.mxu0 %v8334
  %10464 = vmatprep.subr.bf16.mxu0 0
  %10465 = vmatpush1.bf16.msra.mxu0 %v8327
  %10466 = vmatprep.subr.bf16.mxu0 0
  %10467 = vmatpush1.bf16.msra.mxu0 %v8320
  %10468 = vmatprep.subr.bf16.mxu0 0
  %10469 = vmatpush1.bf16.msra.mxu0 %v8313
  %10470 = vmatprep.subr.bf16.mxu0 0
  %10471 = vmatpush1.bf16.msra.mxu0 %v8306
  %10472 = vmatprep.subr.bf16.mxu0 0
  %10473 = vmatpush1.bf16.msra.mxu0 %v8299
  %10474 = vmatprep.subr.bf16.mxu0 0
  %10475 = vmatpush2.bf16.msra.mxu0 %v8404
  %10476 = vmatprep.subr.bf16.mxu0 0
  %10477 = vmatpush2.bf16.msra.mxu0 %v8397
  %10478 = vmatprep.subr.bf16.mxu0 0
  %10479 = vmatpush2.bf16.msra.mxu0 %v8390
  %10480 = vmatprep.subr.bf16.mxu0 0
  %10481 = vmatpush2.bf16.msra.mxu0 %v8383
  %10482 = vmatprep.subr.bf16.mxu0 0
  %10483 = vmatpush2.bf16.msra.mxu0 %v8376
  %10484 = vmatprep.subr.bf16.mxu0 0
  %10485 = vmatpush2.bf16.msra.mxu0 %v8369
  %10486 = vmatprep.subr.bf16.mxu0 0
  %10487 = vmatpush2.bf16.msra.mxu0 %v8362
  %10488 = vmatprep.subr.bf16.mxu0 0
  %10489 = vmatpush2.bf16.msra.mxu0 %v8355
  %10490 = vmatprep.mubr.bf16.mxu0 %v5194
  %10491 = vmatmul.mubr.bf16.gmra.mxu0 %v5193
  %v10492 = vpop.f32.mrf.mxu0
  %v10493 = vadd.f32 %v10453, %v10492
  %v10494 = vpop.f32.mrf.mxu0
  %v10495 = vpop.f32.mrf.mxu0
  %v10496 = vpop.f32.mrf.mxu0
  %10497 = vdwg.mxu0
  %10498 = vmatprep.subr.bf16.mxu0 0
  %10499 = vmatpush1.bf16.msra.mxu0 %v8460
  %10500 = vmatprep.subr.bf16.mxu0 0
  %10501 = vmatpush1.bf16.msra.mxu0 %v8453
  %10502 = vmatprep.subr.bf16.mxu0 0
  %10503 = vmatpush1.bf16.msra.mxu0 %v8446
  %10504 = vmatprep.subr.bf16.mxu0 0
  %10505 = vmatpush1.bf16.msra.mxu0 %v8439
  %10506 = vmatprep.subr.bf16.mxu0 0
  %10507 = vmatpush1.bf16.msra.mxu0 %v8432
  %10508 = vmatprep.subr.bf16.mxu0 0
  %10509 = vmatpush1.bf16.msra.mxu0 %v8425
  %10510 = vmatprep.subr.bf16.mxu0 0
  %10511 = vmatpush1.bf16.msra.mxu0 %v8418
  %10512 = vmatprep.subr.bf16.mxu0 0
  %10513 = vmatpush1.bf16.msra.mxu0 %v8411
  %10514 = vmatprep.subr.bf16.mxu0 0
  %10515 = vmatpush2.bf16.msra.mxu0 %v8516
  %10516 = vmatprep.subr.bf16.mxu0 0
  %10517 = vmatpush2.bf16.msra.mxu0 %v8509
  %10518 = vmatprep.subr.bf16.mxu0 0
  %10519 = vmatpush2.bf16.msra.mxu0 %v8502
  %10520 = vmatprep.subr.bf16.mxu0 0
  %10521 = vmatpush2.bf16.msra.mxu0 %v8495
  %10522 = vmatprep.subr.bf16.mxu0 0
  %10523 = vmatpush2.bf16.msra.mxu0 %v8488
  %10524 = vmatprep.subr.bf16.mxu0 0
  %10525 = vmatpush2.bf16.msra.mxu0 %v8481
  %10526 = vmatprep.subr.bf16.mxu0 0
  %10527 = vmatpush2.bf16.msra.mxu0 %v8474
  %10528 = vmatprep.subr.bf16.mxu0 0
  %10529 = vmatpush2.bf16.msra.mxu0 %v8467
  %10530 = vmatprep.mubr.bf16.mxu0 %v5196
  %10531 = vmatmul.mubr.bf16.gmra.mxu0 %v5195
  %v10532 = vpop.f32.mrf.mxu0
  %v10533 = vadd.f32 %v10493, %v10532
  %v10534 = vpop.f32.mrf.mxu0
  %v10535 = vpop.f32.mrf.mxu0
  %v10536 = vpop.f32.mrf.mxu0
  %10537 = vdwg.mxu0
  %10538 = vmatprep.subr.bf16.mxu0 0
  %10539 = vmatpush1.bf16.msra.mxu0 %v8572
  %10540 = vmatprep.subr.bf16.mxu0 0
  %10541 = vmatpush1.bf16.msra.mxu0 %v8565
  %10542 = vmatprep.subr.bf16.mxu0 0
  %10543 = vmatpush1.bf16.msra.mxu0 %v8558
  %10544 = vmatprep.subr.bf16.mxu0 0
  %10545 = vmatpush1.bf16.msra.mxu0 %v8551
  %10546 = vmatprep.subr.bf16.mxu0 0
  %10547 = vmatpush1.bf16.msra.mxu0 %v8544
  %10548 = vmatprep.subr.bf16.mxu0 0
  %10549 = vmatpush1.bf16.msra.mxu0 %v8537
  %10550 = vmatprep.subr.bf16.mxu0 0
  %10551 = vmatpush1.bf16.msra.mxu0 %v8530
  %10552 = vmatprep.subr.bf16.mxu0 0
  %10553 = vmatpush1.bf16.msra.mxu0 %v8523
  %10554 = vmatprep.subr.bf16.mxu0 0
  %10555 = vmatpush2.bf16.msra.mxu0 %v8628
  %10556 = vmatprep.subr.bf16.mxu0 0
  %10557 = vmatpush2.bf16.msra.mxu0 %v8621
  %10558 = vmatprep.subr.bf16.mxu0 0
  %10559 = vmatpush2.bf16.msra.mxu0 %v8614
  %10560 = vmatprep.subr.bf16.mxu0 0
  %10561 = vmatpush2.bf16.msra.mxu0 %v8607
  %10562 = vmatprep.subr.bf16.mxu0 0
  %10563 = vmatpush2.bf16.msra.mxu0 %v8600
  %10564 = vmatprep.subr.bf16.mxu0 0
  %10565 = vmatpush2.bf16.msra.mxu0 %v8593
  %10566 = vmatprep.subr.bf16.mxu0 0
  %10567 = vmatpush2.bf16.msra.mxu0 %v8586
  %10568 = vmatprep.subr.bf16.mxu0 0
  %10569 = vmatpush2.bf16.msra.mxu0 %v8579
  %10570 = vmatprep.mubr.bf16.mxu0 %v5198
  %10571 = vmatmul.mubr.bf16.gmra.mxu0 %v5197
  %v10572 = vpop.f32.mrf.mxu0
  %v10573 = vadd.f32 %v10533, %v10572
  %v10574 = vpop.f32.mrf.mxu0
  %v10575 = vpop.f32.mrf.mxu0
  %v10576 = vpop.f32.mrf.mxu0
  %10577 = vdwg.mxu0
  %10578 = vmatprep.subr.bf16.mxu0 0
  %10579 = vmatpush1.bf16.msra.mxu0 %v8684
  %10580 = vmatprep.subr.bf16.mxu0 0
  %10581 = vmatpush1.bf16.msra.mxu0 %v8677
  %10582 = vmatprep.subr.bf16.mxu0 0
  %10583 = vmatpush1.bf16.msra.mxu0 %v8670
  %10584 = vmatprep.subr.bf16.mxu0 0
  %10585 = vmatpush1.bf16.msra.mxu0 %v8663
  %10586 = vmatprep.subr.bf16.mxu0 0
  %10587 = vmatpush1.bf16.msra.mxu0 %v8656
  %10588 = vmatprep.subr.bf16.mxu0 0
  %10589 = vmatpush1.bf16.msra.mxu0 %v8649
  %10590 = vmatprep.subr.bf16.mxu0 0
  %10591 = vmatpush1.bf16.msra.mxu0 %v8642
  %10592 = vmatprep.subr.bf16.mxu0 0
  %10593 = vmatpush1.bf16.msra.mxu0 %v8635
  %10594 = vmatprep.subr.bf16.mxu0 0
  %10595 = vmatpush2.bf16.msra.mxu0 %v8740
  %10596 = vmatprep.subr.bf16.mxu0 0
  %10597 = vmatpush2.bf16.msra.mxu0 %v8733
  %10598 = vmatprep.subr.bf16.mxu0 0
  %10599 = vmatpush2.bf16.msra.mxu0 %v8726
  %10600 = vmatprep.subr.bf16.mxu0 0
  %10601 = vmatpush2.bf16.msra.mxu0 %v8719
  %10602 = vmatprep.subr.bf16.mxu0 0
  %10603 = vmatpush2.bf16.msra.mxu0 %v8712
  %10604 = vmatprep.subr.bf16.mxu0 0
  %10605 = vmatpush2.bf16.msra.mxu0 %v8705
  %10606 = vmatprep.subr.bf16.mxu0 0
  %10607 = vmatpush2.bf16.msra.mxu0 %v8698
  %10608 = vmatprep.subr.bf16.mxu0 0
  %10609 = vmatpush2.bf16.msra.mxu0 %v8691
  %10610 = vmatprep.mubr.bf16.mxu0 %v5200
  %10611 = vmatmul.mubr.bf16.gmra.mxu0 %v5199
  %v10612 = vpop.f32.mrf.mxu0
  %v10613 = vadd.f32 %v10573, %v10612
  %v10614 = vpop.f32.mrf.mxu0
  %v10615 = vpop.f32.mrf.mxu0
  %v10616 = vpop.f32.mrf.mxu0
  %10617 = vdwg.mxu0
  %10618 = vmatprep.subr.bf16.mxu0 0
  %10619 = vmatpush1.bf16.msra.mxu0 %v8796
  %10620 = vmatprep.subr.bf16.mxu0 0
  %10621 = vmatpush1.bf16.msra.mxu0 %v8789
  %10622 = vmatprep.subr.bf16.mxu0 0
  %10623 = vmatpush1.bf16.msra.mxu0 %v8782
  %10624 = vmatprep.subr.bf16.mxu0 0
  %10625 = vmatpush1.bf16.msra.mxu0 %v8775
  %10626 = vmatprep.subr.bf16.mxu0 0
  %10627 = vmatpush1.bf16.msra.mxu0 %v8768
  %10628 = vmatprep.subr.bf16.mxu0 0
  %10629 = vmatpush1.bf16.msra.mxu0 %v8761
  %10630 = vmatprep.subr.bf16.mxu0 0
  %10631 = vmatpush1.bf16.msra.mxu0 %v8754
  %10632 = vmatprep.subr.bf16.mxu0 0
  %10633 = vmatpush1.bf16.msra.mxu0 %v8747
  %10634 = vmatprep.subr.bf16.mxu0 0
  %10635 = vmatpush2.bf16.msra.mxu0 %v8852
  %10636 = vmatprep.subr.bf16.mxu0 0
  %10637 = vmatpush2.bf16.msra.mxu0 %v8845
  %10638 = vmatprep.subr.bf16.mxu0 0
  %10639 = vmatpush2.bf16.msra.mxu0 %v8838
  %10640 = vmatprep.subr.bf16.mxu0 0
  %10641 = vmatpush2.bf16.msra.mxu0 %v8831
  %10642 = vmatprep.subr.bf16.mxu0 0
  %10643 = vmatpush2.bf16.msra.mxu0 %v8824
  %10644 = vmatprep.subr.bf16.mxu0 0
  %10645 = vmatpush2.bf16.msra.mxu0 %v8817
  %10646 = vmatprep.subr.bf16.mxu0 0
  %10647 = vmatpush2.bf16.msra.mxu0 %v8810
  %10648 = vmatprep.subr.bf16.mxu0 0
  %10649 = vmatpush2.bf16.msra.mxu0 %v8803
  %10650 = vmatprep.mubr.bf16.mxu0 %v5202
  %10651 = vmatmul.mubr.bf16.gmra.mxu0 %v5201
  %v10652 = vpop.f32.mrf.mxu0
  %v10653 = vadd.f32 %v10613, %v10652
  %v10654 = vpop.f32.mrf.mxu0
  %v10655 = vpop.f32.mrf.mxu0
  %v10656 = vpop.f32.mrf.mxu0
  %10657 = vdwg.mxu0
  %10658 = vmatprep.subr.bf16.mxu0 0
  %10659 = vmatpush1.bf16.msra.mxu0 0
  %10660 = vmatprep.subr.bf16.mxu0 0
  %10661 = vmatpush1.bf16.msra.mxu0 0
  %10662 = vmatprep.subr.bf16.mxu0 0
  %10663 = vmatpush1.bf16.msra.mxu0 0
  %10664 = vmatprep.subr.bf16.mxu0 0
  %10665 = vmatpush1.bf16.msra.mxu0 0
  %10666 = vmatprep.subr.bf16.mxu0 0
  %10667 = vmatpush1.bf16.msra.mxu0 0
  %10668 = vmatprep.subr.bf16.mxu0 0
  %10669 = vmatpush1.bf16.msra.mxu0 0
  %10670 = vmatprep.subr.bf16.mxu0 0
  %10671 = vmatpush1.bf16.msra.mxu0 %v8866
  %10672 = vmatprep.subr.bf16.mxu0 0
  %10673 = vmatpush1.bf16.msra.mxu0 %v8859
  %10674 = vmatprep.subr.bf16.mxu0 0
  %10675 = vmatpush2.bf16.msra.mxu0 0
  %10676 = vmatprep.subr.bf16.mxu0 0
  %10677 = vmatpush2.bf16.msra.mxu0 0
  %10678 = vmatprep.subr.bf16.mxu0 0
  %10679 = vmatpush2.bf16.msra.mxu0 0
  %10680 = vmatprep.subr.bf16.mxu0 0
  %10681 = vmatpush2.bf16.msra.mxu0 0
  %10682 = vmatprep.subr.bf16.mxu0 0
  %10683 = vmatpush2.bf16.msra.mxu0 0
  %10684 = vmatprep.subr.bf16.mxu0 0
  %10685 = vmatpush2.bf16.msra.mxu0 0
  %10686 = vmatprep.subr.bf16.mxu0 0
  %10687 = vmatpush2.bf16.msra.mxu0 0
  %10688 = vmatprep.subr.bf16.mxu0 0
  %10689 = vmatpush2.bf16.msra.mxu0 0
  %10690 = vmatprep.mubr.bf16.mxu0 0
  %10691 = vmatmul.mubr.bf16.gmra.mxu0 %v9555
  %v10692 = vpop.f32.mrf.mxu0
  %v10693 = vadd.f32 %v10653, %v10692
  %v10694 = vpop.f32.mrf.mxu0
  %v10695 = vpop.f32.mrf.mxu0
  %v10696 = vpop.f32.mrf.mxu0
  %10697 = vdwg.mxu0
  %v10698 = vmax.f32 %v9838, 0.0
  %v10699 = vmax.f32 %v9840, 0.0
  %v10700 = vmax.f32 %v10125, 0.0
  %v10701 = vmax.f32 %v10127, 0.0
  %v10702 = vmax.f32 %v10412, 0.0
  %v10703 = vmax.f32 %v10414, 0.0
  %v10704 = vmax.f32 %v10693, 0.0
  %v10705 = vpack.c.bf16 %v10698, %v10698
  %v10706 = vpack.c.bf16 %v10699, %v10699
  %v10707 = vpack.c.bf16 %v10700, %v10700
  %v10708 = vpack.c.bf16 %v10701, %v10701
  %v10709 = vpack.c.bf16 %v10702, %v10702
  %v10710 = vpack.c.bf16 %v10703, %v10703
  %v10711 = vpack.c.bf16 %v10704, %v10704
  %v10712 = vld [vmem:[%s3] sm:$0xf]
  %v10713 = vld [vmem:[%s3 + $0x4] sm:$0xf]
  %v10714 = vld [vmem:[%s3 + $0x8] sm:$0xf]
  %v10715 = vld [vmem:[%s3 + $0xc] sm:$0xf]
  %v10716 = vld [vmem:[%s3 + $0x10] sm:$0xf]
  %v10717 = vld [vmem:[%s3 + $0x14] sm:$0xf]
  %v10718 = vld [vmem:[%s3 + $0x18] sm:$0xf]
  %v10719 = vld [vmem:[%s3 + $0x1c] sm:$0xf]
  %v10720 = vld [vmem:[%s3 + $0x20] sm:$0xf]
  %v10721 = vld [vmem:[%s3 + $0x24] sm:$0xf]
  %v10722 = vld [vmem:[%s3 + $0x28] sm:$0xf]
  %v10723 = vld [vmem:[%s3 + $0x2c] sm:$0xf]
  %v10724 = vld [vmem:[%s3 + $0x30] sm:$0xf]
  %v10725 = vld [vmem:[%s3 + $0x34] sm:$0xf]
  %v10726 = vld [vmem:[%s3 + $0x38] sm:$0xf]
  %v10727 = vld [vmem:[%s3 + $0x3c] sm:$0xf]
  %v10728 = vld [vmem:[%s3 + $0x40] sm:$0xf]
  %v10729 = vld [vmem:[%s3 + $0x44] sm:$0xf]
  %v10730 = vld [vmem:[%s3 + $0x48] sm:$0xf]
  %v10731 = vld [vmem:[%s3 + $0x4c] sm:$0xf]
  %v10732 = vld [vmem:[%s3 + $0x50] sm:$0xf]
  %v10733 = vld [vmem:[%s3 + $0x54] sm:$0xf]
  %v10734 = vld [vmem:[%s3 + $0x58] sm:$0xf]
  %v10735 = vld [vmem:[%s3 + $0x5c] sm:$0xf]
  %v10736 = vld [vmem:[%s3 + $0x60] sm:$0xf]
  %v10737 = vld [vmem:[%s3 + $0x64] sm:$0xf]
  %v10738 = vld [vmem:[%s3 + $0x68] sm:$0xf]
  %v10739 = vld [vmem:[%s3 + $0x6c] sm:$0xf]
  %v10740 = vld [vmem:[%s3 + $0x70] sm:$0xf]
  %v10741 = vld [vmem:[%s3 + $0x74] sm:$0xf]
  %v10742 = vld [vmem:[%s3 + $0x78] sm:$0xf]
  %v10743 = vld [vmem:[%s3 + $0x7c] sm:$0xf]
  %v10744 = vld [vmem:[%s3 + $0x80] sm:$0xf]
  %v10745 = vld [vmem:[%s3 + $0x84] sm:$0xf]
  %v10746 = vld [vmem:[%s3 + $0x88] sm:$0xf]
  %v10747 = vld [vmem:[%s3 + $0x8c] sm:$0xf]
  %v10748 = vld [vmem:[%s3 + $0x90] sm:$0xf]
  %v10749 = vld [vmem:[%s3 + $0x94] sm:$0xf]
  %v10750 = vld [vmem:[%s3 + $0x98] sm:$0xf]
  %v10751 = vld [vmem:[%s3 + $0x9c] sm:$0xf]
  %v10752 = vld [vmem:[%s3 + $0xa0] sm:$0xf]
  %v10753 = vld [vmem:[%s3 + $0xa4] sm:$0xf]
  %v10754 = vld [vmem:[%s3 + $0xa8] sm:$0xf]
  %v10755 = vld [vmem:[%s3 + $0xac] sm:$0xf]
  %v10756 = vld [vmem:[%s3 + $0xb0] sm:$0xf]
  %v10757 = vld [vmem:[%s3 + $0xb4] sm:$0xf]
  %v10758 = vld [vmem:[%s3 + $0xb8] sm:$0xf]
  %v10759 = vld [vmem:[%s3 + $0xbc] sm:$0xf]
  %v10760 = vld [vmem:[%s3 + $0xc0] sm:$0xf]
  %v10761 = vld [vmem:[%s3 + $0xc4] sm:$0xf]
  %v10762 = vld [vmem:[%s3 + $0xc8] sm:$0xf]
  %v10763 = vld [vmem:[%s3 + $0xcc] sm:$0xf]
  %v10764 = vld [vmem:[%s3 + $0xd0] sm:$0xf]
  %v10765 = vld [vmem:[%s3 + $0xd4] sm:$0xf]
  %v10766 = vld [vmem:[%s3 + $0xd8] sm:$0xf]
  %v10767 = vld [vmem:[%s3 + $0xdc] sm:$0xf]
  %v10768 = vld [vmem:[%s3 + $0xe0] sm:$0xf]
  %v10769 = vld [vmem:[%s3 + $0xe4] sm:$0xf]
  %v10770 = vld [vmem:[%s3 + $0xe8] sm:$0xf]
  %v10771 = vld [vmem:[%s3 + $0xec] sm:$0xf]
  %v10772 = vld [vmem:[%s3 + $0xf0] sm:$0xf]
  %v10773 = vld [vmem:[%s3 + $0xf4] sm:$0xf]
  %v10774 = vld [vmem:[%s3 + $0xf8] sm:$0xf]
  %v10775 = vld [vmem:[%s3 + $0xfc] sm:$0xf]
  %v10776 = vld [vmem:[%s3 + $0x100] sm:$0xf]
  %v10777 = vld [vmem:[%s3 + $0x104] sm:$0xf]
  %v10778 = vld [vmem:[%s3 + $0x108] sm:$0xf]
  %v10779 = vld [vmem:[%s3 + $0x10c] sm:$0xf]
  %v10780 = vld [vmem:[%s3 + $0x110] sm:$0xf]
  %v10781 = vld [vmem:[%s3 + $0x114] sm:$0xf]
  %v10782 = vld [vmem:[%s3 + $0x118] sm:$0xf]
  %v10783 = vld [vmem:[%s3 + $0x11c] sm:$0xf]
  %v10784 = vld [vmem:[%s3 + $0x120] sm:$0xf]
  %v10785 = vld [vmem:[%s3 + $0x124] sm:$0xf]
  %v10786 = vld [vmem:[%s3 + $0x128] sm:$0xf]
  %v10787 = vld [vmem:[%s3 + $0x12c] sm:$0xf]
  %v10788 = vld [vmem:[%s3 + $0x130] sm:$0xf]
  %v10789 = vld [vmem:[%s3 + $0x134] sm:$0xf]
  %v10790 = vld [vmem:[%s3 + $0x138] sm:$0xf]
  %v10791 = vld [vmem:[%s3 + $0x13c] sm:$0xf]
  %v10792 = vld [vmem:[%s3 + $0x140] sm:$0xf]
  %v10793 = vld [vmem:[%s3 + $0x144] sm:$0xf]
  %v10794 = vld [vmem:[%s3 + $0x148] sm:$0xf]
  %v10795 = vld [vmem:[%s3 + $0x14c] sm:$0xf]
  %v10796 = vld [vmem:[%s3 + $0x150] sm:$0xf]
  %v10797 = vld [vmem:[%s3 + $0x154] sm:$0xf]
  %v10798 = vld [vmem:[%s3 + $0x158] sm:$0xf]
  %v10799 = vld [vmem:[%s3 + $0x15c] sm:$0xf]
  %v10800 = vld [vmem:[%s3 + $0x160] sm:$0xf]
  %v10801 = vld [vmem:[%s3 + $0x164] sm:$0xf]
  %v10802 = vld [vmem:[%s3 + $0x168] sm:$0xf]
  %v10803 = vld [vmem:[%s3 + $0x16c] sm:$0xf]
  %v10804 = vld [vmem:[%s3 + $0x170] sm:$0xf]
  %v10805 = vld [vmem:[%s3 + $0x174] sm:$0xf]
  %v10806 = vld [vmem:[%s3 + $0x178] sm:$0xf]
  %v10807 = vld [vmem:[%s3 + $0x17c] sm:$0xf]
  %v10808 = vld [vmem:[%s3 + $0x180] sm:$0xf]
  %v10809 = vld [vmem:[%s3 + $0x184] sm:$0xf]
  %v10810 = vld [vmem:[%s6] sm:$0x1]
  %v10812 = vlaneseq
  %v10813 = vshrl.u32 %v10812, 7
  %v10814 = vsub.s32 0, %v10813
  %v10815 = vrot.slane %v10810, %v10814
  %v10915 = vunpack.c.l.b16 %v10712
  %v10916 = vunpack.c.l.b16 %v10713
  %v10917 = vunpack.c.l.b16 %v10714
  %v10918 = vunpack.c.l.b16 %v10715
  %v10919 = vunpack.c.l.b16 %v10716
  %v10920 = vunpack.c.l.b16 %v10717
  %v10921 = vunpack.c.l.b16 %v10718
  %v10922 = vunpack.c.l.b16 %v10719
  %v10923 = vunpack.c.l.b16 %v10720
  %v10924 = vunpack.c.l.b16 %v10721
  %v10925 = vunpack.c.l.b16 %v10722
  %v10926 = vunpack.c.l.b16 %v10723
  %v10927 = vunpack.c.l.b16 %v10724
  %v10928 = vunpack.c.l.b16 %v10725
  %v10929 = vunpack.c.l.b16 %v10726
  %v10930 = vunpack.c.l.b16 %v10727
  %v10931 = vunpack.c.l.b16 %v10728
  %v10932 = vunpack.c.l.b16 %v10729
  %v10933 = vunpack.c.l.b16 %v10730
  %v10934 = vunpack.c.l.b16 %v10731
  %v10935 = vunpack.c.l.b16 %v10732
  %v10936 = vunpack.c.l.b16 %v10733
  %v10937 = vunpack.c.l.b16 %v10734
  %v10938 = vunpack.c.l.b16 %v10735
  %v10939 = vunpack.c.l.b16 %v10736
  %v10940 = vunpack.c.l.b16 %v10737
  %v10941 = vunpack.c.l.b16 %v10738
  %v10942 = vunpack.c.l.b16 %v10739
  %v10943 = vunpack.c.l.b16 %v10740
  %v10944 = vunpack.c.l.b16 %v10741
  %v10945 = vunpack.c.l.b16 %v10742
  %v10946 = vunpack.c.l.b16 %v10743
  %v10947 = vunpack.c.l.b16 %v10744
  %v10948 = vunpack.c.l.b16 %v10745
  %v10949 = vunpack.c.l.b16 %v10746
  %v10950 = vunpack.c.l.b16 %v10747
  %v10951 = vunpack.c.l.b16 %v10748
  %v10952 = vunpack.c.l.b16 %v10749
  %v10953 = vunpack.c.l.b16 %v10750
  %v10954 = vunpack.c.l.b16 %v10751
  %v10955 = vunpack.c.l.b16 %v10752
  %v10956 = vunpack.c.l.b16 %v10753
  %v10957 = vunpack.c.l.b16 %v10754
  %v10958 = vunpack.c.l.b16 %v10755
  %v10959 = vunpack.c.l.b16 %v10756
  %v10960 = vunpack.c.l.b16 %v10757
  %v10961 = vunpack.c.l.b16 %v10758
  %v10962 = vunpack.c.l.b16 %v10759
  %v10963 = vunpack.c.l.b16 %v10760
  %v10964 = vunpack.c.l.b16 %v10761
  %v10965 = vunpack.c.l.b16 %v10762
  %v10966 = vunpack.c.l.b16 %v10763
  %v10967 = vunpack.c.l.b16 %v10764
  %v10968 = vunpack.c.l.b16 %v10765
  %v10969 = vunpack.c.l.b16 %v10766
  %v10970 = vunpack.c.l.b16 %v10767
  %v10971 = vunpack.c.l.b16 %v10768
  %v10972 = vunpack.c.l.b16 %v10769
  %v10973 = vunpack.c.l.b16 %v10770
  %v10974 = vunpack.c.l.b16 %v10771
  %v10975 = vunpack.c.l.b16 %v10772
  %v10976 = vunpack.c.l.b16 %v10773
  %v10977 = vunpack.c.l.b16 %v10774
  %v10978 = vunpack.c.l.b16 %v10775
  %v10979 = vunpack.c.l.b16 %v10776
  %v10980 = vunpack.c.l.b16 %v10777
  %v10981 = vunpack.c.l.b16 %v10778
  %v10982 = vunpack.c.l.b16 %v10779
  %v10983 = vunpack.c.l.b16 %v10780
  %v10984 = vunpack.c.l.b16 %v10781
  %v10985 = vunpack.c.l.b16 %v10782
  %v10986 = vunpack.c.l.b16 %v10783
  %v10987 = vunpack.c.l.b16 %v10784
  %v10988 = vunpack.c.l.b16 %v10785
  %v10989 = vunpack.c.l.b16 %v10786
  %v10990 = vunpack.c.l.b16 %v10787
  %v10991 = vunpack.c.l.b16 %v10788
  %v10992 = vunpack.c.l.b16 %v10789
  %v10993 = vunpack.c.l.b16 %v10790
  %v10994 = vunpack.c.l.b16 %v10791
  %v10995 = vunpack.c.l.b16 %v10792
  %v10996 = vunpack.c.l.b16 %v10793
  %v10997 = vunpack.c.l.b16 %v10794
  %v10998 = vunpack.c.l.b16 %v10795
  %v10999 = vunpack.c.l.b16 %v10796
  %v11000 = vunpack.c.l.b16 %v10797
  %v11001 = vunpack.c.l.b16 %v10798
  %v11002 = vunpack.c.l.b16 %v10799
  %v11003 = vunpack.c.l.b16 %v10800
  %v11004 = vunpack.c.l.b16 %v10801
  %v11005 = vunpack.c.l.b16 %v10802
  %v11006 = vunpack.c.l.b16 %v10803
  %v11007 = vunpack.c.l.b16 %v10804
  %v11008 = vunpack.c.l.b16 %v10805
  %v11009 = vunpack.c.l.b16 %v10806
  %v11010 = vunpack.c.l.b16 %v10807
  %v11011 = vunpack.c.l.b16 %v10808
  %v11012 = vunpack.c.l.b16 %v10809
  %v11013 = vpack.c.b16 %v10916, %v10915
  %v11014 = vpack.c.b16 %v10918, %v10917
  %v11015 = vpack.c.b16 %v10920, %v10919
  %v11016 = vpack.c.b16 %v10922, %v10921
  %v11017 = vpack.c.b16 %v10924, %v10923
  %v11018 = vpack.c.b16 %v10926, %v10925
  %v11019 = vpack.c.b16 %v10928, %v10927
  %v11020 = vpack.c.b16 %v10930, %v10929
  %v11021 = vpack.c.b16 %v10932, %v10931
  %v11022 = vpack.c.b16 %v10934, %v10933
  %v11023 = vpack.c.b16 %v10936, %v10935
  %v11024 = vpack.c.b16 %v10938, %v10937
  %v11025 = vpack.c.b16 %v10940, %v10939
  %v11026 = vpack.c.b16 %v10942, %v10941
  %v11027 = vpack.c.b16 %v10944, %v10943
  %v11028 = vpack.c.b16 %v10946, %v10945
  %v11029 = vpack.c.b16 %v10948, %v10947
  %v11030 = vpack.c.b16 %v10950, %v10949
  %v11031 = vpack.c.b16 %v10952, %v10951
  %v11032 = vpack.c.b16 %v10954, %v10953
  %v11033 = vpack.c.b16 %v10956, %v10955
  %v11034 = vpack.c.b16 %v10958, %v10957
  %v11035 = vpack.c.b16 %v10960, %v10959
  %v11036 = vpack.c.b16 %v10962, %v10961
  %v11037 = vpack.c.b16 %v10964, %v10963
  %v11038 = vpack.c.b16 %v10966, %v10965
  %v11039 = vpack.c.b16 %v10968, %v10967
  %v11040 = vpack.c.b16 %v10970, %v10969
  %v11041 = vpack.c.b16 %v10972, %v10971
  %v11042 = vpack.c.b16 %v10974, %v10973
  %v11043 = vpack.c.b16 %v10976, %v10975
  %v11044 = vpack.c.b16 %v10978, %v10977
  %v11045 = vpack.c.b16 %v10980, %v10979
  %v11046 = vpack.c.b16 %v10982, %v10981
  %v11047 = vpack.c.b16 %v10984, %v10983
  %v11048 = vpack.c.b16 %v10986, %v10985
  %v11049 = vpack.c.b16 %v10988, %v10987
  %v11050 = vpack.c.b16 %v10990, %v10989
  %v11051 = vpack.c.b16 %v10992, %v10991
  %v11052 = vpack.c.b16 %v10994, %v10993
  %v11053 = vpack.c.b16 %v10996, %v10995
  %v11054 = vpack.c.b16 %v10998, %v10997
  %v11055 = vpack.c.b16 %v11000, %v10999
  %v11056 = vpack.c.b16 %v11002, %v11001
  %v11057 = vpack.c.b16 %v11004, %v11003
  %v11058 = vpack.c.b16 %v11006, %v11005
  %v11059 = vpack.c.b16 %v11008, %v11007
  %v11060 = vpack.c.b16 %v11010, %v11009
  %v11061 = vpack.c.b16 %v11012, %v11011
  %v11112 = vsel %vm4030, %v10711, 0
  %11114 = vmatprep.subr.bf16.mxu0 0
  %11115 = vmatpush1.bf16.msra.mxu0 %v11020
  %11116 = vmatprep.subr.bf16.mxu0 0
  %11117 = vmatpush1.bf16.msra.mxu0 %v11019
  %11118 = vmatprep.subr.bf16.mxu0 0
  %11119 = vmatpush1.bf16.msra.mxu0 %v11018
  %11120 = vmatprep.subr.bf16.mxu0 0
  %11121 = vmatpush1.bf16.msra.mxu0 %v11017
  %11122 = vmatprep.subr.bf16.mxu0 0
  %11123 = vmatpush1.bf16.msra.mxu0 %v11016
  %11124 = vmatprep.subr.bf16.mxu0 0
  %11125 = vmatpush1.bf16.msra.mxu0 %v11015
  %11126 = vmatprep.subr.bf16.mxu0 0
  %11127 = vmatpush1.bf16.msra.mxu0 %v11014
  %11128 = vmatprep.subr.bf16.mxu0 0
  %11129 = vmatpush1.bf16.msra.mxu0 %v11013
  %11130 = vmatprep.subr.bf16.mxu0 0
  %11131 = vmatpush2.bf16.msra.mxu0 %v11028
  %11132 = vmatprep.subr.bf16.mxu0 0
  %11133 = vmatpush2.bf16.msra.mxu0 %v11027
  %11134 = vmatprep.subr.bf16.mxu0 0
  %11135 = vmatpush2.bf16.msra.mxu0 %v11026
  %11136 = vmatprep.subr.bf16.mxu0 0
  %11137 = vmatpush2.bf16.msra.mxu0 %v11025
  %11138 = vmatprep.subr.bf16.mxu0 0
  %11139 = vmatpush2.bf16.msra.mxu0 %v11024
  %11140 = vmatprep.subr.bf16.mxu0 0
  %11141 = vmatpush2.bf16.msra.mxu0 %v11023
  %11142 = vmatprep.subr.bf16.mxu0 0
  %11143 = vmatpush2.bf16.msra.mxu0 %v11022
  %11144 = vmatprep.subr.bf16.mxu0 0
  %11145 = vmatpush2.bf16.msra.mxu0 %v11021
  %11146 = vmatprep.mubr.bf16.mxu0 %v10706
  %11147 = vmatmul.mubr.bf16.gmra.mxu0 %v10705
  %v11148 = vpop.f32.mrf.mxu0
  %v11149 = vadd.f32 %v10815, %v11148
  %v11150 = vpop.f32.mrf.mxu0
  %v11151 = vpop.f32.mrf.mxu0
  %v11152 = vpop.f32.mrf.mxu0
  %11153 = vdwg.mxu0
  %11154 = vmatprep.subr.bf16.mxu0 0
  %11155 = vmatpush1.bf16.msra.mxu0 %v11036
  %11156 = vmatprep.subr.bf16.mxu0 0
  %11157 = vmatpush1.bf16.msra.mxu0 %v11035
  %11158 = vmatprep.subr.bf16.mxu0 0
  %11159 = vmatpush1.bf16.msra.mxu0 %v11034
  %11160 = vmatprep.subr.bf16.mxu0 0
  %11161 = vmatpush1.bf16.msra.mxu0 %v11033
  %11162 = vmatprep.subr.bf16.mxu0 0
  %11163 = vmatpush1.bf16.msra.mxu0 %v11032
  %11164 = vmatprep.subr.bf16.mxu0 0
  %11165 = vmatpush1.bf16.msra.mxu0 %v11031
  %11166 = vmatprep.subr.bf16.mxu0 0
  %11167 = vmatpush1.bf16.msra.mxu0 %v11030
  %11168 = vmatprep.subr.bf16.mxu0 0
  %11169 = vmatpush1.bf16.msra.mxu0 %v11029
  %11170 = vmatprep.subr.bf16.mxu0 0
  %11171 = vmatpush2.bf16.msra.mxu0 %v11044
  %11172 = vmatprep.subr.bf16.mxu0 0
  %11173 = vmatpush2.bf16.msra.mxu0 %v11043
  %11174 = vmatprep.subr.bf16.mxu0 0
  %11175 = vmatpush2.bf16.msra.mxu0 %v11042
  %11176 = vmatprep.subr.bf16.mxu0 0
  %11177 = vmatpush2.bf16.msra.mxu0 %v11041
  %11178 = vmatprep.subr.bf16.mxu0 0
  %11179 = vmatpush2.bf16.msra.mxu0 %v11040
  %11180 = vmatprep.subr.bf16.mxu0 0
  %11181 = vmatpush2.bf16.msra.mxu0 %v11039
  %11182 = vmatprep.subr.bf16.mxu0 0
  %11183 = vmatpush2.bf16.msra.mxu0 %v11038
  %11184 = vmatprep.subr.bf16.mxu0 0
  %11185 = vmatpush2.bf16.msra.mxu0 %v11037
  %11186 = vmatprep.mubr.bf16.mxu0 %v10708
  %11187 = vmatmul.mubr.bf16.gmra.mxu0 %v10707
  %v11188 = vpop.f32.mrf.mxu0
  %v11189 = vadd.f32 %v11149, %v11188
  %v11190 = vpop.f32.mrf.mxu0
  %v11191 = vpop.f32.mrf.mxu0
  %v11192 = vpop.f32.mrf.mxu0
  %11193 = vdwg.mxu0
  %11194 = vmatprep.subr.bf16.mxu0 0
  %11195 = vmatpush1.bf16.msra.mxu0 %v11052
  %11196 = vmatprep.subr.bf16.mxu0 0
  %11197 = vmatpush1.bf16.msra.mxu0 %v11051
  %11198 = vmatprep.subr.bf16.mxu0 0
  %11199 = vmatpush1.bf16.msra.mxu0 %v11050
  %11200 = vmatprep.subr.bf16.mxu0 0
  %11201 = vmatpush1.bf16.msra.mxu0 %v11049
  %11202 = vmatprep.subr.bf16.mxu0 0
  %11203 = vmatpush1.bf16.msra.mxu0 %v11048
  %11204 = vmatprep.subr.bf16.mxu0 0
  %11205 = vmatpush1.bf16.msra.mxu0 %v11047
  %11206 = vmatprep.subr.bf16.mxu0 0
  %11207 = vmatpush1.bf16.msra.mxu0 %v11046
  %11208 = vmatprep.subr.bf16.mxu0 0
  %11209 = vmatpush1.bf16.msra.mxu0 %v11045
  %11210 = vmatprep.subr.bf16.mxu0 0
  %11211 = vmatpush2.bf16.msra.mxu0 %v11060
  %11212 = vmatprep.subr.bf16.mxu0 0
  %11213 = vmatpush2.bf16.msra.mxu0 %v11059
  %11214 = vmatprep.subr.bf16.mxu0 0
  %11215 = vmatpush2.bf16.msra.mxu0 %v11058
  %11216 = vmatprep.subr.bf16.mxu0 0
  %11217 = vmatpush2.bf16.msra.mxu0 %v11057
  %11218 = vmatprep.subr.bf16.mxu0 0
  %11219 = vmatpush2.bf16.msra.mxu0 %v11056
  %11220 = vmatprep.subr.bf16.mxu0 0
  %11221 = vmatpush2.bf16.msra.mxu0 %v11055
  %11222 = vmatprep.subr.bf16.mxu0 0
  %11223 = vmatpush2.bf16.msra.mxu0 %v11054
  %11224 = vmatprep.subr.bf16.mxu0 0
  %11225 = vmatpush2.bf16.msra.mxu0 %v11053
  %11226 = vmatprep.mubr.bf16.mxu0 %v10710
  %11227 = vmatmul.mubr.bf16.gmra.mxu0 %v10709
  %v11228 = vpop.f32.mrf.mxu0
  %v11229 = vadd.f32 %v11189, %v11228
  %v11230 = vpop.f32.mrf.mxu0
  %v11231 = vpop.f32.mrf.mxu0
  %v11232 = vpop.f32.mrf.mxu0
  %11233 = vdwg.mxu0
  %11234 = vmatprep.subr.bf16.mxu0 0
  %11235 = vmatpush1.bf16.msra.mxu0 0
  %11236 = vmatprep.subr.bf16.mxu0 0
  %11237 = vmatpush1.bf16.msra.mxu0 0
  %11238 = vmatprep.subr.bf16.mxu0 0
  %11239 = vmatpush1.bf16.msra.mxu0 0
  %11240 = vmatprep.subr.bf16.mxu0 0
  %11241 = vmatpush1.bf16.msra.mxu0 0
  %11242 = vmatprep.subr.bf16.mxu0 0
  %11243 = vmatpush1.bf16.msra.mxu0 0
  %11244 = vmatprep.subr.bf16.mxu0 0
  %11245 = vmatpush1.bf16.msra.mxu0 0
  %11246 = vmatprep.subr.bf16.mxu0 0
  %11247 = vmatpush1.bf16.msra.mxu0 0
  %11248 = vmatprep.subr.bf16.mxu0 0
  %11249 = vmatpush1.bf16.msra.mxu0 %v11061
  %11250 = vmatprep.subr.bf16.mxu0 0
  %11251 = vmatpush2.bf16.msra.mxu0 0
  %11252 = vmatprep.subr.bf16.mxu0 0
  %11253 = vmatpush2.bf16.msra.mxu0 0
  %11254 = vmatprep.subr.bf16.mxu0 0
  %11255 = vmatpush2.bf16.msra.mxu0 0
  %11256 = vmatprep.subr.bf16.mxu0 0
  %11257 = vmatpush2.bf16.msra.mxu0 0
  %11258 = vmatprep.subr.bf16.mxu0 0
  %11259 = vmatpush2.bf16.msra.mxu0 0
  %11260 = vmatprep.subr.bf16.mxu0 0
  %11261 = vmatpush2.bf16.msra.mxu0 0
  %11262 = vmatprep.subr.bf16.mxu0 0
  %11263 = vmatpush2.bf16.msra.mxu0 0
  %11264 = vmatprep.subr.bf16.mxu0 0
  %11265 = vmatpush2.bf16.msra.mxu0 0
  %11266 = vmatprep.mubr.bf16.mxu0 0
  %11267 = vmatmul.mubr.bf16.gmra.mxu0 %v11112
  %v11268 = vpop.f32.mrf.mxu0
  %v11269 = vadd.f32 %v11229, %v11268
  %v11270 = vpop.f32.mrf.mxu0
  %v11271 = vpop.f32.mrf.mxu0
  %v11272 = vpop.f32.mrf.mxu0
  %11273 = vdwg.mxu0
  %11274 = vst.msk [vmem:[%s7] sm:$0xff] %vm9553, %v11269
  // Predicated region
  $region30: #{encoder_forward.1} parent=0 // pred_check
    _
  $region31: #{encoder_forward.1} parent=0 // pred_check_branch
    %11276 = sbr.rel (0) target = $region33
  $region32: #{encoder_forward.1} parent=0 // pred_region
    _
  $region33: #{encoder_forward.1} parent=0 // pred_fallthru
    _
  // Predicated region
  $region34: #{encoder_forward.1} parent=0 // pred_check
    _
  $region35: #{encoder_forward.1} parent=0 // pred_check_branch
    %11278 = sbr.rel (0) target = $region37
  $region36: #{encoder_forward.1} parent=0 // pred_region
    _
  $region37: #{encoder_forward.1} parent=0 // pred_fallthru
    _

</llo_original>
